<compile_context>
chip_gen: v7x
topology: tpu7x:2x2x1
jax: 0.10.0
libtpu: 0.0.40
codegen_flags: <defaults>
</compile_context>

<pallas_src>
import jax
import jax.numpy as jnp
from jax.experimental import pallas as pl
from jax.experimental.pallas import tpu as pltpu

# ----------------------------- model config (small, consistent w/ module) ----
INPUT_SIZE = 16      # module default 50, scaled down
HIDDEN = 32          # module default 256, scaled down
NUM_LAYERS = 4
ACTION_SPACE = 2
BATCH = 2
SEQ = 8


# ----------------------------- fused kernel ----------------------------------
def student_kernel(x_ref, wih0_ref, wihr_ref, whh_ref, bi_ref, bhn_ref,
                   fcw_ref, fcb_ref, out_ref, hn_ref):
    """Whole Student forward (eval mode) in one kernel invocation.

    x_ref    : (B, S, I)        batch-first input, no wrapper-side reshaping
    wih0_ref : (I, 3H)          layer-0 input->gate weights (un-padded)
    wihr_ref : (L-1, H, 3H)     input->gate weights for layers 1..L-1
    whh_ref  : (L, H, 3H)       hidden->gate weights
    bi_ref   : (L, 1, 3H)       b_ih with b_hr/b_hz pre-folded (b_hn NOT folded)
    bhn_ref  : (L, 1, H)        b_hn (must stay inside r * (.) per PyTorch GRU)
    fcw_ref  : (H, A), fcb_ref : (1, A)
    out_ref  : (B, A)           fc(last-layer output at final timestep)
    hn_ref   : (L*B, H)         final hidden state per layer, one aligned store

    PyTorch GRU gate order (r, z, n):
        r  = sigmoid(x W_ir + b_ir + h W_hr + b_hr)
        z  = sigmoid(x W_iz + b_iz + h W_hz + b_hz)
        n  = tanh   (x W_in + b_in + r * (h W_hn + b_hn))
        h' = (1 - z) * n + z * h
    """
    L, H, _ = whh_ref.shape
    B, S, _ = x_ref.shape

    x = x_ref[...]                # (B, S, I) — tiny, load once
    wih0 = wih0_ref[...]          # (I, 3H)

    def gru_cell(gi, gh, h_old, bhn_l):
        r = jax.nn.sigmoid(gi[:, 0:H] + gh[:, 0:H])
        z = jax.nn.sigmoid(gi[:, H:2 * H] + gh[:, H:2 * H])
        n = jnp.tanh(gi[:, 2 * H:3 * H] + r * (gh[:, 2 * H:3 * H] + bhn_l))
        return (1.0 - z) * n + z * h_old

    # Per-layer hidden state (h0 == 0 on the module's first_flag path) and the
    # per-layer output produced on the previous diagonal (input of layer l+1).
    h = [jnp.zeros((B, H), jnp.float32) for _ in range(L)]
    y_prev = [None] * L

    # Wavefront over diagonals d = l + t: chain depth L+S-1 = 11 instead of 32,
    # and all cells on one diagonal are mutually independent.
    for d in range(L + S - 1):
        h_new = list(h)
        y_new = list(y_prev)
        for l in range(L):
            t = d - l
            if 0 <= t < S:
                if l == 0:
                    # Layer-0 input projection depends only on x — off the
                    # recurrence critical path (scheduler hoists it).
                    gi = jnp.dot(x[:, t, :], wih0,
                                 preferred_element_type=jnp.float32) + bi_ref[0]
                else:
                    gi = jnp.dot(y_prev[l - 1], wihr_ref[l - 1],
                                 preferred_element_type=jnp.float32) + bi_ref[l]
                gh = jnp.dot(h[l], whh_ref[l],
                             preferred_element_type=jnp.float32)
                hn = gru_cell(gi, gh, h[l], bhn_ref[l])
                h_new[l] = hn
                y_new[l] = hn
        h = h_new
        y_prev = y_new

    # Final hidden states: single aligned (L*B, H) = (8, 32) store.
    hn_ref[...] = jnp.concatenate(h, axis=0)

    # Fused fc head. Inter-layer GRU dropout and self.dropout_1 are identity
    # in eval mode.
    # TODO(synk): training-mode dropout (p=0.5) is not implemented.
    out_ref[...] = jnp.dot(h[L - 1], fcw_ref[...],
                           preferred_element_type=jnp.float32) + fcb_ref[...]


# ----------------------------- wrapper ----------------------------------------
@jax.jit
def student_forward(x, params):
    """x: (batch, seq, input_size) float32, batch_first (matches the module).
    Returns (out, h_n): out (batch, action_space), h_n (num_layers, batch, hidden)."""
    batch, seq, in_dim = x.shape
    out, hn = pl.pallas_call(
        student_kernel,
        out_shape=(jax.ShapeDtypeStruct((batch, ACTION_SPACE), jnp.float32),
                   jax.ShapeDtypeStruct((NUM_LAYERS * batch, HIDDEN), jnp.float32)),
        grid=(1,),
        in_specs=[
            pl.BlockSpec((batch, seq, in_dim), lambda i: (0, 0, 0)),
            pl.BlockSpec((in_dim, 3 * HIDDEN), lambda i: (0, 0)),
            pl.BlockSpec((NUM_LAYERS - 1, HIDDEN, 3 * HIDDEN), lambda i: (0, 0, 0)),
            pl.BlockSpec((NUM_LAYERS, HIDDEN, 3 * HIDDEN), lambda i: (0, 0, 0)),
            pl.BlockSpec((NUM_LAYERS, 1, 3 * HIDDEN), lambda i: (0, 0, 0)),
            pl.BlockSpec((NUM_LAYERS, 1, HIDDEN), lambda i: (0, 0, 0)),
            pl.BlockSpec((HIDDEN, ACTION_SPACE), lambda i: (0, 0)),
            pl.BlockSpec((1, ACTION_SPACE), lambda i: (0, 0)),
        ],
        out_specs=(pl.BlockSpec((batch, ACTION_SPACE), lambda i: (0, 0)),
                   pl.BlockSpec((NUM_LAYERS * batch, HIDDEN), lambda i: (0, 0))),
        compiler_params=pltpu.CompilerParams(dimension_semantics=("arbitrary",)),
    )(x.astype(jnp.float32), params["wih0"], params["wihr"], params["whh"],
      params["bi"], params["bhn"], params["fc_w"], params["fc_b"])
    return out, hn.reshape(NUM_LAYERS, batch, HIDDEN)


# ----------------------------- parameter init ---------------------------------
def init_params(key):
    k = 1.0 / jnp.sqrt(jnp.float32(HIDDEN))
    H = HIDDEN
    wih_l, whh_l, bih_l, bhh_l = [], [], [], []
    for layer in range(NUM_LAYERS):
        in_dim = INPUT_SIZE if layer == 0 else HIDDEN
        key, k1, k2, k3, k4 = jax.random.split(key, 5)
        # stored pre-transposed relative to PyTorch's (3H, in) layout
        wih_l.append(jax.random.uniform(k1, (in_dim, 3 * H), jnp.float32, -k, k))
        whh_l.append(jax.random.uniform(k2, (H, 3 * H), jnp.float32, -k, k))
        bih_l.append(jax.random.uniform(k3, (1, 3 * H), jnp.float32, -k, k))
        bhh_l.append(jax.random.uniform(k4, (1, 3 * H), jnp.float32, -k, k))
    key, k5, k6 = jax.random.split(key, 3)

    # Fold b_hr / b_hz into b_ih (b_hn must stay separate for the n-gate).
    bi_fold = [bih_l[l] + jnp.concatenate(
                   [bhh_l[l][:, :2 * H], jnp.zeros((1, H), jnp.float32)], axis=1)
               for l in range(NUM_LAYERS)]
    bhn = [bhh_l[l][:, 2 * H:] for l in range(NUM_LAYERS)]

    return {
        # kernel-form parameters
        "wih0": wih_l[0],                       # (I, 3H)
        "wihr": jnp.stack(wih_l[1:]),           # (L-1, H, 3H)
        "whh": jnp.stack(whh_l),                # (L, H, 3H)
        "bi": jnp.stack(bi_fold),               # (L, 1, 3H)
        "bhn": jnp.stack(bhn),                  # (L, 1, H)
        "fc_w": jax.random.uniform(k5, (H, ACTION_SPACE), jnp.float32, -k, k),
        "fc_b": jax.random.uniform(k6, (1, ACTION_SPACE), jnp.float32, -k, k),
        # raw biases (reference only — validates the fold against PyTorch math)
        "bih_raw": jnp.stack(bih_l),
        "bhh_raw": jnp.stack(bhh_l),
    }


# ----------------------------- pure-JAX reference -----------------------------
def student_reference(x, params):
    H = HIDDEN
    layer_in = jnp.transpose(x, (1, 0, 2)).astype(jnp.float32)   # (S, B, I)
    b = x.shape[0]
    hs = []
    for l in range(NUM_LAYERS):
        w_ih = params["wih0"] if l == 0 else params["wihr"][l - 1]
        w_hh = params["whh"][l]
        b_ih = params["bih_raw"][l]
        b_hh = params["bhh_raw"][l]
        h = jnp.zeros((b, H), jnp.float32)
        outs = []
        for t in range(layer_in.shape[0]):
            gi = layer_in[t] @ w_ih + b_ih
            gh = h @ w_hh + b_hh
            r = jax.nn.sigmoid(gi[:, :H] + gh[:, :H])
            z = jax.nn.sigmoid(gi[:, H:2 * H] + gh[:, H:2 * H])
            n = jnp.tanh(gi[:, 2 * H:] + r * gh[:, 2 * H:])
            h = (1.0 - z) * n + z * h
            outs.append(h)
        layer_in = jnp.stack(outs, 0)
        hs.append(h)
    # Eval-mode (identity) dropout semantics.
    out = layer_in[-1] @ params["fc_w"] + params["fc_b"]
    return out, jnp.stack(hs, 0)


if __name__ == "__main__":
    key = jax.random.PRNGKey(0)
    pkey, xkey = jax.random.split(key)
    params = init_params(pkey)
    x = jax.random.normal(xkey, (BATCH, SEQ, INPUT_SIZE), jnp.float32)

    out, h_n = student_forward(x, params)
    jax.block_until_ready(out)
    jax.block_until_ready(h_n)

    assert out.shape == (BATCH, ACTION_SPACE)
    assert h_n.shape == (NUM_LAYERS, BATCH, HIDDEN)

    out_ref, h_ref = student_reference(x, params)
    assert jnp.allclose(out, out_ref, atol=1e-3, rtol=1e-3), "fc output mismatch"
    assert jnp.allclose(h_n, h_ref, atol=1e-3, rtol=1e-3), "h_n mismatch"

    print("KERNEL_OK")
</pallas_src>

<mosaic_0001>
module attributes {stable_mosaic.version = 11 : i64} {
  func.func @student_kernel(%arg0: i32, %arg1: memref<2x8x16xf32, #tpu.memory_space<vmem>>, %arg2: memref<16x96xf32, #tpu.memory_space<vmem>>, %arg3: memref<3x32x96xf32, #tpu.memory_space<vmem>>, %arg4: memref<4x32x96xf32, #tpu.memory_space<vmem>>, %arg5: memref<4x1x96xf32, #tpu.memory_space<vmem>>, %arg6: memref<4x1x32xf32, #tpu.memory_space<vmem>>, %arg7: memref<32x2xf32, #tpu.memory_space<vmem>>, %arg8: memref<1x2xf32, #tpu.memory_space<vmem>>, %arg9: memref<2x2xf32, #tpu.memory_space<vmem>>, %arg10: memref<8x32xf32, #tpu.memory_space<vmem>>) attributes {dimension_semantics = [#tpu.dimension_semantics<arbitrary>], iteration_bounds = array<i64: 1>, scalar_prefetch = 0 : i64, scratch_operands = 0 : i64, tpu.core_type = #tpu.core_type<tc>, window_params = [{pipeline_mode = #tpu.pipeline_mode<synchronous>, transform_indices = @transform_0, window_bounds = array<i64: 2, 8, 16>}, {pipeline_mode = #tpu.pipeline_mode<synchronous>, transform_indices = @transform_1, window_bounds = array<i64: 16, 96>}, {pipeline_mode = #tpu.pipeline_mode<synchronous>, transform_indices = @transform_2, window_bounds = array<i64: 3, 32, 96>}, {pipeline_mode = #tpu.pipeline_mode<synchronous>, transform_indices = @transform_3, window_bounds = array<i64: 4, 32, 96>}, {pipeline_mode = #tpu.pipeline_mode<synchronous>, transform_indices = @transform_4, window_bounds = array<i64: 4, 1, 96>}, {pipeline_mode = #tpu.pipeline_mode<synchronous>, transform_indices = @transform_5, window_bounds = array<i64: 4, 1, 32>}, {pipeline_mode = #tpu.pipeline_mode<synchronous>, transform_indices = @transform_6, window_bounds = array<i64: 32, 2>}, {pipeline_mode = #tpu.pipeline_mode<synchronous>, transform_indices = @transform_7, window_bounds = array<i64: 1, 2>}, {pipeline_mode = #tpu.pipeline_mode<synchronous>, transform_indices = @transform_8, window_bounds = array<i64: 2, 2>}, {pipeline_mode = #tpu.pipeline_mode<synchronous>, transform_indices = @transform_9, window_bounds = array<i64: 8, 32>}]} {
    %c0 = arith.constant 0 : index
    %c0_0 = arith.constant 0 : index
    %c0_1 = arith.constant 0 : index
    %0 = vector.load %arg1[%c0, %c0_0, %c0_1] : memref<2x8x16xf32, #tpu.memory_space<vmem>>, vector<2x8x16xf32>
    %c0_2 = arith.constant 0 : index
    %c0_3 = arith.constant 0 : index
    %1 = vector.load %arg2[%c0_2, %c0_3] : memref<16x96xf32, #tpu.memory_space<vmem>>, vector<16x96xf32>
    %cst = arith.constant 0.000000e+00 : f32
    %2 = vector.broadcast %cst : f32 to vector<2x32xf32>
    %cst_4 = arith.constant 0.000000e+00 : f32
    %3 = vector.broadcast %cst_4 : f32 to vector<2x32xf32>
    %cst_5 = arith.constant 0.000000e+00 : f32
    %4 = vector.broadcast %cst_5 : f32 to vector<2x32xf32>
    %cst_6 = arith.constant 0.000000e+00 : f32
    %5 = vector.broadcast %cst_6 : f32 to vector<2x32xf32>
    %6 = vector.extract_strided_slice %0 {offsets = [0, 0, 0], sizes = [2, 1, 16], strides = [1, 1, 1]} : vector<2x8x16xf32> to vector<2x1x16xf32>
    %7 = vector.shape_cast %6 : vector<2x1x16xf32> to vector<2x16xf32>
    %cst_7 = arith.constant dense<0.000000e+00> : vector<2x96xf32>
    %8 = tpu.matmul %7, %1, %cst_7 {dimension_numbers = #tpu.dot_dimension_numbers<[1], [0], [0], [1], [0, 0, 1, 1], [], []>} : vector<2x16xf32>, vector<16x96xf32>, vector<2x96xf32> -> vector<2x96xf32>
    %c0_8 = arith.constant 0 : index
    %c0_9 = arith.constant 0 : index
    %c0_10 = arith.constant 0 : index
    %9 = vector.load %arg5[%c0_8, %c0_9, %c0_10] : memref<4x1x96xf32, #tpu.memory_space<vmem>>, vector<1x1x96xf32>
    %10 = vector.shape_cast %9 : vector<1x1x96xf32> to vector<1x96xf32>
    %11 = vector.broadcast %10 : vector<1x96xf32> to vector<2x96xf32>
    %12 = arith.addf %8, %11 : vector<2x96xf32>
    %c0_11 = arith.constant 0 : index
    %c0_12 = arith.constant 0 : index
    %c0_13 = arith.constant 0 : index
    %13 = vector.load %arg4[%c0_11, %c0_12, %c0_13] : memref<4x32x96xf32, #tpu.memory_space<vmem>>, vector<1x32x96xf32>
    %14 = vector.shape_cast %13 : vector<1x32x96xf32> to vector<32x96xf32>
    %cst_14 = arith.constant dense<0.000000e+00> : vector<2x96xf32>
    %15 = tpu.matmul %2, %14, %cst_14 {dimension_numbers = #tpu.dot_dimension_numbers<[1], [0], [0], [1], [0, 0, 1, 1], [], []>} : vector<2x32xf32>, vector<32x96xf32>, vector<2x96xf32> -> vector<2x96xf32>
    %c0_15 = arith.constant 0 : index
    %c0_16 = arith.constant 0 : index
    %c0_17 = arith.constant 0 : index
    %16 = vector.load %arg6[%c0_15, %c0_16, %c0_17] : memref<4x1x32xf32, #tpu.memory_space<vmem>>, vector<1x1x32xf32>
    %17 = vector.shape_cast %16 : vector<1x1x32xf32> to vector<1x32xf32>
    %18 = vector.extract_strided_slice %12 {offsets = [0, 0], sizes = [2, 32], strides = [1, 1]} : vector<2x96xf32> to vector<2x32xf32>
    %19 = vector.extract_strided_slice %15 {offsets = [0, 0], sizes = [2, 32], strides = [1, 1]} : vector<2x96xf32> to vector<2x32xf32>
    %20 = arith.addf %18, %19 : vector<2x32xf32>
    %21 = arith.negf %20 : vector<2x32xf32>
    %22 = math.exp %21 : vector<2x32xf32>
    %cst_18 = arith.constant 1.000000e+00 : f32
    %23 = vector.broadcast %cst_18 : f32 to vector<2x32xf32>
    %24 = arith.addf %23, %22 : vector<2x32xf32>
    %25 = arith.divf %23, %24 : vector<2x32xf32>
    %26 = vector.extract_strided_slice %12 {offsets = [0, 32], sizes = [2, 32], strides = [1, 1]} : vector<2x96xf32> to vector<2x32xf32>
    %27 = vector.extract_strided_slice %15 {offsets = [0, 32], sizes = [2, 32], strides = [1, 1]} : vector<2x96xf32> to vector<2x32xf32>
    %28 = arith.addf %26, %27 : vector<2x32xf32>
    %29 = arith.negf %28 : vector<2x32xf32>
    %30 = math.exp %29 : vector<2x32xf32>
    %cst_19 = arith.constant 1.000000e+00 : f32
    %31 = vector.broadcast %cst_19 : f32 to vector<2x32xf32>
    %32 = arith.addf %31, %30 : vector<2x32xf32>
    %33 = arith.divf %31, %32 : vector<2x32xf32>
    %34 = vector.extract_strided_slice %12 {offsets = [0, 64], sizes = [2, 32], strides = [1, 1]} : vector<2x96xf32> to vector<2x32xf32>
    %35 = vector.extract_strided_slice %15 {offsets = [0, 64], sizes = [2, 32], strides = [1, 1]} : vector<2x96xf32> to vector<2x32xf32>
    %36 = vector.broadcast %17 : vector<1x32xf32> to vector<2x32xf32>
    %37 = arith.addf %35, %36 : vector<2x32xf32>
    %38 = arith.mulf %25, %37 : vector<2x32xf32>
    %39 = arith.addf %34, %38 : vector<2x32xf32>
    %40 = math.tanh %39 : vector<2x32xf32>
    %cst_20 = arith.constant 1.000000e+00 : f32
    %41 = vector.broadcast %cst_20 : f32 to vector<2x32xf32>
    %42 = arith.subf %41, %33 : vector<2x32xf32>
    %43 = arith.mulf %42, %40 : vector<2x32xf32>
    %44 = arith.mulf %33, %2 : vector<2x32xf32>
    %45 = arith.addf %43, %44 : vector<2x32xf32>
    %46 = vector.extract_strided_slice %0 {offsets = [0, 1, 0], sizes = [2, 1, 16], strides = [1, 1, 1]} : vector<2x8x16xf32> to vector<2x1x16xf32>
    %47 = vector.shape_cast %46 : vector<2x1x16xf32> to vector<2x16xf32>
    %cst_21 = arith.constant dense<0.000000e+00> : vector<2x96xf32>
    %48 = tpu.matmul %47, %1, %cst_21 {dimension_numbers = #tpu.dot_dimension_numbers<[1], [0], [0], [1], [0, 0, 1, 1], [], []>} : vector<2x16xf32>, vector<16x96xf32>, vector<2x96xf32> -> vector<2x96xf32>
    %c0_22 = arith.constant 0 : index
    %c0_23 = arith.constant 0 : index
    %c0_24 = arith.constant 0 : index
    %49 = vector.load %arg5[%c0_22, %c0_23, %c0_24] : memref<4x1x96xf32, #tpu.memory_space<vmem>>, vector<1x1x96xf32>
    %50 = vector.shape_cast %49 : vector<1x1x96xf32> to vector<1x96xf32>
    %51 = vector.broadcast %50 : vector<1x96xf32> to vector<2x96xf32>
    %52 = arith.addf %48, %51 : vector<2x96xf32>
    %c0_25 = arith.constant 0 : index
    %c0_26 = arith.constant 0 : index
    %c0_27 = arith.constant 0 : index
    %53 = vector.load %arg4[%c0_25, %c0_26, %c0_27] : memref<4x32x96xf32, #tpu.memory_space<vmem>>, vector<1x32x96xf32>
    %54 = vector.shape_cast %53 : vector<1x32x96xf32> to vector<32x96xf32>
    %cst_28 = arith.constant dense<0.000000e+00> : vector<2x96xf32>
    %55 = tpu.matmul %45, %54, %cst_28 {dimension_numbers = #tpu.dot_dimension_numbers<[1], [0], [0], [1], [0, 0, 1, 1], [], []>} : vector<2x32xf32>, vector<32x96xf32>, vector<2x96xf32> -> vector<2x96xf32>
    %c0_29 = arith.constant 0 : index
    %c0_30 = arith.constant 0 : index
    %c0_31 = arith.constant 0 : index
    %56 = vector.load %arg6[%c0_29, %c0_30, %c0_31] : memref<4x1x32xf32, #tpu.memory_space<vmem>>, vector<1x1x32xf32>
    %57 = vector.shape_cast %56 : vector<1x1x32xf32> to vector<1x32xf32>
    %58 = vector.extract_strided_slice %52 {offsets = [0, 0], sizes = [2, 32], strides = [1, 1]} : vector<2x96xf32> to vector<2x32xf32>
    %59 = vector.extract_strided_slice %55 {offsets = [0, 0], sizes = [2, 32], strides = [1, 1]} : vector<2x96xf32> to vector<2x32xf32>
    %60 = arith.addf %58, %59 : vector<2x32xf32>
    %61 = arith.negf %60 : vector<2x32xf32>
    %62 = math.exp %61 : vector<2x32xf32>
    %cst_32 = arith.constant 1.000000e+00 : f32
    %63 = vector.broadcast %cst_32 : f32 to vector<2x32xf32>
    %64 = arith.addf %63, %62 : vector<2x32xf32>
    %65 = arith.divf %63, %64 : vector<2x32xf32>
    %66 = vector.extract_strided_slice %52 {offsets = [0, 32], sizes = [2, 32], strides = [1, 1]} : vector<2x96xf32> to vector<2x32xf32>
    %67 = vector.extract_strided_slice %55 {offsets = [0, 32], sizes = [2, 32], strides = [1, 1]} : vector<2x96xf32> to vector<2x32xf32>
    %68 = arith.addf %66, %67 : vector<2x32xf32>
    %69 = arith.negf %68 : vector<2x32xf32>
    %70 = math.exp %69 : vector<2x32xf32>
    %cst_33 = arith.constant 1.000000e+00 : f32
    %71 = vector.broadcast %cst_33 : f32 to vector<2x32xf32>
    %72 = arith.addf %71, %70 : vector<2x32xf32>
    %73 = arith.divf %71, %72 : vector<2x32xf32>
    %74 = vector.extract_strided_slice %52 {offsets = [0, 64], sizes = [2, 32], strides = [1, 1]} : vector<2x96xf32> to vector<2x32xf32>
    %75 = vector.extract_strided_slice %55 {offsets = [0, 64], sizes = [2, 32], strides = [1, 1]} : vector<2x96xf32> to vector<2x32xf32>
    %76 = vector.broadcast %57 : vector<1x32xf32> to vector<2x32xf32>
    %77 = arith.addf %75, %76 : vector<2x32xf32>
    %78 = arith.mulf %65, %77 : vector<2x32xf32>
    %79 = arith.addf %74, %78 : vector<2x32xf32>
    %80 = math.tanh %79 : vector<2x32xf32>
    %cst_34 = arith.constant 1.000000e+00 : f32
    %81 = vector.broadcast %cst_34 : f32 to vector<2x32xf32>
    %82 = arith.subf %81, %73 : vector<2x32xf32>
    %83 = arith.mulf %82, %80 : vector<2x32xf32>
    %84 = arith.mulf %73, %45 : vector<2x32xf32>
    %85 = arith.addf %83, %84 : vector<2x32xf32>
    %c0_35 = arith.constant 0 : index
    %c0_36 = arith.constant 0 : index
    %c0_37 = arith.constant 0 : index
    %86 = vector.load %arg3[%c0_35, %c0_36, %c0_37] : memref<3x32x96xf32, #tpu.memory_space<vmem>>, vector<1x32x96xf32>
    %87 = vector.shape_cast %86 : vector<1x32x96xf32> to vector<32x96xf32>
    %cst_38 = arith.constant dense<0.000000e+00> : vector<2x96xf32>
    %88 = tpu.matmul %45, %87, %cst_38 {dimension_numbers = #tpu.dot_dimension_numbers<[1], [0], [0], [1], [0, 0, 1, 1], [], []>} : vector<2x32xf32>, vector<32x96xf32>, vector<2x96xf32> -> vector<2x96xf32>
    %c1 = arith.constant 1 : index
    %c0_39 = arith.constant 0 : index
    %c0_40 = arith.constant 0 : index
    %89 = vector.load %arg5[%c1, %c0_39, %c0_40] : memref<4x1x96xf32, #tpu.memory_space<vmem>>, vector<1x1x96xf32>
    %90 = vector.shape_cast %89 : vector<1x1x96xf32> to vector<1x96xf32>
    %91 = vector.broadcast %90 : vector<1x96xf32> to vector<2x96xf32>
    %92 = arith.addf %88, %91 : vector<2x96xf32>
    %c1_41 = arith.constant 1 : index
    %c0_42 = arith.constant 0 : index
    %c0_43 = arith.constant 0 : index
    %93 = vector.load %arg4[%c1_41, %c0_42, %c0_43] : memref<4x32x96xf32, #tpu.memory_space<vmem>>, vector<1x32x96xf32>
    %94 = vector.shape_cast %93 : vector<1x32x96xf32> to vector<32x96xf32>
    %cst_44 = arith.constant dense<0.000000e+00> : vector<2x96xf32>
    %95 = tpu.matmul %3, %94, %cst_44 {dimension_numbers = #tpu.dot_dimension_numbers<[1], [0], [0], [1], [0, 0, 1, 1], [], []>} : vector<2x32xf32>, vector<32x96xf32>, vector<2x96xf32> -> vector<2x96xf32>
    %c1_45 = arith.constant 1 : index
    %c0_46 = arith.constant 0 : index
    %c0_47 = arith.constant 0 : index
    %96 = vector.load %arg6[%c1_45, %c0_46, %c0_47] : memref<4x1x32xf32, #tpu.memory_space<vmem>>, vector<1x1x32xf32>
    %97 = vector.shape_cast %96 : vector<1x1x32xf32> to vector<1x32xf32>
    %98 = vector.extract_strided_slice %92 {offsets = [0, 0], sizes = [2, 32], strides = [1, 1]} : vector<2x96xf32> to vector<2x32xf32>
    %99 = vector.extract_strided_slice %95 {offsets = [0, 0], sizes = [2, 32], strides = [1, 1]} : vector<2x96xf32> to vector<2x32xf32>
    %100 = arith.addf %98, %99 : vector<2x32xf32>
    %101 = arith.negf %100 : vector<2x32xf32>
    %102 = math.exp %101 : vector<2x32xf32>
    %cst_48 = arith.constant 1.000000e+00 : f32
    %103 = vector.broadcast %cst_48 : f32 to vector<2x32xf32>
    %104 = arith.addf %103, %102 : vector<2x32xf32>
    %105 = arith.divf %103, %104 : vector<2x32xf32>
    %106 = vector.extract_strided_slice %92 {offsets = [0, 32], sizes = [2, 32], strides = [1, 1]} : vector<2x96xf32> to vector<2x32xf32>
    %107 = vector.extract_strided_slice %95 {offsets = [0, 32], sizes = [2, 32], strides = [1, 1]} : vector<2x96xf32> to vector<2x32xf32>
    %108 = arith.addf %106, %107 : vector<2x32xf32>
    %109 = arith.negf %108 : vector<2x32xf32>
    %110 = math.exp %109 : vector<2x32xf32>
    %cst_49 = arith.constant 1.000000e+00 : f32
    %111 = vector.broadcast %cst_49 : f32 to vector<2x32xf32>
    %112 = arith.addf %111, %110 : vector<2x32xf32>
    %113 = arith.divf %111, %112 : vector<2x32xf32>
    %114 = vector.extract_strided_slice %92 {offsets = [0, 64], sizes = [2, 32], strides = [1, 1]} : vector<2x96xf32> to vector<2x32xf32>
    %115 = vector.extract_strided_slice %95 {offsets = [0, 64], sizes = [2, 32], strides = [1, 1]} : vector<2x96xf32> to vector<2x32xf32>
    %116 = vector.broadcast %97 : vector<1x32xf32> to vector<2x32xf32>
    %117 = arith.addf %115, %116 : vector<2x32xf32>
    %118 = arith.mulf %105, %117 : vector<2x32xf32>
    %119 = arith.addf %114, %118 : vector<2x32xf32>
    %120 = math.tanh %119 : vector<2x32xf32>
    %cst_50 = arith.constant 1.000000e+00 : f32
    %121 = vector.broadcast %cst_50 : f32 to vector<2x32xf32>
    %122 = arith.subf %121, %113 : vector<2x32xf32>
    %123 = arith.mulf %122, %120 : vector<2x32xf32>
    %124 = arith.mulf %113, %3 : vector<2x32xf32>
    %125 = arith.addf %123, %124 : vector<2x32xf32>
    %126 = vector.extract_strided_slice %0 {offsets = [0, 2, 0], sizes = [2, 1, 16], strides = [1, 1, 1]} : vector<2x8x16xf32> to vector<2x1x16xf32>
    %127 = vector.shape_cast %126 : vector<2x1x16xf32> to vector<2x16xf32>
    %cst_51 = arith.constant dense<0.000000e+00> : vector<2x96xf32>
    %128 = tpu.matmul %127, %1, %cst_51 {dimension_numbers = #tpu.dot_dimension_numbers<[1], [0], [0], [1], [0, 0, 1, 1], [], []>} : vector<2x16xf32>, vector<16x96xf32>, vector<2x96xf32> -> vector<2x96xf32>
    %c0_52 = arith.constant 0 : index
    %c0_53 = arith.constant 0 : index
    %c0_54 = arith.constant 0 : index
    %129 = vector.load %arg5[%c0_52, %c0_53, %c0_54] : memref<4x1x96xf32, #tpu.memory_space<vmem>>, vector<1x1x96xf32>
    %130 = vector.shape_cast %129 : vector<1x1x96xf32> to vector<1x96xf32>
    %131 = vector.broadcast %130 : vector<1x96xf32> to vector<2x96xf32>
    %132 = arith.addf %128, %131 : vector<2x96xf32>
    %c0_55 = arith.constant 0 : index
    %c0_56 = arith.constant 0 : index
    %c0_57 = arith.constant 0 : index
    %133 = vector.load %arg4[%c0_55, %c0_56, %c0_57] : memref<4x32x96xf32, #tpu.memory_space<vmem>>, vector<1x32x96xf32>
    %134 = vector.shape_cast %133 : vector<1x32x96xf32> to vector<32x96xf32>
    %cst_58 = arith.constant dense<0.000000e+00> : vector<2x96xf32>
    %135 = tpu.matmul %85, %134, %cst_58 {dimension_numbers = #tpu.dot_dimension_numbers<[1], [0], [0], [1], [0, 0, 1, 1], [], []>} : vector<2x32xf32>, vector<32x96xf32>, vector<2x96xf32> -> vector<2x96xf32>
    %c0_59 = arith.constant 0 : index
    %c0_60 = arith.constant 0 : index
    %c0_61 = arith.constant 0 : index
    %136 = vector.load %arg6[%c0_59, %c0_60, %c0_61] : memref<4x1x32xf32, #tpu.memory_space<vmem>>, vector<1x1x32xf32>
    %137 = vector.shape_cast %136 : vector<1x1x32xf32> to vector<1x32xf32>
    %138 = vector.extract_strided_slice %132 {offsets = [0, 0], sizes = [2, 32], strides = [1, 1]} : vector<2x96xf32> to vector<2x32xf32>
    %139 = vector.extract_strided_slice %135 {offsets = [0, 0], sizes = [2, 32], strides = [1, 1]} : vector<2x96xf32> to vector<2x32xf32>
    %140 = arith.addf %138, %139 : vector<2x32xf32>
    %141 = arith.negf %140 : vector<2x32xf32>
    %142 = math.exp %141 : vector<2x32xf32>
    %cst_62 = arith.constant 1.000000e+00 : f32
    %143 = vector.broadcast %cst_62 : f32 to vector<2x32xf32>
    %144 = arith.addf %143, %142 : vector<2x32xf32>
    %145 = arith.divf %143, %144 : vector<2x32xf32>
    %146 = vector.extract_strided_slice %132 {offsets = [0, 32], sizes = [2, 32], strides = [1, 1]} : vector<2x96xf32> to vector<2x32xf32>
    %147 = vector.extract_strided_slice %135 {offsets = [0, 32], sizes = [2, 32], strides = [1, 1]} : vector<2x96xf32> to vector<2x32xf32>
    %148 = arith.addf %146, %147 : vector<2x32xf32>
    %149 = arith.negf %148 : vector<2x32xf32>
    %150 = math.exp %149 : vector<2x32xf32>
    %cst_63 = arith.constant 1.000000e+00 : f32
    %151 = vector.broadcast %cst_63 : f32 to vector<2x32xf32>
    %152 = arith.addf %151, %150 : vector<2x32xf32>
    %153 = arith.divf %151, %152 : vector<2x32xf32>
    %154 = vector.extract_strided_slice %132 {offsets = [0, 64], sizes = [2, 32], strides = [1, 1]} : vector<2x96xf32> to vector<2x32xf32>
    %155 = vector.extract_strided_slice %135 {offsets = [0, 64], sizes = [2, 32], strides = [1, 1]} : vector<2x96xf32> to vector<2x32xf32>
    %156 = vector.broadcast %137 : vector<1x32xf32> to vector<2x32xf32>
    %157 = arith.addf %155, %156 : vector<2x32xf32>
    %158 = arith.mulf %145, %157 : vector<2x32xf32>
    %159 = arith.addf %154, %158 : vector<2x32xf32>
    %160 = math.tanh %159 : vector<2x32xf32>
    %cst_64 = arith.constant 1.000000e+00 : f32
    %161 = vector.broadcast %cst_64 : f32 to vector<2x32xf32>
    %162 = arith.subf %161, %153 : vector<2x32xf32>
    %163 = arith.mulf %162, %160 : vector<2x32xf32>
    %164 = arith.mulf %153, %85 : vector<2x32xf32>
    %165 = arith.addf %163, %164 : vector<2x32xf32>
    %c0_65 = arith.constant 0 : index
    %c0_66 = arith.constant 0 : index
    %c0_67 = arith.constant 0 : index
    %166 = vector.load %arg3[%c0_65, %c0_66, %c0_67] : memref<3x32x96xf32, #tpu.memory_space<vmem>>, vector<1x32x96xf32>
    %167 = vector.shape_cast %166 : vector<1x32x96xf32> to vector<32x96xf32>
    %cst_68 = arith.constant dense<0.000000e+00> : vector<2x96xf32>
    %168 = tpu.matmul %85, %167, %cst_68 {dimension_numbers = #tpu.dot_dimension_numbers<[1], [0], [0], [1], [0, 0, 1, 1], [], []>} : vector<2x32xf32>, vector<32x96xf32>, vector<2x96xf32> -> vector<2x96xf32>
    %c1_69 = arith.constant 1 : index
    %c0_70 = arith.constant 0 : index
    %c0_71 = arith.constant 0 : index
    %169 = vector.load %arg5[%c1_69, %c0_70, %c0_71] : memref<4x1x96xf32, #tpu.memory_space<vmem>>, vector<1x1x96xf32>
    %170 = vector.shape_cast %169 : vector<1x1x96xf32> to vector<1x96xf32>
    %171 = vector.broadcast %170 : vector<1x96xf32> to vector<2x96xf32>
    %172 = arith.addf %168, %171 : vector<2x96xf32>
    %c1_72 = arith.constant 1 : index
    %c0_73 = arith.constant 0 : index
    %c0_74 = arith.constant 0 : index
    %173 = vector.load %arg4[%c1_72, %c0_73, %c0_74] : memref<4x32x96xf32, #tpu.memory_space<vmem>>, vector<1x32x96xf32>
    %174 = vector.shape_cast %173 : vector<1x32x96xf32> to vector<32x96xf32>
    %cst_75 = arith.constant dense<0.000000e+00> : vector<2x96xf32>
    %175 = tpu.matmul %125, %174, %cst_75 {dimension_numbers = #tpu.dot_dimension_numbers<[1], [0], [0], [1], [0, 0, 1, 1], [], []>} : vector<2x32xf32>, vector<32x96xf32>, vector<2x96xf32> -> vector<2x96xf32>
    %c1_76 = arith.constant 1 : index
    %c0_77 = arith.constant 0 : index
    %c0_78 = arith.constant 0 : index
    %176 = vector.load %arg6[%c1_76, %c0_77, %c0_78] : memref<4x1x32xf32, #tpu.memory_space<vmem>>, vector<1x1x32xf32>
    %177 = vector.shape_cast %176 : vector<1x1x32xf32> to vector<1x32xf32>
    %178 = vector.extract_strided_slice %172 {offsets = [0, 0], sizes = [2, 32], strides = [1, 1]} : vector<2x96xf32> to vector<2x32xf32>
    %179 = vector.extract_strided_slice %175 {offsets = [0, 0], sizes = [2, 32], strides = [1, 1]} : vector<2x96xf32> to vector<2x32xf32>
    %180 = arith.addf %178, %179 : vector<2x32xf32>
    %181 = arith.negf %180 : vector<2x32xf32>
    %182 = math.exp %181 : vector<2x32xf32>
    %cst_79 = arith.constant 1.000000e+00 : f32
    %183 = vector.broadcast %cst_79 : f32 to vector<2x32xf32>
    %184 = arith.addf %183, %182 : vector<2x32xf32>
    %185 = arith.divf %183, %184 : vector<2x32xf32>
    %186 = vector.extract_strided_slice %172 {offsets = [0, 32], sizes = [2, 32], strides = [1, 1]} : vector<2x96xf32> to vector<2x32xf32>
    %187 = vector.extract_strided_slice %175 {offsets = [0, 32], sizes = [2, 32], strides = [1, 1]} : vector<2x96xf32> to vector<2x32xf32>
    %188 = arith.addf %186, %187 : vector<2x32xf32>
    %189 = arith.negf %188 : vector<2x32xf32>
    %190 = math.exp %189 : vector<2x32xf32>
    %cst_80 = arith.constant 1.000000e+00 : f32
    %191 = vector.broadcast %cst_80 : f32 to vector<2x32xf32>
    %192 = arith.addf %191, %190 : vector<2x32xf32>
    %193 = arith.divf %191, %192 : vector<2x32xf32>
    %194 = vector.extract_strided_slice %172 {offsets = [0, 64], sizes = [2, 32], strides = [1, 1]} : vector<2x96xf32> to vector<2x32xf32>
    %195 = vector.extract_strided_slice %175 {offsets = [0, 64], sizes = [2, 32], strides = [1, 1]} : vector<2x96xf32> to vector<2x32xf32>
    %196 = vector.broadcast %177 : vector<1x32xf32> to vector<2x32xf32>
    %197 = arith.addf %195, %196 : vector<2x32xf32>
    %198 = arith.mulf %185, %197 : vector<2x32xf32>
    %199 = arith.addf %194, %198 : vector<2x32xf32>
    %200 = math.tanh %199 : vector<2x32xf32>
    %cst_81 = arith.constant 1.000000e+00 : f32
    %201 = vector.broadcast %cst_81 : f32 to vector<2x32xf32>
    %202 = arith.subf %201, %193 : vector<2x32xf32>
    %203 = arith.mulf %202, %200 : vector<2x32xf32>
    %204 = arith.mulf %193, %125 : vector<2x32xf32>
    %205 = arith.addf %203, %204 : vector<2x32xf32>
    %c1_82 = arith.constant 1 : index
    %c0_83 = arith.constant 0 : index
    %c0_84 = arith.constant 0 : index
    %206 = vector.load %arg3[%c1_82, %c0_83, %c0_84] : memref<3x32x96xf32, #tpu.memory_space<vmem>>, vector<1x32x96xf32>
    %207 = vector.shape_cast %206 : vector<1x32x96xf32> to vector<32x96xf32>
    %cst_85 = arith.constant dense<0.000000e+00> : vector<2x96xf32>
    %208 = tpu.matmul %125, %207, %cst_85 {dimension_numbers = #tpu.dot_dimension_numbers<[1], [0], [0], [1], [0, 0, 1, 1], [], []>} : vector<2x32xf32>, vector<32x96xf32>, vector<2x96xf32> -> vector<2x96xf32>
    %c2 = arith.constant 2 : index
    %c0_86 = arith.constant 0 : index
    %c0_87 = arith.constant 0 : index
    %209 = vector.load %arg5[%c2, %c0_86, %c0_87] : memref<4x1x96xf32, #tpu.memory_space<vmem>>, vector<1x1x96xf32>
    %210 = vector.shape_cast %209 : vector<1x1x96xf32> to vector<1x96xf32>
    %211 = vector.broadcast %210 : vector<1x96xf32> to vector<2x96xf32>
    %212 = arith.addf %208, %211 : vector<2x96xf32>
    %c2_88 = arith.constant 2 : index
    %c0_89 = arith.constant 0 : index
    %c0_90 = arith.constant 0 : index
    %213 = vector.load %arg4[%c2_88, %c0_89, %c0_90] : memref<4x32x96xf32, #tpu.memory_space<vmem>>, vector<1x32x96xf32>
    %214 = vector.shape_cast %213 : vector<1x32x96xf32> to vector<32x96xf32>
    %cst_91 = arith.constant dense<0.000000e+00> : vector<2x96xf32>
    %215 = tpu.matmul %4, %214, %cst_91 {dimension_numbers = #tpu.dot_dimension_numbers<[1], [0], [0], [1], [0, 0, 1, 1], [], []>} : vector<2x32xf32>, vector<32x96xf32>, vector<2x96xf32> -> vector<2x96xf32>
    %c2_92 = arith.constant 2 : index
    %c0_93 = arith.constant 0 : index
    %c0_94 = arith.constant 0 : index
    %216 = vector.load %arg6[%c2_92, %c0_93, %c0_94] : memref<4x1x32xf32, #tpu.memory_space<vmem>>, vector<1x1x32xf32>
    %217 = vector.shape_cast %216 : vector<1x1x32xf32> to vector<1x32xf32>
    %218 = vector.extract_strided_slice %212 {offsets = [0, 0], sizes = [2, 32], strides = [1, 1]} : vector<2x96xf32> to vector<2x32xf32>
    %219 = vector.extract_strided_slice %215 {offsets = [0, 0], sizes = [2, 32], strides = [1, 1]} : vector<2x96xf32> to vector<2x32xf32>
    %220 = arith.addf %218, %219 : vector<2x32xf32>
    %221 = arith.negf %220 : vector<2x32xf32>
    %222 = math.exp %221 : vector<2x32xf32>
    %cst_95 = arith.constant 1.000000e+00 : f32
    %223 = vector.broadcast %cst_95 : f32 to vector<2x32xf32>
    %224 = arith.addf %223, %222 : vector<2x32xf32>
    %225 = arith.divf %223, %224 : vector<2x32xf32>
    %226 = vector.extract_strided_slice %212 {offsets = [0, 32], sizes = [2, 32], strides = [1, 1]} : vector<2x96xf32> to vector<2x32xf32>
    %227 = vector.extract_strided_slice %215 {offsets = [0, 32], sizes = [2, 32], strides = [1, 1]} : vector<2x96xf32> to vector<2x32xf32>
    %228 = arith.addf %226, %227 : vector<2x32xf32>
    %229 = arith.negf %228 : vector<2x32xf32>
    %230 = math.exp %229 : vector<2x32xf32>
    %cst_96 = arith.constant 1.000000e+00 : f32
    %231 = vector.broadcast %cst_96 : f32 to vector<2x32xf32>
    %232 = arith.addf %231, %230 : vector<2x32xf32>
    %233 = arith.divf %231, %232 : vector<2x32xf32>
    %234 = vector.extract_strided_slice %212 {offsets = [0, 64], sizes = [2, 32], strides = [1, 1]} : vector<2x96xf32> to vector<2x32xf32>
    %235 = vector.extract_strided_slice %215 {offsets = [0, 64], sizes = [2, 32], strides = [1, 1]} : vector<2x96xf32> to vector<2x32xf32>
    %236 = vector.broadcast %217 : vector<1x32xf32> to vector<2x32xf32>
    %237 = arith.addf %235, %236 : vector<2x32xf32>
    %238 = arith.mulf %225, %237 : vector<2x32xf32>
    %239 = arith.addf %234, %238 : vector<2x32xf32>
    %240 = math.tanh %239 : vector<2x32xf32>
    %cst_97 = arith.constant 1.000000e+00 : f32
    %241 = vector.broadcast %cst_97 : f32 to vector<2x32xf32>
    %242 = arith.subf %241, %233 : vector<2x32xf32>
    %243 = arith.mulf %242, %240 : vector<2x32xf32>
    %244 = arith.mulf %233, %4 : vector<2x32xf32>
    %245 = arith.addf %243, %244 : vector<2x32xf32>
    %246 = vector.extract_strided_slice %0 {offsets = [0, 3, 0], sizes = [2, 1, 16], strides = [1, 1, 1]} : vector<2x8x16xf32> to vector<2x1x16xf32>
    %247 = vector.shape_cast %246 : vector<2x1x16xf32> to vector<2x16xf32>
    %cst_98 = arith.constant dense<0.000000e+00> : vector<2x96xf32>
    %248 = tpu.matmul %247, %1, %cst_98 {dimension_numbers = #tpu.dot_dimension_numbers<[1], [0], [0], [1], [0, 0, 1, 1], [], []>} : vector<2x16xf32>, vector<16x96xf32>, vector<2x96xf32> -> vector<2x96xf32>
    %c0_99 = arith.constant 0 : index
    %c0_100 = arith.constant 0 : index
    %c0_101 = arith.constant 0 : index
    %249 = vector.load %arg5[%c0_99, %c0_100, %c0_101] : memref<4x1x96xf32, #tpu.memory_space<vmem>>, vector<1x1x96xf32>
    %250 = vector.shape_cast %249 : vector<1x1x96xf32> to vector<1x96xf32>
    %251 = vector.broadcast %250 : vector<1x96xf32> to vector<2x96xf32>
    %252 = arith.addf %248, %251 : vector<2x96xf32>
    %c0_102 = arith.constant 0 : index
    %c0_103 = arith.constant 0 : index
    %c0_104 = arith.constant 0 : index
    %253 = vector.load %arg4[%c0_102, %c0_103, %c0_104] : memref<4x32x96xf32, #tpu.memory_space<vmem>>, vector<1x32x96xf32>
    %254 = vector.shape_cast %253 : vector<1x32x96xf32> to vector<32x96xf32>
    %cst_105 = arith.constant dense<0.000000e+00> : vector<2x96xf32>
    %255 = tpu.matmul %165, %254, %cst_105 {dimension_numbers = #tpu.dot_dimension_numbers<[1], [0], [0], [1], [0, 0, 1, 1], [], []>} : vector<2x32xf32>, vector<32x96xf32>, vector<2x96xf32> -> vector<2x96xf32>
    %c0_106 = arith.constant 0 : index
    %c0_107 = arith.constant 0 : index
    %c0_108 = arith.constant 0 : index
    %256 = vector.load %arg6[%c0_106, %c0_107, %c0_108] : memref<4x1x32xf32, #tpu.memory_space<vmem>>, vector<1x1x32xf32>
    %257 = vector.shape_cast %256 : vector<1x1x32xf32> to vector<1x32xf32>
    %258 = vector.extract_strided_slice %252 {offsets = [0, 0], sizes = [2, 32], strides = [1, 1]} : vector<2x96xf32> to vector<2x32xf32>
    %259 = vector.extract_strided_slice %255 {offsets = [0, 0], sizes = [2, 32], strides = [1, 1]} : vector<2x96xf32> to vector<2x32xf32>
    %260 = arith.addf %258, %259 : vector<2x32xf32>
    %261 = arith.negf %260 : vector<2x32xf32>
    %262 = math.exp %261 : vector<2x32xf32>
    %cst_109 = arith.constant 1.000000e+00 : f32
    %263 = vector.broadcast %cst_109 : f32 to vector<2x32xf32>
    %264 = arith.addf %263, %262 : vector<2x32xf32>
    %265 = arith.divf %263, %264 : vector<2x32xf32>
    %266 = vector.extract_strided_slice %252 {offsets = [0, 32], sizes = [2, 32], strides = [1, 1]} : vector<2x96xf32> to vector<2x32xf32>
    %267 = vector.extract_strided_slice %255 {offsets = [0, 32], sizes = [2, 32], strides = [1, 1]} : vector<2x96xf32> to vector<2x32xf32>
    %268 = arith.addf %266, %267 : vector<2x32xf32>
    %269 = arith.negf %268 : vector<2x32xf32>
    %270 = math.exp %269 : vector<2x32xf32>
    %cst_110 = arith.constant 1.000000e+00 : f32
    %271 = vector.broadcast %cst_110 : f32 to vector<2x32xf32>
    %272 = arith.addf %271, %270 : vector<2x32xf32>
    %273 = arith.divf %271, %272 : vector<2x32xf32>
    %274 = vector.extract_strided_slice %252 {offsets = [0, 64], sizes = [2, 32], strides = [1, 1]} : vector<2x96xf32> to vector<2x32xf32>
    %275 = vector.extract_strided_slice %255 {offsets = [0, 64], sizes = [2, 32], strides = [1, 1]} : vector<2x96xf32> to vector<2x32xf32>
    %276 = vector.broadcast %257 : vector<1x32xf32> to vector<2x32xf32>
    %277 = arith.addf %275, %276 : vector<2x32xf32>
    %278 = arith.mulf %265, %277 : vector<2x32xf32>
    %279 = arith.addf %274, %278 : vector<2x32xf32>
    %280 = math.tanh %279 : vector<2x32xf32>
    %cst_111 = arith.constant 1.000000e+00 : f32
    %281 = vector.broadcast %cst_111 : f32 to vector<2x32xf32>
    %282 = arith.subf %281, %273 : vector<2x32xf32>
    %283 = arith.mulf %282, %280 : vector<2x32xf32>
    %284 = arith.mulf %273, %165 : vector<2x32xf32>
    %285 = arith.addf %283, %284 : vector<2x32xf32>
    %c0_112 = arith.constant 0 : index
    %c0_113 = arith.constant 0 : index
    %c0_114 = arith.constant 0 : index
    %286 = vector.load %arg3[%c0_112, %c0_113, %c0_114] : memref<3x32x96xf32, #tpu.memory_space<vmem>>, vector<1x32x96xf32>
    %287 = vector.shape_cast %286 : vector<1x32x96xf32> to vector<32x96xf32>
    %cst_115 = arith.constant dense<0.000000e+00> : vector<2x96xf32>
    %288 = tpu.matmul %165, %287, %cst_115 {dimension_numbers = #tpu.dot_dimension_numbers<[1], [0], [0], [1], [0, 0, 1, 1], [], []>} : vector<2x32xf32>, vector<32x96xf32>, vector<2x96xf32> -> vector<2x96xf32>
    %c1_116 = arith.constant 1 : index
    %c0_117 = arith.constant 0 : index
    %c0_118 = arith.constant 0 : index
    %289 = vector.load %arg5[%c1_116, %c0_117, %c0_118] : memref<4x1x96xf32, #tpu.memory_space<vmem>>, vector<1x1x96xf32>
    %290 = vector.shape_cast %289 : vector<1x1x96xf32> to vector<1x96xf32>
    %291 = vector.broadcast %290 : vector<1x96xf32> to vector<2x96xf32>
    %292 = arith.addf %288, %291 : vector<2x96xf32>
    %c1_119 = arith.constant 1 : index
    %c0_120 = arith.constant 0 : index
    %c0_121 = arith.constant 0 : index
    %293 = vector.load %arg4[%c1_119, %c0_120, %c0_121] : memref<4x32x96xf32, #tpu.memory_space<vmem>>, vector<1x32x96xf32>
    %294 = vector.shape_cast %293 : vector<1x32x96xf32> to vector<32x96xf32>
    %cst_122 = arith.constant dense<0.000000e+00> : vector<2x96xf32>
    %295 = tpu.matmul %205, %294, %cst_122 {dimension_numbers = #tpu.dot_dimension_numbers<[1], [0], [0], [1], [0, 0, 1, 1], [], []>} : vector<2x32xf32>, vector<32x96xf32>, vector<2x96xf32> -> vector<2x96xf32>
    %c1_123 = arith.constant 1 : index
    %c0_124 = arith.constant 0 : index
    %c0_125 = arith.constant 0 : index
    %296 = vector.load %arg6[%c1_123, %c0_124, %c0_125] : memref<4x1x32xf32, #tpu.memory_space<vmem>>, vector<1x1x32xf32>
    %297 = vector.shape_cast %296 : vector<1x1x32xf32> to vector<1x32xf32>
    %298 = vector.extract_strided_slice %292 {offsets = [0, 0], sizes = [2, 32], strides = [1, 1]} : vector<2x96xf32> to vector<2x32xf32>
    %299 = vector.extract_strided_slice %295 {offsets = [0, 0], sizes = [2, 32], strides = [1, 1]} : vector<2x96xf32> to vector<2x32xf32>
    %300 = arith.addf %298, %299 : vector<2x32xf32>
    %301 = arith.negf %300 : vector<2x32xf32>
    %302 = math.exp %301 : vector<2x32xf32>
    %cst_126 = arith.constant 1.000000e+00 : f32
    %303 = vector.broadcast %cst_126 : f32 to vector<2x32xf32>
    %304 = arith.addf %303, %302 : vector<2x32xf32>
    %305 = arith.divf %303, %304 : vector<2x32xf32>
    %306 = vector.extract_strided_slice %292 {offsets = [0, 32], sizes = [2, 32], strides = [1, 1]} : vector<2x96xf32> to vector<2x32xf32>
    %307 = vector.extract_strided_slice %295 {offsets = [0, 32], sizes = [2, 32], strides = [1, 1]} : vector<2x96xf32> to vector<2x32xf32>
    %308 = arith.addf %306, %307 : vector<2x32xf32>
    %309 = arith.negf %308 : vector<2x32xf32>
    %310 = math.exp %309 : vector<2x32xf32>
    %cst_127 = arith.constant 1.000000e+00 : f32
    %311 = vector.broadcast %cst_127 : f32 to vector<2x32xf32>
    %312 = arith.addf %311, %310 : vector<2x32xf32>
    %313 = arith.divf %311, %312 : vector<2x32xf32>
    %314 = vector.extract_strided_slice %292 {offsets = [0, 64], sizes = [2, 32], strides = [1, 1]} : vector<2x96xf32> to vector<2x32xf32>
    %315 = vector.extract_strided_slice %295 {offsets = [0, 64], sizes = [2, 32], strides = [1, 1]} : vector<2x96xf32> to vector<2x32xf32>
    %316 = vector.broadcast %297 : vector<1x32xf32> to vector<2x32xf32>
    %317 = arith.addf %315, %316 : vector<2x32xf32>
    %318 = arith.mulf %305, %317 : vector<2x32xf32>
    %319 = arith.addf %314, %318 : vector<2x32xf32>
    %320 = math.tanh %319 : vector<2x32xf32>
    %cst_128 = arith.constant 1.000000e+00 : f32
    %321 = vector.broadcast %cst_128 : f32 to vector<2x32xf32>
    %322 = arith.subf %321, %313 : vector<2x32xf32>
    %323 = arith.mulf %322, %320 : vector<2x32xf32>
    %324 = arith.mulf %313, %205 : vector<2x32xf32>
    %325 = arith.addf %323, %324 : vector<2x32xf32>
    %c1_129 = arith.constant 1 : index
    %c0_130 = arith.constant 0 : index
    %c0_131 = arith.constant 0 : index
    %326 = vector.load %arg3[%c1_129, %c0_130, %c0_131] : memref<3x32x96xf32, #tpu.memory_space<vmem>>, vector<1x32x96xf32>
    %327 = vector.shape_cast %326 : vector<1x32x96xf32> to vector<32x96xf32>
    %cst_132 = arith.constant dense<0.000000e+00> : vector<2x96xf32>
    %328 = tpu.matmul %205, %327, %cst_132 {dimension_numbers = #tpu.dot_dimension_numbers<[1], [0], [0], [1], [0, 0, 1, 1], [], []>} : vector<2x32xf32>, vector<32x96xf32>, vector<2x96xf32> -> vector<2x96xf32>
    %c2_133 = arith.constant 2 : index
    %c0_134 = arith.constant 0 : index
    %c0_135 = arith.constant 0 : index
    %329 = vector.load %arg5[%c2_133, %c0_134, %c0_135] : memref<4x1x96xf32, #tpu.memory_space<vmem>>, vector<1x1x96xf32>
    %330 = vector.shape_cast %329 : vector<1x1x96xf32> to vector<1x96xf32>
    %331 = vector.broadcast %330 : vector<1x96xf32> to vector<2x96xf32>
    %332 = arith.addf %328, %331 : vector<2x96xf32>
    %c2_136 = arith.constant 2 : index
    %c0_137 = arith.constant 0 : index
    %c0_138 = arith.constant 0 : index
    %333 = vector.load %arg4[%c2_136, %c0_137, %c0_138] : memref<4x32x96xf32, #tpu.memory_space<vmem>>, vector<1x32x96xf32>
    %334 = vector.shape_cast %333 : vector<1x32x96xf32> to vector<32x96xf32>
    %cst_139 = arith.constant dense<0.000000e+00> : vector<2x96xf32>
    %335 = tpu.matmul %245, %334, %cst_139 {dimension_numbers = #tpu.dot_dimension_numbers<[1], [0], [0], [1], [0, 0, 1, 1], [], []>} : vector<2x32xf32>, vector<32x96xf32>, vector<2x96xf32> -> vector<2x96xf32>
    %c2_140 = arith.constant 2 : index
    %c0_141 = arith.constant 0 : index
    %c0_142 = arith.constant 0 : index
    %336 = vector.load %arg6[%c2_140, %c0_141, %c0_142] : memref<4x1x32xf32, #tpu.memory_space<vmem>>, vector<1x1x32xf32>
    %337 = vector.shape_cast %336 : vector<1x1x32xf32> to vector<1x32xf32>
    %338 = vector.extract_strided_slice %332 {offsets = [0, 0], sizes = [2, 32], strides = [1, 1]} : vector<2x96xf32> to vector<2x32xf32>
    %339 = vector.extract_strided_slice %335 {offsets = [0, 0], sizes = [2, 32], strides = [1, 1]} : vector<2x96xf32> to vector<2x32xf32>
    %340 = arith.addf %338, %339 : vector<2x32xf32>
    %341 = arith.negf %340 : vector<2x32xf32>
    %342 = math.exp %341 : vector<2x32xf32>
    %cst_143 = arith.constant 1.000000e+00 : f32
    %343 = vector.broadcast %cst_143 : f32 to vector<2x32xf32>
    %344 = arith.addf %343, %342 : vector<2x32xf32>
    %345 = arith.divf %343, %344 : vector<2x32xf32>
    %346 = vector.extract_strided_slice %332 {offsets = [0, 32], sizes = [2, 32], strides = [1, 1]} : vector<2x96xf32> to vector<2x32xf32>
    %347 = vector.extract_strided_slice %335 {offsets = [0, 32], sizes = [2, 32], strides = [1, 1]} : vector<2x96xf32> to vector<2x32xf32>
    %348 = arith.addf %346, %347 : vector<2x32xf32>
    %349 = arith.negf %348 : vector<2x32xf32>
    %350 = math.exp %349 : vector<2x32xf32>
    %cst_144 = arith.constant 1.000000e+00 : f32
    %351 = vector.broadcast %cst_144 : f32 to vector<2x32xf32>
    %352 = arith.addf %351, %350 : vector<2x32xf32>
    %353 = arith.divf %351, %352 : vector<2x32xf32>
    %354 = vector.extract_strided_slice %332 {offsets = [0, 64], sizes = [2, 32], strides = [1, 1]} : vector<2x96xf32> to vector<2x32xf32>
    %355 = vector.extract_strided_slice %335 {offsets = [0, 64], sizes = [2, 32], strides = [1, 1]} : vector<2x96xf32> to vector<2x32xf32>
    %356 = vector.broadcast %337 : vector<1x32xf32> to vector<2x32xf32>
    %357 = arith.addf %355, %356 : vector<2x32xf32>
    %358 = arith.mulf %345, %357 : vector<2x32xf32>
    %359 = arith.addf %354, %358 : vector<2x32xf32>
    %360 = math.tanh %359 : vector<2x32xf32>
    %cst_145 = arith.constant 1.000000e+00 : f32
    %361 = vector.broadcast %cst_145 : f32 to vector<2x32xf32>
    %362 = arith.subf %361, %353 : vector<2x32xf32>
    %363 = arith.mulf %362, %360 : vector<2x32xf32>
    %364 = arith.mulf %353, %245 : vector<2x32xf32>
    %365 = arith.addf %363, %364 : vector<2x32xf32>
    %c2_146 = arith.constant 2 : index
    %c0_147 = arith.constant 0 : index
    %c0_148 = arith.constant 0 : index
    %366 = vector.load %arg3[%c2_146, %c0_147, %c0_148] : memref<3x32x96xf32, #tpu.memory_space<vmem>>, vector<1x32x96xf32>
    %367 = vector.shape_cast %366 : vector<1x32x96xf32> to vector<32x96xf32>
    %cst_149 = arith.constant dense<0.000000e+00> : vector<2x96xf32>
    %368 = tpu.matmul %245, %367, %cst_149 {dimension_numbers = #tpu.dot_dimension_numbers<[1], [0], [0], [1], [0, 0, 1, 1], [], []>} : vector<2x32xf32>, vector<32x96xf32>, vector<2x96xf32> -> vector<2x96xf32>
    %c3 = arith.constant 3 : index
    %c0_150 = arith.constant 0 : index
    %c0_151 = arith.constant 0 : index
    %369 = vector.load %arg5[%c3, %c0_150, %c0_151] : memref<4x1x96xf32, #tpu.memory_space<vmem>>, vector<1x1x96xf32>
    %370 = vector.shape_cast %369 : vector<1x1x96xf32> to vector<1x96xf32>
    %371 = vector.broadcast %370 : vector<1x96xf32> to vector<2x96xf32>
    %372 = arith.addf %368, %371 : vector<2x96xf32>
    %c3_152 = arith.constant 3 : index
    %c0_153 = arith.constant 0 : index
    %c0_154 = arith.constant 0 : index
    %373 = vector.load %arg4[%c3_152, %c0_153, %c0_154] : memref<4x32x96xf32, #tpu.memory_space<vmem>>, vector<1x32x96xf32>
    %374 = vector.shape_cast %373 : vector<1x32x96xf32> to vector<32x96xf32>
    %cst_155 = arith.constant dense<0.000000e+00> : vector<2x96xf32>
    %375 = tpu.matmul %5, %374, %cst_155 {dimension_numbers = #tpu.dot_dimension_numbers<[1], [0], [0], [1], [0, 0, 1, 1], [], []>} : vector<2x32xf32>, vector<32x96xf32>, vector<2x96xf32> -> vector<2x96xf32>
    %c3_156 = arith.constant 3 : index
    %c0_157 = arith.constant 0 : index
    %c0_158 = arith.constant 0 : index
    %376 = vector.load %arg6[%c3_156, %c0_157, %c0_158] : memref<4x1x32xf32, #tpu.memory_space<vmem>>, vector<1x1x32xf32>
    %377 = vector.shape_cast %376 : vector<1x1x32xf32> to vector<1x32xf32>
    %378 = vector.extract_strided_slice %372 {offsets = [0, 0], sizes = [2, 32], strides = [1, 1]} : vector<2x96xf32> to vector<2x32xf32>
    %379 = vector.extract_strided_slice %375 {offsets = [0, 0], sizes = [2, 32], strides = [1, 1]} : vector<2x96xf32> to vector<2x32xf32>
    %380 = arith.addf %378, %379 : vector<2x32xf32>
    %381 = arith.negf %380 : vector<2x32xf32>
    %382 = math.exp %381 : vector<2x32xf32>
    %cst_159 = arith.constant 1.000000e+00 : f32
    %383 = vector.broadcast %cst_159 : f32 to vector<2x32xf32>
    %384 = arith.addf %383, %382 : vector<2x32xf32>
    %385 = arith.divf %383, %384 : vector<2x32xf32>
    %386 = vector.extract_strided_slice %372 {offsets = [0, 32], sizes = [2, 32], strides = [1, 1]} : vector<2x96xf32> to vector<2x32xf32>
    %387 = vector.extract_strided_slice %375 {offsets = [0, 32], sizes = [2, 32], strides = [1, 1]} : vector<2x96xf32> to vector<2x32xf32>
    %388 = arith.addf %386, %387 : vector<2x32xf32>
    %389 = arith.negf %388 : vector<2x32xf32>
    %390 = math.exp %389 : vector<2x32xf32>
    %cst_160 = arith.constant 1.000000e+00 : f32
    %391 = vector.broadcast %cst_160 : f32 to vector<2x32xf32>
    %392 = arith.addf %391, %390 : vector<2x32xf32>
    %393 = arith.divf %391, %392 : vector<2x32xf32>
    %394 = vector.extract_strided_slice %372 {offsets = [0, 64], sizes = [2, 32], strides = [1, 1]} : vector<2x96xf32> to vector<2x32xf32>
    %395 = vector.extract_strided_slice %375 {offsets = [0, 64], sizes = [2, 32], strides = [1, 1]} : vector<2x96xf32> to vector<2x32xf32>
    %396 = vector.broadcast %377 : vector<1x32xf32> to vector<2x32xf32>
    %397 = arith.addf %395, %396 : vector<2x32xf32>
    %398 = arith.mulf %385, %397 : vector<2x32xf32>
    %399 = arith.addf %394, %398 : vector<2x32xf32>
    %400 = math.tanh %399 : vector<2x32xf32>
    %cst_161 = arith.constant 1.000000e+00 : f32
    %401 = vector.broadcast %cst_161 : f32 to vector<2x32xf32>
    %402 = arith.subf %401, %393 : vector<2x32xf32>
    %403 = arith.mulf %402, %400 : vector<2x32xf32>
    %404 = arith.mulf %393, %5 : vector<2x32xf32>
    %405 = arith.addf %403, %404 : vector<2x32xf32>
    %406 = vector.extract_strided_slice %0 {offsets = [0, 4, 0], sizes = [2, 1, 16], strides = [1, 1, 1]} : vector<2x8x16xf32> to vector<2x1x16xf32>
    %407 = vector.shape_cast %406 : vector<2x1x16xf32> to vector<2x16xf32>
    %cst_162 = arith.constant dense<0.000000e+00> : vector<2x96xf32>
    %408 = tpu.matmul %407, %1, %cst_162 {dimension_numbers = #tpu.dot_dimension_numbers<[1], [0], [0], [1], [0, 0, 1, 1], [], []>} : vector<2x16xf32>, vector<16x96xf32>, vector<2x96xf32> -> vector<2x96xf32>
    %c0_163 = arith.constant 0 : index
    %c0_164 = arith.constant 0 : index
    %c0_165 = arith.constant 0 : index
    %409 = vector.load %arg5[%c0_163, %c0_164, %c0_165] : memref<4x1x96xf32, #tpu.memory_space<vmem>>, vector<1x1x96xf32>
    %410 = vector.shape_cast %409 : vector<1x1x96xf32> to vector<1x96xf32>
    %411 = vector.broadcast %410 : vector<1x96xf32> to vector<2x96xf32>
    %412 = arith.addf %408, %411 : vector<2x96xf32>
    %c0_166 = arith.constant 0 : index
    %c0_167 = arith.constant 0 : index
    %c0_168 = arith.constant 0 : index
    %413 = vector.load %arg4[%c0_166, %c0_167, %c0_168] : memref<4x32x96xf32, #tpu.memory_space<vmem>>, vector<1x32x96xf32>
    %414 = vector.shape_cast %413 : vector<1x32x96xf32> to vector<32x96xf32>
    %cst_169 = arith.constant dense<0.000000e+00> : vector<2x96xf32>
    %415 = tpu.matmul %285, %414, %cst_169 {dimension_numbers = #tpu.dot_dimension_numbers<[1], [0], [0], [1], [0, 0, 1, 1], [], []>} : vector<2x32xf32>, vector<32x96xf32>, vector<2x96xf32> -> vector<2x96xf32>
    %c0_170 = arith.constant 0 : index
    %c0_171 = arith.constant 0 : index
    %c0_172 = arith.constant 0 : index
    %416 = vector.load %arg6[%c0_170, %c0_171, %c0_172] : memref<4x1x32xf32, #tpu.memory_space<vmem>>, vector<1x1x32xf32>
    %417 = vector.shape_cast %416 : vector<1x1x32xf32> to vector<1x32xf32>
    %418 = vector.extract_strided_slice %412 {offsets = [0, 0], sizes = [2, 32], strides = [1, 1]} : vector<2x96xf32> to vector<2x32xf32>
    %419 = vector.extract_strided_slice %415 {offsets = [0, 0], sizes = [2, 32], strides = [1, 1]} : vector<2x96xf32> to vector<2x32xf32>
    %420 = arith.addf %418, %419 : vector<2x32xf32>
    %421 = arith.negf %420 : vector<2x32xf32>
    %422 = math.exp %421 : vector<2x32xf32>
    %cst_173 = arith.constant 1.000000e+00 : f32
    %423 = vector.broadcast %cst_173 : f32 to vector<2x32xf32>
    %424 = arith.addf %423, %422 : vector<2x32xf32>
    %425 = arith.divf %423, %424 : vector<2x32xf32>
    %426 = vector.extract_strided_slice %412 {offsets = [0, 32], sizes = [2, 32], strides = [1, 1]} : vector<2x96xf32> to vector<2x32xf32>
    %427 = vector.extract_strided_slice %415 {offsets = [0, 32], sizes = [2, 32], strides = [1, 1]} : vector<2x96xf32> to vector<2x32xf32>
    %428 = arith.addf %426, %427 : vector<2x32xf32>
    %429 = arith.negf %428 : vector<2x32xf32>
    %430 = math.exp %429 : vector<2x32xf32>
    %cst_174 = arith.constant 1.000000e+00 : f32
    %431 = vector.broadcast %cst_174 : f32 to vector<2x32xf32>
    %432 = arith.addf %431, %430 : vector<2x32xf32>
    %433 = arith.divf %431, %432 : vector<2x32xf32>
    %434 = vector.extract_strided_slice %412 {offsets = [0, 64], sizes = [2, 32], strides = [1, 1]} : vector<2x96xf32> to vector<2x32xf32>
    %435 = vector.extract_strided_slice %415 {offsets = [0, 64], sizes = [2, 32], strides = [1, 1]} : vector<2x96xf32> to vector<2x32xf32>
    %436 = vector.broadcast %417 : vector<1x32xf32> to vector<2x32xf32>
    %437 = arith.addf %435, %436 : vector<2x32xf32>
    %438 = arith.mulf %425, %437 : vector<2x32xf32>
    %439 = arith.addf %434, %438 : vector<2x32xf32>
    %440 = math.tanh %439 : vector<2x32xf32>
    %cst_175 = arith.constant 1.000000e+00 : f32
    %441 = vector.broadcast %cst_175 : f32 to vector<2x32xf32>
    %442 = arith.subf %441, %433 : vector<2x32xf32>
    %443 = arith.mulf %442, %440 : vector<2x32xf32>
    %444 = arith.mulf %433, %285 : vector<2x32xf32>
    %445 = arith.addf %443, %444 : vector<2x32xf32>
    %c0_176 = arith.constant 0 : index
    %c0_177 = arith.constant 0 : index
    %c0_178 = arith.constant 0 : index
    %446 = vector.load %arg3[%c0_176, %c0_177, %c0_178] : memref<3x32x96xf32, #tpu.memory_space<vmem>>, vector<1x32x96xf32>
    %447 = vector.shape_cast %446 : vector<1x32x96xf32> to vector<32x96xf32>
    %cst_179 = arith.constant dense<0.000000e+00> : vector<2x96xf32>
    %448 = tpu.matmul %285, %447, %cst_179 {dimension_numbers = #tpu.dot_dimension_numbers<[1], [0], [0], [1], [0, 0, 1, 1], [], []>} : vector<2x32xf32>, vector<32x96xf32>, vector<2x96xf32> -> vector<2x96xf32>
    %c1_180 = arith.constant 1 : index
    %c0_181 = arith.constant 0 : index
    %c0_182 = arith.constant 0 : index
    %449 = vector.load %arg5[%c1_180, %c0_181, %c0_182] : memref<4x1x96xf32, #tpu.memory_space<vmem>>, vector<1x1x96xf32>
    %450 = vector.shape_cast %449 : vector<1x1x96xf32> to vector<1x96xf32>
    %451 = vector.broadcast %450 : vector<1x96xf32> to vector<2x96xf32>
    %452 = arith.addf %448, %451 : vector<2x96xf32>
    %c1_183 = arith.constant 1 : index
    %c0_184 = arith.constant 0 : index
    %c0_185 = arith.constant 0 : index
    %453 = vector.load %arg4[%c1_183, %c0_184, %c0_185] : memref<4x32x96xf32, #tpu.memory_space<vmem>>, vector<1x32x96xf32>
    %454 = vector.shape_cast %453 : vector<1x32x96xf32> to vector<32x96xf32>
    %cst_186 = arith.constant dense<0.000000e+00> : vector<2x96xf32>
    %455 = tpu.matmul %325, %454, %cst_186 {dimension_numbers = #tpu.dot_dimension_numbers<[1], [0], [0], [1], [0, 0, 1, 1], [], []>} : vector<2x32xf32>, vector<32x96xf32>, vector<2x96xf32> -> vector<2x96xf32>
    %c1_187 = arith.constant 1 : index
    %c0_188 = arith.constant 0 : index
    %c0_189 = arith.constant 0 : index
    %456 = vector.load %arg6[%c1_187, %c0_188, %c0_189] : memref<4x1x32xf32, #tpu.memory_space<vmem>>, vector<1x1x32xf32>
    %457 = vector.shape_cast %456 : vector<1x1x32xf32> to vector<1x32xf32>
    %458 = vector.extract_strided_slice %452 {offsets = [0, 0], sizes = [2, 32], strides = [1, 1]} : vector<2x96xf32> to vector<2x32xf32>
    %459 = vector.extract_strided_slice %455 {offsets = [0, 0], sizes = [2, 32], strides = [1, 1]} : vector<2x96xf32> to vector<2x32xf32>
    %460 = arith.addf %458, %459 : vector<2x32xf32>
    %461 = arith.negf %460 : vector<2x32xf32>
    %462 = math.exp %461 : vector<2x32xf32>
    %cst_190 = arith.constant 1.000000e+00 : f32
    %463 = vector.broadcast %cst_190 : f32 to vector<2x32xf32>
    %464 = arith.addf %463, %462 : vector<2x32xf32>
    %465 = arith.divf %463, %464 : vector<2x32xf32>
    %466 = vector.extract_strided_slice %452 {offsets = [0, 32], sizes = [2, 32], strides = [1, 1]} : vector<2x96xf32> to vector<2x32xf32>
    %467 = vector.extract_strided_slice %455 {offsets = [0, 32], sizes = [2, 32], strides = [1, 1]} : vector<2x96xf32> to vector<2x32xf32>
    %468 = arith.addf %466, %467 : vector<2x32xf32>
    %469 = arith.negf %468 : vector<2x32xf32>
    %470 = math.exp %469 : vector<2x32xf32>
    %cst_191 = arith.constant 1.000000e+00 : f32
    %471 = vector.broadcast %cst_191 : f32 to vector<2x32xf32>
    %472 = arith.addf %471, %470 : vector<2x32xf32>
    %473 = arith.divf %471, %472 : vector<2x32xf32>
    %474 = vector.extract_strided_slice %452 {offsets = [0, 64], sizes = [2, 32], strides = [1, 1]} : vector<2x96xf32> to vector<2x32xf32>
    %475 = vector.extract_strided_slice %455 {offsets = [0, 64], sizes = [2, 32], strides = [1, 1]} : vector<2x96xf32> to vector<2x32xf32>
    %476 = vector.broadcast %457 : vector<1x32xf32> to vector<2x32xf32>
    %477 = arith.addf %475, %476 : vector<2x32xf32>
    %478 = arith.mulf %465, %477 : vector<2x32xf32>
    %479 = arith.addf %474, %478 : vector<2x32xf32>
    %480 = math.tanh %479 : vector<2x32xf32>
    %cst_192 = arith.constant 1.000000e+00 : f32
    %481 = vector.broadcast %cst_192 : f32 to vector<2x32xf32>
    %482 = arith.subf %481, %473 : vector<2x32xf32>
    %483 = arith.mulf %482, %480 : vector<2x32xf32>
    %484 = arith.mulf %473, %325 : vector<2x32xf32>
    %485 = arith.addf %483, %484 : vector<2x32xf32>
    %c1_193 = arith.constant 1 : index
    %c0_194 = arith.constant 0 : index
    %c0_195 = arith.constant 0 : index
    %486 = vector.load %arg3[%c1_193, %c0_194, %c0_195] : memref<3x32x96xf32, #tpu.memory_space<vmem>>, vector<1x32x96xf32>
    %487 = vector.shape_cast %486 : vector<1x32x96xf32> to vector<32x96xf32>
    %cst_196 = arith.constant dense<0.000000e+00> : vector<2x96xf32>
    %488 = tpu.matmul %325, %487, %cst_196 {dimension_numbers = #tpu.dot_dimension_numbers<[1], [0], [0], [1], [0, 0, 1, 1], [], []>} : vector<2x32xf32>, vector<32x96xf32>, vector<2x96xf32> -> vector<2x96xf32>
    %c2_197 = arith.constant 2 : index
    %c0_198 = arith.constant 0 : index
    %c0_199 = arith.constant 0 : index
    %489 = vector.load %arg5[%c2_197, %c0_198, %c0_199] : memref<4x1x96xf32, #tpu.memory_space<vmem>>, vector<1x1x96xf32>
    %490 = vector.shape_cast %489 : vector<1x1x96xf32> to vector<1x96xf32>
    %491 = vector.broadcast %490 : vector<1x96xf32> to vector<2x96xf32>
    %492 = arith.addf %488, %491 : vector<2x96xf32>
    %c2_200 = arith.constant 2 : index
    %c0_201 = arith.constant 0 : index
    %c0_202 = arith.constant 0 : index
    %493 = vector.load %arg4[%c2_200, %c0_201, %c0_202] : memref<4x32x96xf32, #tpu.memory_space<vmem>>, vector<1x32x96xf32>
    %494 = vector.shape_cast %493 : vector<1x32x96xf32> to vector<32x96xf32>
    %cst_203 = arith.constant dense<0.000000e+00> : vector<2x96xf32>
    %495 = tpu.matmul %365, %494, %cst_203 {dimension_numbers = #tpu.dot_dimension_numbers<[1], [0], [0], [1], [0, 0, 1, 1], [], []>} : vector<2x32xf32>, vector<32x96xf32>, vector<2x96xf32> -> vector<2x96xf32>
    %c2_204 = arith.constant 2 : index
    %c0_205 = arith.constant 0 : index
    %c0_206 = arith.constant 0 : index
    %496 = vector.load %arg6[%c2_204, %c0_205, %c0_206] : memref<4x1x32xf32, #tpu.memory_space<vmem>>, vector<1x1x32xf32>
    %497 = vector.shape_cast %496 : vector<1x1x32xf32> to vector<1x32xf32>
    %498 = vector.extract_strided_slice %492 {offsets = [0, 0], sizes = [2, 32], strides = [1, 1]} : vector<2x96xf32> to vector<2x32xf32>
    %499 = vector.extract_strided_slice %495 {offsets = [0, 0], sizes = [2, 32], strides = [1, 1]} : vector<2x96xf32> to vector<2x32xf32>
    %500 = arith.addf %498, %499 : vector<2x32xf32>
    %501 = arith.negf %500 : vector<2x32xf32>
    %502 = math.exp %501 : vector<2x32xf32>
    %cst_207 = arith.constant 1.000000e+00 : f32
    %503 = vector.broadcast %cst_207 : f32 to vector<2x32xf32>
    %504 = arith.addf %503, %502 : vector<2x32xf32>
    %505 = arith.divf %503, %504 : vector<2x32xf32>
    %506 = vector.extract_strided_slice %492 {offsets = [0, 32], sizes = [2, 32], strides = [1, 1]} : vector<2x96xf32> to vector<2x32xf32>
    %507 = vector.extract_strided_slice %495 {offsets = [0, 32], sizes = [2, 32], strides = [1, 1]} : vector<2x96xf32> to vector<2x32xf32>
    %508 = arith.addf %506, %507 : vector<2x32xf32>
    %509 = arith.negf %508 : vector<2x32xf32>
    %510 = math.exp %509 : vector<2x32xf32>
    %cst_208 = arith.constant 1.000000e+00 : f32
    %511 = vector.broadcast %cst_208 : f32 to vector<2x32xf32>
    %512 = arith.addf %511, %510 : vector<2x32xf32>
    %513 = arith.divf %511, %512 : vector<2x32xf32>
    %514 = vector.extract_strided_slice %492 {offsets = [0, 64], sizes = [2, 32], strides = [1, 1]} : vector<2x96xf32> to vector<2x32xf32>
    %515 = vector.extract_strided_slice %495 {offsets = [0, 64], sizes = [2, 32], strides = [1, 1]} : vector<2x96xf32> to vector<2x32xf32>
    %516 = vector.broadcast %497 : vector<1x32xf32> to vector<2x32xf32>
    %517 = arith.addf %515, %516 : vector<2x32xf32>
    %518 = arith.mulf %505, %517 : vector<2x32xf32>
    %519 = arith.addf %514, %518 : vector<2x32xf32>
    %520 = math.tanh %519 : vector<2x32xf32>
    %cst_209 = arith.constant 1.000000e+00 : f32
    %521 = vector.broadcast %cst_209 : f32 to vector<2x32xf32>
    %522 = arith.subf %521, %513 : vector<2x32xf32>
    %523 = arith.mulf %522, %520 : vector<2x32xf32>
    %524 = arith.mulf %513, %365 : vector<2x32xf32>
    %525 = arith.addf %523, %524 : vector<2x32xf32>
    %c2_210 = arith.constant 2 : index
    %c0_211 = arith.constant 0 : index
    %c0_212 = arith.constant 0 : index
    %526 = vector.load %arg3[%c2_210, %c0_211, %c0_212] : memref<3x32x96xf32, #tpu.memory_space<vmem>>, vector<1x32x96xf32>
    %527 = vector.shape_cast %526 : vector<1x32x96xf32> to vector<32x96xf32>
    %cst_213 = arith.constant dense<0.000000e+00> : vector<2x96xf32>
    %528 = tpu.matmul %365, %527, %cst_213 {dimension_numbers = #tpu.dot_dimension_numbers<[1], [0], [0], [1], [0, 0, 1, 1], [], []>} : vector<2x32xf32>, vector<32x96xf32>, vector<2x96xf32> -> vector<2x96xf32>
    %c3_214 = arith.constant 3 : index
    %c0_215 = arith.constant 0 : index
    %c0_216 = arith.constant 0 : index
    %529 = vector.load %arg5[%c3_214, %c0_215, %c0_216] : memref<4x1x96xf32, #tpu.memory_space<vmem>>, vector<1x1x96xf32>
    %530 = vector.shape_cast %529 : vector<1x1x96xf32> to vector<1x96xf32>
    %531 = vector.broadcast %530 : vector<1x96xf32> to vector<2x96xf32>
    %532 = arith.addf %528, %531 : vector<2x96xf32>
    %c3_217 = arith.constant 3 : index
    %c0_218 = arith.constant 0 : index
    %c0_219 = arith.constant 0 : index
    %533 = vector.load %arg4[%c3_217, %c0_218, %c0_219] : memref<4x32x96xf32, #tpu.memory_space<vmem>>, vector<1x32x96xf32>
    %534 = vector.shape_cast %533 : vector<1x32x96xf32> to vector<32x96xf32>
    %cst_220 = arith.constant dense<0.000000e+00> : vector<2x96xf32>
    %535 = tpu.matmul %405, %534, %cst_220 {dimension_numbers = #tpu.dot_dimension_numbers<[1], [0], [0], [1], [0, 0, 1, 1], [], []>} : vector<2x32xf32>, vector<32x96xf32>, vector<2x96xf32> -> vector<2x96xf32>
    %c3_221 = arith.constant 3 : index
    %c0_222 = arith.constant 0 : index
    %c0_223 = arith.constant 0 : index
    %536 = vector.load %arg6[%c3_221, %c0_222, %c0_223] : memref<4x1x32xf32, #tpu.memory_space<vmem>>, vector<1x1x32xf32>
    %537 = vector.shape_cast %536 : vector<1x1x32xf32> to vector<1x32xf32>
    %538 = vector.extract_strided_slice %532 {offsets = [0, 0], sizes = [2, 32], strides = [1, 1]} : vector<2x96xf32> to vector<2x32xf32>
    %539 = vector.extract_strided_slice %535 {offsets = [0, 0], sizes = [2, 32], strides = [1, 1]} : vector<2x96xf32> to vector<2x32xf32>
    %540 = arith.addf %538, %539 : vector<2x32xf32>
    %541 = arith.negf %540 : vector<2x32xf32>
    %542 = math.exp %541 : vector<2x32xf32>
    %cst_224 = arith.constant 1.000000e+00 : f32
    %543 = vector.broadcast %cst_224 : f32 to vector<2x32xf32>
    %544 = arith.addf %543, %542 : vector<2x32xf32>
    %545 = arith.divf %543, %544 : vector<2x32xf32>
    %546 = vector.extract_strided_slice %532 {offsets = [0, 32], sizes = [2, 32], strides = [1, 1]} : vector<2x96xf32> to vector<2x32xf32>
    %547 = vector.extract_strided_slice %535 {offsets = [0, 32], sizes = [2, 32], strides = [1, 1]} : vector<2x96xf32> to vector<2x32xf32>
    %548 = arith.addf %546, %547 : vector<2x32xf32>
    %549 = arith.negf %548 : vector<2x32xf32>
    %550 = math.exp %549 : vector<2x32xf32>
    %cst_225 = arith.constant 1.000000e+00 : f32
    %551 = vector.broadcast %cst_225 : f32 to vector<2x32xf32>
    %552 = arith.addf %551, %550 : vector<2x32xf32>
    %553 = arith.divf %551, %552 : vector<2x32xf32>
    %554 = vector.extract_strided_slice %532 {offsets = [0, 64], sizes = [2, 32], strides = [1, 1]} : vector<2x96xf32> to vector<2x32xf32>
    %555 = vector.extract_strided_slice %535 {offsets = [0, 64], sizes = [2, 32], strides = [1, 1]} : vector<2x96xf32> to vector<2x32xf32>
    %556 = vector.broadcast %537 : vector<1x32xf32> to vector<2x32xf32>
    %557 = arith.addf %555, %556 : vector<2x32xf32>
    %558 = arith.mulf %545, %557 : vector<2x32xf32>
    %559 = arith.addf %554, %558 : vector<2x32xf32>
    %560 = math.tanh %559 : vector<2x32xf32>
    %cst_226 = arith.constant 1.000000e+00 : f32
    %561 = vector.broadcast %cst_226 : f32 to vector<2x32xf32>
    %562 = arith.subf %561, %553 : vector<2x32xf32>
    %563 = arith.mulf %562, %560 : vector<2x32xf32>
    %564 = arith.mulf %553, %405 : vector<2x32xf32>
    %565 = arith.addf %563, %564 : vector<2x32xf32>
    %566 = vector.extract_strided_slice %0 {offsets = [0, 5, 0], sizes = [2, 1, 16], strides = [1, 1, 1]} : vector<2x8x16xf32> to vector<2x1x16xf32>
    %567 = vector.shape_cast %566 : vector<2x1x16xf32> to vector<2x16xf32>
    %cst_227 = arith.constant dense<0.000000e+00> : vector<2x96xf32>
    %568 = tpu.matmul %567, %1, %cst_227 {dimension_numbers = #tpu.dot_dimension_numbers<[1], [0], [0], [1], [0, 0, 1, 1], [], []>} : vector<2x16xf32>, vector<16x96xf32>, vector<2x96xf32> -> vector<2x96xf32>
    %c0_228 = arith.constant 0 : index
    %c0_229 = arith.constant 0 : index
    %c0_230 = arith.constant 0 : index
    %569 = vector.load %arg5[%c0_228, %c0_229, %c0_230] : memref<4x1x96xf32, #tpu.memory_space<vmem>>, vector<1x1x96xf32>
    %570 = vector.shape_cast %569 : vector<1x1x96xf32> to vector<1x96xf32>
    %571 = vector.broadcast %570 : vector<1x96xf32> to vector<2x96xf32>
    %572 = arith.addf %568, %571 : vector<2x96xf32>
    %c0_231 = arith.constant 0 : index
    %c0_232 = arith.constant 0 : index
    %c0_233 = arith.constant 0 : index
    %573 = vector.load %arg4[%c0_231, %c0_232, %c0_233] : memref<4x32x96xf32, #tpu.memory_space<vmem>>, vector<1x32x96xf32>
    %574 = vector.shape_cast %573 : vector<1x32x96xf32> to vector<32x96xf32>
    %cst_234 = arith.constant dense<0.000000e+00> : vector<2x96xf32>
    %575 = tpu.matmul %445, %574, %cst_234 {dimension_numbers = #tpu.dot_dimension_numbers<[1], [0], [0], [1], [0, 0, 1, 1], [], []>} : vector<2x32xf32>, vector<32x96xf32>, vector<2x96xf32> -> vector<2x96xf32>
    %c0_235 = arith.constant 0 : index
    %c0_236 = arith.constant 0 : index
    %c0_237 = arith.constant 0 : index
    %576 = vector.load %arg6[%c0_235, %c0_236, %c0_237] : memref<4x1x32xf32, #tpu.memory_space<vmem>>, vector<1x1x32xf32>
    %577 = vector.shape_cast %576 : vector<1x1x32xf32> to vector<1x32xf32>
    %578 = vector.extract_strided_slice %572 {offsets = [0, 0], sizes = [2, 32], strides = [1, 1]} : vector<2x96xf32> to vector<2x32xf32>
    %579 = vector.extract_strided_slice %575 {offsets = [0, 0], sizes = [2, 32], strides = [1, 1]} : vector<2x96xf32> to vector<2x32xf32>
    %580 = arith.addf %578, %579 : vector<2x32xf32>
    %581 = arith.negf %580 : vector<2x32xf32>
    %582 = math.exp %581 : vector<2x32xf32>
    %cst_238 = arith.constant 1.000000e+00 : f32
    %583 = vector.broadcast %cst_238 : f32 to vector<2x32xf32>
    %584 = arith.addf %583, %582 : vector<2x32xf32>
    %585 = arith.divf %583, %584 : vector<2x32xf32>
    %586 = vector.extract_strided_slice %572 {offsets = [0, 32], sizes = [2, 32], strides = [1, 1]} : vector<2x96xf32> to vector<2x32xf32>
    %587 = vector.extract_strided_slice %575 {offsets = [0, 32], sizes = [2, 32], strides = [1, 1]} : vector<2x96xf32> to vector<2x32xf32>
    %588 = arith.addf %586, %587 : vector<2x32xf32>
    %589 = arith.negf %588 : vector<2x32xf32>
    %590 = math.exp %589 : vector<2x32xf32>
    %cst_239 = arith.constant 1.000000e+00 : f32
    %591 = vector.broadcast %cst_239 : f32 to vector<2x32xf32>
    %592 = arith.addf %591, %590 : vector<2x32xf32>
    %593 = arith.divf %591, %592 : vector<2x32xf32>
    %594 = vector.extract_strided_slice %572 {offsets = [0, 64], sizes = [2, 32], strides = [1, 1]} : vector<2x96xf32> to vector<2x32xf32>
    %595 = vector.extract_strided_slice %575 {offsets = [0, 64], sizes = [2, 32], strides = [1, 1]} : vector<2x96xf32> to vector<2x32xf32>
    %596 = vector.broadcast %577 : vector<1x32xf32> to vector<2x32xf32>
    %597 = arith.addf %595, %596 : vector<2x32xf32>
    %598 = arith.mulf %585, %597 : vector<2x32xf32>
    %599 = arith.addf %594, %598 : vector<2x32xf32>
    %600 = math.tanh %599 : vector<2x32xf32>
    %cst_240 = arith.constant 1.000000e+00 : f32
    %601 = vector.broadcast %cst_240 : f32 to vector<2x32xf32>
    %602 = arith.subf %601, %593 : vector<2x32xf32>
    %603 = arith.mulf %602, %600 : vector<2x32xf32>
    %604 = arith.mulf %593, %445 : vector<2x32xf32>
    %605 = arith.addf %603, %604 : vector<2x32xf32>
    %c0_241 = arith.constant 0 : index
    %c0_242 = arith.constant 0 : index
    %c0_243 = arith.constant 0 : index
    %606 = vector.load %arg3[%c0_241, %c0_242, %c0_243] : memref<3x32x96xf32, #tpu.memory_space<vmem>>, vector<1x32x96xf32>
    %607 = vector.shape_cast %606 : vector<1x32x96xf32> to vector<32x96xf32>
    %cst_244 = arith.constant dense<0.000000e+00> : vector<2x96xf32>
    %608 = tpu.matmul %445, %607, %cst_244 {dimension_numbers = #tpu.dot_dimension_numbers<[1], [0], [0], [1], [0, 0, 1, 1], [], []>} : vector<2x32xf32>, vector<32x96xf32>, vector<2x96xf32> -> vector<2x96xf32>
    %c1_245 = arith.constant 1 : index
    %c0_246 = arith.constant 0 : index
    %c0_247 = arith.constant 0 : index
    %609 = vector.load %arg5[%c1_245, %c0_246, %c0_247] : memref<4x1x96xf32, #tpu.memory_space<vmem>>, vector<1x1x96xf32>
    %610 = vector.shape_cast %609 : vector<1x1x96xf32> to vector<1x96xf32>
    %611 = vector.broadcast %610 : vector<1x96xf32> to vector<2x96xf32>
    %612 = arith.addf %608, %611 : vector<2x96xf32>
    %c1_248 = arith.constant 1 : index
    %c0_249 = arith.constant 0 : index
    %c0_250 = arith.constant 0 : index
    %613 = vector.load %arg4[%c1_248, %c0_249, %c0_250] : memref<4x32x96xf32, #tpu.memory_space<vmem>>, vector<1x32x96xf32>
    %614 = vector.shape_cast %613 : vector<1x32x96xf32> to vector<32x96xf32>
    %cst_251 = arith.constant dense<0.000000e+00> : vector<2x96xf32>
    %615 = tpu.matmul %485, %614, %cst_251 {dimension_numbers = #tpu.dot_dimension_numbers<[1], [0], [0], [1], [0, 0, 1, 1], [], []>} : vector<2x32xf32>, vector<32x96xf32>, vector<2x96xf32> -> vector<2x96xf32>
    %c1_252 = arith.constant 1 : index
    %c0_253 = arith.constant 0 : index
    %c0_254 = arith.constant 0 : index
    %616 = vector.load %arg6[%c1_252, %c0_253, %c0_254] : memref<4x1x32xf32, #tpu.memory_space<vmem>>, vector<1x1x32xf32>
    %617 = vector.shape_cast %616 : vector<1x1x32xf32> to vector<1x32xf32>
    %618 = vector.extract_strided_slice %612 {offsets = [0, 0], sizes = [2, 32], strides = [1, 1]} : vector<2x96xf32> to vector<2x32xf32>
    %619 = vector.extract_strided_slice %615 {offsets = [0, 0], sizes = [2, 32], strides = [1, 1]} : vector<2x96xf32> to vector<2x32xf32>
    %620 = arith.addf %618, %619 : vector<2x32xf32>
    %621 = arith.negf %620 : vector<2x32xf32>
    %622 = math.exp %621 : vector<2x32xf32>
    %cst_255 = arith.constant 1.000000e+00 : f32
    %623 = vector.broadcast %cst_255 : f32 to vector<2x32xf32>
    %624 = arith.addf %623, %622 : vector<2x32xf32>
    %625 = arith.divf %623, %624 : vector<2x32xf32>
    %626 = vector.extract_strided_slice %612 {offsets = [0, 32], sizes = [2, 32], strides = [1, 1]} : vector<2x96xf32> to vector<2x32xf32>
    %627 = vector.extract_strided_slice %615 {offsets = [0, 32], sizes = [2, 32], strides = [1, 1]} : vector<2x96xf32> to vector<2x32xf32>
    %628 = arith.addf %626, %627 : vector<2x32xf32>
    %629 = arith.negf %628 : vector<2x32xf32>
    %630 = math.exp %629 : vector<2x32xf32>
    %cst_256 = arith.constant 1.000000e+00 : f32
    %631 = vector.broadcast %cst_256 : f32 to vector<2x32xf32>
    %632 = arith.addf %631, %630 : vector<2x32xf32>
    %633 = arith.divf %631, %632 : vector<2x32xf32>
    %634 = vector.extract_strided_slice %612 {offsets = [0, 64], sizes = [2, 32], strides = [1, 1]} : vector<2x96xf32> to vector<2x32xf32>
    %635 = vector.extract_strided_slice %615 {offsets = [0, 64], sizes = [2, 32], strides = [1, 1]} : vector<2x96xf32> to vector<2x32xf32>
    %636 = vector.broadcast %617 : vector<1x32xf32> to vector<2x32xf32>
    %637 = arith.addf %635, %636 : vector<2x32xf32>
    %638 = arith.mulf %625, %637 : vector<2x32xf32>
    %639 = arith.addf %634, %638 : vector<2x32xf32>
    %640 = math.tanh %639 : vector<2x32xf32>
    %cst_257 = arith.constant 1.000000e+00 : f32
    %641 = vector.broadcast %cst_257 : f32 to vector<2x32xf32>
    %642 = arith.subf %641, %633 : vector<2x32xf32>
    %643 = arith.mulf %642, %640 : vector<2x32xf32>
    %644 = arith.mulf %633, %485 : vector<2x32xf32>
    %645 = arith.addf %643, %644 : vector<2x32xf32>
    %c1_258 = arith.constant 1 : index
    %c0_259 = arith.constant 0 : index
    %c0_260 = arith.constant 0 : index
    %646 = vector.load %arg3[%c1_258, %c0_259, %c0_260] : memref<3x32x96xf32, #tpu.memory_space<vmem>>, vector<1x32x96xf32>
    %647 = vector.shape_cast %646 : vector<1x32x96xf32> to vector<32x96xf32>
    %cst_261 = arith.constant dense<0.000000e+00> : vector<2x96xf32>
    %648 = tpu.matmul %485, %647, %cst_261 {dimension_numbers = #tpu.dot_dimension_numbers<[1], [0], [0], [1], [0, 0, 1, 1], [], []>} : vector<2x32xf32>, vector<32x96xf32>, vector<2x96xf32> -> vector<2x96xf32>
    %c2_262 = arith.constant 2 : index
    %c0_263 = arith.constant 0 : index
    %c0_264 = arith.constant 0 : index
    %649 = vector.load %arg5[%c2_262, %c0_263, %c0_264] : memref<4x1x96xf32, #tpu.memory_space<vmem>>, vector<1x1x96xf32>
    %650 = vector.shape_cast %649 : vector<1x1x96xf32> to vector<1x96xf32>
    %651 = vector.broadcast %650 : vector<1x96xf32> to vector<2x96xf32>
    %652 = arith.addf %648, %651 : vector<2x96xf32>
    %c2_265 = arith.constant 2 : index
    %c0_266 = arith.constant 0 : index
    %c0_267 = arith.constant 0 : index
    %653 = vector.load %arg4[%c2_265, %c0_266, %c0_267] : memref<4x32x96xf32, #tpu.memory_space<vmem>>, vector<1x32x96xf32>
    %654 = vector.shape_cast %653 : vector<1x32x96xf32> to vector<32x96xf32>
    %cst_268 = arith.constant dense<0.000000e+00> : vector<2x96xf32>
    %655 = tpu.matmul %525, %654, %cst_268 {dimension_numbers = #tpu.dot_dimension_numbers<[1], [0], [0], [1], [0, 0, 1, 1], [], []>} : vector<2x32xf32>, vector<32x96xf32>, vector<2x96xf32> -> vector<2x96xf32>
    %c2_269 = arith.constant 2 : index
    %c0_270 = arith.constant 0 : index
    %c0_271 = arith.constant 0 : index
    %656 = vector.load %arg6[%c2_269, %c0_270, %c0_271] : memref<4x1x32xf32, #tpu.memory_space<vmem>>, vector<1x1x32xf32>
    %657 = vector.shape_cast %656 : vector<1x1x32xf32> to vector<1x32xf32>
    %658 = vector.extract_strided_slice %652 {offsets = [0, 0], sizes = [2, 32], strides = [1, 1]} : vector<2x96xf32> to vector<2x32xf32>
    %659 = vector.extract_strided_slice %655 {offsets = [0, 0], sizes = [2, 32], strides = [1, 1]} : vector<2x96xf32> to vector<2x32xf32>
    %660 = arith.addf %658, %659 : vector<2x32xf32>
    %661 = arith.negf %660 : vector<2x32xf32>
    %662 = math.exp %661 : vector<2x32xf32>
    %cst_272 = arith.constant 1.000000e+00 : f32
    %663 = vector.broadcast %cst_272 : f32 to vector<2x32xf32>
    %664 = arith.addf %663, %662 : vector<2x32xf32>
    %665 = arith.divf %663, %664 : vector<2x32xf32>
    %666 = vector.extract_strided_slice %652 {offsets = [0, 32], sizes = [2, 32], strides = [1, 1]} : vector<2x96xf32> to vector<2x32xf32>
    %667 = vector.extract_strided_slice %655 {offsets = [0, 32], sizes = [2, 32], strides = [1, 1]} : vector<2x96xf32> to vector<2x32xf32>
    %668 = arith.addf %666, %667 : vector<2x32xf32>
    %669 = arith.negf %668 : vector<2x32xf32>
    %670 = math.exp %669 : vector<2x32xf32>
    %cst_273 = arith.constant 1.000000e+00 : f32
    %671 = vector.broadcast %cst_273 : f32 to vector<2x32xf32>
    %672 = arith.addf %671, %670 : vector<2x32xf32>
    %673 = arith.divf %671, %672 : vector<2x32xf32>
    %674 = vector.extract_strided_slice %652 {offsets = [0, 64], sizes = [2, 32], strides = [1, 1]} : vector<2x96xf32> to vector<2x32xf32>
    %675 = vector.extract_strided_slice %655 {offsets = [0, 64], sizes = [2, 32], strides = [1, 1]} : vector<2x96xf32> to vector<2x32xf32>
    %676 = vector.broadcast %657 : vector<1x32xf32> to vector<2x32xf32>
    %677 = arith.addf %675, %676 : vector<2x32xf32>
    %678 = arith.mulf %665, %677 : vector<2x32xf32>
    %679 = arith.addf %674, %678 : vector<2x32xf32>
    %680 = math.tanh %679 : vector<2x32xf32>
    %cst_274 = arith.constant 1.000000e+00 : f32
    %681 = vector.broadcast %cst_274 : f32 to vector<2x32xf32>
    %682 = arith.subf %681, %673 : vector<2x32xf32>
    %683 = arith.mulf %682, %680 : vector<2x32xf32>
    %684 = arith.mulf %673, %525 : vector<2x32xf32>
    %685 = arith.addf %683, %684 : vector<2x32xf32>
    %c2_275 = arith.constant 2 : index
    %c0_276 = arith.constant 0 : index
    %c0_277 = arith.constant 0 : index
    %686 = vector.load %arg3[%c2_275, %c0_276, %c0_277] : memref<3x32x96xf32, #tpu.memory_space<vmem>>, vector<1x32x96xf32>
    %687 = vector.shape_cast %686 : vector<1x32x96xf32> to vector<32x96xf32>
    %cst_278 = arith.constant dense<0.000000e+00> : vector<2x96xf32>
    %688 = tpu.matmul %525, %687, %cst_278 {dimension_numbers = #tpu.dot_dimension_numbers<[1], [0], [0], [1], [0, 0, 1, 1], [], []>} : vector<2x32xf32>, vector<32x96xf32>, vector<2x96xf32> -> vector<2x96xf32>
    %c3_279 = arith.constant 3 : index
    %c0_280 = arith.constant 0 : index
    %c0_281 = arith.constant 0 : index
    %689 = vector.load %arg5[%c3_279, %c0_280, %c0_281] : memref<4x1x96xf32, #tpu.memory_space<vmem>>, vector<1x1x96xf32>
    %690 = vector.shape_cast %689 : vector<1x1x96xf32> to vector<1x96xf32>
    %691 = vector.broadcast %690 : vector<1x96xf32> to vector<2x96xf32>
    %692 = arith.addf %688, %691 : vector<2x96xf32>
    %c3_282 = arith.constant 3 : index
    %c0_283 = arith.constant 0 : index
    %c0_284 = arith.constant 0 : index
    %693 = vector.load %arg4[%c3_282, %c0_283, %c0_284] : memref<4x32x96xf32, #tpu.memory_space<vmem>>, vector<1x32x96xf32>
    %694 = vector.shape_cast %693 : vector<1x32x96xf32> to vector<32x96xf32>
    %cst_285 = arith.constant dense<0.000000e+00> : vector<2x96xf32>
    %695 = tpu.matmul %565, %694, %cst_285 {dimension_numbers = #tpu.dot_dimension_numbers<[1], [0], [0], [1], [0, 0, 1, 1], [], []>} : vector<2x32xf32>, vector<32x96xf32>, vector<2x96xf32> -> vector<2x96xf32>
    %c3_286 = arith.constant 3 : index
    %c0_287 = arith.constant 0 : index
    %c0_288 = arith.constant 0 : index
    %696 = vector.load %arg6[%c3_286, %c0_287, %c0_288] : memref<4x1x32xf32, #tpu.memory_space<vmem>>, vector<1x1x32xf32>
    %697 = vector.shape_cast %696 : vector<1x1x32xf32> to vector<1x32xf32>
    %698 = vector.extract_strided_slice %692 {offsets = [0, 0], sizes = [2, 32], strides = [1, 1]} : vector<2x96xf32> to vector<2x32xf32>
    %699 = vector.extract_strided_slice %695 {offsets = [0, 0], sizes = [2, 32], strides = [1, 1]} : vector<2x96xf32> to vector<2x32xf32>
    %700 = arith.addf %698, %699 : vector<2x32xf32>
    %701 = arith.negf %700 : vector<2x32xf32>
    %702 = math.exp %701 : vector<2x32xf32>
    %cst_289 = arith.constant 1.000000e+00 : f32
    %703 = vector.broadcast %cst_289 : f32 to vector<2x32xf32>
    %704 = arith.addf %703, %702 : vector<2x32xf32>
    %705 = arith.divf %703, %704 : vector<2x32xf32>
    %706 = vector.extract_strided_slice %692 {offsets = [0, 32], sizes = [2, 32], strides = [1, 1]} : vector<2x96xf32> to vector<2x32xf32>
    %707 = vector.extract_strided_slice %695 {offsets = [0, 32], sizes = [2, 32], strides = [1, 1]} : vector<2x96xf32> to vector<2x32xf32>
    %708 = arith.addf %706, %707 : vector<2x32xf32>
    %709 = arith.negf %708 : vector<2x32xf32>
    %710 = math.exp %709 : vector<2x32xf32>
    %cst_290 = arith.constant 1.000000e+00 : f32
    %711 = vector.broadcast %cst_290 : f32 to vector<2x32xf32>
    %712 = arith.addf %711, %710 : vector<2x32xf32>
    %713 = arith.divf %711, %712 : vector<2x32xf32>
    %714 = vector.extract_strided_slice %692 {offsets = [0, 64], sizes = [2, 32], strides = [1, 1]} : vector<2x96xf32> to vector<2x32xf32>
    %715 = vector.extract_strided_slice %695 {offsets = [0, 64], sizes = [2, 32], strides = [1, 1]} : vector<2x96xf32> to vector<2x32xf32>
    %716 = vector.broadcast %697 : vector<1x32xf32> to vector<2x32xf32>
    %717 = arith.addf %715, %716 : vector<2x32xf32>
    %718 = arith.mulf %705, %717 : vector<2x32xf32>
    %719 = arith.addf %714, %718 : vector<2x32xf32>
    %720 = math.tanh %719 : vector<2x32xf32>
    %cst_291 = arith.constant 1.000000e+00 : f32
    %721 = vector.broadcast %cst_291 : f32 to vector<2x32xf32>
    %722 = arith.subf %721, %713 : vector<2x32xf32>
    %723 = arith.mulf %722, %720 : vector<2x32xf32>
    %724 = arith.mulf %713, %565 : vector<2x32xf32>
    %725 = arith.addf %723, %724 : vector<2x32xf32>
    %726 = vector.extract_strided_slice %0 {offsets = [0, 6, 0], sizes = [2, 1, 16], strides = [1, 1, 1]} : vector<2x8x16xf32> to vector<2x1x16xf32>
    %727 = vector.shape_cast %726 : vector<2x1x16xf32> to vector<2x16xf32>
    %cst_292 = arith.constant dense<0.000000e+00> : vector<2x96xf32>
    %728 = tpu.matmul %727, %1, %cst_292 {dimension_numbers = #tpu.dot_dimension_numbers<[1], [0], [0], [1], [0, 0, 1, 1], [], []>} : vector<2x16xf32>, vector<16x96xf32>, vector<2x96xf32> -> vector<2x96xf32>
    %c0_293 = arith.constant 0 : index
    %c0_294 = arith.constant 0 : index
    %c0_295 = arith.constant 0 : index
    %729 = vector.load %arg5[%c0_293, %c0_294, %c0_295] : memref<4x1x96xf32, #tpu.memory_space<vmem>>, vector<1x1x96xf32>
    %730 = vector.shape_cast %729 : vector<1x1x96xf32> to vector<1x96xf32>
    %731 = vector.broadcast %730 : vector<1x96xf32> to vector<2x96xf32>
    %732 = arith.addf %728, %731 : vector<2x96xf32>
    %c0_296 = arith.constant 0 : index
    %c0_297 = arith.constant 0 : index
    %c0_298 = arith.constant 0 : index
    %733 = vector.load %arg4[%c0_296, %c0_297, %c0_298] : memref<4x32x96xf32, #tpu.memory_space<vmem>>, vector<1x32x96xf32>
    %734 = vector.shape_cast %733 : vector<1x32x96xf32> to vector<32x96xf32>
    %cst_299 = arith.constant dense<0.000000e+00> : vector<2x96xf32>
    %735 = tpu.matmul %605, %734, %cst_299 {dimension_numbers = #tpu.dot_dimension_numbers<[1], [0], [0], [1], [0, 0, 1, 1], [], []>} : vector<2x32xf32>, vector<32x96xf32>, vector<2x96xf32> -> vector<2x96xf32>
    %c0_300 = arith.constant 0 : index
    %c0_301 = arith.constant 0 : index
    %c0_302 = arith.constant 0 : index
    %736 = vector.load %arg6[%c0_300, %c0_301, %c0_302] : memref<4x1x32xf32, #tpu.memory_space<vmem>>, vector<1x1x32xf32>
    %737 = vector.shape_cast %736 : vector<1x1x32xf32> to vector<1x32xf32>
    %738 = vector.extract_strided_slice %732 {offsets = [0, 0], sizes = [2, 32], strides = [1, 1]} : vector<2x96xf32> to vector<2x32xf32>
    %739 = vector.extract_strided_slice %735 {offsets = [0, 0], sizes = [2, 32], strides = [1, 1]} : vector<2x96xf32> to vector<2x32xf32>
    %740 = arith.addf %738, %739 : vector<2x32xf32>
    %741 = arith.negf %740 : vector<2x32xf32>
    %742 = math.exp %741 : vector<2x32xf32>
    %cst_303 = arith.constant 1.000000e+00 : f32
    %743 = vector.broadcast %cst_303 : f32 to vector<2x32xf32>
    %744 = arith.addf %743, %742 : vector<2x32xf32>
    %745 = arith.divf %743, %744 : vector<2x32xf32>
    %746 = vector.extract_strided_slice %732 {offsets = [0, 32], sizes = [2, 32], strides = [1, 1]} : vector<2x96xf32> to vector<2x32xf32>
    %747 = vector.extract_strided_slice %735 {offsets = [0, 32], sizes = [2, 32], strides = [1, 1]} : vector<2x96xf32> to vector<2x32xf32>
    %748 = arith.addf %746, %747 : vector<2x32xf32>
    %749 = arith.negf %748 : vector<2x32xf32>
    %750 = math.exp %749 : vector<2x32xf32>
    %cst_304 = arith.constant 1.000000e+00 : f32
    %751 = vector.broadcast %cst_304 : f32 to vector<2x32xf32>
    %752 = arith.addf %751, %750 : vector<2x32xf32>
    %753 = arith.divf %751, %752 : vector<2x32xf32>
    %754 = vector.extract_strided_slice %732 {offsets = [0, 64], sizes = [2, 32], strides = [1, 1]} : vector<2x96xf32> to vector<2x32xf32>
    %755 = vector.extract_strided_slice %735 {offsets = [0, 64], sizes = [2, 32], strides = [1, 1]} : vector<2x96xf32> to vector<2x32xf32>
    %756 = vector.broadcast %737 : vector<1x32xf32> to vector<2x32xf32>
    %757 = arith.addf %755, %756 : vector<2x32xf32>
    %758 = arith.mulf %745, %757 : vector<2x32xf32>
    %759 = arith.addf %754, %758 : vector<2x32xf32>
    %760 = math.tanh %759 : vector<2x32xf32>
    %cst_305 = arith.constant 1.000000e+00 : f32
    %761 = vector.broadcast %cst_305 : f32 to vector<2x32xf32>
    %762 = arith.subf %761, %753 : vector<2x32xf32>
    %763 = arith.mulf %762, %760 : vector<2x32xf32>
    %764 = arith.mulf %753, %605 : vector<2x32xf32>
    %765 = arith.addf %763, %764 : vector<2x32xf32>
    %c0_306 = arith.constant 0 : index
    %c0_307 = arith.constant 0 : index
    %c0_308 = arith.constant 0 : index
    %766 = vector.load %arg3[%c0_306, %c0_307, %c0_308] : memref<3x32x96xf32, #tpu.memory_space<vmem>>, vector<1x32x96xf32>
    %767 = vector.shape_cast %766 : vector<1x32x96xf32> to vector<32x96xf32>
    %cst_309 = arith.constant dense<0.000000e+00> : vector<2x96xf32>
    %768 = tpu.matmul %605, %767, %cst_309 {dimension_numbers = #tpu.dot_dimension_numbers<[1], [0], [0], [1], [0, 0, 1, 1], [], []>} : vector<2x32xf32>, vector<32x96xf32>, vector<2x96xf32> -> vector<2x96xf32>
    %c1_310 = arith.constant 1 : index
    %c0_311 = arith.constant 0 : index
    %c0_312 = arith.constant 0 : index
    %769 = vector.load %arg5[%c1_310, %c0_311, %c0_312] : memref<4x1x96xf32, #tpu.memory_space<vmem>>, vector<1x1x96xf32>
    %770 = vector.shape_cast %769 : vector<1x1x96xf32> to vector<1x96xf32>
    %771 = vector.broadcast %770 : vector<1x96xf32> to vector<2x96xf32>
    %772 = arith.addf %768, %771 : vector<2x96xf32>
    %c1_313 = arith.constant 1 : index
    %c0_314 = arith.constant 0 : index
    %c0_315 = arith.constant 0 : index
    %773 = vector.load %arg4[%c1_313, %c0_314, %c0_315] : memref<4x32x96xf32, #tpu.memory_space<vmem>>, vector<1x32x96xf32>
    %774 = vector.shape_cast %773 : vector<1x32x96xf32> to vector<32x96xf32>
    %cst_316 = arith.constant dense<0.000000e+00> : vector<2x96xf32>
    %775 = tpu.matmul %645, %774, %cst_316 {dimension_numbers = #tpu.dot_dimension_numbers<[1], [0], [0], [1], [0, 0, 1, 1], [], []>} : vector<2x32xf32>, vector<32x96xf32>, vector<2x96xf32> -> vector<2x96xf32>
    %c1_317 = arith.constant 1 : index
    %c0_318 = arith.constant 0 : index
    %c0_319 = arith.constant 0 : index
    %776 = vector.load %arg6[%c1_317, %c0_318, %c0_319] : memref<4x1x32xf32, #tpu.memory_space<vmem>>, vector<1x1x32xf32>
    %777 = vector.shape_cast %776 : vector<1x1x32xf32> to vector<1x32xf32>
    %778 = vector.extract_strided_slice %772 {offsets = [0, 0], sizes = [2, 32], strides = [1, 1]} : vector<2x96xf32> to vector<2x32xf32>
    %779 = vector.extract_strided_slice %775 {offsets = [0, 0], sizes = [2, 32], strides = [1, 1]} : vector<2x96xf32> to vector<2x32xf32>
    %780 = arith.addf %778, %779 : vector<2x32xf32>
    %781 = arith.negf %780 : vector<2x32xf32>
    %782 = math.exp %781 : vector<2x32xf32>
    %cst_320 = arith.constant 1.000000e+00 : f32
    %783 = vector.broadcast %cst_320 : f32 to vector<2x32xf32>
    %784 = arith.addf %783, %782 : vector<2x32xf32>
    %785 = arith.divf %783, %784 : vector<2x32xf32>
    %786 = vector.extract_strided_slice %772 {offsets = [0, 32], sizes = [2, 32], strides = [1, 1]} : vector<2x96xf32> to vector<2x32xf32>
    %787 = vector.extract_strided_slice %775 {offsets = [0, 32], sizes = [2, 32], strides = [1, 1]} : vector<2x96xf32> to vector<2x32xf32>
    %788 = arith.addf %786, %787 : vector<2x32xf32>
    %789 = arith.negf %788 : vector<2x32xf32>
    %790 = math.exp %789 : vector<2x32xf32>
    %cst_321 = arith.constant 1.000000e+00 : f32
    %791 = vector.broadcast %cst_321 : f32 to vector<2x32xf32>
    %792 = arith.addf %791, %790 : vector<2x32xf32>
    %793 = arith.divf %791, %792 : vector<2x32xf32>
    %794 = vector.extract_strided_slice %772 {offsets = [0, 64], sizes = [2, 32], strides = [1, 1]} : vector<2x96xf32> to vector<2x32xf32>
    %795 = vector.extract_strided_slice %775 {offsets = [0, 64], sizes = [2, 32], strides = [1, 1]} : vector<2x96xf32> to vector<2x32xf32>
    %796 = vector.broadcast %777 : vector<1x32xf32> to vector<2x32xf32>
    %797 = arith.addf %795, %796 : vector<2x32xf32>
    %798 = arith.mulf %785, %797 : vector<2x32xf32>
    %799 = arith.addf %794, %798 : vector<2x32xf32>
    %800 = math.tanh %799 : vector<2x32xf32>
    %cst_322 = arith.constant 1.000000e+00 : f32
    %801 = vector.broadcast %cst_322 : f32 to vector<2x32xf32>
    %802 = arith.subf %801, %793 : vector<2x32xf32>
    %803 = arith.mulf %802, %800 : vector<2x32xf32>
    %804 = arith.mulf %793, %645 : vector<2x32xf32>
    %805 = arith.addf %803, %804 : vector<2x32xf32>
    %c1_323 = arith.constant 1 : index
    %c0_324 = arith.constant 0 : index
    %c0_325 = arith.constant 0 : index
    %806 = vector.load %arg3[%c1_323, %c0_324, %c0_325] : memref<3x32x96xf32, #tpu.memory_space<vmem>>, vector<1x32x96xf32>
    %807 = vector.shape_cast %806 : vector<1x32x96xf32> to vector<32x96xf32>
    %cst_326 = arith.constant dense<0.000000e+00> : vector<2x96xf32>
    %808 = tpu.matmul %645, %807, %cst_326 {dimension_numbers = #tpu.dot_dimension_numbers<[1], [0], [0], [1], [0, 0, 1, 1], [], []>} : vector<2x32xf32>, vector<32x96xf32>, vector<2x96xf32> -> vector<2x96xf32>
    %c2_327 = arith.constant 2 : index
    %c0_328 = arith.constant 0 : index
    %c0_329 = arith.constant 0 : index
    %809 = vector.load %arg5[%c2_327, %c0_328, %c0_329] : memref<4x1x96xf32, #tpu.memory_space<vmem>>, vector<1x1x96xf32>
    %810 = vector.shape_cast %809 : vector<1x1x96xf32> to vector<1x96xf32>
    %811 = vector.broadcast %810 : vector<1x96xf32> to vector<2x96xf32>
    %812 = arith.addf %808, %811 : vector<2x96xf32>
    %c2_330 = arith.constant 2 : index
    %c0_331 = arith.constant 0 : index
    %c0_332 = arith.constant 0 : index
    %813 = vector.load %arg4[%c2_330, %c0_331, %c0_332] : memref<4x32x96xf32, #tpu.memory_space<vmem>>, vector<1x32x96xf32>
    %814 = vector.shape_cast %813 : vector<1x32x96xf32> to vector<32x96xf32>
    %cst_333 = arith.constant dense<0.000000e+00> : vector<2x96xf32>
    %815 = tpu.matmul %685, %814, %cst_333 {dimension_numbers = #tpu.dot_dimension_numbers<[1], [0], [0], [1], [0, 0, 1, 1], [], []>} : vector<2x32xf32>, vector<32x96xf32>, vector<2x96xf32> -> vector<2x96xf32>
    %c2_334 = arith.constant 2 : index
    %c0_335 = arith.constant 0 : index
    %c0_336 = arith.constant 0 : index
    %816 = vector.load %arg6[%c2_334, %c0_335, %c0_336] : memref<4x1x32xf32, #tpu.memory_space<vmem>>, vector<1x1x32xf32>
    %817 = vector.shape_cast %816 : vector<1x1x32xf32> to vector<1x32xf32>
    %818 = vector.extract_strided_slice %812 {offsets = [0, 0], sizes = [2, 32], strides = [1, 1]} : vector<2x96xf32> to vector<2x32xf32>
    %819 = vector.extract_strided_slice %815 {offsets = [0, 0], sizes = [2, 32], strides = [1, 1]} : vector<2x96xf32> to vector<2x32xf32>
    %820 = arith.addf %818, %819 : vector<2x32xf32>
    %821 = arith.negf %820 : vector<2x32xf32>
    %822 = math.exp %821 : vector<2x32xf32>
    %cst_337 = arith.constant 1.000000e+00 : f32
    %823 = vector.broadcast %cst_337 : f32 to vector<2x32xf32>
    %824 = arith.addf %823, %822 : vector<2x32xf32>
    %825 = arith.divf %823, %824 : vector<2x32xf32>
    %826 = vector.extract_strided_slice %812 {offsets = [0, 32], sizes = [2, 32], strides = [1, 1]} : vector<2x96xf32> to vector<2x32xf32>
    %827 = vector.extract_strided_slice %815 {offsets = [0, 32], sizes = [2, 32], strides = [1, 1]} : vector<2x96xf32> to vector<2x32xf32>
    %828 = arith.addf %826, %827 : vector<2x32xf32>
    %829 = arith.negf %828 : vector<2x32xf32>
    %830 = math.exp %829 : vector<2x32xf32>
    %cst_338 = arith.constant 1.000000e+00 : f32
    %831 = vector.broadcast %cst_338 : f32 to vector<2x32xf32>
    %832 = arith.addf %831, %830 : vector<2x32xf32>
    %833 = arith.divf %831, %832 : vector<2x32xf32>
    %834 = vector.extract_strided_slice %812 {offsets = [0, 64], sizes = [2, 32], strides = [1, 1]} : vector<2x96xf32> to vector<2x32xf32>
    %835 = vector.extract_strided_slice %815 {offsets = [0, 64], sizes = [2, 32], strides = [1, 1]} : vector<2x96xf32> to vector<2x32xf32>
    %836 = vector.broadcast %817 : vector<1x32xf32> to vector<2x32xf32>
    %837 = arith.addf %835, %836 : vector<2x32xf32>
    %838 = arith.mulf %825, %837 : vector<2x32xf32>
    %839 = arith.addf %834, %838 : vector<2x32xf32>
    %840 = math.tanh %839 : vector<2x32xf32>
    %cst_339 = arith.constant 1.000000e+00 : f32
    %841 = vector.broadcast %cst_339 : f32 to vector<2x32xf32>
    %842 = arith.subf %841, %833 : vector<2x32xf32>
    %843 = arith.mulf %842, %840 : vector<2x32xf32>
    %844 = arith.mulf %833, %685 : vector<2x32xf32>
    %845 = arith.addf %843, %844 : vector<2x32xf32>
    %c2_340 = arith.constant 2 : index
    %c0_341 = arith.constant 0 : index
    %c0_342 = arith.constant 0 : index
    %846 = vector.load %arg3[%c2_340, %c0_341, %c0_342] : memref<3x32x96xf32, #tpu.memory_space<vmem>>, vector<1x32x96xf32>
    %847 = vector.shape_cast %846 : vector<1x32x96xf32> to vector<32x96xf32>
    %cst_343 = arith.constant dense<0.000000e+00> : vector<2x96xf32>
    %848 = tpu.matmul %685, %847, %cst_343 {dimension_numbers = #tpu.dot_dimension_numbers<[1], [0], [0], [1], [0, 0, 1, 1], [], []>} : vector<2x32xf32>, vector<32x96xf32>, vector<2x96xf32> -> vector<2x96xf32>
    %c3_344 = arith.constant 3 : index
    %c0_345 = arith.constant 0 : index
    %c0_346 = arith.constant 0 : index
    %849 = vector.load %arg5[%c3_344, %c0_345, %c0_346] : memref<4x1x96xf32, #tpu.memory_space<vmem>>, vector<1x1x96xf32>
    %850 = vector.shape_cast %849 : vector<1x1x96xf32> to vector<1x96xf32>
    %851 = vector.broadcast %850 : vector<1x96xf32> to vector<2x96xf32>
    %852 = arith.addf %848, %851 : vector<2x96xf32>
    %c3_347 = arith.constant 3 : index
    %c0_348 = arith.constant 0 : index
    %c0_349 = arith.constant 0 : index
    %853 = vector.load %arg4[%c3_347, %c0_348, %c0_349] : memref<4x32x96xf32, #tpu.memory_space<vmem>>, vector<1x32x96xf32>
    %854 = vector.shape_cast %853 : vector<1x32x96xf32> to vector<32x96xf32>
    %cst_350 = arith.constant dense<0.000000e+00> : vector<2x96xf32>
    %855 = tpu.matmul %725, %854, %cst_350 {dimension_numbers = #tpu.dot_dimension_numbers<[1], [0], [0], [1], [0, 0, 1, 1], [], []>} : vector<2x32xf32>, vector<32x96xf32>, vector<2x96xf32> -> vector<2x96xf32>
    %c3_351 = arith.constant 3 : index
    %c0_352 = arith.constant 0 : index
    %c0_353 = arith.constant 0 : index
    %856 = vector.load %arg6[%c3_351, %c0_352, %c0_353] : memref<4x1x32xf32, #tpu.memory_space<vmem>>, vector<1x1x32xf32>
    %857 = vector.shape_cast %856 : vector<1x1x32xf32> to vector<1x32xf32>
    %858 = vector.extract_strided_slice %852 {offsets = [0, 0], sizes = [2, 32], strides = [1, 1]} : vector<2x96xf32> to vector<2x32xf32>
    %859 = vector.extract_strided_slice %855 {offsets = [0, 0], sizes = [2, 32], strides = [1, 1]} : vector<2x96xf32> to vector<2x32xf32>
    %860 = arith.addf %858, %859 : vector<2x32xf32>
    %861 = arith.negf %860 : vector<2x32xf32>
    %862 = math.exp %861 : vector<2x32xf32>
    %cst_354 = arith.constant 1.000000e+00 : f32
    %863 = vector.broadcast %cst_354 : f32 to vector<2x32xf32>
    %864 = arith.addf %863, %862 : vector<2x32xf32>
    %865 = arith.divf %863, %864 : vector<2x32xf32>
    %866 = vector.extract_strided_slice %852 {offsets = [0, 32], sizes = [2, 32], strides = [1, 1]} : vector<2x96xf32> to vector<2x32xf32>
    %867 = vector.extract_strided_slice %855 {offsets = [0, 32], sizes = [2, 32], strides = [1, 1]} : vector<2x96xf32> to vector<2x32xf32>
    %868 = arith.addf %866, %867 : vector<2x32xf32>
    %869 = arith.negf %868 : vector<2x32xf32>
    %870 = math.exp %869 : vector<2x32xf32>
    %cst_355 = arith.constant 1.000000e+00 : f32
    %871 = vector.broadcast %cst_355 : f32 to vector<2x32xf32>
    %872 = arith.addf %871, %870 : vector<2x32xf32>
    %873 = arith.divf %871, %872 : vector<2x32xf32>
    %874 = vector.extract_strided_slice %852 {offsets = [0, 64], sizes = [2, 32], strides = [1, 1]} : vector<2x96xf32> to vector<2x32xf32>
    %875 = vector.extract_strided_slice %855 {offsets = [0, 64], sizes = [2, 32], strides = [1, 1]} : vector<2x96xf32> to vector<2x32xf32>
    %876 = vector.broadcast %857 : vector<1x32xf32> to vector<2x32xf32>
    %877 = arith.addf %875, %876 : vector<2x32xf32>
    %878 = arith.mulf %865, %877 : vector<2x32xf32>
    %879 = arith.addf %874, %878 : vector<2x32xf32>
    %880 = math.tanh %879 : vector<2x32xf32>
    %cst_356 = arith.constant 1.000000e+00 : f32
    %881 = vector.broadcast %cst_356 : f32 to vector<2x32xf32>
    %882 = arith.subf %881, %873 : vector<2x32xf32>
    %883 = arith.mulf %882, %880 : vector<2x32xf32>
    %884 = arith.mulf %873, %725 : vector<2x32xf32>
    %885 = arith.addf %883, %884 : vector<2x32xf32>
    %886 = vector.extract_strided_slice %0 {offsets = [0, 7, 0], sizes = [2, 1, 16], strides = [1, 1, 1]} : vector<2x8x16xf32> to vector<2x1x16xf32>
    %887 = vector.shape_cast %886 : vector<2x1x16xf32> to vector<2x16xf32>
    %cst_357 = arith.constant dense<0.000000e+00> : vector<2x96xf32>
    %888 = tpu.matmul %887, %1, %cst_357 {dimension_numbers = #tpu.dot_dimension_numbers<[1], [0], [0], [1], [0, 0, 1, 1], [], []>} : vector<2x16xf32>, vector<16x96xf32>, vector<2x96xf32> -> vector<2x96xf32>
    %c0_358 = arith.constant 0 : index
    %c0_359 = arith.constant 0 : index
    %c0_360 = arith.constant 0 : index
    %889 = vector.load %arg5[%c0_358, %c0_359, %c0_360] : memref<4x1x96xf32, #tpu.memory_space<vmem>>, vector<1x1x96xf32>
    %890 = vector.shape_cast %889 : vector<1x1x96xf32> to vector<1x96xf32>
    %891 = vector.broadcast %890 : vector<1x96xf32> to vector<2x96xf32>
    %892 = arith.addf %888, %891 : vector<2x96xf32>
    %c0_361 = arith.constant 0 : index
    %c0_362 = arith.constant 0 : index
    %c0_363 = arith.constant 0 : index
    %893 = vector.load %arg4[%c0_361, %c0_362, %c0_363] : memref<4x32x96xf32, #tpu.memory_space<vmem>>, vector<1x32x96xf32>
    %894 = vector.shape_cast %893 : vector<1x32x96xf32> to vector<32x96xf32>
    %cst_364 = arith.constant dense<0.000000e+00> : vector<2x96xf32>
    %895 = tpu.matmul %765, %894, %cst_364 {dimension_numbers = #tpu.dot_dimension_numbers<[1], [0], [0], [1], [0, 0, 1, 1], [], []>} : vector<2x32xf32>, vector<32x96xf32>, vector<2x96xf32> -> vector<2x96xf32>
    %c0_365 = arith.constant 0 : index
    %c0_366 = arith.constant 0 : index
    %c0_367 = arith.constant 0 : index
    %896 = vector.load %arg6[%c0_365, %c0_366, %c0_367] : memref<4x1x32xf32, #tpu.memory_space<vmem>>, vector<1x1x32xf32>
    %897 = vector.shape_cast %896 : vector<1x1x32xf32> to vector<1x32xf32>
    %898 = vector.extract_strided_slice %892 {offsets = [0, 0], sizes = [2, 32], strides = [1, 1]} : vector<2x96xf32> to vector<2x32xf32>
    %899 = vector.extract_strided_slice %895 {offsets = [0, 0], sizes = [2, 32], strides = [1, 1]} : vector<2x96xf32> to vector<2x32xf32>
    %900 = arith.addf %898, %899 : vector<2x32xf32>
    %901 = arith.negf %900 : vector<2x32xf32>
    %902 = math.exp %901 : vector<2x32xf32>
    %cst_368 = arith.constant 1.000000e+00 : f32
    %903 = vector.broadcast %cst_368 : f32 to vector<2x32xf32>
    %904 = arith.addf %903, %902 : vector<2x32xf32>
    %905 = arith.divf %903, %904 : vector<2x32xf32>
    %906 = vector.extract_strided_slice %892 {offsets = [0, 32], sizes = [2, 32], strides = [1, 1]} : vector<2x96xf32> to vector<2x32xf32>
    %907 = vector.extract_strided_slice %895 {offsets = [0, 32], sizes = [2, 32], strides = [1, 1]} : vector<2x96xf32> to vector<2x32xf32>
    %908 = arith.addf %906, %907 : vector<2x32xf32>
    %909 = arith.negf %908 : vector<2x32xf32>
    %910 = math.exp %909 : vector<2x32xf32>
    %cst_369 = arith.constant 1.000000e+00 : f32
    %911 = vector.broadcast %cst_369 : f32 to vector<2x32xf32>
    %912 = arith.addf %911, %910 : vector<2x32xf32>
    %913 = arith.divf %911, %912 : vector<2x32xf32>
    %914 = vector.extract_strided_slice %892 {offsets = [0, 64], sizes = [2, 32], strides = [1, 1]} : vector<2x96xf32> to vector<2x32xf32>
    %915 = vector.extract_strided_slice %895 {offsets = [0, 64], sizes = [2, 32], strides = [1, 1]} : vector<2x96xf32> to vector<2x32xf32>
    %916 = vector.broadcast %897 : vector<1x32xf32> to vector<2x32xf32>
    %917 = arith.addf %915, %916 : vector<2x32xf32>
    %918 = arith.mulf %905, %917 : vector<2x32xf32>
    %919 = arith.addf %914, %918 : vector<2x32xf32>
    %920 = math.tanh %919 : vector<2x32xf32>
    %cst_370 = arith.constant 1.000000e+00 : f32
    %921 = vector.broadcast %cst_370 : f32 to vector<2x32xf32>
    %922 = arith.subf %921, %913 : vector<2x32xf32>
    %923 = arith.mulf %922, %920 : vector<2x32xf32>
    %924 = arith.mulf %913, %765 : vector<2x32xf32>
    %925 = arith.addf %923, %924 : vector<2x32xf32>
    %c0_371 = arith.constant 0 : index
    %c0_372 = arith.constant 0 : index
    %c0_373 = arith.constant 0 : index
    %926 = vector.load %arg3[%c0_371, %c0_372, %c0_373] : memref<3x32x96xf32, #tpu.memory_space<vmem>>, vector<1x32x96xf32>
    %927 = vector.shape_cast %926 : vector<1x32x96xf32> to vector<32x96xf32>
    %cst_374 = arith.constant dense<0.000000e+00> : vector<2x96xf32>
    %928 = tpu.matmul %765, %927, %cst_374 {dimension_numbers = #tpu.dot_dimension_numbers<[1], [0], [0], [1], [0, 0, 1, 1], [], []>} : vector<2x32xf32>, vector<32x96xf32>, vector<2x96xf32> -> vector<2x96xf32>
    %c1_375 = arith.constant 1 : index
    %c0_376 = arith.constant 0 : index
    %c0_377 = arith.constant 0 : index
    %929 = vector.load %arg5[%c1_375, %c0_376, %c0_377] : memref<4x1x96xf32, #tpu.memory_space<vmem>>, vector<1x1x96xf32>
    %930 = vector.shape_cast %929 : vector<1x1x96xf32> to vector<1x96xf32>
    %931 = vector.broadcast %930 : vector<1x96xf32> to vector<2x96xf32>
    %932 = arith.addf %928, %931 : vector<2x96xf32>
    %c1_378 = arith.constant 1 : index
    %c0_379 = arith.constant 0 : index
    %c0_380 = arith.constant 0 : index
    %933 = vector.load %arg4[%c1_378, %c0_379, %c0_380] : memref<4x32x96xf32, #tpu.memory_space<vmem>>, vector<1x32x96xf32>
    %934 = vector.shape_cast %933 : vector<1x32x96xf32> to vector<32x96xf32>
    %cst_381 = arith.constant dense<0.000000e+00> : vector<2x96xf32>
    %935 = tpu.matmul %805, %934, %cst_381 {dimension_numbers = #tpu.dot_dimension_numbers<[1], [0], [0], [1], [0, 0, 1, 1], [], []>} : vector<2x32xf32>, vector<32x96xf32>, vector<2x96xf32> -> vector<2x96xf32>
    %c1_382 = arith.constant 1 : index
    %c0_383 = arith.constant 0 : index
    %c0_384 = arith.constant 0 : index
    %936 = vector.load %arg6[%c1_382, %c0_383, %c0_384] : memref<4x1x32xf32, #tpu.memory_space<vmem>>, vector<1x1x32xf32>
    %937 = vector.shape_cast %936 : vector<1x1x32xf32> to vector<1x32xf32>
    %938 = vector.extract_strided_slice %932 {offsets = [0, 0], sizes = [2, 32], strides = [1, 1]} : vector<2x96xf32> to vector<2x32xf32>
    %939 = vector.extract_strided_slice %935 {offsets = [0, 0], sizes = [2, 32], strides = [1, 1]} : vector<2x96xf32> to vector<2x32xf32>
    %940 = arith.addf %938, %939 : vector<2x32xf32>
    %941 = arith.negf %940 : vector<2x32xf32>
    %942 = math.exp %941 : vector<2x32xf32>
    %cst_385 = arith.constant 1.000000e+00 : f32
    %943 = vector.broadcast %cst_385 : f32 to vector<2x32xf32>
    %944 = arith.addf %943, %942 : vector<2x32xf32>
    %945 = arith.divf %943, %944 : vector<2x32xf32>
    %946 = vector.extract_strided_slice %932 {offsets = [0, 32], sizes = [2, 32], strides = [1, 1]} : vector<2x96xf32> to vector<2x32xf32>
    %947 = vector.extract_strided_slice %935 {offsets = [0, 32], sizes = [2, 32], strides = [1, 1]} : vector<2x96xf32> to vector<2x32xf32>
    %948 = arith.addf %946, %947 : vector<2x32xf32>
    %949 = arith.negf %948 : vector<2x32xf32>
    %950 = math.exp %949 : vector<2x32xf32>
    %cst_386 = arith.constant 1.000000e+00 : f32
    %951 = vector.broadcast %cst_386 : f32 to vector<2x32xf32>
    %952 = arith.addf %951, %950 : vector<2x32xf32>
    %953 = arith.divf %951, %952 : vector<2x32xf32>
    %954 = vector.extract_strided_slice %932 {offsets = [0, 64], sizes = [2, 32], strides = [1, 1]} : vector<2x96xf32> to vector<2x32xf32>
    %955 = vector.extract_strided_slice %935 {offsets = [0, 64], sizes = [2, 32], strides = [1, 1]} : vector<2x96xf32> to vector<2x32xf32>
    %956 = vector.broadcast %937 : vector<1x32xf32> to vector<2x32xf32>
    %957 = arith.addf %955, %956 : vector<2x32xf32>
    %958 = arith.mulf %945, %957 : vector<2x32xf32>
    %959 = arith.addf %954, %958 : vector<2x32xf32>
    %960 = math.tanh %959 : vector<2x32xf32>
    %cst_387 = arith.constant 1.000000e+00 : f32
    %961 = vector.broadcast %cst_387 : f32 to vector<2x32xf32>
    %962 = arith.subf %961, %953 : vector<2x32xf32>
    %963 = arith.mulf %962, %960 : vector<2x32xf32>
    %964 = arith.mulf %953, %805 : vector<2x32xf32>
    %965 = arith.addf %963, %964 : vector<2x32xf32>
    %c1_388 = arith.constant 1 : index
    %c0_389 = arith.constant 0 : index
    %c0_390 = arith.constant 0 : index
    %966 = vector.load %arg3[%c1_388, %c0_389, %c0_390] : memref<3x32x96xf32, #tpu.memory_space<vmem>>, vector<1x32x96xf32>
    %967 = vector.shape_cast %966 : vector<1x32x96xf32> to vector<32x96xf32>
    %cst_391 = arith.constant dense<0.000000e+00> : vector<2x96xf32>
    %968 = tpu.matmul %805, %967, %cst_391 {dimension_numbers = #tpu.dot_dimension_numbers<[1], [0], [0], [1], [0, 0, 1, 1], [], []>} : vector<2x32xf32>, vector<32x96xf32>, vector<2x96xf32> -> vector<2x96xf32>
    %c2_392 = arith.constant 2 : index
    %c0_393 = arith.constant 0 : index
    %c0_394 = arith.constant 0 : index
    %969 = vector.load %arg5[%c2_392, %c0_393, %c0_394] : memref<4x1x96xf32, #tpu.memory_space<vmem>>, vector<1x1x96xf32>
    %970 = vector.shape_cast %969 : vector<1x1x96xf32> to vector<1x96xf32>
    %971 = vector.broadcast %970 : vector<1x96xf32> to vector<2x96xf32>
    %972 = arith.addf %968, %971 : vector<2x96xf32>
    %c2_395 = arith.constant 2 : index
    %c0_396 = arith.constant 0 : index
    %c0_397 = arith.constant 0 : index
    %973 = vector.load %arg4[%c2_395, %c0_396, %c0_397] : memref<4x32x96xf32, #tpu.memory_space<vmem>>, vector<1x32x96xf32>
    %974 = vector.shape_cast %973 : vector<1x32x96xf32> to vector<32x96xf32>
    %cst_398 = arith.constant dense<0.000000e+00> : vector<2x96xf32>
    %975 = tpu.matmul %845, %974, %cst_398 {dimension_numbers = #tpu.dot_dimension_numbers<[1], [0], [0], [1], [0, 0, 1, 1], [], []>} : vector<2x32xf32>, vector<32x96xf32>, vector<2x96xf32> -> vector<2x96xf32>
    %c2_399 = arith.constant 2 : index
    %c0_400 = arith.constant 0 : index
    %c0_401 = arith.constant 0 : index
    %976 = vector.load %arg6[%c2_399, %c0_400, %c0_401] : memref<4x1x32xf32, #tpu.memory_space<vmem>>, vector<1x1x32xf32>
    %977 = vector.shape_cast %976 : vector<1x1x32xf32> to vector<1x32xf32>
    %978 = vector.extract_strided_slice %972 {offsets = [0, 0], sizes = [2, 32], strides = [1, 1]} : vector<2x96xf32> to vector<2x32xf32>
    %979 = vector.extract_strided_slice %975 {offsets = [0, 0], sizes = [2, 32], strides = [1, 1]} : vector<2x96xf32> to vector<2x32xf32>
    %980 = arith.addf %978, %979 : vector<2x32xf32>
    %981 = arith.negf %980 : vector<2x32xf32>
    %982 = math.exp %981 : vector<2x32xf32>
    %cst_402 = arith.constant 1.000000e+00 : f32
    %983 = vector.broadcast %cst_402 : f32 to vector<2x32xf32>
    %984 = arith.addf %983, %982 : vector<2x32xf32>
    %985 = arith.divf %983, %984 : vector<2x32xf32>
    %986 = vector.extract_strided_slice %972 {offsets = [0, 32], sizes = [2, 32], strides = [1, 1]} : vector<2x96xf32> to vector<2x32xf32>
    %987 = vector.extract_strided_slice %975 {offsets = [0, 32], sizes = [2, 32], strides = [1, 1]} : vector<2x96xf32> to vector<2x32xf32>
    %988 = arith.addf %986, %987 : vector<2x32xf32>
    %989 = arith.negf %988 : vector<2x32xf32>
    %990 = math.exp %989 : vector<2x32xf32>
    %cst_403 = arith.constant 1.000000e+00 : f32
    %991 = vector.broadcast %cst_403 : f32 to vector<2x32xf32>
    %992 = arith.addf %991, %990 : vector<2x32xf32>
    %993 = arith.divf %991, %992 : vector<2x32xf32>
    %994 = vector.extract_strided_slice %972 {offsets = [0, 64], sizes = [2, 32], strides = [1, 1]} : vector<2x96xf32> to vector<2x32xf32>
    %995 = vector.extract_strided_slice %975 {offsets = [0, 64], sizes = [2, 32], strides = [1, 1]} : vector<2x96xf32> to vector<2x32xf32>
    %996 = vector.broadcast %977 : vector<1x32xf32> to vector<2x32xf32>
    %997 = arith.addf %995, %996 : vector<2x32xf32>
    %998 = arith.mulf %985, %997 : vector<2x32xf32>
    %999 = arith.addf %994, %998 : vector<2x32xf32>
    %1000 = math.tanh %999 : vector<2x32xf32>
    %cst_404 = arith.constant 1.000000e+00 : f32
    %1001 = vector.broadcast %cst_404 : f32 to vector<2x32xf32>
    %1002 = arith.subf %1001, %993 : vector<2x32xf32>
    %1003 = arith.mulf %1002, %1000 : vector<2x32xf32>
    %1004 = arith.mulf %993, %845 : vector<2x32xf32>
    %1005 = arith.addf %1003, %1004 : vector<2x32xf32>
    %c2_405 = arith.constant 2 : index
    %c0_406 = arith.constant 0 : index
    %c0_407 = arith.constant 0 : index
    %1006 = vector.load %arg3[%c2_405, %c0_406, %c0_407] : memref<3x32x96xf32, #tpu.memory_space<vmem>>, vector<1x32x96xf32>
    %1007 = vector.shape_cast %1006 : vector<1x32x96xf32> to vector<32x96xf32>
    %cst_408 = arith.constant dense<0.000000e+00> : vector<2x96xf32>
    %1008 = tpu.matmul %845, %1007, %cst_408 {dimension_numbers = #tpu.dot_dimension_numbers<[1], [0], [0], [1], [0, 0, 1, 1], [], []>} : vector<2x32xf32>, vector<32x96xf32>, vector<2x96xf32> -> vector<2x96xf32>
    %c3_409 = arith.constant 3 : index
    %c0_410 = arith.constant 0 : index
    %c0_411 = arith.constant 0 : index
    %1009 = vector.load %arg5[%c3_409, %c0_410, %c0_411] : memref<4x1x96xf32, #tpu.memory_space<vmem>>, vector<1x1x96xf32>
    %1010 = vector.shape_cast %1009 : vector<1x1x96xf32> to vector<1x96xf32>
    %1011 = vector.broadcast %1010 : vector<1x96xf32> to vector<2x96xf32>
    %1012 = arith.addf %1008, %1011 : vector<2x96xf32>
    %c3_412 = arith.constant 3 : index
    %c0_413 = arith.constant 0 : index
    %c0_414 = arith.constant 0 : index
    %1013 = vector.load %arg4[%c3_412, %c0_413, %c0_414] : memref<4x32x96xf32, #tpu.memory_space<vmem>>, vector<1x32x96xf32>
    %1014 = vector.shape_cast %1013 : vector<1x32x96xf32> to vector<32x96xf32>
    %cst_415 = arith.constant dense<0.000000e+00> : vector<2x96xf32>
    %1015 = tpu.matmul %885, %1014, %cst_415 {dimension_numbers = #tpu.dot_dimension_numbers<[1], [0], [0], [1], [0, 0, 1, 1], [], []>} : vector<2x32xf32>, vector<32x96xf32>, vector<2x96xf32> -> vector<2x96xf32>
    %c3_416 = arith.constant 3 : index
    %c0_417 = arith.constant 0 : index
    %c0_418 = arith.constant 0 : index
    %1016 = vector.load %arg6[%c3_416, %c0_417, %c0_418] : memref<4x1x32xf32, #tpu.memory_space<vmem>>, vector<1x1x32xf32>
    %1017 = vector.shape_cast %1016 : vector<1x1x32xf32> to vector<1x32xf32>
    %1018 = vector.extract_strided_slice %1012 {offsets = [0, 0], sizes = [2, 32], strides = [1, 1]} : vector<2x96xf32> to vector<2x32xf32>
    %1019 = vector.extract_strided_slice %1015 {offsets = [0, 0], sizes = [2, 32], strides = [1, 1]} : vector<2x96xf32> to vector<2x32xf32>
    %1020 = arith.addf %1018, %1019 : vector<2x32xf32>
    %1021 = arith.negf %1020 : vector<2x32xf32>
    %1022 = math.exp %1021 : vector<2x32xf32>
    %cst_419 = arith.constant 1.000000e+00 : f32
    %1023 = vector.broadcast %cst_419 : f32 to vector<2x32xf32>
    %1024 = arith.addf %1023, %1022 : vector<2x32xf32>
    %1025 = arith.divf %1023, %1024 : vector<2x32xf32>
    %1026 = vector.extract_strided_slice %1012 {offsets = [0, 32], sizes = [2, 32], strides = [1, 1]} : vector<2x96xf32> to vector<2x32xf32>
    %1027 = vector.extract_strided_slice %1015 {offsets = [0, 32], sizes = [2, 32], strides = [1, 1]} : vector<2x96xf32> to vector<2x32xf32>
    %1028 = arith.addf %1026, %1027 : vector<2x32xf32>
    %1029 = arith.negf %1028 : vector<2x32xf32>
    %1030 = math.exp %1029 : vector<2x32xf32>
    %cst_420 = arith.constant 1.000000e+00 : f32
    %1031 = vector.broadcast %cst_420 : f32 to vector<2x32xf32>
    %1032 = arith.addf %1031, %1030 : vector<2x32xf32>
    %1033 = arith.divf %1031, %1032 : vector<2x32xf32>
    %1034 = vector.extract_strided_slice %1012 {offsets = [0, 64], sizes = [2, 32], strides = [1, 1]} : vector<2x96xf32> to vector<2x32xf32>
    %1035 = vector.extract_strided_slice %1015 {offsets = [0, 64], sizes = [2, 32], strides = [1, 1]} : vector<2x96xf32> to vector<2x32xf32>
    %1036 = vector.broadcast %1017 : vector<1x32xf32> to vector<2x32xf32>
    %1037 = arith.addf %1035, %1036 : vector<2x32xf32>
    %1038 = arith.mulf %1025, %1037 : vector<2x32xf32>
    %1039 = arith.addf %1034, %1038 : vector<2x32xf32>
    %1040 = math.tanh %1039 : vector<2x32xf32>
    %cst_421 = arith.constant 1.000000e+00 : f32
    %1041 = vector.broadcast %cst_421 : f32 to vector<2x32xf32>
    %1042 = arith.subf %1041, %1033 : vector<2x32xf32>
    %1043 = arith.mulf %1042, %1040 : vector<2x32xf32>
    %1044 = arith.mulf %1033, %885 : vector<2x32xf32>
    %1045 = arith.addf %1043, %1044 : vector<2x32xf32>
    %c0_422 = arith.constant 0 : index
    %c0_423 = arith.constant 0 : index
    %c0_424 = arith.constant 0 : index
    %1046 = vector.load %arg3[%c0_422, %c0_423, %c0_424] : memref<3x32x96xf32, #tpu.memory_space<vmem>>, vector<1x32x96xf32>
    %1047 = vector.shape_cast %1046 : vector<1x32x96xf32> to vector<32x96xf32>
    %cst_425 = arith.constant dense<0.000000e+00> : vector<2x96xf32>
    %1048 = tpu.matmul %925, %1047, %cst_425 {dimension_numbers = #tpu.dot_dimension_numbers<[1], [0], [0], [1], [0, 0, 1, 1], [], []>} : vector<2x32xf32>, vector<32x96xf32>, vector<2x96xf32> -> vector<2x96xf32>
    %c1_426 = arith.constant 1 : index
    %c0_427 = arith.constant 0 : index
    %c0_428 = arith.constant 0 : index
    %1049 = vector.load %arg5[%c1_426, %c0_427, %c0_428] : memref<4x1x96xf32, #tpu.memory_space<vmem>>, vector<1x1x96xf32>
    %1050 = vector.shape_cast %1049 : vector<1x1x96xf32> to vector<1x96xf32>
    %1051 = vector.broadcast %1050 : vector<1x96xf32> to vector<2x96xf32>
    %1052 = arith.addf %1048, %1051 : vector<2x96xf32>
    %c1_429 = arith.constant 1 : index
    %c0_430 = arith.constant 0 : index
    %c0_431 = arith.constant 0 : index
    %1053 = vector.load %arg4[%c1_429, %c0_430, %c0_431] : memref<4x32x96xf32, #tpu.memory_space<vmem>>, vector<1x32x96xf32>
    %1054 = vector.shape_cast %1053 : vector<1x32x96xf32> to vector<32x96xf32>
    %cst_432 = arith.constant dense<0.000000e+00> : vector<2x96xf32>
    %1055 = tpu.matmul %965, %1054, %cst_432 {dimension_numbers = #tpu.dot_dimension_numbers<[1], [0], [0], [1], [0, 0, 1, 1], [], []>} : vector<2x32xf32>, vector<32x96xf32>, vector<2x96xf32> -> vector<2x96xf32>
    %c1_433 = arith.constant 1 : index
    %c0_434 = arith.constant 0 : index
    %c0_435 = arith.constant 0 : index
    %1056 = vector.load %arg6[%c1_433, %c0_434, %c0_435] : memref<4x1x32xf32, #tpu.memory_space<vmem>>, vector<1x1x32xf32>
    %1057 = vector.shape_cast %1056 : vector<1x1x32xf32> to vector<1x32xf32>
    %1058 = vector.extract_strided_slice %1052 {offsets = [0, 0], sizes = [2, 32], strides = [1, 1]} : vector<2x96xf32> to vector<2x32xf32>
    %1059 = vector.extract_strided_slice %1055 {offsets = [0, 0], sizes = [2, 32], strides = [1, 1]} : vector<2x96xf32> to vector<2x32xf32>
    %1060 = arith.addf %1058, %1059 : vector<2x32xf32>
    %1061 = arith.negf %1060 : vector<2x32xf32>
    %1062 = math.exp %1061 : vector<2x32xf32>
    %cst_436 = arith.constant 1.000000e+00 : f32
    %1063 = vector.broadcast %cst_436 : f32 to vector<2x32xf32>
    %1064 = arith.addf %1063, %1062 : vector<2x32xf32>
    %1065 = arith.divf %1063, %1064 : vector<2x32xf32>
    %1066 = vector.extract_strided_slice %1052 {offsets = [0, 32], sizes = [2, 32], strides = [1, 1]} : vector<2x96xf32> to vector<2x32xf32>
    %1067 = vector.extract_strided_slice %1055 {offsets = [0, 32], sizes = [2, 32], strides = [1, 1]} : vector<2x96xf32> to vector<2x32xf32>
    %1068 = arith.addf %1066, %1067 : vector<2x32xf32>
    %1069 = arith.negf %1068 : vector<2x32xf32>
    %1070 = math.exp %1069 : vector<2x32xf32>
    %cst_437 = arith.constant 1.000000e+00 : f32
    %1071 = vector.broadcast %cst_437 : f32 to vector<2x32xf32>
    %1072 = arith.addf %1071, %1070 : vector<2x32xf32>
    %1073 = arith.divf %1071, %1072 : vector<2x32xf32>
    %1074 = vector.extract_strided_slice %1052 {offsets = [0, 64], sizes = [2, 32], strides = [1, 1]} : vector<2x96xf32> to vector<2x32xf32>
    %1075 = vector.extract_strided_slice %1055 {offsets = [0, 64], sizes = [2, 32], strides = [1, 1]} : vector<2x96xf32> to vector<2x32xf32>
    %1076 = vector.broadcast %1057 : vector<1x32xf32> to vector<2x32xf32>
    %1077 = arith.addf %1075, %1076 : vector<2x32xf32>
    %1078 = arith.mulf %1065, %1077 : vector<2x32xf32>
    %1079 = arith.addf %1074, %1078 : vector<2x32xf32>
    %1080 = math.tanh %1079 : vector<2x32xf32>
    %cst_438 = arith.constant 1.000000e+00 : f32
    %1081 = vector.broadcast %cst_438 : f32 to vector<2x32xf32>
    %1082 = arith.subf %1081, %1073 : vector<2x32xf32>
    %1083 = arith.mulf %1082, %1080 : vector<2x32xf32>
    %1084 = arith.mulf %1073, %965 : vector<2x32xf32>
    %1085 = arith.addf %1083, %1084 : vector<2x32xf32>
    %c1_439 = arith.constant 1 : index
    %c0_440 = arith.constant 0 : index
    %c0_441 = arith.constant 0 : index
    %1086 = vector.load %arg3[%c1_439, %c0_440, %c0_441] : memref<3x32x96xf32, #tpu.memory_space<vmem>>, vector<1x32x96xf32>
    %1087 = vector.shape_cast %1086 : vector<1x32x96xf32> to vector<32x96xf32>
    %cst_442 = arith.constant dense<0.000000e+00> : vector<2x96xf32>
    %1088 = tpu.matmul %965, %1087, %cst_442 {dimension_numbers = #tpu.dot_dimension_numbers<[1], [0], [0], [1], [0, 0, 1, 1], [], []>} : vector<2x32xf32>, vector<32x96xf32>, vector<2x96xf32> -> vector<2x96xf32>
    %c2_443 = arith.constant 2 : index
    %c0_444 = arith.constant 0 : index
    %c0_445 = arith.constant 0 : index
    %1089 = vector.load %arg5[%c2_443, %c0_444, %c0_445] : memref<4x1x96xf32, #tpu.memory_space<vmem>>, vector<1x1x96xf32>
    %1090 = vector.shape_cast %1089 : vector<1x1x96xf32> to vector<1x96xf32>
    %1091 = vector.broadcast %1090 : vector<1x96xf32> to vector<2x96xf32>
    %1092 = arith.addf %1088, %1091 : vector<2x96xf32>
    %c2_446 = arith.constant 2 : index
    %c0_447 = arith.constant 0 : index
    %c0_448 = arith.constant 0 : index
    %1093 = vector.load %arg4[%c2_446, %c0_447, %c0_448] : memref<4x32x96xf32, #tpu.memory_space<vmem>>, vector<1x32x96xf32>
    %1094 = vector.shape_cast %1093 : vector<1x32x96xf32> to vector<32x96xf32>
    %cst_449 = arith.constant dense<0.000000e+00> : vector<2x96xf32>
    %1095 = tpu.matmul %1005, %1094, %cst_449 {dimension_numbers = #tpu.dot_dimension_numbers<[1], [0], [0], [1], [0, 0, 1, 1], [], []>} : vector<2x32xf32>, vector<32x96xf32>, vector<2x96xf32> -> vector<2x96xf32>
    %c2_450 = arith.constant 2 : index
    %c0_451 = arith.constant 0 : index
    %c0_452 = arith.constant 0 : index
    %1096 = vector.load %arg6[%c2_450, %c0_451, %c0_452] : memref<4x1x32xf32, #tpu.memory_space<vmem>>, vector<1x1x32xf32>
    %1097 = vector.shape_cast %1096 : vector<1x1x32xf32> to vector<1x32xf32>
    %1098 = vector.extract_strided_slice %1092 {offsets = [0, 0], sizes = [2, 32], strides = [1, 1]} : vector<2x96xf32> to vector<2x32xf32>
    %1099 = vector.extract_strided_slice %1095 {offsets = [0, 0], sizes = [2, 32], strides = [1, 1]} : vector<2x96xf32> to vector<2x32xf32>
    %1100 = arith.addf %1098, %1099 : vector<2x32xf32>
    %1101 = arith.negf %1100 : vector<2x32xf32>
    %1102 = math.exp %1101 : vector<2x32xf32>
    %cst_453 = arith.constant 1.000000e+00 : f32
    %1103 = vector.broadcast %cst_453 : f32 to vector<2x32xf32>
    %1104 = arith.addf %1103, %1102 : vector<2x32xf32>
    %1105 = arith.divf %1103, %1104 : vector<2x32xf32>
    %1106 = vector.extract_strided_slice %1092 {offsets = [0, 32], sizes = [2, 32], strides = [1, 1]} : vector<2x96xf32> to vector<2x32xf32>
    %1107 = vector.extract_strided_slice %1095 {offsets = [0, 32], sizes = [2, 32], strides = [1, 1]} : vector<2x96xf32> to vector<2x32xf32>
    %1108 = arith.addf %1106, %1107 : vector<2x32xf32>
    %1109 = arith.negf %1108 : vector<2x32xf32>
    %1110 = math.exp %1109 : vector<2x32xf32>
    %cst_454 = arith.constant 1.000000e+00 : f32
    %1111 = vector.broadcast %cst_454 : f32 to vector<2x32xf32>
    %1112 = arith.addf %1111, %1110 : vector<2x32xf32>
    %1113 = arith.divf %1111, %1112 : vector<2x32xf32>
    %1114 = vector.extract_strided_slice %1092 {offsets = [0, 64], sizes = [2, 32], strides = [1, 1]} : vector<2x96xf32> to vector<2x32xf32>
    %1115 = vector.extract_strided_slice %1095 {offsets = [0, 64], sizes = [2, 32], strides = [1, 1]} : vector<2x96xf32> to vector<2x32xf32>
    %1116 = vector.broadcast %1097 : vector<1x32xf32> to vector<2x32xf32>
    %1117 = arith.addf %1115, %1116 : vector<2x32xf32>
    %1118 = arith.mulf %1105, %1117 : vector<2x32xf32>
    %1119 = arith.addf %1114, %1118 : vector<2x32xf32>
    %1120 = math.tanh %1119 : vector<2x32xf32>
    %cst_455 = arith.constant 1.000000e+00 : f32
    %1121 = vector.broadcast %cst_455 : f32 to vector<2x32xf32>
    %1122 = arith.subf %1121, %1113 : vector<2x32xf32>
    %1123 = arith.mulf %1122, %1120 : vector<2x32xf32>
    %1124 = arith.mulf %1113, %1005 : vector<2x32xf32>
    %1125 = arith.addf %1123, %1124 : vector<2x32xf32>
    %c2_456 = arith.constant 2 : index
    %c0_457 = arith.constant 0 : index
    %c0_458 = arith.constant 0 : index
    %1126 = vector.load %arg3[%c2_456, %c0_457, %c0_458] : memref<3x32x96xf32, #tpu.memory_space<vmem>>, vector<1x32x96xf32>
    %1127 = vector.shape_cast %1126 : vector<1x32x96xf32> to vector<32x96xf32>
    %cst_459 = arith.constant dense<0.000000e+00> : vector<2x96xf32>
    %1128 = tpu.matmul %1005, %1127, %cst_459 {dimension_numbers = #tpu.dot_dimension_numbers<[1], [0], [0], [1], [0, 0, 1, 1], [], []>} : vector<2x32xf32>, vector<32x96xf32>, vector<2x96xf32> -> vector<2x96xf32>
    %c3_460 = arith.constant 3 : index
    %c0_461 = arith.constant 0 : index
    %c0_462 = arith.constant 0 : index
    %1129 = vector.load %arg5[%c3_460, %c0_461, %c0_462] : memref<4x1x96xf32, #tpu.memory_space<vmem>>, vector<1x1x96xf32>
    %1130 = vector.shape_cast %1129 : vector<1x1x96xf32> to vector<1x96xf32>
    %1131 = vector.broadcast %1130 : vector<1x96xf32> to vector<2x96xf32>
    %1132 = arith.addf %1128, %1131 : vector<2x96xf32>
    %c3_463 = arith.constant 3 : index
    %c0_464 = arith.constant 0 : index
    %c0_465 = arith.constant 0 : index
    %1133 = vector.load %arg4[%c3_463, %c0_464, %c0_465] : memref<4x32x96xf32, #tpu.memory_space<vmem>>, vector<1x32x96xf32>
    %1134 = vector.shape_cast %1133 : vector<1x32x96xf32> to vector<32x96xf32>
    %cst_466 = arith.constant dense<0.000000e+00> : vector<2x96xf32>
    %1135 = tpu.matmul %1045, %1134, %cst_466 {dimension_numbers = #tpu.dot_dimension_numbers<[1], [0], [0], [1], [0, 0, 1, 1], [], []>} : vector<2x32xf32>, vector<32x96xf32>, vector<2x96xf32> -> vector<2x96xf32>
    %c3_467 = arith.constant 3 : index
    %c0_468 = arith.constant 0 : index
    %c0_469 = arith.constant 0 : index
    %1136 = vector.load %arg6[%c3_467, %c0_468, %c0_469] : memref<4x1x32xf32, #tpu.memory_space<vmem>>, vector<1x1x32xf32>
    %1137 = vector.shape_cast %1136 : vector<1x1x32xf32> to vector<1x32xf32>
    %1138 = vector.extract_strided_slice %1132 {offsets = [0, 0], sizes = [2, 32], strides = [1, 1]} : vector<2x96xf32> to vector<2x32xf32>
    %1139 = vector.extract_strided_slice %1135 {offsets = [0, 0], sizes = [2, 32], strides = [1, 1]} : vector<2x96xf32> to vector<2x32xf32>
    %1140 = arith.addf %1138, %1139 : vector<2x32xf32>
    %1141 = arith.negf %1140 : vector<2x32xf32>
    %1142 = math.exp %1141 : vector<2x32xf32>
    %cst_470 = arith.constant 1.000000e+00 : f32
    %1143 = vector.broadcast %cst_470 : f32 to vector<2x32xf32>
    %1144 = arith.addf %1143, %1142 : vector<2x32xf32>
    %1145 = arith.divf %1143, %1144 : vector<2x32xf32>
    %1146 = vector.extract_strided_slice %1132 {offsets = [0, 32], sizes = [2, 32], strides = [1, 1]} : vector<2x96xf32> to vector<2x32xf32>
    %1147 = vector.extract_strided_slice %1135 {offsets = [0, 32], sizes = [2, 32], strides = [1, 1]} : vector<2x96xf32> to vector<2x32xf32>
    %1148 = arith.addf %1146, %1147 : vector<2x32xf32>
    %1149 = arith.negf %1148 : vector<2x32xf32>
    %1150 = math.exp %1149 : vector<2x32xf32>
    %cst_471 = arith.constant 1.000000e+00 : f32
    %1151 = vector.broadcast %cst_471 : f32 to vector<2x32xf32>
    %1152 = arith.addf %1151, %1150 : vector<2x32xf32>
    %1153 = arith.divf %1151, %1152 : vector<2x32xf32>
    %1154 = vector.extract_strided_slice %1132 {offsets = [0, 64], sizes = [2, 32], strides = [1, 1]} : vector<2x96xf32> to vector<2x32xf32>
    %1155 = vector.extract_strided_slice %1135 {offsets = [0, 64], sizes = [2, 32], strides = [1, 1]} : vector<2x96xf32> to vector<2x32xf32>
    %1156 = vector.broadcast %1137 : vector<1x32xf32> to vector<2x32xf32>
    %1157 = arith.addf %1155, %1156 : vector<2x32xf32>
    %1158 = arith.mulf %1145, %1157 : vector<2x32xf32>
    %1159 = arith.addf %1154, %1158 : vector<2x32xf32>
    %1160 = math.tanh %1159 : vector<2x32xf32>
    %cst_472 = arith.constant 1.000000e+00 : f32
    %1161 = vector.broadcast %cst_472 : f32 to vector<2x32xf32>
    %1162 = arith.subf %1161, %1153 : vector<2x32xf32>
    %1163 = arith.mulf %1162, %1160 : vector<2x32xf32>
    %1164 = arith.mulf %1153, %1045 : vector<2x32xf32>
    %1165 = arith.addf %1163, %1164 : vector<2x32xf32>
    %c1_473 = arith.constant 1 : index
    %c0_474 = arith.constant 0 : index
    %c0_475 = arith.constant 0 : index
    %1166 = vector.load %arg3[%c1_473, %c0_474, %c0_475] : memref<3x32x96xf32, #tpu.memory_space<vmem>>, vector<1x32x96xf32>
    %1167 = vector.shape_cast %1166 : vector<1x32x96xf32> to vector<32x96xf32>
    %cst_476 = arith.constant dense<0.000000e+00> : vector<2x96xf32>
    %1168 = tpu.matmul %1085, %1167, %cst_476 {dimension_numbers = #tpu.dot_dimension_numbers<[1], [0], [0], [1], [0, 0, 1, 1], [], []>} : vector<2x32xf32>, vector<32x96xf32>, vector<2x96xf32> -> vector<2x96xf32>
    %c2_477 = arith.constant 2 : index
    %c0_478 = arith.constant 0 : index
    %c0_479 = arith.constant 0 : index
    %1169 = vector.load %arg5[%c2_477, %c0_478, %c0_479] : memref<4x1x96xf32, #tpu.memory_space<vmem>>, vector<1x1x96xf32>
    %1170 = vector.shape_cast %1169 : vector<1x1x96xf32> to vector<1x96xf32>
    %1171 = vector.broadcast %1170 : vector<1x96xf32> to vector<2x96xf32>
    %1172 = arith.addf %1168, %1171 : vector<2x96xf32>
    %c2_480 = arith.constant 2 : index
    %c0_481 = arith.constant 0 : index
    %c0_482 = arith.constant 0 : index
    %1173 = vector.load %arg4[%c2_480, %c0_481, %c0_482] : memref<4x32x96xf32, #tpu.memory_space<vmem>>, vector<1x32x96xf32>
    %1174 = vector.shape_cast %1173 : vector<1x32x96xf32> to vector<32x96xf32>
    %cst_483 = arith.constant dense<0.000000e+00> : vector<2x96xf32>
    %1175 = tpu.matmul %1125, %1174, %cst_483 {dimension_numbers = #tpu.dot_dimension_numbers<[1], [0], [0], [1], [0, 0, 1, 1], [], []>} : vector<2x32xf32>, vector<32x96xf32>, vector<2x96xf32> -> vector<2x96xf32>
    %c2_484 = arith.constant 2 : index
    %c0_485 = arith.constant 0 : index
    %c0_486 = arith.constant 0 : index
    %1176 = vector.load %arg6[%c2_484, %c0_485, %c0_486] : memref<4x1x32xf32, #tpu.memory_space<vmem>>, vector<1x1x32xf32>
    %1177 = vector.shape_cast %1176 : vector<1x1x32xf32> to vector<1x32xf32>
    %1178 = vector.extract_strided_slice %1172 {offsets = [0, 0], sizes = [2, 32], strides = [1, 1]} : vector<2x96xf32> to vector<2x32xf32>
    %1179 = vector.extract_strided_slice %1175 {offsets = [0, 0], sizes = [2, 32], strides = [1, 1]} : vector<2x96xf32> to vector<2x32xf32>
    %1180 = arith.addf %1178, %1179 : vector<2x32xf32>
    %1181 = arith.negf %1180 : vector<2x32xf32>
    %1182 = math.exp %1181 : vector<2x32xf32>
    %cst_487 = arith.constant 1.000000e+00 : f32
    %1183 = vector.broadcast %cst_487 : f32 to vector<2x32xf32>
    %1184 = arith.addf %1183, %1182 : vector<2x32xf32>
    %1185 = arith.divf %1183, %1184 : vector<2x32xf32>
    %1186 = vector.extract_strided_slice %1172 {offsets = [0, 32], sizes = [2, 32], strides = [1, 1]} : vector<2x96xf32> to vector<2x32xf32>
    %1187 = vector.extract_strided_slice %1175 {offsets = [0, 32], sizes = [2, 32], strides = [1, 1]} : vector<2x96xf32> to vector<2x32xf32>
    %1188 = arith.addf %1186, %1187 : vector<2x32xf32>
    %1189 = arith.negf %1188 : vector<2x32xf32>
    %1190 = math.exp %1189 : vector<2x32xf32>
    %cst_488 = arith.constant 1.000000e+00 : f32
    %1191 = vector.broadcast %cst_488 : f32 to vector<2x32xf32>
    %1192 = arith.addf %1191, %1190 : vector<2x32xf32>
    %1193 = arith.divf %1191, %1192 : vector<2x32xf32>
    %1194 = vector.extract_strided_slice %1172 {offsets = [0, 64], sizes = [2, 32], strides = [1, 1]} : vector<2x96xf32> to vector<2x32xf32>
    %1195 = vector.extract_strided_slice %1175 {offsets = [0, 64], sizes = [2, 32], strides = [1, 1]} : vector<2x96xf32> to vector<2x32xf32>
    %1196 = vector.broadcast %1177 : vector<1x32xf32> to vector<2x32xf32>
    %1197 = arith.addf %1195, %1196 : vector<2x32xf32>
    %1198 = arith.mulf %1185, %1197 : vector<2x32xf32>
    %1199 = arith.addf %1194, %1198 : vector<2x32xf32>
    %1200 = math.tanh %1199 : vector<2x32xf32>
    %cst_489 = arith.constant 1.000000e+00 : f32
    %1201 = vector.broadcast %cst_489 : f32 to vector<2x32xf32>
    %1202 = arith.subf %1201, %1193 : vector<2x32xf32>
    %1203 = arith.mulf %1202, %1200 : vector<2x32xf32>
    %1204 = arith.mulf %1193, %1125 : vector<2x32xf32>
    %1205 = arith.addf %1203, %1204 : vector<2x32xf32>
    %c2_490 = arith.constant 2 : index
    %c0_491 = arith.constant 0 : index
    %c0_492 = arith.constant 0 : index
    %1206 = vector.load %arg3[%c2_490, %c0_491, %c0_492] : memref<3x32x96xf32, #tpu.memory_space<vmem>>, vector<1x32x96xf32>
    %1207 = vector.shape_cast %1206 : vector<1x32x96xf32> to vector<32x96xf32>
    %cst_493 = arith.constant dense<0.000000e+00> : vector<2x96xf32>
    %1208 = tpu.matmul %1125, %1207, %cst_493 {dimension_numbers = #tpu.dot_dimension_numbers<[1], [0], [0], [1], [0, 0, 1, 1], [], []>} : vector<2x32xf32>, vector<32x96xf32>, vector<2x96xf32> -> vector<2x96xf32>
    %c3_494 = arith.constant 3 : index
    %c0_495 = arith.constant 0 : index
    %c0_496 = arith.constant 0 : index
    %1209 = vector.load %arg5[%c3_494, %c0_495, %c0_496] : memref<4x1x96xf32, #tpu.memory_space<vmem>>, vector<1x1x96xf32>
    %1210 = vector.shape_cast %1209 : vector<1x1x96xf32> to vector<1x96xf32>
    %1211 = vector.broadcast %1210 : vector<1x96xf32> to vector<2x96xf32>
    %1212 = arith.addf %1208, %1211 : vector<2x96xf32>
    %c3_497 = arith.constant 3 : index
    %c0_498 = arith.constant 0 : index
    %c0_499 = arith.constant 0 : index
    %1213 = vector.load %arg4[%c3_497, %c0_498, %c0_499] : memref<4x32x96xf32, #tpu.memory_space<vmem>>, vector<1x32x96xf32>
    %1214 = vector.shape_cast %1213 : vector<1x32x96xf32> to vector<32x96xf32>
    %cst_500 = arith.constant dense<0.000000e+00> : vector<2x96xf32>
    %1215 = tpu.matmul %1165, %1214, %cst_500 {dimension_numbers = #tpu.dot_dimension_numbers<[1], [0], [0], [1], [0, 0, 1, 1], [], []>} : vector<2x32xf32>, vector<32x96xf32>, vector<2x96xf32> -> vector<2x96xf32>
    %c3_501 = arith.constant 3 : index
    %c0_502 = arith.constant 0 : index
    %c0_503 = arith.constant 0 : index
    %1216 = vector.load %arg6[%c3_501, %c0_502, %c0_503] : memref<4x1x32xf32, #tpu.memory_space<vmem>>, vector<1x1x32xf32>
    %1217 = vector.shape_cast %1216 : vector<1x1x32xf32> to vector<1x32xf32>
    %1218 = vector.extract_strided_slice %1212 {offsets = [0, 0], sizes = [2, 32], strides = [1, 1]} : vector<2x96xf32> to vector<2x32xf32>
    %1219 = vector.extract_strided_slice %1215 {offsets = [0, 0], sizes = [2, 32], strides = [1, 1]} : vector<2x96xf32> to vector<2x32xf32>
    %1220 = arith.addf %1218, %1219 : vector<2x32xf32>
    %1221 = arith.negf %1220 : vector<2x32xf32>
    %1222 = math.exp %1221 : vector<2x32xf32>
    %cst_504 = arith.constant 1.000000e+00 : f32
    %1223 = vector.broadcast %cst_504 : f32 to vector<2x32xf32>
    %1224 = arith.addf %1223, %1222 : vector<2x32xf32>
    %1225 = arith.divf %1223, %1224 : vector<2x32xf32>
    %1226 = vector.extract_strided_slice %1212 {offsets = [0, 32], sizes = [2, 32], strides = [1, 1]} : vector<2x96xf32> to vector<2x32xf32>
    %1227 = vector.extract_strided_slice %1215 {offsets = [0, 32], sizes = [2, 32], strides = [1, 1]} : vector<2x96xf32> to vector<2x32xf32>
    %1228 = arith.addf %1226, %1227 : vector<2x32xf32>
    %1229 = arith.negf %1228 : vector<2x32xf32>
    %1230 = math.exp %1229 : vector<2x32xf32>
    %cst_505 = arith.constant 1.000000e+00 : f32
    %1231 = vector.broadcast %cst_505 : f32 to vector<2x32xf32>
    %1232 = arith.addf %1231, %1230 : vector<2x32xf32>
    %1233 = arith.divf %1231, %1232 : vector<2x32xf32>
    %1234 = vector.extract_strided_slice %1212 {offsets = [0, 64], sizes = [2, 32], strides = [1, 1]} : vector<2x96xf32> to vector<2x32xf32>
    %1235 = vector.extract_strided_slice %1215 {offsets = [0, 64], sizes = [2, 32], strides = [1, 1]} : vector<2x96xf32> to vector<2x32xf32>
    %1236 = vector.broadcast %1217 : vector<1x32xf32> to vector<2x32xf32>
    %1237 = arith.addf %1235, %1236 : vector<2x32xf32>
    %1238 = arith.mulf %1225, %1237 : vector<2x32xf32>
    %1239 = arith.addf %1234, %1238 : vector<2x32xf32>
    %1240 = math.tanh %1239 : vector<2x32xf32>
    %cst_506 = arith.constant 1.000000e+00 : f32
    %1241 = vector.broadcast %cst_506 : f32 to vector<2x32xf32>
    %1242 = arith.subf %1241, %1233 : vector<2x32xf32>
    %1243 = arith.mulf %1242, %1240 : vector<2x32xf32>
    %1244 = arith.mulf %1233, %1165 : vector<2x32xf32>
    %1245 = arith.addf %1243, %1244 : vector<2x32xf32>
    %c2_507 = arith.constant 2 : index
    %c0_508 = arith.constant 0 : index
    %c0_509 = arith.constant 0 : index
    %1246 = vector.load %arg3[%c2_507, %c0_508, %c0_509] : memref<3x32x96xf32, #tpu.memory_space<vmem>>, vector<1x32x96xf32>
    %1247 = vector.shape_cast %1246 : vector<1x32x96xf32> to vector<32x96xf32>
    %cst_510 = arith.constant dense<0.000000e+00> : vector<2x96xf32>
    %1248 = tpu.matmul %1205, %1247, %cst_510 {dimension_numbers = #tpu.dot_dimension_numbers<[1], [0], [0], [1], [0, 0, 1, 1], [], []>} : vector<2x32xf32>, vector<32x96xf32>, vector<2x96xf32> -> vector<2x96xf32>
    %c3_511 = arith.constant 3 : index
    %c0_512 = arith.constant 0 : index
    %c0_513 = arith.constant 0 : index
    %1249 = vector.load %arg5[%c3_511, %c0_512, %c0_513] : memref<4x1x96xf32, #tpu.memory_space<vmem>>, vector<1x1x96xf32>
    %1250 = vector.shape_cast %1249 : vector<1x1x96xf32> to vector<1x96xf32>
    %1251 = vector.broadcast %1250 : vector<1x96xf32> to vector<2x96xf32>
    %1252 = arith.addf %1248, %1251 : vector<2x96xf32>
    %c3_514 = arith.constant 3 : index
    %c0_515 = arith.constant 0 : index
    %c0_516 = arith.constant 0 : index
    %1253 = vector.load %arg4[%c3_514, %c0_515, %c0_516] : memref<4x32x96xf32, #tpu.memory_space<vmem>>, vector<1x32x96xf32>
    %1254 = vector.shape_cast %1253 : vector<1x32x96xf32> to vector<32x96xf32>
    %cst_517 = arith.constant dense<0.000000e+00> : vector<2x96xf32>
    %1255 = tpu.matmul %1245, %1254, %cst_517 {dimension_numbers = #tpu.dot_dimension_numbers<[1], [0], [0], [1], [0, 0, 1, 1], [], []>} : vector<2x32xf32>, vector<32x96xf32>, vector<2x96xf32> -> vector<2x96xf32>
    %c3_518 = arith.constant 3 : index
    %c0_519 = arith.constant 0 : index
    %c0_520 = arith.constant 0 : index
    %1256 = vector.load %arg6[%c3_518, %c0_519, %c0_520] : memref<4x1x32xf32, #tpu.memory_space<vmem>>, vector<1x1x32xf32>
    %1257 = vector.shape_cast %1256 : vector<1x1x32xf32> to vector<1x32xf32>
    %1258 = vector.extract_strided_slice %1252 {offsets = [0, 0], sizes = [2, 32], strides = [1, 1]} : vector<2x96xf32> to vector<2x32xf32>
    %1259 = vector.extract_strided_slice %1255 {offsets = [0, 0], sizes = [2, 32], strides = [1, 1]} : vector<2x96xf32> to vector<2x32xf32>
    %1260 = arith.addf %1258, %1259 : vector<2x32xf32>
    %1261 = arith.negf %1260 : vector<2x32xf32>
    %1262 = math.exp %1261 : vector<2x32xf32>
    %cst_521 = arith.constant 1.000000e+00 : f32
    %1263 = vector.broadcast %cst_521 : f32 to vector<2x32xf32>
    %1264 = arith.addf %1263, %1262 : vector<2x32xf32>
    %1265 = arith.divf %1263, %1264 : vector<2x32xf32>
    %1266 = vector.extract_strided_slice %1252 {offsets = [0, 32], sizes = [2, 32], strides = [1, 1]} : vector<2x96xf32> to vector<2x32xf32>
    %1267 = vector.extract_strided_slice %1255 {offsets = [0, 32], sizes = [2, 32], strides = [1, 1]} : vector<2x96xf32> to vector<2x32xf32>
    %1268 = arith.addf %1266, %1267 : vector<2x32xf32>
    %1269 = arith.negf %1268 : vector<2x32xf32>
    %1270 = math.exp %1269 : vector<2x32xf32>
    %cst_522 = arith.constant 1.000000e+00 : f32
    %1271 = vector.broadcast %cst_522 : f32 to vector<2x32xf32>
    %1272 = arith.addf %1271, %1270 : vector<2x32xf32>
    %1273 = arith.divf %1271, %1272 : vector<2x32xf32>
    %1274 = vector.extract_strided_slice %1252 {offsets = [0, 64], sizes = [2, 32], strides = [1, 1]} : vector<2x96xf32> to vector<2x32xf32>
    %1275 = vector.extract_strided_slice %1255 {offsets = [0, 64], sizes = [2, 32], strides = [1, 1]} : vector<2x96xf32> to vector<2x32xf32>
    %1276 = vector.broadcast %1257 : vector<1x32xf32> to vector<2x32xf32>
    %1277 = arith.addf %1275, %1276 : vector<2x32xf32>
    %1278 = arith.mulf %1265, %1277 : vector<2x32xf32>
    %1279 = arith.addf %1274, %1278 : vector<2x32xf32>
    %1280 = math.tanh %1279 : vector<2x32xf32>
    %cst_523 = arith.constant 1.000000e+00 : f32
    %1281 = vector.broadcast %cst_523 : f32 to vector<2x32xf32>
    %1282 = arith.subf %1281, %1273 : vector<2x32xf32>
    %1283 = arith.mulf %1282, %1280 : vector<2x32xf32>
    %1284 = arith.mulf %1273, %1245 : vector<2x32xf32>
    %1285 = arith.addf %1283, %1284 : vector<2x32xf32>
    %1286 = tpu.concatenate %925, %1085, %1205, %1285 in 0 : vector<2x32xf32>, vector<2x32xf32>, vector<2x32xf32>, vector<2x32xf32> -> vector<8x32xf32>
    %c0_524 = arith.constant 0 : index
    %c0_525 = arith.constant 0 : index
    %1287 = vector.load %arg10[%c0_524, %c0_525] : memref<8x32xf32, #tpu.memory_space<vmem>>, vector<8x32xf32>
    tpu.vector_store %arg10[%c0_524, %c0_525], %1286 {strides = array<i32>} : memref<8x32xf32, #tpu.memory_space<vmem>>, vector<8x32xf32>,
    %c0_526 = arith.constant 0 : index
    %c0_527 = arith.constant 0 : index
    %1288 = vector.load %arg7[%c0_526, %c0_527] : memref<32x2xf32, #tpu.memory_space<vmem>>, vector<32x2xf32>
    %cst_528 = arith.constant dense<0.000000e+00> : vector<2x2xf32>
    %1289 = tpu.matmul %1285, %1288, %cst_528 {dimension_numbers = #tpu.dot_dimension_numbers<[1], [0], [0], [1], [0, 0, 1, 1], [], []>} : vector<2x32xf32>, vector<32x2xf32>, vector<2x2xf32> -> vector<2x2xf32>
    %c0_529 = arith.constant 0 : index
    %c0_530 = arith.constant 0 : index
    %1290 = vector.load %arg8[%c0_529, %c0_530] : memref<1x2xf32, #tpu.memory_space<vmem>>, vector<1x2xf32>
    %1291 = vector.broadcast %1290 : vector<1x2xf32> to vector<2x2xf32>
    %1292 = arith.addf %1289, %1291 : vector<2x2xf32>
    %c0_531 = arith.constant 0 : index
    %c0_532 = arith.constant 0 : index
    %1293 = vector.load %arg9[%c0_531, %c0_532] : memref<2x2xf32, #tpu.memory_space<vmem>>, vector<2x2xf32>
    tpu.vector_store %arg9[%c0_531, %c0_532], %1292 {strides = array<i32>} : memref<2x2xf32, #tpu.memory_space<vmem>>, vector<2x2xf32>,
    return
  }
  func.func @transform_0(%arg0: i32) -> (i32, i32, i32) {
    %c0_i32 = arith.constant 0 : i32
    %c0_i32_0 = arith.constant 0 : i32
    %c0_i32_1 = arith.constant 0 : i32
    %c0_i32_2 = arith.constant 0 : i32
    return %c0_i32, %c0_i32_0, %c0_i32_1 : i32, i32, i32
  }
  func.func @transform_1(%arg0: i32) -> (i32, i32) {
    %c0_i32 = arith.constant 0 : i32
    %c0_i32_0 = arith.constant 0 : i32
    %c0_i32_1 = arith.constant 0 : i32
    return %c0_i32, %c0_i32_0 : i32, i32
  }
  func.func @transform_2(%arg0: i32) -> (i32, i32, i32) {
    %c0_i32 = arith.constant 0 : i32
    %c0_i32_0 = arith.constant 0 : i32
    %c0_i32_1 = arith.constant 0 : i32
    %c0_i32_2 = arith.constant 0 : i32
    return %c0_i32, %c0_i32_0, %c0_i32_1 : i32, i32, i32
  }
  func.func @transform_3(%arg0: i32) -> (i32, i32, i32) {
    %c0_i32 = arith.constant 0 : i32
    %c0_i32_0 = arith.constant 0 : i32
    %c0_i32_1 = arith.constant 0 : i32
    %c0_i32_2 = arith.constant 0 : i32
    return %c0_i32, %c0_i32_0, %c0_i32_1 : i32, i32, i32
  }
  func.func @transform_4(%arg0: i32) -> (i32, i32, i32) {
    %c0_i32 = arith.constant 0 : i32
    %c0_i32_0 = arith.constant 0 : i32
    %c0_i32_1 = arith.constant 0 : i32
    %c0_i32_2 = arith.constant 0 : i32
    return %c0_i32, %c0_i32_0, %c0_i32_1 : i32, i32, i32
  }
  func.func @transform_5(%arg0: i32) -> (i32, i32, i32) {
    %c0_i32 = arith.constant 0 : i32
    %c0_i32_0 = arith.constant 0 : i32
    %c0_i32_1 = arith.constant 0 : i32
    %c0_i32_2 = arith.constant 0 : i32
    return %c0_i32, %c0_i32_0, %c0_i32_1 : i32, i32, i32
  }
  func.func @transform_6(%arg0: i32) -> (i32, i32) {
    %c0_i32 = arith.constant 0 : i32
    %c0_i32_0 = arith.constant 0 : i32
    %c0_i32_1 = arith.constant 0 : i32
    return %c0_i32, %c0_i32_0 : i32, i32
  }
  func.func @transform_7(%arg0: i32) -> (i32, i32) {
    %c0_i32 = arith.constant 0 : i32
    %c0_i32_0 = arith.constant 0 : i32
    %c0_i32_1 = arith.constant 0 : i32
    return %c0_i32, %c0_i32_0 : i32, i32
  }
  func.func @transform_8(%arg0: i32) -> (i32, i32) {
    %c0_i32 = arith.constant 0 : i32
    %c0_i32_0 = arith.constant 0 : i32
    %c0_i32_1 = arith.constant 0 : i32
    return %c0_i32, %c0_i32_0 : i32, i32
  }
  func.func @transform_9(%arg0: i32) -> (i32, i32) {
    %c0_i32 = arith.constant 0 : i32
    %c0_i32_0 = arith.constant 0 : i32
    %c0_i32_1 = arith.constant 0 : i32
    return %c0_i32, %c0_i32_0 : i32, i32
  }
}

</mosaic_0001>

<llo_original>
// kernel: student_forward.1
$region0: #{student_forward.1}
  #allocation0 [shape = 'u32[]', space=smem, size = 0x4, offset = 0x4, fixed_abs, tag = 'smem constant byte address 0x4 - core index']
  #allocation1 [shape = 'u32[144,128]{1,0:T(1,128)}', space=vmem, size = 0x12000, scoped, tag = 'internal scratch']
  %s0 = inlined_call_operand.vmem [shape: f32[2,8,16], index: 0, kind: input, shape index: {}]
  %s1 = inlined_call_operand.vmem [shape: f32[16,96], index: 1, kind: input, shape index: {}]
  %s2 = inlined_call_operand.hbm [shape: f32[3,32,96], index: 2, kind: input, shape index: {}]
  %s3 = inlined_call_operand.hbm [shape: f32[4,32,96], index: 3, kind: input, shape index: {}]
  %s4 = inlined_call_operand.vmem [shape: f32[4,1,96], index: 4, kind: input, shape index: {}]
  %s5 = inlined_call_operand.hbm [shape: f32[4,1,32], index: 5, kind: input, shape index: {}]
  %s6 = inlined_call_operand.vmem [shape: f32[32,2], index: 6, kind: input, shape index: {}]
  %s7 = inlined_call_operand.vmem [shape: f32[1,2], index: 7, kind: input, shape index: {}]
  %s8 = inlined_call_operand.hbm [shape: f32[2,2], index: 8, kind: output, shape index: {0}]
  %s9 = inlined_call_operand.hbm [shape: f32[8,32], index: 9, kind: output, shape index: {1}]
  %10 = xla_tuple %s8, %s9
  %s11 = sld [smem:[#allocation0]]
  $region62: #{student_forward.1} parent=0
    _
  %s13 = ssub.s32 1, %s11
  %s14 = scalar_select 0, %s13, %s11
  $region1: #{student_forward.1} parent=0
    #allocation2 [shape = 'u8[49152]{0}', space=vmem, size = 0xc000, scoped, tag = 'input window, operand 2, single buffered']
    #allocation3 [shape = 's32[1]{0}', space=sflag, size = 0x4, scoped, tag = 'scoped memory for student_forward.1']
    #allocation4 [shape = 's32[1]{0}', space=sflag, size = 0x4, scoped, tag = 'scoped memory for student_forward.1']
    #allocation5 [shape = 'u8[65536]{0}', space=vmem, size = 0x10000, scoped, tag = 'input window, operand 3, single buffered']
    #allocation6 [shape = 's32[1]{0}', space=sflag, size = 0x4, scoped, tag = 'scoped memory for student_forward.1']
    #allocation7 [shape = 'u8[2048]{0}', space=vmem, size = 0x800, scoped, tag = 'input window, operand 5, single buffered']
    #allocation8 [shape = 'u8[1024]{0}', space=vmem, size = 0x400, scoped, tag = 'output window, operand 0, single buffered']
    #allocation9 [shape = 'u8[4096]{0}', space=vmem, size = 0x1000, scoped, tag = 'output window, operand 1, single buffered']
    #allocation10 [shape = 's32[1]{0}', space=sflag, size = 0x4, scoped, tag = 'scoped memory for student_forward.1']
    %15 = vsyncpa [#allocation3], 0
    %16 = vsyncpa [#allocation6], 0
    %17 = vsyncpa [#allocation4], 0
    %18 = vsyncpa [#allocation10], 0
    // Predicated region
    $region2: #{student_forward.1} parent=1 // pred_check
      _
    $region3: #{student_forward.1} parent=1 // pred_check_branch
      %20 = sbr.rel (0) target = $region5
    $region4: #{student_forward.1} parent=1 // pred_region
      _
    $region5: #{student_forward.1} parent=1 // pred_fallthru
      _
    // Predicated region
    $region6: #{student_forward.1} parent=1 // pred_check
      _
    $region7: #{student_forward.1} parent=1 // pred_check_branch
      %22 = sbr.rel (0) target = $region9
    $region8: #{student_forward.1} parent=1 // pred_region
      _
    $region9: #{student_forward.1} parent=1 // pred_fallthru
      _
    // Predicated region
    $region10: #{student_forward.1} parent=1 // pred_check
      _
    $region11: #{student_forward.1} parent=1 // pred_check_branch
      %24 = sbr.rel (0) target = $region13
    $region12: #{student_forward.1} parent=1 // pred_region
      %s26 = ssub.s32 1536, 1536
      %27 = vsyncadd [#allocation3], %s26
      %s28 = sshll.u32 [#allocation2], 4
      %s29 = int_to_ptr.vmem [resolvable:$true] %s28
      %34 = dma.hbm_to_vmem [thread:$0]  %s2, 1536, %s29, [#allocation3], 128, 128, 8
    $region13: #{student_forward.1} parent=1 // pred_fallthru
      _
    // Predicated region
    $region14: #{student_forward.1} parent=1 // pred_check
      _
    $region15: #{student_forward.1} parent=1 // pred_check_branch
      %36 = sbr.rel (0) target = $region17
    $region16: #{student_forward.1} parent=1 // pred_region
      %s38 = ssub.s32 2048, 2048
      %39 = vsyncadd [#allocation6], %s38
      %s40 = sshll.u32 [#allocation5], 4
      %s41 = int_to_ptr.vmem [resolvable:$true] %s40
      %46 = dma.hbm_to_vmem [thread:$0]  %s3, 2048, %s41, [#allocation6], 128, 128, 8
    $region17: #{student_forward.1} parent=1 // pred_fallthru
      _
    // Predicated region
    $region18: #{student_forward.1} parent=1 // pred_check
      _
    $region19: #{student_forward.1} parent=1 // pred_check_branch
      %48 = sbr.rel (0) target = $region21
    $region20: #{student_forward.1} parent=1 // pred_region
      _
    $region21: #{student_forward.1} parent=1 // pred_fallthru
      _
    // Predicated region
    $region22: #{student_forward.1} parent=1 // pred_check
      _
    $region23: #{student_forward.1} parent=1 // pred_check_branch
      %50 = sbr.rel (0) target = $region25
    $region24: #{student_forward.1} parent=1 // pred_region
      %s52 = ssub.s32 64, 64
      %53 = vsyncadd [#allocation6], %s52
      %s54 = sshll.u32 [#allocation7], 4
      %s55 = int_to_ptr.vmem [resolvable:$true] %s54
      %60 = dma.hbm_to_vmem [thread:$0]  %s5, 64, %s55, [#allocation6], 16, 16, 1
    $region25: #{student_forward.1} parent=1 // pred_fallthru
      _
    // Predicated region
    $region26: #{student_forward.1} parent=1 // pred_check
      _
    $region27: #{student_forward.1} parent=1 // pred_check_branch
      %62 = sbr.rel (0) target = $region29
    $region28: #{student_forward.1} parent=1 // pred_region
      _
    $region29: #{student_forward.1} parent=1 // pred_fallthru
      _
    // Predicated region
    $region30: #{student_forward.1} parent=1 // pred_check
      _
    $region31: #{student_forward.1} parent=1 // pred_check_branch
      %64 = sbr.rel (0) target = $region33
    $region32: #{student_forward.1} parent=1 // pred_region
      _
    $region33: #{student_forward.1} parent=1 // pred_fallthru
      _
    // Predicated region
    $region34: #{student_forward.1} parent=1 // pred_check
      _
    $region35: #{student_forward.1} parent=1 // pred_check_branch
      %66 = sbr.rel (0) target = $region37
    $region36: #{student_forward.1} parent=1 // pred_region
      %67 = dma.done [#allocation3], 1536
    $region37: #{student_forward.1} parent=1 // pred_fallthru
      _
    // Predicated region
    $region38: #{student_forward.1} parent=1 // pred_check
      _
    $region39: #{student_forward.1} parent=1 // pred_check_branch
      %69 = sbr.rel (0) target = $region41
    $region40: #{student_forward.1} parent=1 // pred_region
      %70 = dma.done [#allocation6], 2048
    $region41: #{student_forward.1} parent=1 // pred_fallthru
      _
    // Predicated region
    $region42: #{student_forward.1} parent=1 // pred_check
      _
    $region43: #{student_forward.1} parent=1 // pred_check_branch
      %72 = sbr.rel (0) target = $region45
    $region44: #{student_forward.1} parent=1 // pred_region
      %73 = dma.done [#allocation6], 64
    $region45: #{student_forward.1} parent=1 // pred_fallthru
      _
    %v74 = vld [vmem:[%s0] sm:$0xff]
    %v75 = vld [vmem:[%s0 + $0x8] sm:$0xff]
    %v76 = vld [vmem:[%s1] sm:$0xff]
    %v77 = vld [vmem:[%s1 + $0x8] sm:$0xff]
    %v78 = vld [vmem:[%s4] sm:$0x1]
    %v80 = vlaneseq
    %v81 = vshrl.u32 %v80, 7
    %v82 = vsub.s32 0, %v81
    %v83 = vrot.slane %v78, %v82
    %v87 = vrot.slane %v75, 7
    %vm88 = vcmask 1041409
    %v89 = vsel %vm88, %v87, %v74
    %vm90 = vcmask 130048
    %v91 = vsel %vm90, %v89, 0
    %93 = vmatprep.subr.mxu0 0.0
    %94 = vmatpush1.msra.mxu0 %v76
    %95 = vmatprep.subr.mxu0 0.0
    %96 = vmatpush1.msra.mxu0 %v77
    %97 = vmatprep.subr.mxu0 0.0
    %98 = vmatpush1.msra.mxu0 0.0
    %99 = vmatprep.subr.mxu0 0.0
    %100 = vmatpush1.msra.mxu0 0.0
    %101 = vmatprep.subr.mxu0 0.0
    %102 = vmatpush1.msra.mxu0 0.0
    %103 = vmatprep.subr.mxu0 0.0
    %104 = vmatpush1.msra.mxu0 0.0
    %105 = vmatprep.subr.mxu0 0.0
    %106 = vmatpush1.msra.mxu0 0.0
    %107 = vmatprep.subr.mxu0 0.0
    %108 = vmatpush1.msra.mxu0 0.0
    %109 = vmatprep.subr.mxu0 0.0
    %110 = vmatpush1.msra.mxu0 0.0
    %111 = vmatprep.subr.mxu0 0.0
    %112 = vmatpush1.msra.mxu0 0.0
    %113 = vmatprep.subr.mxu0 0.0
    %114 = vmatpush1.msra.mxu0 0.0
    %115 = vmatprep.subr.mxu0 0.0
    %116 = vmatpush1.msra.mxu0 0.0
    %117 = vmatprep.subr.mxu0 0.0
    %118 = vmatpush1.msra.mxu0 0.0
    %119 = vmatprep.subr.mxu0 0.0
    %120 = vmatpush1.msra.mxu0 0.0
    %121 = vmatprep.subr.mxu0 0.0
    %122 = vmatpush1.msra.mxu0 0.0
    %123 = vmatprep.subr.mxu0 0.0
    %124 = vmatpush1.msra.mxu0 0.0
    %125 = vmatprep.subr.mxu0 0.0
    %126 = vmatpush1.msra.mxu0 0.0
    %127 = vmatprep.subr.mxu0 0.0
    %128 = vmatpush1.msra.mxu0 0.0
    %129 = vmatprep.subr.mxu0 0.0
    %130 = vmatpush1.msra.mxu0 0.0
    %131 = vmatprep.subr.mxu0 0.0
    %132 = vmatpush1.msra.mxu0 0.0
    %133 = vmatprep.subr.mxu0 0.0
    %134 = vmatpush1.msra.mxu0 0.0
    %135 = vmatprep.subr.mxu0 0.0
    %136 = vmatpush1.msra.mxu0 0.0
    %137 = vmatprep.subr.mxu0 0.0
    %138 = vmatpush1.msra.mxu0 0.0
    %139 = vmatprep.subr.mxu0 0.0
    %140 = vmatpush1.msra.mxu0 0.0
    %141 = vmatprep.subr.mxu0 0.0
    %142 = vmatpush1.msra.mxu0 0.0
    %143 = vmatprep.subr.mxu0 0.0
    %144 = vmatpush1.msra.mxu0 0.0
    %145 = vmatprep.subr.mxu0 0.0
    %146 = vmatpush1.msra.mxu0 0.0
    %147 = vmatprep.subr.mxu0 0.0
    %148 = vmatpush1.msra.mxu0 0.0
    %149 = vmatprep.subr.mxu0 0.0
    %150 = vmatpush1.msra.mxu0 0.0
    %151 = vmatprep.subr.mxu0 0.0
    %152 = vmatpush1.msra.mxu0 0.0
    %153 = vmatprep.subr.mxu0 0.0
    %154 = vmatpush1.msra.mxu0 0.0
    %155 = vmatprep.subr.mxu0 0.0
    %156 = vmatpush1.msra.mxu0 0.0
    %157 = vmatprep.mubr.f32.mxu0 0.0
    %158 = vmatmul.mubr.f32.gmra.mrb[0].mxu0 %v91
    %v159 = vpop.f32.mrb[0].mxu0
    %v160 = vadd.f32 %v83, %v159
    %v161 = vpop.f32.mrb[0].mxu0
    %162 = vdwg.mxu0
    %v163 = vld [vmem:[#allocation5] sm:$0xff]
    %v164 = vld [vmem:[#allocation5 + $0x8] sm:$0xff]
    %v165 = vld [vmem:[#allocation5 + $0x10] sm:$0xff]
    %v166 = vld [vmem:[#allocation5 + $0x18] sm:$0xff]
    %vm167 = vcmask 261120
    %v169 = vsel %vm167, 0.0, 0
    %171 = vmatprep.subr.mxu0 0.0
    %172 = vmatpush1.msra.mxu0 %v163
    %173 = vmatprep.subr.mxu0 0.0
    %174 = vmatpush1.msra.mxu0 %v164
    %175 = vmatprep.subr.mxu0 0.0
    %176 = vmatpush1.msra.mxu0 %v165
    %177 = vmatprep.subr.mxu0 0.0
    %178 = vmatpush1.msra.mxu0 %v166
    %179 = vmatprep.subr.mxu0 0.0
    %180 = vmatpush1.msra.mxu0 0.0
    %181 = vmatprep.subr.mxu0 0.0
    %182 = vmatpush1.msra.mxu0 0.0
    %183 = vmatprep.subr.mxu0 0.0
    %184 = vmatpush1.msra.mxu0 0.0
    %185 = vmatprep.subr.mxu0 0.0
    %186 = vmatpush1.msra.mxu0 0.0
    %187 = vmatprep.subr.mxu0 0.0
    %188 = vmatpush1.msra.mxu0 0.0
    %189 = vmatprep.subr.mxu0 0.0
    %190 = vmatpush1.msra.mxu0 0.0
    %191 = vmatprep.subr.mxu0 0.0
    %192 = vmatpush1.msra.mxu0 0.0
    %193 = vmatprep.subr.mxu0 0.0
    %194 = vmatpush1.msra.mxu0 0.0
    %195 = vmatprep.subr.mxu0 0.0
    %196 = vmatpush1.msra.mxu0 0.0
    %197 = vmatprep.subr.mxu0 0.0
    %198 = vmatpush1.msra.mxu0 0.0
    %199 = vmatprep.subr.mxu0 0.0
    %200 = vmatpush1.msra.mxu0 0.0
    %201 = vmatprep.subr.mxu0 0.0
    %202 = vmatpush1.msra.mxu0 0.0
    %203 = vmatprep.subr.mxu0 0.0
    %204 = vmatpush1.msra.mxu0 0.0
    %205 = vmatprep.subr.mxu0 0.0
    %206 = vmatpush1.msra.mxu0 0.0
    %207 = vmatprep.subr.mxu0 0.0
    %208 = vmatpush1.msra.mxu0 0.0
    %209 = vmatprep.subr.mxu0 0.0
    %210 = vmatpush1.msra.mxu0 0.0
    %211 = vmatprep.subr.mxu0 0.0
    %212 = vmatpush1.msra.mxu0 0.0
    %213 = vmatprep.subr.mxu0 0.0
    %214 = vmatpush1.msra.mxu0 0.0
    %215 = vmatprep.subr.mxu0 0.0
    %216 = vmatpush1.msra.mxu0 0.0
    %217 = vmatprep.subr.mxu0 0.0
    %218 = vmatpush1.msra.mxu0 0.0
    %219 = vmatprep.subr.mxu0 0.0
    %220 = vmatpush1.msra.mxu0 0.0
    %221 = vmatprep.subr.mxu0 0.0
    %222 = vmatpush1.msra.mxu0 0.0
    %223 = vmatprep.subr.mxu0 0.0
    %224 = vmatpush1.msra.mxu0 0.0
    %225 = vmatprep.subr.mxu0 0.0
    %226 = vmatpush1.msra.mxu0 0.0
    %227 = vmatprep.subr.mxu0 0.0
    %228 = vmatpush1.msra.mxu0 0.0
    %229 = vmatprep.subr.mxu0 0.0
    %230 = vmatpush1.msra.mxu0 0.0
    %231 = vmatprep.subr.mxu0 0.0
    %232 = vmatpush1.msra.mxu0 0.0
    %233 = vmatprep.subr.mxu0 0.0
    %234 = vmatpush1.msra.mxu0 0.0
    %235 = vmatprep.mubr.f32.mxu0 0.0
    %236 = vmatmul.mubr.f32.gmra.mrb[0].mxu0 %v169
    %v237 = vpop.f32.mrb[0].mxu0
    %v238 = vadd.f32 0.0, %v237
    %v239 = vpop.f32.mrb[0].mxu0
    %240 = vdwg.mxu0
    %v241 = vld [vmem:[#allocation7] sm:$0x1]
    %v242 = vadd.f32 %v160, %v238
    %v243 = vxor.u32 %v242, 2147483648
    %v244 = vmul.f32 %v243, 1.442695
    %v245 = vpow.pop %v244
    %v246 = vadd.f32 %v245, 1.0
    %v247 = vrcp.pop %v246
    %v248 = vmul.f32 1.0, %v247
    %v250 = vlaneseq
    %v251 = vshrl.u32 %v250, 7
    %v252 = vsub.s32 0, %v251
    %v253 = vrot.slane %v241, %v252
    %254 = vrot.lane.b32.xlu0 %v253, 64
    %v255 = vpop.permute.xlu0 %254
    %v257 = vadd.f32 %v238, %v255
    %259 = vrot.lane.b32.xlu0 %v257, 64
    %v260 = vpop.permute.xlu0 %259
    %v262 = vmul.f32 %v248, %v260
    %264 = vrot.lane.b32.xlu0 %v262, 64
    %v265 = vpop.permute.xlu0 %264
    %v267 = vadd.f32 %v160, %v265
    %v268 = vtanh.pop %v267
    %v269 = vsub.f32 1.0, %v248
    %271 = vrot.lane.b32.xlu0 %v268, 96
    %v272 = vpop.permute.xlu0 %271
    %v274 = vmul.f32 %v269, %v272
    %v275 = vmul.f32 %v248, 0.0
    %v276 = vadd.f32 %v274, %v275
    %v277 = vrot.slane %v74, 1
    %v278 = vsel %vm88, %v75, %v277
    %v279 = vsel %vm90, %v278, 0
    %281 = vmatprep.subr.mxu0 0.0
    %282 = vmatpush1.msra.mxu0 %v76
    %283 = vmatprep.subr.mxu0 0.0
    %284 = vmatpush1.msra.mxu0 %v77
    %285 = vmatprep.subr.mxu0 0.0
    %286 = vmatpush1.msra.mxu0 0.0
    %287 = vmatprep.subr.mxu0 0.0
    %288 = vmatpush1.msra.mxu0 0.0
    %289 = vmatprep.subr.mxu0 0.0
    %290 = vmatpush1.msra.mxu0 0.0
    %291 = vmatprep.subr.mxu0 0.0
    %292 = vmatpush1.msra.mxu0 0.0
    %293 = vmatprep.subr.mxu0 0.0
    %294 = vmatpush1.msra.mxu0 0.0
    %295 = vmatprep.subr.mxu0 0.0
    %296 = vmatpush1.msra.mxu0 0.0
    %297 = vmatprep.subr.mxu0 0.0
    %298 = vmatpush1.msra.mxu0 0.0
    %299 = vmatprep.subr.mxu0 0.0
    %300 = vmatpush1.msra.mxu0 0.0
    %301 = vmatprep.subr.mxu0 0.0
    %302 = vmatpush1.msra.mxu0 0.0
    %303 = vmatprep.subr.mxu0 0.0
    %304 = vmatpush1.msra.mxu0 0.0
    %305 = vmatprep.subr.mxu0 0.0
    %306 = vmatpush1.msra.mxu0 0.0
    %307 = vmatprep.subr.mxu0 0.0
    %308 = vmatpush1.msra.mxu0 0.0
    %309 = vmatprep.subr.mxu0 0.0
    %310 = vmatpush1.msra.mxu0 0.0
    %311 = vmatprep.subr.mxu0 0.0
    %312 = vmatpush1.msra.mxu0 0.0
    %313 = vmatprep.subr.mxu0 0.0
    %314 = vmatpush1.msra.mxu0 0.0
    %315 = vmatprep.subr.mxu0 0.0
    %316 = vmatpush1.msra.mxu0 0.0
    %317 = vmatprep.subr.mxu0 0.0
    %318 = vmatpush1.msra.mxu0 0.0
    %319 = vmatprep.subr.mxu0 0.0
    %320 = vmatpush1.msra.mxu0 0.0
    %321 = vmatprep.subr.mxu0 0.0
    %322 = vmatpush1.msra.mxu0 0.0
    %323 = vmatprep.subr.mxu0 0.0
    %324 = vmatpush1.msra.mxu0 0.0
    %325 = vmatprep.subr.mxu0 0.0
    %326 = vmatpush1.msra.mxu0 0.0
    %327 = vmatprep.subr.mxu0 0.0
    %328 = vmatpush1.msra.mxu0 0.0
    %329 = vmatprep.subr.mxu0 0.0
    %330 = vmatpush1.msra.mxu0 0.0
    %331 = vmatprep.subr.mxu0 0.0
    %332 = vmatpush1.msra.mxu0 0.0
    %333 = vmatprep.subr.mxu0 0.0
    %334 = vmatpush1.msra.mxu0 0.0
    %335 = vmatprep.subr.mxu0 0.0
    %336 = vmatpush1.msra.mxu0 0.0
    %337 = vmatprep.subr.mxu0 0.0
    %338 = vmatpush1.msra.mxu0 0.0
    %339 = vmatprep.subr.mxu0 0.0
    %340 = vmatpush1.msra.mxu0 0.0
    %341 = vmatprep.subr.mxu0 0.0
    %342 = vmatpush1.msra.mxu0 0.0
    %343 = vmatprep.subr.mxu0 0.0
    %344 = vmatpush1.msra.mxu0 0.0
    %345 = vmatprep.mubr.f32.mxu0 0.0
    %346 = vmatmul.mubr.f32.gmra.mrb[0].mxu0 %v279
    %v347 = vpop.f32.mrb[0].mxu0
    %v348 = vadd.f32 %v83, %v347
    %v349 = vpop.f32.mrb[0].mxu0
    %350 = vdwg.mxu0
    %352 = vrot.lane.b32.xlu0 %v276, 96
    %v353 = vpop.permute.xlu0 %352
    %v354 = vsel %vm167, %v353, 0
    %356 = vmatprep.subr.mxu0 0.0
    %357 = vmatpush1.msra.mxu0 %v163
    %358 = vmatprep.subr.mxu0 0.0
    %359 = vmatpush1.msra.mxu0 %v164
    %360 = vmatprep.subr.mxu0 0.0
    %361 = vmatpush1.msra.mxu0 %v165
    %362 = vmatprep.subr.mxu0 0.0
    %363 = vmatpush1.msra.mxu0 %v166
    %364 = vmatprep.subr.mxu0 0.0
    %365 = vmatpush1.msra.mxu0 0.0
    %366 = vmatprep.subr.mxu0 0.0
    %367 = vmatpush1.msra.mxu0 0.0
    %368 = vmatprep.subr.mxu0 0.0
    %369 = vmatpush1.msra.mxu0 0.0
    %370 = vmatprep.subr.mxu0 0.0
    %371 = vmatpush1.msra.mxu0 0.0
    %372 = vmatprep.subr.mxu0 0.0
    %373 = vmatpush1.msra.mxu0 0.0
    %374 = vmatprep.subr.mxu0 0.0
    %375 = vmatpush1.msra.mxu0 0.0
    %376 = vmatprep.subr.mxu0 0.0
    %377 = vmatpush1.msra.mxu0 0.0
    %378 = vmatprep.subr.mxu0 0.0
    %379 = vmatpush1.msra.mxu0 0.0
    %380 = vmatprep.subr.mxu0 0.0
    %381 = vmatpush1.msra.mxu0 0.0
    %382 = vmatprep.subr.mxu0 0.0
    %383 = vmatpush1.msra.mxu0 0.0
    %384 = vmatprep.subr.mxu0 0.0
    %385 = vmatpush1.msra.mxu0 0.0
    %386 = vmatprep.subr.mxu0 0.0
    %387 = vmatpush1.msra.mxu0 0.0
    %388 = vmatprep.subr.mxu0 0.0
    %389 = vmatpush1.msra.mxu0 0.0
    %390 = vmatprep.subr.mxu0 0.0
    %391 = vmatpush1.msra.mxu0 0.0
    %392 = vmatprep.subr.mxu0 0.0
    %393 = vmatpush1.msra.mxu0 0.0
    %394 = vmatprep.subr.mxu0 0.0
    %395 = vmatpush1.msra.mxu0 0.0
    %396 = vmatprep.subr.mxu0 0.0
    %397 = vmatpush1.msra.mxu0 0.0
    %398 = vmatprep.subr.mxu0 0.0
    %399 = vmatpush1.msra.mxu0 0.0
    %400 = vmatprep.subr.mxu0 0.0
    %401 = vmatpush1.msra.mxu0 0.0
    %402 = vmatprep.subr.mxu0 0.0
    %403 = vmatpush1.msra.mxu0 0.0
    %404 = vmatprep.subr.mxu0 0.0
    %405 = vmatpush1.msra.mxu0 0.0
    %406 = vmatprep.subr.mxu0 0.0
    %407 = vmatpush1.msra.mxu0 0.0
    %408 = vmatprep.subr.mxu0 0.0
    %409 = vmatpush1.msra.mxu0 0.0
    %410 = vmatprep.subr.mxu0 0.0
    %411 = vmatpush1.msra.mxu0 0.0
    %412 = vmatprep.subr.mxu0 0.0
    %413 = vmatpush1.msra.mxu0 0.0
    %414 = vmatprep.subr.mxu0 0.0
    %415 = vmatpush1.msra.mxu0 0.0
    %416 = vmatprep.subr.mxu0 0.0
    %417 = vmatpush1.msra.mxu0 0.0
    %418 = vmatprep.subr.mxu0 0.0
    %419 = vmatpush1.msra.mxu0 0.0
    %420 = vmatprep.mubr.f32.mxu0 0.0
    %421 = vmatmul.mubr.f32.gmra.mrb[0].mxu0 %v354
    %v422 = vpop.f32.mrb[0].mxu0
    %v423 = vadd.f32 0.0, %v422
    %v424 = vpop.f32.mrb[0].mxu0
    %425 = vdwg.mxu0
    %v426 = vadd.f32 %v348, %v423
    %v427 = vxor.u32 %v426, 2147483648
    %v428 = vmul.f32 %v427, 1.442695
    %v429 = vpow.pop %v428
    %v430 = vadd.f32 %v429, 1.0
    %v431 = vrcp.pop %v430
    %v432 = vmul.f32 1.0, %v431
    %v433 = vadd.f32 %v423, %v255
    %435 = vrot.lane.b32.xlu0 %v433, 64
    %v436 = vpop.permute.xlu0 %435
    %v438 = vmul.f32 %v432, %v436
    %440 = vrot.lane.b32.xlu0 %v438, 64
    %v441 = vpop.permute.xlu0 %440
    %v443 = vadd.f32 %v348, %v441
    %v444 = vtanh.pop %v443
    %v445 = vsub.f32 1.0, %v432
    %447 = vrot.lane.b32.xlu0 %v444, 96
    %v448 = vpop.permute.xlu0 %447
    %v450 = vmul.f32 %v445, %v448
    %v451 = vmul.f32 %v432, %v276
    %v452 = vadd.f32 %v450, %v451
    %v453 = vld [vmem:[#allocation2] sm:$0xff]
    %v454 = vld [vmem:[#allocation2 + $0x8] sm:$0xff]
    %v455 = vld [vmem:[#allocation2 + $0x10] sm:$0xff]
    %v456 = vld [vmem:[#allocation2 + $0x18] sm:$0xff]
    %s457 = scalar_lea.vmem %s4, 1
    %v458 = vld [vmem:[%s457] sm:$0x1]
    %v460 = vlaneseq
    %v461 = vshrl.u32 %v460, 7
    %v462 = vsub.s32 0, %v461
    %v463 = vrot.slane %v458, %v462
    %465 = vmatprep.subr.mxu0 0.0
    %466 = vmatpush1.msra.mxu0 %v453
    %467 = vmatprep.subr.mxu0 0.0
    %468 = vmatpush1.msra.mxu0 %v454
    %469 = vmatprep.subr.mxu0 0.0
    %470 = vmatpush1.msra.mxu0 %v455
    %471 = vmatprep.subr.mxu0 0.0
    %472 = vmatpush1.msra.mxu0 %v456
    %473 = vmatprep.subr.mxu0 0.0
    %474 = vmatpush1.msra.mxu0 0.0
    %475 = vmatprep.subr.mxu0 0.0
    %476 = vmatpush1.msra.mxu0 0.0
    %477 = vmatprep.subr.mxu0 0.0
    %478 = vmatpush1.msra.mxu0 0.0
    %479 = vmatprep.subr.mxu0 0.0
    %480 = vmatpush1.msra.mxu0 0.0
    %481 = vmatprep.subr.mxu0 0.0
    %482 = vmatpush1.msra.mxu0 0.0
    %483 = vmatprep.subr.mxu0 0.0
    %484 = vmatpush1.msra.mxu0 0.0
    %485 = vmatprep.subr.mxu0 0.0
    %486 = vmatpush1.msra.mxu0 0.0
    %487 = vmatprep.subr.mxu0 0.0
    %488 = vmatpush1.msra.mxu0 0.0
    %489 = vmatprep.subr.mxu0 0.0
    %490 = vmatpush1.msra.mxu0 0.0
    %491 = vmatprep.subr.mxu0 0.0
    %492 = vmatpush1.msra.mxu0 0.0
    %493 = vmatprep.subr.mxu0 0.0
    %494 = vmatpush1.msra.mxu0 0.0
    %495 = vmatprep.subr.mxu0 0.0
    %496 = vmatpush1.msra.mxu0 0.0
    %497 = vmatprep.subr.mxu0 0.0
    %498 = vmatpush1.msra.mxu0 0.0
    %499 = vmatprep.subr.mxu0 0.0
    %500 = vmatpush1.msra.mxu0 0.0
    %501 = vmatprep.subr.mxu0 0.0
    %502 = vmatpush1.msra.mxu0 0.0
    %503 = vmatprep.subr.mxu0 0.0
    %504 = vmatpush1.msra.mxu0 0.0
    %505 = vmatprep.subr.mxu0 0.0
    %506 = vmatpush1.msra.mxu0 0.0
    %507 = vmatprep.subr.mxu0 0.0
    %508 = vmatpush1.msra.mxu0 0.0
    %509 = vmatprep.subr.mxu0 0.0
    %510 = vmatpush1.msra.mxu0 0.0
    %511 = vmatprep.subr.mxu0 0.0
    %512 = vmatpush1.msra.mxu0 0.0
    %513 = vmatprep.subr.mxu0 0.0
    %514 = vmatpush1.msra.mxu0 0.0
    %515 = vmatprep.subr.mxu0 0.0
    %516 = vmatpush1.msra.mxu0 0.0
    %517 = vmatprep.subr.mxu0 0.0
    %518 = vmatpush1.msra.mxu0 0.0
    %519 = vmatprep.subr.mxu0 0.0
    %520 = vmatpush1.msra.mxu0 0.0
    %521 = vmatprep.subr.mxu0 0.0
    %522 = vmatpush1.msra.mxu0 0.0
    %523 = vmatprep.subr.mxu0 0.0
    %524 = vmatpush1.msra.mxu0 0.0
    %525 = vmatprep.subr.mxu0 0.0
    %526 = vmatpush1.msra.mxu0 0.0
    %527 = vmatprep.subr.mxu0 0.0
    %528 = vmatpush1.msra.mxu0 0.0
    %529 = vmatprep.mubr.f32.mxu0 0.0
    %530 = vmatmul.mubr.f32.gmra.mrb[0].mxu0 %v354
    %v531 = vpop.f32.mrb[0].mxu0
    %v532 = vadd.f32 %v463, %v531
    %v533 = vpop.f32.mrb[0].mxu0
    %534 = vdwg.mxu0
    %s535 = scalar_lea.vmem [#allocation5], 32
    %v536 = vld [vmem:[%s535] sm:$0xff]
    %v537 = vld [vmem:[%s535 + $0x8] sm:$0xff]
    %v538 = vld [vmem:[%s535 + $0x10] sm:$0xff]
    %v539 = vld [vmem:[%s535 + $0x18] sm:$0xff]
    %540 = vmatprep.subr.mxu0 0.0
    %541 = vmatpush1.msra.mxu0 %v536
    %542 = vmatprep.subr.mxu0 0.0
    %543 = vmatpush1.msra.mxu0 %v537
    %544 = vmatprep.subr.mxu0 0.0
    %545 = vmatpush1.msra.mxu0 %v538
    %546 = vmatprep.subr.mxu0 0.0
    %547 = vmatpush1.msra.mxu0 %v539
    %548 = vmatprep.subr.mxu0 0.0
    %549 = vmatpush1.msra.mxu0 0.0
    %550 = vmatprep.subr.mxu0 0.0
    %551 = vmatpush1.msra.mxu0 0.0
    %552 = vmatprep.subr.mxu0 0.0
    %553 = vmatpush1.msra.mxu0 0.0
    %554 = vmatprep.subr.mxu0 0.0
    %555 = vmatpush1.msra.mxu0 0.0
    %556 = vmatprep.subr.mxu0 0.0
    %557 = vmatpush1.msra.mxu0 0.0
    %558 = vmatprep.subr.mxu0 0.0
    %559 = vmatpush1.msra.mxu0 0.0
    %560 = vmatprep.subr.mxu0 0.0
    %561 = vmatpush1.msra.mxu0 0.0
    %562 = vmatprep.subr.mxu0 0.0
    %563 = vmatpush1.msra.mxu0 0.0
    %564 = vmatprep.subr.mxu0 0.0
    %565 = vmatpush1.msra.mxu0 0.0
    %566 = vmatprep.subr.mxu0 0.0
    %567 = vmatpush1.msra.mxu0 0.0
    %568 = vmatprep.subr.mxu0 0.0
    %569 = vmatpush1.msra.mxu0 0.0
    %570 = vmatprep.subr.mxu0 0.0
    %571 = vmatpush1.msra.mxu0 0.0
    %572 = vmatprep.subr.mxu0 0.0
    %573 = vmatpush1.msra.mxu0 0.0
    %574 = vmatprep.subr.mxu0 0.0
    %575 = vmatpush1.msra.mxu0 0.0
    %576 = vmatprep.subr.mxu0 0.0
    %577 = vmatpush1.msra.mxu0 0.0
    %578 = vmatprep.subr.mxu0 0.0
    %579 = vmatpush1.msra.mxu0 0.0
    %580 = vmatprep.subr.mxu0 0.0
    %581 = vmatpush1.msra.mxu0 0.0
    %582 = vmatprep.subr.mxu0 0.0
    %583 = vmatpush1.msra.mxu0 0.0
    %584 = vmatprep.subr.mxu0 0.0
    %585 = vmatpush1.msra.mxu0 0.0
    %586 = vmatprep.subr.mxu0 0.0
    %587 = vmatpush1.msra.mxu0 0.0
    %588 = vmatprep.subr.mxu0 0.0
    %589 = vmatpush1.msra.mxu0 0.0
    %590 = vmatprep.subr.mxu0 0.0
    %591 = vmatpush1.msra.mxu0 0.0
    %592 = vmatprep.subr.mxu0 0.0
    %593 = vmatpush1.msra.mxu0 0.0
    %594 = vmatprep.subr.mxu0 0.0
    %595 = vmatpush1.msra.mxu0 0.0
    %596 = vmatprep.subr.mxu0 0.0
    %597 = vmatpush1.msra.mxu0 0.0
    %598 = vmatprep.subr.mxu0 0.0
    %599 = vmatpush1.msra.mxu0 0.0
    %600 = vmatprep.subr.mxu0 0.0
    %601 = vmatpush1.msra.mxu0 0.0
    %602 = vmatprep.subr.mxu0 0.0
    %603 = vmatpush1.msra.mxu0 0.0
    %604 = vmatprep.mubr.f32.mxu0 0.0
    %605 = vmatmul.mubr.f32.gmra.mrb[0].mxu0 %v169
    %v606 = vpop.f32.mrb[0].mxu0
    %v607 = vadd.f32 0.0, %v606
    %v608 = vpop.f32.mrb[0].mxu0
    %609 = vdwg.mxu0
    %s610 = scalar_lea.vmem [#allocation7], 1
    %v611 = vld [vmem:[%s610] sm:$0x1]
    %v612 = vadd.f32 %v532, %v607
    %v613 = vxor.u32 %v612, 2147483648
    %v614 = vmul.f32 %v613, 1.442695
    %v615 = vpow.pop %v614
    %v616 = vadd.f32 %v615, 1.0
    %v617 = vrcp.pop %v616
    %v618 = vmul.f32 1.0, %v617
    %v620 = vlaneseq
    %v621 = vshrl.u32 %v620, 7
    %v622 = vsub.s32 0, %v621
    %v623 = vrot.slane %v611, %v622
    %624 = vrot.lane.b32.xlu0 %v623, 64
    %v625 = vpop.permute.xlu0 %624
    %v627 = vadd.f32 %v607, %v625
    %629 = vrot.lane.b32.xlu0 %v627, 64
    %v630 = vpop.permute.xlu0 %629
    %v632 = vmul.f32 %v618, %v630
    %634 = vrot.lane.b32.xlu0 %v632, 64
    %v635 = vpop.permute.xlu0 %634
    %v637 = vadd.f32 %v532, %v635
    %v638 = vtanh.pop %v637
    %v639 = vsub.f32 1.0, %v618
    %641 = vrot.lane.b32.xlu0 %v638, 96
    %v642 = vpop.permute.xlu0 %641
    %v644 = vmul.f32 %v639, %v642
    %v645 = vmul.f32 %v618, 0.0
    %v646 = vadd.f32 %v644, %v645
    %v647 = vrot.slane %v74, 2
    %v648 = vrot.slane %v75, 1
    %v649 = vsel %vm88, %v648, %v647
    %v650 = vsel %vm90, %v649, 0
    %652 = vmatprep.subr.mxu0 0.0
    %653 = vmatpush1.msra.mxu0 %v76
    %654 = vmatprep.subr.mxu0 0.0
    %655 = vmatpush1.msra.mxu0 %v77
    %656 = vmatprep.subr.mxu0 0.0
    %657 = vmatpush1.msra.mxu0 0.0
    %658 = vmatprep.subr.mxu0 0.0
    %659 = vmatpush1.msra.mxu0 0.0
    %660 = vmatprep.subr.mxu0 0.0
    %661 = vmatpush1.msra.mxu0 0.0
    %662 = vmatprep.subr.mxu0 0.0
    %663 = vmatpush1.msra.mxu0 0.0
    %664 = vmatprep.subr.mxu0 0.0
    %665 = vmatpush1.msra.mxu0 0.0
    %666 = vmatprep.subr.mxu0 0.0
    %667 = vmatpush1.msra.mxu0 0.0
    %668 = vmatprep.subr.mxu0 0.0
    %669 = vmatpush1.msra.mxu0 0.0
    %670 = vmatprep.subr.mxu0 0.0
    %671 = vmatpush1.msra.mxu0 0.0
    %672 = vmatprep.subr.mxu0 0.0
    %673 = vmatpush1.msra.mxu0 0.0
    %674 = vmatprep.subr.mxu0 0.0
    %675 = vmatpush1.msra.mxu0 0.0
    %676 = vmatprep.subr.mxu0 0.0
    %677 = vmatpush1.msra.mxu0 0.0
    %678 = vmatprep.subr.mxu0 0.0
    %679 = vmatpush1.msra.mxu0 0.0
    %680 = vmatprep.subr.mxu0 0.0
    %681 = vmatpush1.msra.mxu0 0.0
    %682 = vmatprep.subr.mxu0 0.0
    %683 = vmatpush1.msra.mxu0 0.0
    %684 = vmatprep.subr.mxu0 0.0
    %685 = vmatpush1.msra.mxu0 0.0
    %686 = vmatprep.subr.mxu0 0.0
    %687 = vmatpush1.msra.mxu0 0.0
    %688 = vmatprep.subr.mxu0 0.0
    %689 = vmatpush1.msra.mxu0 0.0
    %690 = vmatprep.subr.mxu0 0.0
    %691 = vmatpush1.msra.mxu0 0.0
    %692 = vmatprep.subr.mxu0 0.0
    %693 = vmatpush1.msra.mxu0 0.0
    %694 = vmatprep.subr.mxu0 0.0
    %695 = vmatpush1.msra.mxu0 0.0
    %696 = vmatprep.subr.mxu0 0.0
    %697 = vmatpush1.msra.mxu0 0.0
    %698 = vmatprep.subr.mxu0 0.0
    %699 = vmatpush1.msra.mxu0 0.0
    %700 = vmatprep.subr.mxu0 0.0
    %701 = vmatpush1.msra.mxu0 0.0
    %702 = vmatprep.subr.mxu0 0.0
    %703 = vmatpush1.msra.mxu0 0.0
    %704 = vmatprep.subr.mxu0 0.0
    %705 = vmatpush1.msra.mxu0 0.0
    %706 = vmatprep.subr.mxu0 0.0
    %707 = vmatpush1.msra.mxu0 0.0
    %708 = vmatprep.subr.mxu0 0.0
    %709 = vmatpush1.msra.mxu0 0.0
    %710 = vmatprep.subr.mxu0 0.0
    %711 = vmatpush1.msra.mxu0 0.0
    %712 = vmatprep.subr.mxu0 0.0
    %713 = vmatpush1.msra.mxu0 0.0
    %714 = vmatprep.subr.mxu0 0.0
    %715 = vmatpush1.msra.mxu0 0.0
    %716 = vmatprep.mubr.f32.mxu0 0.0
    %717 = vmatmul.mubr.f32.gmra.mrb[0].mxu0 %v650
    %v718 = vpop.f32.mrb[0].mxu0
    %v719 = vadd.f32 %v83, %v718
    %v720 = vpop.f32.mrb[0].mxu0
    %721 = vdwg.mxu0
    %723 = vrot.lane.b32.xlu0 %v452, 96
    %v724 = vpop.permute.xlu0 %723
    %v725 = vsel %vm167, %v724, 0
    %727 = vmatprep.subr.mxu0 0.0
    %728 = vmatpush1.msra.mxu0 %v163
    %729 = vmatprep.subr.mxu0 0.0
    %730 = vmatpush1.msra.mxu0 %v164
    %731 = vmatprep.subr.mxu0 0.0
    %732 = vmatpush1.msra.mxu0 %v165
    %733 = vmatprep.subr.mxu0 0.0
    %734 = vmatpush1.msra.mxu0 %v166
    %735 = vmatprep.subr.mxu0 0.0
    %736 = vmatpush1.msra.mxu0 0.0
    %737 = vmatprep.subr.mxu0 0.0
    %738 = vmatpush1.msra.mxu0 0.0
    %739 = vmatprep.subr.mxu0 0.0
    %740 = vmatpush1.msra.mxu0 0.0
    %741 = vmatprep.subr.mxu0 0.0
    %742 = vmatpush1.msra.mxu0 0.0
    %743 = vmatprep.subr.mxu0 0.0
    %744 = vmatpush1.msra.mxu0 0.0
    %745 = vmatprep.subr.mxu0 0.0
    %746 = vmatpush1.msra.mxu0 0.0
    %747 = vmatprep.subr.mxu0 0.0
    %748 = vmatpush1.msra.mxu0 0.0
    %749 = vmatprep.subr.mxu0 0.0
    %750 = vmatpush1.msra.mxu0 0.0
    %751 = vmatprep.subr.mxu0 0.0
    %752 = vmatpush1.msra.mxu0 0.0
    %753 = vmatprep.subr.mxu0 0.0
    %754 = vmatpush1.msra.mxu0 0.0
    %755 = vmatprep.subr.mxu0 0.0
    %756 = vmatpush1.msra.mxu0 0.0
    %757 = vmatprep.subr.mxu0 0.0
    %758 = vmatpush1.msra.mxu0 0.0
    %759 = vmatprep.subr.mxu0 0.0
    %760 = vmatpush1.msra.mxu0 0.0
    %761 = vmatprep.subr.mxu0 0.0
    %762 = vmatpush1.msra.mxu0 0.0
    %763 = vmatprep.subr.mxu0 0.0
    %764 = vmatpush1.msra.mxu0 0.0
    %765 = vmatprep.subr.mxu0 0.0
    %766 = vmatpush1.msra.mxu0 0.0
    %767 = vmatprep.subr.mxu0 0.0
    %768 = vmatpush1.msra.mxu0 0.0
    %769 = vmatprep.subr.mxu0 0.0
    %770 = vmatpush1.msra.mxu0 0.0
    %771 = vmatprep.subr.mxu0 0.0
    %772 = vmatpush1.msra.mxu0 0.0
    %773 = vmatprep.subr.mxu0 0.0
    %774 = vmatpush1.msra.mxu0 0.0
    %775 = vmatprep.subr.mxu0 0.0
    %776 = vmatpush1.msra.mxu0 0.0
    %777 = vmatprep.subr.mxu0 0.0
    %778 = vmatpush1.msra.mxu0 0.0
    %779 = vmatprep.subr.mxu0 0.0
    %780 = vmatpush1.msra.mxu0 0.0
    %781 = vmatprep.subr.mxu0 0.0
    %782 = vmatpush1.msra.mxu0 0.0
    %783 = vmatprep.subr.mxu0 0.0
    %784 = vmatpush1.msra.mxu0 0.0
    %785 = vmatprep.subr.mxu0 0.0
    %786 = vmatpush1.msra.mxu0 0.0
    %787 = vmatprep.subr.mxu0 0.0
    %788 = vmatpush1.msra.mxu0 0.0
    %789 = vmatprep.subr.mxu0 0.0
    %790 = vmatpush1.msra.mxu0 0.0
    %791 = vmatprep.mubr.f32.mxu0 0.0
    %792 = vmatmul.mubr.f32.gmra.mrb[0].mxu0 %v725
    %v793 = vpop.f32.mrb[0].mxu0
    %v794 = vadd.f32 0.0, %v793
    %v795 = vpop.f32.mrb[0].mxu0
    %796 = vdwg.mxu0
    %v797 = vadd.f32 %v719, %v794
    %v798 = vxor.u32 %v797, 2147483648
    %v799 = vmul.f32 %v798, 1.442695
    %v800 = vpow.pop %v799
    %v801 = vadd.f32 %v800, 1.0
    %v802 = vrcp.pop %v801
    %v803 = vmul.f32 1.0, %v802
    %v804 = vadd.f32 %v794, %v255
    %806 = vrot.lane.b32.xlu0 %v804, 64
    %v807 = vpop.permute.xlu0 %806
    %v809 = vmul.f32 %v803, %v807
    %811 = vrot.lane.b32.xlu0 %v809, 64
    %v812 = vpop.permute.xlu0 %811
    %v814 = vadd.f32 %v719, %v812
    %v815 = vtanh.pop %v814
    %v816 = vsub.f32 1.0, %v803
    %818 = vrot.lane.b32.xlu0 %v815, 96
    %v819 = vpop.permute.xlu0 %818
    %v821 = vmul.f32 %v816, %v819
    %v822 = vmul.f32 %v803, %v452
    %v823 = vadd.f32 %v821, %v822
    %824 = vmatprep.subr.mxu0 0.0
    %825 = vmatpush1.msra.mxu0 %v453
    %826 = vmatprep.subr.mxu0 0.0
    %827 = vmatpush1.msra.mxu0 %v454
    %828 = vmatprep.subr.mxu0 0.0
    %829 = vmatpush1.msra.mxu0 %v455
    %830 = vmatprep.subr.mxu0 0.0
    %831 = vmatpush1.msra.mxu0 %v456
    %832 = vmatprep.subr.mxu0 0.0
    %833 = vmatpush1.msra.mxu0 0.0
    %834 = vmatprep.subr.mxu0 0.0
    %835 = vmatpush1.msra.mxu0 0.0
    %836 = vmatprep.subr.mxu0 0.0
    %837 = vmatpush1.msra.mxu0 0.0
    %838 = vmatprep.subr.mxu0 0.0
    %839 = vmatpush1.msra.mxu0 0.0
    %840 = vmatprep.subr.mxu0 0.0
    %841 = vmatpush1.msra.mxu0 0.0
    %842 = vmatprep.subr.mxu0 0.0
    %843 = vmatpush1.msra.mxu0 0.0
    %844 = vmatprep.subr.mxu0 0.0
    %845 = vmatpush1.msra.mxu0 0.0
    %846 = vmatprep.subr.mxu0 0.0
    %847 = vmatpush1.msra.mxu0 0.0
    %848 = vmatprep.subr.mxu0 0.0
    %849 = vmatpush1.msra.mxu0 0.0
    %850 = vmatprep.subr.mxu0 0.0
    %851 = vmatpush1.msra.mxu0 0.0
    %852 = vmatprep.subr.mxu0 0.0
    %853 = vmatpush1.msra.mxu0 0.0
    %854 = vmatprep.subr.mxu0 0.0
    %855 = vmatpush1.msra.mxu0 0.0
    %856 = vmatprep.subr.mxu0 0.0
    %857 = vmatpush1.msra.mxu0 0.0
    %858 = vmatprep.subr.mxu0 0.0
    %859 = vmatpush1.msra.mxu0 0.0
    %860 = vmatprep.subr.mxu0 0.0
    %861 = vmatpush1.msra.mxu0 0.0
    %862 = vmatprep.subr.mxu0 0.0
    %863 = vmatpush1.msra.mxu0 0.0
    %864 = vmatprep.subr.mxu0 0.0
    %865 = vmatpush1.msra.mxu0 0.0
    %866 = vmatprep.subr.mxu0 0.0
    %867 = vmatpush1.msra.mxu0 0.0
    %868 = vmatprep.subr.mxu0 0.0
    %869 = vmatpush1.msra.mxu0 0.0
    %870 = vmatprep.subr.mxu0 0.0
    %871 = vmatpush1.msra.mxu0 0.0
    %872 = vmatprep.subr.mxu0 0.0
    %873 = vmatpush1.msra.mxu0 0.0
    %874 = vmatprep.subr.mxu0 0.0
    %875 = vmatpush1.msra.mxu0 0.0
    %876 = vmatprep.subr.mxu0 0.0
    %877 = vmatpush1.msra.mxu0 0.0
    %878 = vmatprep.subr.mxu0 0.0
    %879 = vmatpush1.msra.mxu0 0.0
    %880 = vmatprep.subr.mxu0 0.0
    %881 = vmatpush1.msra.mxu0 0.0
    %882 = vmatprep.subr.mxu0 0.0
    %883 = vmatpush1.msra.mxu0 0.0
    %884 = vmatprep.subr.mxu0 0.0
    %885 = vmatpush1.msra.mxu0 0.0
    %886 = vmatprep.subr.mxu0 0.0
    %887 = vmatpush1.msra.mxu0 0.0
    %888 = vmatprep.mubr.f32.mxu0 0.0
    %889 = vmatmul.mubr.f32.gmra.mrb[0].mxu0 %v725
    %v890 = vpop.f32.mrb[0].mxu0
    %v891 = vadd.f32 %v463, %v890
    %v892 = vpop.f32.mrb[0].mxu0
    %893 = vdwg.mxu0
    %895 = vrot.lane.b32.xlu0 %v646, 96
    %v896 = vpop.permute.xlu0 %895
    %v897 = vsel %vm167, %v896, 0
    %899 = vmatprep.subr.mxu0 0.0
    %900 = vmatpush1.msra.mxu0 %v536
    %901 = vmatprep.subr.mxu0 0.0
    %902 = vmatpush1.msra.mxu0 %v537
    %903 = vmatprep.subr.mxu0 0.0
    %904 = vmatpush1.msra.mxu0 %v538
    %905 = vmatprep.subr.mxu0 0.0
    %906 = vmatpush1.msra.mxu0 %v539
    %907 = vmatprep.subr.mxu0 0.0
    %908 = vmatpush1.msra.mxu0 0.0
    %909 = vmatprep.subr.mxu0 0.0
    %910 = vmatpush1.msra.mxu0 0.0
    %911 = vmatprep.subr.mxu0 0.0
    %912 = vmatpush1.msra.mxu0 0.0
    %913 = vmatprep.subr.mxu0 0.0
    %914 = vmatpush1.msra.mxu0 0.0
    %915 = vmatprep.subr.mxu0 0.0
    %916 = vmatpush1.msra.mxu0 0.0
    %917 = vmatprep.subr.mxu0 0.0
    %918 = vmatpush1.msra.mxu0 0.0
    %919 = vmatprep.subr.mxu0 0.0
    %920 = vmatpush1.msra.mxu0 0.0
    %921 = vmatprep.subr.mxu0 0.0
    %922 = vmatpush1.msra.mxu0 0.0
    %923 = vmatprep.subr.mxu0 0.0
    %924 = vmatpush1.msra.mxu0 0.0
    %925 = vmatprep.subr.mxu0 0.0
    %926 = vmatpush1.msra.mxu0 0.0
    %927 = vmatprep.subr.mxu0 0.0
    %928 = vmatpush1.msra.mxu0 0.0
    %929 = vmatprep.subr.mxu0 0.0
    %930 = vmatpush1.msra.mxu0 0.0
    %931 = vmatprep.subr.mxu0 0.0
    %932 = vmatpush1.msra.mxu0 0.0
    %933 = vmatprep.subr.mxu0 0.0
    %934 = vmatpush1.msra.mxu0 0.0
    %935 = vmatprep.subr.mxu0 0.0
    %936 = vmatpush1.msra.mxu0 0.0
    %937 = vmatprep.subr.mxu0 0.0
    %938 = vmatpush1.msra.mxu0 0.0
    %939 = vmatprep.subr.mxu0 0.0
    %940 = vmatpush1.msra.mxu0 0.0
    %941 = vmatprep.subr.mxu0 0.0
    %942 = vmatpush1.msra.mxu0 0.0
    %943 = vmatprep.subr.mxu0 0.0
    %944 = vmatpush1.msra.mxu0 0.0
    %945 = vmatprep.subr.mxu0 0.0
    %946 = vmatpush1.msra.mxu0 0.0
    %947 = vmatprep.subr.mxu0 0.0
    %948 = vmatpush1.msra.mxu0 0.0
    %949 = vmatprep.subr.mxu0 0.0
    %950 = vmatpush1.msra.mxu0 0.0
    %951 = vmatprep.subr.mxu0 0.0
    %952 = vmatpush1.msra.mxu0 0.0
    %953 = vmatprep.subr.mxu0 0.0
    %954 = vmatpush1.msra.mxu0 0.0
    %955 = vmatprep.subr.mxu0 0.0
    %956 = vmatpush1.msra.mxu0 0.0
    %957 = vmatprep.subr.mxu0 0.0
    %958 = vmatpush1.msra.mxu0 0.0
    %959 = vmatprep.subr.mxu0 0.0
    %960 = vmatpush1.msra.mxu0 0.0
    %961 = vmatprep.subr.mxu0 0.0
    %962 = vmatpush1.msra.mxu0 0.0
    %963 = vmatprep.mubr.f32.mxu0 0.0
    %964 = vmatmul.mubr.f32.gmra.mrb[0].mxu0 %v897
    %v965 = vpop.f32.mrb[0].mxu0
    %v966 = vadd.f32 0.0, %v965
    %v967 = vpop.f32.mrb[0].mxu0
    %968 = vdwg.mxu0
    %v969 = vadd.f32 %v891, %v966
    %v970 = vxor.u32 %v969, 2147483648
    %v971 = vmul.f32 %v970, 1.442695
    %v972 = vpow.pop %v971
    %v973 = vadd.f32 %v972, 1.0
    %v974 = vrcp.pop %v973
    %v975 = vmul.f32 1.0, %v974
    %v976 = vadd.f32 %v966, %v625
    %978 = vrot.lane.b32.xlu0 %v976, 64
    %v979 = vpop.permute.xlu0 %978
    %v981 = vmul.f32 %v975, %v979
    %983 = vrot.lane.b32.xlu0 %v981, 64
    %v984 = vpop.permute.xlu0 %983
    %v986 = vadd.f32 %v891, %v984
    %v987 = vtanh.pop %v986
    %v988 = vsub.f32 1.0, %v975
    %990 = vrot.lane.b32.xlu0 %v987, 96
    %v991 = vpop.permute.xlu0 %990
    %v993 = vmul.f32 %v988, %v991
    %v994 = vmul.f32 %v975, %v646
    %v995 = vadd.f32 %v993, %v994
    %s996 = scalar_lea.vmem [#allocation2], 32
    %v997 = vld [vmem:[%s996] sm:$0xff]
    %v998 = vld [vmem:[%s996 + $0x8] sm:$0xff]
    %v999 = vld [vmem:[%s996 + $0x10] sm:$0xff]
    %v1000 = vld [vmem:[%s996 + $0x18] sm:$0xff]
    %s1001 = scalar_lea.vmem %s4, 2
    %v1002 = vld [vmem:[%s1001] sm:$0x1]
    %v1004 = vlaneseq
    %v1005 = vshrl.u32 %v1004, 7
    %v1006 = vsub.s32 0, %v1005
    %v1007 = vrot.slane %v1002, %v1006
    %1009 = vmatprep.subr.mxu0 0.0
    %1010 = vmatpush1.msra.mxu0 %v997
    %1011 = vmatprep.subr.mxu0 0.0
    %1012 = vmatpush1.msra.mxu0 %v998
    %1013 = vmatprep.subr.mxu0 0.0
    %1014 = vmatpush1.msra.mxu0 %v999
    %1015 = vmatprep.subr.mxu0 0.0
    %1016 = vmatpush1.msra.mxu0 %v1000
    %1017 = vmatprep.subr.mxu0 0.0
    %1018 = vmatpush1.msra.mxu0 0.0
    %1019 = vmatprep.subr.mxu0 0.0
    %1020 = vmatpush1.msra.mxu0 0.0
    %1021 = vmatprep.subr.mxu0 0.0
    %1022 = vmatpush1.msra.mxu0 0.0
    %1023 = vmatprep.subr.mxu0 0.0
    %1024 = vmatpush1.msra.mxu0 0.0
    %1025 = vmatprep.subr.mxu0 0.0
    %1026 = vmatpush1.msra.mxu0 0.0
    %1027 = vmatprep.subr.mxu0 0.0
    %1028 = vmatpush1.msra.mxu0 0.0
    %1029 = vmatprep.subr.mxu0 0.0
    %1030 = vmatpush1.msra.mxu0 0.0
    %1031 = vmatprep.subr.mxu0 0.0
    %1032 = vmatpush1.msra.mxu0 0.0
    %1033 = vmatprep.subr.mxu0 0.0
    %1034 = vmatpush1.msra.mxu0 0.0
    %1035 = vmatprep.subr.mxu0 0.0
    %1036 = vmatpush1.msra.mxu0 0.0
    %1037 = vmatprep.subr.mxu0 0.0
    %1038 = vmatpush1.msra.mxu0 0.0
    %1039 = vmatprep.subr.mxu0 0.0
    %1040 = vmatpush1.msra.mxu0 0.0
    %1041 = vmatprep.subr.mxu0 0.0
    %1042 = vmatpush1.msra.mxu0 0.0
    %1043 = vmatprep.subr.mxu0 0.0
    %1044 = vmatpush1.msra.mxu0 0.0
    %1045 = vmatprep.subr.mxu0 0.0
    %1046 = vmatpush1.msra.mxu0 0.0
    %1047 = vmatprep.subr.mxu0 0.0
    %1048 = vmatpush1.msra.mxu0 0.0
    %1049 = vmatprep.subr.mxu0 0.0
    %1050 = vmatpush1.msra.mxu0 0.0
    %1051 = vmatprep.subr.mxu0 0.0
    %1052 = vmatpush1.msra.mxu0 0.0
    %1053 = vmatprep.subr.mxu0 0.0
    %1054 = vmatpush1.msra.mxu0 0.0
    %1055 = vmatprep.subr.mxu0 0.0
    %1056 = vmatpush1.msra.mxu0 0.0
    %1057 = vmatprep.subr.mxu0 0.0
    %1058 = vmatpush1.msra.mxu0 0.0
    %1059 = vmatprep.subr.mxu0 0.0
    %1060 = vmatpush1.msra.mxu0 0.0
    %1061 = vmatprep.subr.mxu0 0.0
    %1062 = vmatpush1.msra.mxu0 0.0
    %1063 = vmatprep.subr.mxu0 0.0
    %1064 = vmatpush1.msra.mxu0 0.0
    %1065 = vmatprep.subr.mxu0 0.0
    %1066 = vmatpush1.msra.mxu0 0.0
    %1067 = vmatprep.subr.mxu0 0.0
    %1068 = vmatpush1.msra.mxu0 0.0
    %1069 = vmatprep.subr.mxu0 0.0
    %1070 = vmatpush1.msra.mxu0 0.0
    %1071 = vmatprep.subr.mxu0 0.0
    %1072 = vmatpush1.msra.mxu0 0.0
    %1073 = vmatprep.mubr.f32.mxu0 0.0
    %1074 = vmatmul.mubr.f32.gmra.mrb[0].mxu0 %v897
    %v1075 = vpop.f32.mrb[0].mxu0
    %v1076 = vadd.f32 %v1007, %v1075
    %v1077 = vpop.f32.mrb[0].mxu0
    %1078 = vdwg.mxu0
    %s1079 = scalar_lea.vmem [#allocation5], 64
    %v1080 = vld [vmem:[%s1079] sm:$0xff]
    %v1081 = vld [vmem:[%s1079 + $0x8] sm:$0xff]
    %v1082 = vld [vmem:[%s1079 + $0x10] sm:$0xff]
    %v1083 = vld [vmem:[%s1079 + $0x18] sm:$0xff]
    %1084 = vmatprep.subr.mxu0 0.0
    %1085 = vmatpush1.msra.mxu0 %v1080
    %1086 = vmatprep.subr.mxu0 0.0
    %1087 = vmatpush1.msra.mxu0 %v1081
    %1088 = vmatprep.subr.mxu0 0.0
    %1089 = vmatpush1.msra.mxu0 %v1082
    %1090 = vmatprep.subr.mxu0 0.0
    %1091 = vmatpush1.msra.mxu0 %v1083
    %1092 = vmatprep.subr.mxu0 0.0
    %1093 = vmatpush1.msra.mxu0 0.0
    %1094 = vmatprep.subr.mxu0 0.0
    %1095 = vmatpush1.msra.mxu0 0.0
    %1096 = vmatprep.subr.mxu0 0.0
    %1097 = vmatpush1.msra.mxu0 0.0
    %1098 = vmatprep.subr.mxu0 0.0
    %1099 = vmatpush1.msra.mxu0 0.0
    %1100 = vmatprep.subr.mxu0 0.0
    %1101 = vmatpush1.msra.mxu0 0.0
    %1102 = vmatprep.subr.mxu0 0.0
    %1103 = vmatpush1.msra.mxu0 0.0
    %1104 = vmatprep.subr.mxu0 0.0
    %1105 = vmatpush1.msra.mxu0 0.0
    %1106 = vmatprep.subr.mxu0 0.0
    %1107 = vmatpush1.msra.mxu0 0.0
    %1108 = vmatprep.subr.mxu0 0.0
    %1109 = vmatpush1.msra.mxu0 0.0
    %1110 = vmatprep.subr.mxu0 0.0
    %1111 = vmatpush1.msra.mxu0 0.0
    %1112 = vmatprep.subr.mxu0 0.0
    %1113 = vmatpush1.msra.mxu0 0.0
    %1114 = vmatprep.subr.mxu0 0.0
    %1115 = vmatpush1.msra.mxu0 0.0
    %1116 = vmatprep.subr.mxu0 0.0
    %1117 = vmatpush1.msra.mxu0 0.0
    %1118 = vmatprep.subr.mxu0 0.0
    %1119 = vmatpush1.msra.mxu0 0.0
    %1120 = vmatprep.subr.mxu0 0.0
    %1121 = vmatpush1.msra.mxu0 0.0
    %1122 = vmatprep.subr.mxu0 0.0
    %1123 = vmatpush1.msra.mxu0 0.0
    %1124 = vmatprep.subr.mxu0 0.0
    %1125 = vmatpush1.msra.mxu0 0.0
    %1126 = vmatprep.subr.mxu0 0.0
    %1127 = vmatpush1.msra.mxu0 0.0
    %1128 = vmatprep.subr.mxu0 0.0
    %1129 = vmatpush1.msra.mxu0 0.0
    %1130 = vmatprep.subr.mxu0 0.0
    %1131 = vmatpush1.msra.mxu0 0.0
    %1132 = vmatprep.subr.mxu0 0.0
    %1133 = vmatpush1.msra.mxu0 0.0
    %1134 = vmatprep.subr.mxu0 0.0
    %1135 = vmatpush1.msra.mxu0 0.0
    %1136 = vmatprep.subr.mxu0 0.0
    %1137 = vmatpush1.msra.mxu0 0.0
    %1138 = vmatprep.subr.mxu0 0.0
    %1139 = vmatpush1.msra.mxu0 0.0
    %1140 = vmatprep.subr.mxu0 0.0
    %1141 = vmatpush1.msra.mxu0 0.0
    %1142 = vmatprep.subr.mxu0 0.0
    %1143 = vmatpush1.msra.mxu0 0.0
    %1144 = vmatprep.subr.mxu0 0.0
    %1145 = vmatpush1.msra.mxu0 0.0
    %1146 = vmatprep.subr.mxu0 0.0
    %1147 = vmatpush1.msra.mxu0 0.0
    %1148 = vmatprep.mubr.f32.mxu0 0.0
    %1149 = vmatmul.mubr.f32.gmra.mrb[0].mxu0 %v169
    %v1150 = vpop.f32.mrb[0].mxu0
    %v1151 = vadd.f32 0.0, %v1150
    %v1152 = vpop.f32.mrb[0].mxu0
    %1153 = vdwg.mxu0
    %s1154 = scalar_lea.vmem [#allocation7], 2
    %v1155 = vld [vmem:[%s1154] sm:$0x1]
    %v1156 = vadd.f32 %v1076, %v1151
    %v1157 = vxor.u32 %v1156, 2147483648
    %v1158 = vmul.f32 %v1157, 1.442695
    %v1159 = vpow.pop %v1158
    %v1160 = vadd.f32 %v1159, 1.0
    %v1161 = vrcp.pop %v1160
    %v1162 = vmul.f32 1.0, %v1161
    %v1164 = vlaneseq
    %v1165 = vshrl.u32 %v1164, 7
    %v1166 = vsub.s32 0, %v1165
    %v1167 = vrot.slane %v1155, %v1166
    %1168 = vrot.lane.b32.xlu0 %v1167, 64
    %v1169 = vpop.permute.xlu0 %1168
    %v1171 = vadd.f32 %v1151, %v1169
    %1173 = vrot.lane.b32.xlu0 %v1171, 64
    %v1174 = vpop.permute.xlu0 %1173
    %v1176 = vmul.f32 %v1162, %v1174
    %1178 = vrot.lane.b32.xlu0 %v1176, 64
    %v1179 = vpop.permute.xlu0 %1178
    %v1181 = vadd.f32 %v1076, %v1179
    %v1182 = vtanh.pop %v1181
    %v1183 = vsub.f32 1.0, %v1162
    %1185 = vrot.lane.b32.xlu0 %v1182, 96
    %v1186 = vpop.permute.xlu0 %1185
    %v1188 = vmul.f32 %v1183, %v1186
    %v1189 = vmul.f32 %v1162, 0.0
    %v1190 = vadd.f32 %v1188, %v1189
    %v1191 = vrot.slane %v74, 3
    %v1192 = vrot.slane %v75, 2
    %v1193 = vsel %vm88, %v1192, %v1191
    %v1194 = vsel %vm90, %v1193, 0
    %1196 = vmatprep.subr.mxu0 0.0
    %1197 = vmatpush1.msra.mxu0 %v76
    %1198 = vmatprep.subr.mxu0 0.0
    %1199 = vmatpush1.msra.mxu0 %v77
    %1200 = vmatprep.subr.mxu0 0.0
    %1201 = vmatpush1.msra.mxu0 0.0
    %1202 = vmatprep.subr.mxu0 0.0
    %1203 = vmatpush1.msra.mxu0 0.0
    %1204 = vmatprep.subr.mxu0 0.0
    %1205 = vmatpush1.msra.mxu0 0.0
    %1206 = vmatprep.subr.mxu0 0.0
    %1207 = vmatpush1.msra.mxu0 0.0
    %1208 = vmatprep.subr.mxu0 0.0
    %1209 = vmatpush1.msra.mxu0 0.0
    %1210 = vmatprep.subr.mxu0 0.0
    %1211 = vmatpush1.msra.mxu0 0.0
    %1212 = vmatprep.subr.mxu0 0.0
    %1213 = vmatpush1.msra.mxu0 0.0
    %1214 = vmatprep.subr.mxu0 0.0
    %1215 = vmatpush1.msra.mxu0 0.0
    %1216 = vmatprep.subr.mxu0 0.0
    %1217 = vmatpush1.msra.mxu0 0.0
    %1218 = vmatprep.subr.mxu0 0.0
    %1219 = vmatpush1.msra.mxu0 0.0
    %1220 = vmatprep.subr.mxu0 0.0
    %1221 = vmatpush1.msra.mxu0 0.0
    %1222 = vmatprep.subr.mxu0 0.0
    %1223 = vmatpush1.msra.mxu0 0.0
    %1224 = vmatprep.subr.mxu0 0.0
    %1225 = vmatpush1.msra.mxu0 0.0
    %1226 = vmatprep.subr.mxu0 0.0
    %1227 = vmatpush1.msra.mxu0 0.0
    %1228 = vmatprep.subr.mxu0 0.0
    %1229 = vmatpush1.msra.mxu0 0.0
    %1230 = vmatprep.subr.mxu0 0.0
    %1231 = vmatpush1.msra.mxu0 0.0
    %1232 = vmatprep.subr.mxu0 0.0
    %1233 = vmatpush1.msra.mxu0 0.0
    %1234 = vmatprep.subr.mxu0 0.0
    %1235 = vmatpush1.msra.mxu0 0.0
    %1236 = vmatprep.subr.mxu0 0.0
    %1237 = vmatpush1.msra.mxu0 0.0
    %1238 = vmatprep.subr.mxu0 0.0
    %1239 = vmatpush1.msra.mxu0 0.0
    %1240 = vmatprep.subr.mxu0 0.0
    %1241 = vmatpush1.msra.mxu0 0.0
    %1242 = vmatprep.subr.mxu0 0.0
    %1243 = vmatpush1.msra.mxu0 0.0
    %1244 = vmatprep.subr.mxu0 0.0
    %1245 = vmatpush1.msra.mxu0 0.0
    %1246 = vmatprep.subr.mxu0 0.0
    %1247 = vmatpush1.msra.mxu0 0.0
    %1248 = vmatprep.subr.mxu0 0.0
    %1249 = vmatpush1.msra.mxu0 0.0
    %1250 = vmatprep.subr.mxu0 0.0
    %1251 = vmatpush1.msra.mxu0 0.0
    %1252 = vmatprep.subr.mxu0 0.0
    %1253 = vmatpush1.msra.mxu0 0.0
    %1254 = vmatprep.subr.mxu0 0.0
    %1255 = vmatpush1.msra.mxu0 0.0
    %1256 = vmatprep.subr.mxu0 0.0
    %1257 = vmatpush1.msra.mxu0 0.0
    %1258 = vmatprep.subr.mxu0 0.0
    %1259 = vmatpush1.msra.mxu0 0.0
    %1260 = vmatprep.mubr.f32.mxu0 0.0
    %1261 = vmatmul.mubr.f32.gmra.mrb[0].mxu0 %v1194
    %v1262 = vpop.f32.mrb[0].mxu0
    %v1263 = vadd.f32 %v83, %v1262
    %v1264 = vpop.f32.mrb[0].mxu0
    %1265 = vdwg.mxu0
    %1267 = vrot.lane.b32.xlu0 %v823, 96
    %v1268 = vpop.permute.xlu0 %1267
    %v1269 = vsel %vm167, %v1268, 0
    %1271 = vmatprep.subr.mxu0 0.0
    %1272 = vmatpush1.msra.mxu0 %v163
    %1273 = vmatprep.subr.mxu0 0.0
    %1274 = vmatpush1.msra.mxu0 %v164
    %1275 = vmatprep.subr.mxu0 0.0
    %1276 = vmatpush1.msra.mxu0 %v165
    %1277 = vmatprep.subr.mxu0 0.0
    %1278 = vmatpush1.msra.mxu0 %v166
    %1279 = vmatprep.subr.mxu0 0.0
    %1280 = vmatpush1.msra.mxu0 0.0
    %1281 = vmatprep.subr.mxu0 0.0
    %1282 = vmatpush1.msra.mxu0 0.0
    %1283 = vmatprep.subr.mxu0 0.0
    %1284 = vmatpush1.msra.mxu0 0.0
    %1285 = vmatprep.subr.mxu0 0.0
    %1286 = vmatpush1.msra.mxu0 0.0
    %1287 = vmatprep.subr.mxu0 0.0
    %1288 = vmatpush1.msra.mxu0 0.0
    %1289 = vmatprep.subr.mxu0 0.0
    %1290 = vmatpush1.msra.mxu0 0.0
    %1291 = vmatprep.subr.mxu0 0.0
    %1292 = vmatpush1.msra.mxu0 0.0
    %1293 = vmatprep.subr.mxu0 0.0
    %1294 = vmatpush1.msra.mxu0 0.0
    %1295 = vmatprep.subr.mxu0 0.0
    %1296 = vmatpush1.msra.mxu0 0.0
    %1297 = vmatprep.subr.mxu0 0.0
    %1298 = vmatpush1.msra.mxu0 0.0
    %1299 = vmatprep.subr.mxu0 0.0
    %1300 = vmatpush1.msra.mxu0 0.0
    %1301 = vmatprep.subr.mxu0 0.0
    %1302 = vmatpush1.msra.mxu0 0.0
    %1303 = vmatprep.subr.mxu0 0.0
    %1304 = vmatpush1.msra.mxu0 0.0
    %1305 = vmatprep.subr.mxu0 0.0
    %1306 = vmatpush1.msra.mxu0 0.0
    %1307 = vmatprep.subr.mxu0 0.0
    %1308 = vmatpush1.msra.mxu0 0.0
    %1309 = vmatprep.subr.mxu0 0.0
    %1310 = vmatpush1.msra.mxu0 0.0
    %1311 = vmatprep.subr.mxu0 0.0
    %1312 = vmatpush1.msra.mxu0 0.0
    %1313 = vmatprep.subr.mxu0 0.0
    %1314 = vmatpush1.msra.mxu0 0.0
    %1315 = vmatprep.subr.mxu0 0.0
    %1316 = vmatpush1.msra.mxu0 0.0
    %1317 = vmatprep.subr.mxu0 0.0
    %1318 = vmatpush1.msra.mxu0 0.0
    %1319 = vmatprep.subr.mxu0 0.0
    %1320 = vmatpush1.msra.mxu0 0.0
    %1321 = vmatprep.subr.mxu0 0.0
    %1322 = vmatpush1.msra.mxu0 0.0
    %1323 = vmatprep.subr.mxu0 0.0
    %1324 = vmatpush1.msra.mxu0 0.0
    %1325 = vmatprep.subr.mxu0 0.0
    %1326 = vmatpush1.msra.mxu0 0.0
    %1327 = vmatprep.subr.mxu0 0.0
    %1328 = vmatpush1.msra.mxu0 0.0
    %1329 = vmatprep.subr.mxu0 0.0
    %1330 = vmatpush1.msra.mxu0 0.0
    %1331 = vmatprep.subr.mxu0 0.0
    %1332 = vmatpush1.msra.mxu0 0.0
    %1333 = vmatprep.subr.mxu0 0.0
    %1334 = vmatpush1.msra.mxu0 0.0
    %1335 = vmatprep.mubr.f32.mxu0 0.0
    %1336 = vmatmul.mubr.f32.gmra.mrb[0].mxu0 %v1269
    %v1337 = vpop.f32.mrb[0].mxu0
    %v1338 = vadd.f32 0.0, %v1337
    %v1339 = vpop.f32.mrb[0].mxu0
    %1340 = vdwg.mxu0
    %v1341 = vadd.f32 %v1263, %v1338
    %v1342 = vxor.u32 %v1341, 2147483648
    %v1343 = vmul.f32 %v1342, 1.442695
    %v1344 = vpow.pop %v1343
    %v1345 = vadd.f32 %v1344, 1.0
    %v1346 = vrcp.pop %v1345
    %v1347 = vmul.f32 1.0, %v1346
    %v1348 = vadd.f32 %v1338, %v255
    %1350 = vrot.lane.b32.xlu0 %v1348, 64
    %v1351 = vpop.permute.xlu0 %1350
    %v1353 = vmul.f32 %v1347, %v1351
    %1355 = vrot.lane.b32.xlu0 %v1353, 64
    %v1356 = vpop.permute.xlu0 %1355
    %v1358 = vadd.f32 %v1263, %v1356
    %v1359 = vtanh.pop %v1358
    %v1360 = vsub.f32 1.0, %v1347
    %1362 = vrot.lane.b32.xlu0 %v1359, 96
    %v1363 = vpop.permute.xlu0 %1362
    %v1365 = vmul.f32 %v1360, %v1363
    %v1366 = vmul.f32 %v1347, %v823
    %v1367 = vadd.f32 %v1365, %v1366
    %1368 = vmatprep.subr.mxu0 0.0
    %1369 = vmatpush1.msra.mxu0 %v453
    %1370 = vmatprep.subr.mxu0 0.0
    %1371 = vmatpush1.msra.mxu0 %v454
    %1372 = vmatprep.subr.mxu0 0.0
    %1373 = vmatpush1.msra.mxu0 %v455
    %1374 = vmatprep.subr.mxu0 0.0
    %1375 = vmatpush1.msra.mxu0 %v456
    %1376 = vmatprep.subr.mxu0 0.0
    %1377 = vmatpush1.msra.mxu0 0.0
    %1378 = vmatprep.subr.mxu0 0.0
    %1379 = vmatpush1.msra.mxu0 0.0
    %1380 = vmatprep.subr.mxu0 0.0
    %1381 = vmatpush1.msra.mxu0 0.0
    %1382 = vmatprep.subr.mxu0 0.0
    %1383 = vmatpush1.msra.mxu0 0.0
    %1384 = vmatprep.subr.mxu0 0.0
    %1385 = vmatpush1.msra.mxu0 0.0
    %1386 = vmatprep.subr.mxu0 0.0
    %1387 = vmatpush1.msra.mxu0 0.0
    %1388 = vmatprep.subr.mxu0 0.0
    %1389 = vmatpush1.msra.mxu0 0.0
    %1390 = vmatprep.subr.mxu0 0.0
    %1391 = vmatpush1.msra.mxu0 0.0
    %1392 = vmatprep.subr.mxu0 0.0
    %1393 = vmatpush1.msra.mxu0 0.0
    %1394 = vmatprep.subr.mxu0 0.0
    %1395 = vmatpush1.msra.mxu0 0.0
    %1396 = vmatprep.subr.mxu0 0.0
    %1397 = vmatpush1.msra.mxu0 0.0
    %1398 = vmatprep.subr.mxu0 0.0
    %1399 = vmatpush1.msra.mxu0 0.0
    %1400 = vmatprep.subr.mxu0 0.0
    %1401 = vmatpush1.msra.mxu0 0.0
    %1402 = vmatprep.subr.mxu0 0.0
    %1403 = vmatpush1.msra.mxu0 0.0
    %1404 = vmatprep.subr.mxu0 0.0
    %1405 = vmatpush1.msra.mxu0 0.0
    %1406 = vmatprep.subr.mxu0 0.0
    %1407 = vmatpush1.msra.mxu0 0.0
    %1408 = vmatprep.subr.mxu0 0.0
    %1409 = vmatpush1.msra.mxu0 0.0
    %1410 = vmatprep.subr.mxu0 0.0
    %1411 = vmatpush1.msra.mxu0 0.0
    %1412 = vmatprep.subr.mxu0 0.0
    %1413 = vmatpush1.msra.mxu0 0.0
    %1414 = vmatprep.subr.mxu0 0.0
    %1415 = vmatpush1.msra.mxu0 0.0
    %1416 = vmatprep.subr.mxu0 0.0
    %1417 = vmatpush1.msra.mxu0 0.0
    %1418 = vmatprep.subr.mxu0 0.0
    %1419 = vmatpush1.msra.mxu0 0.0
    %1420 = vmatprep.subr.mxu0 0.0
    %1421 = vmatpush1.msra.mxu0 0.0
    %1422 = vmatprep.subr.mxu0 0.0
    %1423 = vmatpush1.msra.mxu0 0.0
    %1424 = vmatprep.subr.mxu0 0.0
    %1425 = vmatpush1.msra.mxu0 0.0
    %1426 = vmatprep.subr.mxu0 0.0
    %1427 = vmatpush1.msra.mxu0 0.0
    %1428 = vmatprep.subr.mxu0 0.0
    %1429 = vmatpush1.msra.mxu0 0.0
    %1430 = vmatprep.subr.mxu0 0.0
    %1431 = vmatpush1.msra.mxu0 0.0
    %1432 = vmatprep.mubr.f32.mxu0 0.0
    %1433 = vmatmul.mubr.f32.gmra.mrb[0].mxu0 %v1269
    %v1434 = vpop.f32.mrb[0].mxu0
    %v1435 = vadd.f32 %v463, %v1434
    %v1436 = vpop.f32.mrb[0].mxu0
    %1437 = vdwg.mxu0
    %1439 = vrot.lane.b32.xlu0 %v995, 96
    %v1440 = vpop.permute.xlu0 %1439
    %v1441 = vsel %vm167, %v1440, 0
    %1443 = vmatprep.subr.mxu0 0.0
    %1444 = vmatpush1.msra.mxu0 %v536
    %1445 = vmatprep.subr.mxu0 0.0
    %1446 = vmatpush1.msra.mxu0 %v537
    %1447 = vmatprep.subr.mxu0 0.0
    %1448 = vmatpush1.msra.mxu0 %v538
    %1449 = vmatprep.subr.mxu0 0.0
    %1450 = vmatpush1.msra.mxu0 %v539
    %1451 = vmatprep.subr.mxu0 0.0
    %1452 = vmatpush1.msra.mxu0 0.0
    %1453 = vmatprep.subr.mxu0 0.0
    %1454 = vmatpush1.msra.mxu0 0.0
    %1455 = vmatprep.subr.mxu0 0.0
    %1456 = vmatpush1.msra.mxu0 0.0
    %1457 = vmatprep.subr.mxu0 0.0
    %1458 = vmatpush1.msra.mxu0 0.0
    %1459 = vmatprep.subr.mxu0 0.0
    %1460 = vmatpush1.msra.mxu0 0.0
    %1461 = vmatprep.subr.mxu0 0.0
    %1462 = vmatpush1.msra.mxu0 0.0
    %1463 = vmatprep.subr.mxu0 0.0
    %1464 = vmatpush1.msra.mxu0 0.0
    %1465 = vmatprep.subr.mxu0 0.0
    %1466 = vmatpush1.msra.mxu0 0.0
    %1467 = vmatprep.subr.mxu0 0.0
    %1468 = vmatpush1.msra.mxu0 0.0
    %1469 = vmatprep.subr.mxu0 0.0
    %1470 = vmatpush1.msra.mxu0 0.0
    %1471 = vmatprep.subr.mxu0 0.0
    %1472 = vmatpush1.msra.mxu0 0.0
    %1473 = vmatprep.subr.mxu0 0.0
    %1474 = vmatpush1.msra.mxu0 0.0
    %1475 = vmatprep.subr.mxu0 0.0
    %1476 = vmatpush1.msra.mxu0 0.0
    %1477 = vmatprep.subr.mxu0 0.0
    %1478 = vmatpush1.msra.mxu0 0.0
    %1479 = vmatprep.subr.mxu0 0.0
    %1480 = vmatpush1.msra.mxu0 0.0
    %1481 = vmatprep.subr.mxu0 0.0
    %1482 = vmatpush1.msra.mxu0 0.0
    %1483 = vmatprep.subr.mxu0 0.0
    %1484 = vmatpush1.msra.mxu0 0.0
    %1485 = vmatprep.subr.mxu0 0.0
    %1486 = vmatpush1.msra.mxu0 0.0
    %1487 = vmatprep.subr.mxu0 0.0
    %1488 = vmatpush1.msra.mxu0 0.0
    %1489 = vmatprep.subr.mxu0 0.0
    %1490 = vmatpush1.msra.mxu0 0.0
    %1491 = vmatprep.subr.mxu0 0.0
    %1492 = vmatpush1.msra.mxu0 0.0
    %1493 = vmatprep.subr.mxu0 0.0
    %1494 = vmatpush1.msra.mxu0 0.0
    %1495 = vmatprep.subr.mxu0 0.0
    %1496 = vmatpush1.msra.mxu0 0.0
    %1497 = vmatprep.subr.mxu0 0.0
    %1498 = vmatpush1.msra.mxu0 0.0
    %1499 = vmatprep.subr.mxu0 0.0
    %1500 = vmatpush1.msra.mxu0 0.0
    %1501 = vmatprep.subr.mxu0 0.0
    %1502 = vmatpush1.msra.mxu0 0.0
    %1503 = vmatprep.subr.mxu0 0.0
    %1504 = vmatpush1.msra.mxu0 0.0
    %1505 = vmatprep.subr.mxu0 0.0
    %1506 = vmatpush1.msra.mxu0 0.0
    %1507 = vmatprep.mubr.f32.mxu0 0.0
    %1508 = vmatmul.mubr.f32.gmra.mrb[0].mxu0 %v1441
    %v1509 = vpop.f32.mrb[0].mxu0
    %v1510 = vadd.f32 0.0, %v1509
    %v1511 = vpop.f32.mrb[0].mxu0
    %1512 = vdwg.mxu0
    %v1513 = vadd.f32 %v1435, %v1510
    %v1514 = vxor.u32 %v1513, 2147483648
    %v1515 = vmul.f32 %v1514, 1.442695
    %v1516 = vpow.pop %v1515
    %v1517 = vadd.f32 %v1516, 1.0
    %v1518 = vrcp.pop %v1517
    %v1519 = vmul.f32 1.0, %v1518
    %v1520 = vadd.f32 %v1510, %v625
    %1522 = vrot.lane.b32.xlu0 %v1520, 64
    %v1523 = vpop.permute.xlu0 %1522
    %v1525 = vmul.f32 %v1519, %v1523
    %1527 = vrot.lane.b32.xlu0 %v1525, 64
    %v1528 = vpop.permute.xlu0 %1527
    %v1530 = vadd.f32 %v1435, %v1528
    %v1531 = vtanh.pop %v1530
    %v1532 = vsub.f32 1.0, %v1519
    %1534 = vrot.lane.b32.xlu0 %v1531, 96
    %v1535 = vpop.permute.xlu0 %1534
    %v1537 = vmul.f32 %v1532, %v1535
    %v1538 = vmul.f32 %v1519, %v995
    %v1539 = vadd.f32 %v1537, %v1538
    %1540 = vmatprep.subr.mxu0 0.0
    %1541 = vmatpush1.msra.mxu0 %v997
    %1542 = vmatprep.subr.mxu0 0.0
    %1543 = vmatpush1.msra.mxu0 %v998
    %1544 = vmatprep.subr.mxu0 0.0
    %1545 = vmatpush1.msra.mxu0 %v999
    %1546 = vmatprep.subr.mxu0 0.0
    %1547 = vmatpush1.msra.mxu0 %v1000
    %1548 = vmatprep.subr.mxu0 0.0
    %1549 = vmatpush1.msra.mxu0 0.0
    %1550 = vmatprep.subr.mxu0 0.0
    %1551 = vmatpush1.msra.mxu0 0.0
    %1552 = vmatprep.subr.mxu0 0.0
    %1553 = vmatpush1.msra.mxu0 0.0
    %1554 = vmatprep.subr.mxu0 0.0
    %1555 = vmatpush1.msra.mxu0 0.0
    %1556 = vmatprep.subr.mxu0 0.0
    %1557 = vmatpush1.msra.mxu0 0.0
    %1558 = vmatprep.subr.mxu0 0.0
    %1559 = vmatpush1.msra.mxu0 0.0
    %1560 = vmatprep.subr.mxu0 0.0
    %1561 = vmatpush1.msra.mxu0 0.0
    %1562 = vmatprep.subr.mxu0 0.0
    %1563 = vmatpush1.msra.mxu0 0.0
    %1564 = vmatprep.subr.mxu0 0.0
    %1565 = vmatpush1.msra.mxu0 0.0
    %1566 = vmatprep.subr.mxu0 0.0
    %1567 = vmatpush1.msra.mxu0 0.0
    %1568 = vmatprep.subr.mxu0 0.0
    %1569 = vmatpush1.msra.mxu0 0.0
    %1570 = vmatprep.subr.mxu0 0.0
    %1571 = vmatpush1.msra.mxu0 0.0
    %1572 = vmatprep.subr.mxu0 0.0
    %1573 = vmatpush1.msra.mxu0 0.0
    %1574 = vmatprep.subr.mxu0 0.0
    %1575 = vmatpush1.msra.mxu0 0.0
    %1576 = vmatprep.subr.mxu0 0.0
    %1577 = vmatpush1.msra.mxu0 0.0
    %1578 = vmatprep.subr.mxu0 0.0
    %1579 = vmatpush1.msra.mxu0 0.0
    %1580 = vmatprep.subr.mxu0 0.0
    %1581 = vmatpush1.msra.mxu0 0.0
    %1582 = vmatprep.subr.mxu0 0.0
    %1583 = vmatpush1.msra.mxu0 0.0
    %1584 = vmatprep.subr.mxu0 0.0
    %1585 = vmatpush1.msra.mxu0 0.0
    %1586 = vmatprep.subr.mxu0 0.0
    %1587 = vmatpush1.msra.mxu0 0.0
    %1588 = vmatprep.subr.mxu0 0.0
    %1589 = vmatpush1.msra.mxu0 0.0
    %1590 = vmatprep.subr.mxu0 0.0
    %1591 = vmatpush1.msra.mxu0 0.0
    %1592 = vmatprep.subr.mxu0 0.0
    %1593 = vmatpush1.msra.mxu0 0.0
    %1594 = vmatprep.subr.mxu0 0.0
    %1595 = vmatpush1.msra.mxu0 0.0
    %1596 = vmatprep.subr.mxu0 0.0
    %1597 = vmatpush1.msra.mxu0 0.0
    %1598 = vmatprep.subr.mxu0 0.0
    %1599 = vmatpush1.msra.mxu0 0.0
    %1600 = vmatprep.subr.mxu0 0.0
    %1601 = vmatpush1.msra.mxu0 0.0
    %1602 = vmatprep.subr.mxu0 0.0
    %1603 = vmatpush1.msra.mxu0 0.0
    %1604 = vmatprep.mubr.f32.mxu0 0.0
    %1605 = vmatmul.mubr.f32.gmra.mrb[0].mxu0 %v1441
    %v1606 = vpop.f32.mrb[0].mxu0
    %v1607 = vadd.f32 %v1007, %v1606
    %v1608 = vpop.f32.mrb[0].mxu0
    %1609 = vdwg.mxu0
    %1611 = vrot.lane.b32.xlu0 %v1190, 96
    %v1612 = vpop.permute.xlu0 %1611
    %v1613 = vsel %vm167, %v1612, 0
    %1615 = vmatprep.subr.mxu0 0.0
    %1616 = vmatpush1.msra.mxu0 %v1080
    %1617 = vmatprep.subr.mxu0 0.0
    %1618 = vmatpush1.msra.mxu0 %v1081
    %1619 = vmatprep.subr.mxu0 0.0
    %1620 = vmatpush1.msra.mxu0 %v1082
    %1621 = vmatprep.subr.mxu0 0.0
    %1622 = vmatpush1.msra.mxu0 %v1083
    %1623 = vmatprep.subr.mxu0 0.0
    %1624 = vmatpush1.msra.mxu0 0.0
    %1625 = vmatprep.subr.mxu0 0.0
    %1626 = vmatpush1.msra.mxu0 0.0
    %1627 = vmatprep.subr.mxu0 0.0
    %1628 = vmatpush1.msra.mxu0 0.0
    %1629 = vmatprep.subr.mxu0 0.0
    %1630 = vmatpush1.msra.mxu0 0.0
    %1631 = vmatprep.subr.mxu0 0.0
    %1632 = vmatpush1.msra.mxu0 0.0
    %1633 = vmatprep.subr.mxu0 0.0
    %1634 = vmatpush1.msra.mxu0 0.0
    %1635 = vmatprep.subr.mxu0 0.0
    %1636 = vmatpush1.msra.mxu0 0.0
    %1637 = vmatprep.subr.mxu0 0.0
    %1638 = vmatpush1.msra.mxu0 0.0
    %1639 = vmatprep.subr.mxu0 0.0
    %1640 = vmatpush1.msra.mxu0 0.0
    %1641 = vmatprep.subr.mxu0 0.0
    %1642 = vmatpush1.msra.mxu0 0.0
    %1643 = vmatprep.subr.mxu0 0.0
    %1644 = vmatpush1.msra.mxu0 0.0
    %1645 = vmatprep.subr.mxu0 0.0
    %1646 = vmatpush1.msra.mxu0 0.0
    %1647 = vmatprep.subr.mxu0 0.0
    %1648 = vmatpush1.msra.mxu0 0.0
    %1649 = vmatprep.subr.mxu0 0.0
    %1650 = vmatpush1.msra.mxu0 0.0
    %1651 = vmatprep.subr.mxu0 0.0
    %1652 = vmatpush1.msra.mxu0 0.0
    %1653 = vmatprep.subr.mxu0 0.0
    %1654 = vmatpush1.msra.mxu0 0.0
    %1655 = vmatprep.subr.mxu0 0.0
    %1656 = vmatpush1.msra.mxu0 0.0
    %1657 = vmatprep.subr.mxu0 0.0
    %1658 = vmatpush1.msra.mxu0 0.0
    %1659 = vmatprep.subr.mxu0 0.0
    %1660 = vmatpush1.msra.mxu0 0.0
    %1661 = vmatprep.subr.mxu0 0.0
    %1662 = vmatpush1.msra.mxu0 0.0
    %1663 = vmatprep.subr.mxu0 0.0
    %1664 = vmatpush1.msra.mxu0 0.0
    %1665 = vmatprep.subr.mxu0 0.0
    %1666 = vmatpush1.msra.mxu0 0.0
    %1667 = vmatprep.subr.mxu0 0.0
    %1668 = vmatpush1.msra.mxu0 0.0
    %1669 = vmatprep.subr.mxu0 0.0
    %1670 = vmatpush1.msra.mxu0 0.0
    %1671 = vmatprep.subr.mxu0 0.0
    %1672 = vmatpush1.msra.mxu0 0.0
    %1673 = vmatprep.subr.mxu0 0.0
    %1674 = vmatpush1.msra.mxu0 0.0
    %1675 = vmatprep.subr.mxu0 0.0
    %1676 = vmatpush1.msra.mxu0 0.0
    %1677 = vmatprep.subr.mxu0 0.0
    %1678 = vmatpush1.msra.mxu0 0.0
    %1679 = vmatprep.mubr.f32.mxu0 0.0
    %1680 = vmatmul.mubr.f32.gmra.mrb[0].mxu0 %v1613
    %v1681 = vpop.f32.mrb[0].mxu0
    %v1682 = vadd.f32 0.0, %v1681
    %v1683 = vpop.f32.mrb[0].mxu0
    %1684 = vdwg.mxu0
    %v1685 = vadd.f32 %v1607, %v1682
    %v1686 = vxor.u32 %v1685, 2147483648
    %v1687 = vmul.f32 %v1686, 1.442695
    %v1688 = vpow.pop %v1687
    %v1689 = vadd.f32 %v1688, 1.0
    %v1690 = vrcp.pop %v1689
    %v1691 = vmul.f32 1.0, %v1690
    %v1692 = vadd.f32 %v1682, %v1169
    %1694 = vrot.lane.b32.xlu0 %v1692, 64
    %v1695 = vpop.permute.xlu0 %1694
    %v1697 = vmul.f32 %v1691, %v1695
    %1699 = vrot.lane.b32.xlu0 %v1697, 64
    %v1700 = vpop.permute.xlu0 %1699
    %v1702 = vadd.f32 %v1607, %v1700
    %v1703 = vtanh.pop %v1702
    %v1704 = vsub.f32 1.0, %v1691
    %1706 = vrot.lane.b32.xlu0 %v1703, 96
    %v1707 = vpop.permute.xlu0 %1706
    %v1709 = vmul.f32 %v1704, %v1707
    %v1710 = vmul.f32 %v1691, %v1190
    %v1711 = vadd.f32 %v1709, %v1710
    %s1712 = scalar_lea.vmem [#allocation2], 64
    %v1713 = vld [vmem:[%s1712] sm:$0xff]
    %v1714 = vld [vmem:[%s1712 + $0x8] sm:$0xff]
    %v1715 = vld [vmem:[%s1712 + $0x10] sm:$0xff]
    %v1716 = vld [vmem:[%s1712 + $0x18] sm:$0xff]
    %s1717 = scalar_lea.vmem %s4, 3
    %v1718 = vld [vmem:[%s1717] sm:$0x1]
    %v1720 = vlaneseq
    %v1721 = vshrl.u32 %v1720, 7
    %v1722 = vsub.s32 0, %v1721
    %v1723 = vrot.slane %v1718, %v1722
    %1725 = vmatprep.subr.mxu0 0.0
    %1726 = vmatpush1.msra.mxu0 %v1713
    %1727 = vmatprep.subr.mxu0 0.0
    %1728 = vmatpush1.msra.mxu0 %v1714
    %1729 = vmatprep.subr.mxu0 0.0
    %1730 = vmatpush1.msra.mxu0 %v1715
    %1731 = vmatprep.subr.mxu0 0.0
    %1732 = vmatpush1.msra.mxu0 %v1716
    %1733 = vmatprep.subr.mxu0 0.0
    %1734 = vmatpush1.msra.mxu0 0.0
    %1735 = vmatprep.subr.mxu0 0.0
    %1736 = vmatpush1.msra.mxu0 0.0
    %1737 = vmatprep.subr.mxu0 0.0
    %1738 = vmatpush1.msra.mxu0 0.0
    %1739 = vmatprep.subr.mxu0 0.0
    %1740 = vmatpush1.msra.mxu0 0.0
    %1741 = vmatprep.subr.mxu0 0.0
    %1742 = vmatpush1.msra.mxu0 0.0
    %1743 = vmatprep.subr.mxu0 0.0
    %1744 = vmatpush1.msra.mxu0 0.0
    %1745 = vmatprep.subr.mxu0 0.0
    %1746 = vmatpush1.msra.mxu0 0.0
    %1747 = vmatprep.subr.mxu0 0.0
    %1748 = vmatpush1.msra.mxu0 0.0
    %1749 = vmatprep.subr.mxu0 0.0
    %1750 = vmatpush1.msra.mxu0 0.0
    %1751 = vmatprep.subr.mxu0 0.0
    %1752 = vmatpush1.msra.mxu0 0.0
    %1753 = vmatprep.subr.mxu0 0.0
    %1754 = vmatpush1.msra.mxu0 0.0
    %1755 = vmatprep.subr.mxu0 0.0
    %1756 = vmatpush1.msra.mxu0 0.0
    %1757 = vmatprep.subr.mxu0 0.0
    %1758 = vmatpush1.msra.mxu0 0.0
    %1759 = vmatprep.subr.mxu0 0.0
    %1760 = vmatpush1.msra.mxu0 0.0
    %1761 = vmatprep.subr.mxu0 0.0
    %1762 = vmatpush1.msra.mxu0 0.0
    %1763 = vmatprep.subr.mxu0 0.0
    %1764 = vmatpush1.msra.mxu0 0.0
    %1765 = vmatprep.subr.mxu0 0.0
    %1766 = vmatpush1.msra.mxu0 0.0
    %1767 = vmatprep.subr.mxu0 0.0
    %1768 = vmatpush1.msra.mxu0 0.0
    %1769 = vmatprep.subr.mxu0 0.0
    %1770 = vmatpush1.msra.mxu0 0.0
    %1771 = vmatprep.subr.mxu0 0.0
    %1772 = vmatpush1.msra.mxu0 0.0
    %1773 = vmatprep.subr.mxu0 0.0
    %1774 = vmatpush1.msra.mxu0 0.0
    %1775 = vmatprep.subr.mxu0 0.0
    %1776 = vmatpush1.msra.mxu0 0.0
    %1777 = vmatprep.subr.mxu0 0.0
    %1778 = vmatpush1.msra.mxu0 0.0
    %1779 = vmatprep.subr.mxu0 0.0
    %1780 = vmatpush1.msra.mxu0 0.0
    %1781 = vmatprep.subr.mxu0 0.0
    %1782 = vmatpush1.msra.mxu0 0.0
    %1783 = vmatprep.subr.mxu0 0.0
    %1784 = vmatpush1.msra.mxu0 0.0
    %1785 = vmatprep.subr.mxu0 0.0
    %1786 = vmatpush1.msra.mxu0 0.0
    %1787 = vmatprep.subr.mxu0 0.0
    %1788 = vmatpush1.msra.mxu0 0.0
    %1789 = vmatprep.mubr.f32.mxu0 0.0
    %1790 = vmatmul.mubr.f32.gmra.mrb[0].mxu0 %v1613
    %v1791 = vpop.f32.mrb[0].mxu0
    %v1792 = vadd.f32 %v1723, %v1791
    %v1793 = vpop.f32.mrb[0].mxu0
    %1794 = vdwg.mxu0
    %s1795 = scalar_lea.vmem [#allocation5], 96
    %v1796 = vld [vmem:[%s1795] sm:$0xff]
    %v1797 = vld [vmem:[%s1795 + $0x8] sm:$0xff]
    %v1798 = vld [vmem:[%s1795 + $0x10] sm:$0xff]
    %v1799 = vld [vmem:[%s1795 + $0x18] sm:$0xff]
    %1800 = vmatprep.subr.mxu0 0.0
    %1801 = vmatpush1.msra.mxu0 %v1796
    %1802 = vmatprep.subr.mxu0 0.0
    %1803 = vmatpush1.msra.mxu0 %v1797
    %1804 = vmatprep.subr.mxu0 0.0
    %1805 = vmatpush1.msra.mxu0 %v1798
    %1806 = vmatprep.subr.mxu0 0.0
    %1807 = vmatpush1.msra.mxu0 %v1799
    %1808 = vmatprep.subr.mxu0 0.0
    %1809 = vmatpush1.msra.mxu0 0.0
    %1810 = vmatprep.subr.mxu0 0.0
    %1811 = vmatpush1.msra.mxu0 0.0
    %1812 = vmatprep.subr.mxu0 0.0
    %1813 = vmatpush1.msra.mxu0 0.0
    %1814 = vmatprep.subr.mxu0 0.0
    %1815 = vmatpush1.msra.mxu0 0.0
    %1816 = vmatprep.subr.mxu0 0.0
    %1817 = vmatpush1.msra.mxu0 0.0
    %1818 = vmatprep.subr.mxu0 0.0
    %1819 = vmatpush1.msra.mxu0 0.0
    %1820 = vmatprep.subr.mxu0 0.0
    %1821 = vmatpush1.msra.mxu0 0.0
    %1822 = vmatprep.subr.mxu0 0.0
    %1823 = vmatpush1.msra.mxu0 0.0
    %1824 = vmatprep.subr.mxu0 0.0
    %1825 = vmatpush1.msra.mxu0 0.0
    %1826 = vmatprep.subr.mxu0 0.0
    %1827 = vmatpush1.msra.mxu0 0.0
    %1828 = vmatprep.subr.mxu0 0.0
    %1829 = vmatpush1.msra.mxu0 0.0
    %1830 = vmatprep.subr.mxu0 0.0
    %1831 = vmatpush1.msra.mxu0 0.0
    %1832 = vmatprep.subr.mxu0 0.0
    %1833 = vmatpush1.msra.mxu0 0.0
    %1834 = vmatprep.subr.mxu0 0.0
    %1835 = vmatpush1.msra.mxu0 0.0
    %1836 = vmatprep.subr.mxu0 0.0
    %1837 = vmatpush1.msra.mxu0 0.0
    %1838 = vmatprep.subr.mxu0 0.0
    %1839 = vmatpush1.msra.mxu0 0.0
    %1840 = vmatprep.subr.mxu0 0.0
    %1841 = vmatpush1.msra.mxu0 0.0
    %1842 = vmatprep.subr.mxu0 0.0
    %1843 = vmatpush1.msra.mxu0 0.0
    %1844 = vmatprep.subr.mxu0 0.0
    %1845 = vmatpush1.msra.mxu0 0.0
    %1846 = vmatprep.subr.mxu0 0.0
    %1847 = vmatpush1.msra.mxu0 0.0
    %1848 = vmatprep.subr.mxu0 0.0
    %1849 = vmatpush1.msra.mxu0 0.0
    %1850 = vmatprep.subr.mxu0 0.0
    %1851 = vmatpush1.msra.mxu0 0.0
    %1852 = vmatprep.subr.mxu0 0.0
    %1853 = vmatpush1.msra.mxu0 0.0
    %1854 = vmatprep.subr.mxu0 0.0
    %1855 = vmatpush1.msra.mxu0 0.0
    %1856 = vmatprep.subr.mxu0 0.0
    %1857 = vmatpush1.msra.mxu0 0.0
    %1858 = vmatprep.subr.mxu0 0.0
    %1859 = vmatpush1.msra.mxu0 0.0
    %1860 = vmatprep.subr.mxu0 0.0
    %1861 = vmatpush1.msra.mxu0 0.0
    %1862 = vmatprep.subr.mxu0 0.0
    %1863 = vmatpush1.msra.mxu0 0.0
    %1864 = vmatprep.mubr.f32.mxu0 0.0
    %1865 = vmatmul.mubr.f32.gmra.mrb[0].mxu0 %v169
    %v1866 = vpop.f32.mrb[0].mxu0
    %v1867 = vadd.f32 0.0, %v1866
    %v1868 = vpop.f32.mrb[0].mxu0
    %1869 = vdwg.mxu0
    %s1870 = scalar_lea.vmem [#allocation7], 3
    %v1871 = vld [vmem:[%s1870] sm:$0x1]
    %v1872 = vadd.f32 %v1792, %v1867
    %v1873 = vxor.u32 %v1872, 2147483648
    %v1874 = vmul.f32 %v1873, 1.442695
    %v1875 = vpow.pop %v1874
    %v1876 = vadd.f32 %v1875, 1.0
    %v1877 = vrcp.pop %v1876
    %v1878 = vmul.f32 1.0, %v1877
    %v1880 = vlaneseq
    %v1881 = vshrl.u32 %v1880, 7
    %v1882 = vsub.s32 0, %v1881
    %v1883 = vrot.slane %v1871, %v1882
    %1884 = vrot.lane.b32.xlu0 %v1883, 64
    %v1885 = vpop.permute.xlu0 %1884
    %v1887 = vadd.f32 %v1867, %v1885
    %1889 = vrot.lane.b32.xlu0 %v1887, 64
    %v1890 = vpop.permute.xlu0 %1889
    %v1892 = vmul.f32 %v1878, %v1890
    %1894 = vrot.lane.b32.xlu0 %v1892, 64
    %v1895 = vpop.permute.xlu0 %1894
    %v1897 = vadd.f32 %v1792, %v1895
    %v1898 = vtanh.pop %v1897
    %v1899 = vsub.f32 1.0, %v1878
    %1901 = vrot.lane.b32.xlu0 %v1898, 96
    %v1902 = vpop.permute.xlu0 %1901
    %v1904 = vmul.f32 %v1899, %v1902
    %v1905 = vmul.f32 %v1878, 0.0
    %v1906 = vadd.f32 %v1904, %v1905
    %v1907 = vrot.slane %v74, 4
    %v1908 = vrot.slane %v75, 3
    %v1909 = vsel %vm88, %v1908, %v1907
    %v1910 = vsel %vm90, %v1909, 0
    %1912 = vmatprep.subr.mxu0 0.0
    %1913 = vmatpush1.msra.mxu0 %v76
    %1914 = vmatprep.subr.mxu0 0.0
    %1915 = vmatpush1.msra.mxu0 %v77
    %1916 = vmatprep.subr.mxu0 0.0
    %1917 = vmatpush1.msra.mxu0 0.0
    %1918 = vmatprep.subr.mxu0 0.0
    %1919 = vmatpush1.msra.mxu0 0.0
    %1920 = vmatprep.subr.mxu0 0.0
    %1921 = vmatpush1.msra.mxu0 0.0
    %1922 = vmatprep.subr.mxu0 0.0
    %1923 = vmatpush1.msra.mxu0 0.0
    %1924 = vmatprep.subr.mxu0 0.0
    %1925 = vmatpush1.msra.mxu0 0.0
    %1926 = vmatprep.subr.mxu0 0.0
    %1927 = vmatpush1.msra.mxu0 0.0
    %1928 = vmatprep.subr.mxu0 0.0
    %1929 = vmatpush1.msra.mxu0 0.0
    %1930 = vmatprep.subr.mxu0 0.0
    %1931 = vmatpush1.msra.mxu0 0.0
    %1932 = vmatprep.subr.mxu0 0.0
    %1933 = vmatpush1.msra.mxu0 0.0
    %1934 = vmatprep.subr.mxu0 0.0
    %1935 = vmatpush1.msra.mxu0 0.0
    %1936 = vmatprep.subr.mxu0 0.0
    %1937 = vmatpush1.msra.mxu0 0.0
    %1938 = vmatprep.subr.mxu0 0.0
    %1939 = vmatpush1.msra.mxu0 0.0
    %1940 = vmatprep.subr.mxu0 0.0
    %1941 = vmatpush1.msra.mxu0 0.0
    %1942 = vmatprep.subr.mxu0 0.0
    %1943 = vmatpush1.msra.mxu0 0.0
    %1944 = vmatprep.subr.mxu0 0.0
    %1945 = vmatpush1.msra.mxu0 0.0
    %1946 = vmatprep.subr.mxu0 0.0
    %1947 = vmatpush1.msra.mxu0 0.0
    %1948 = vmatprep.subr.mxu0 0.0
    %1949 = vmatpush1.msra.mxu0 0.0
    %1950 = vmatprep.subr.mxu0 0.0
    %1951 = vmatpush1.msra.mxu0 0.0
    %1952 = vmatprep.subr.mxu0 0.0
    %1953 = vmatpush1.msra.mxu0 0.0
    %1954 = vmatprep.subr.mxu0 0.0
    %1955 = vmatpush1.msra.mxu0 0.0
    %1956 = vmatprep.subr.mxu0 0.0
    %1957 = vmatpush1.msra.mxu0 0.0
    %1958 = vmatprep.subr.mxu0 0.0
    %1959 = vmatpush1.msra.mxu0 0.0
    %1960 = vmatprep.subr.mxu0 0.0
    %1961 = vmatpush1.msra.mxu0 0.0
    %1962 = vmatprep.subr.mxu0 0.0
    %1963 = vmatpush1.msra.mxu0 0.0
    %1964 = vmatprep.subr.mxu0 0.0
    %1965 = vmatpush1.msra.mxu0 0.0
    %1966 = vmatprep.subr.mxu0 0.0
    %1967 = vmatpush1.msra.mxu0 0.0
    %1968 = vmatprep.subr.mxu0 0.0
    %1969 = vmatpush1.msra.mxu0 0.0
    %1970 = vmatprep.subr.mxu0 0.0
    %1971 = vmatpush1.msra.mxu0 0.0
    %1972 = vmatprep.subr.mxu0 0.0
    %1973 = vmatpush1.msra.mxu0 0.0
    %1974 = vmatprep.subr.mxu0 0.0
    %1975 = vmatpush1.msra.mxu0 0.0
    %1976 = vmatprep.mubr.f32.mxu0 0.0
    %1977 = vmatmul.mubr.f32.gmra.mrb[0].mxu0 %v1910
    %v1978 = vpop.f32.mrb[0].mxu0
    %v1979 = vadd.f32 %v83, %v1978
    %v1980 = vpop.f32.mrb[0].mxu0
    %1981 = vdwg.mxu0
    %1983 = vrot.lane.b32.xlu0 %v1367, 96
    %v1984 = vpop.permute.xlu0 %1983
    %v1985 = vsel %vm167, %v1984, 0
    %1987 = vmatprep.subr.mxu0 0.0
    %1988 = vmatpush1.msra.mxu0 %v163
    %1989 = vmatprep.subr.mxu0 0.0
    %1990 = vmatpush1.msra.mxu0 %v164
    %1991 = vmatprep.subr.mxu0 0.0
    %1992 = vmatpush1.msra.mxu0 %v165
    %1993 = vmatprep.subr.mxu0 0.0
    %1994 = vmatpush1.msra.mxu0 %v166
    %1995 = vmatprep.subr.mxu0 0.0
    %1996 = vmatpush1.msra.mxu0 0.0
    %1997 = vmatprep.subr.mxu0 0.0
    %1998 = vmatpush1.msra.mxu0 0.0
    %1999 = vmatprep.subr.mxu0 0.0
    %2000 = vmatpush1.msra.mxu0 0.0
    %2001 = vmatprep.subr.mxu0 0.0
    %2002 = vmatpush1.msra.mxu0 0.0
    %2003 = vmatprep.subr.mxu0 0.0
    %2004 = vmatpush1.msra.mxu0 0.0
    %2005 = vmatprep.subr.mxu0 0.0
    %2006 = vmatpush1.msra.mxu0 0.0
    %2007 = vmatprep.subr.mxu0 0.0
    %2008 = vmatpush1.msra.mxu0 0.0
    %2009 = vmatprep.subr.mxu0 0.0
    %2010 = vmatpush1.msra.mxu0 0.0
    %2011 = vmatprep.subr.mxu0 0.0
    %2012 = vmatpush1.msra.mxu0 0.0
    %2013 = vmatprep.subr.mxu0 0.0
    %2014 = vmatpush1.msra.mxu0 0.0
    %2015 = vmatprep.subr.mxu0 0.0
    %2016 = vmatpush1.msra.mxu0 0.0
    %2017 = vmatprep.subr.mxu0 0.0
    %2018 = vmatpush1.msra.mxu0 0.0
    %2019 = vmatprep.subr.mxu0 0.0
    %2020 = vmatpush1.msra.mxu0 0.0
    %2021 = vmatprep.subr.mxu0 0.0
    %2022 = vmatpush1.msra.mxu0 0.0
    %2023 = vmatprep.subr.mxu0 0.0
    %2024 = vmatpush1.msra.mxu0 0.0
    %2025 = vmatprep.subr.mxu0 0.0
    %2026 = vmatpush1.msra.mxu0 0.0
    %2027 = vmatprep.subr.mxu0 0.0
    %2028 = vmatpush1.msra.mxu0 0.0
    %2029 = vmatprep.subr.mxu0 0.0
    %2030 = vmatpush1.msra.mxu0 0.0
    %2031 = vmatprep.subr.mxu0 0.0
    %2032 = vmatpush1.msra.mxu0 0.0
    %2033 = vmatprep.subr.mxu0 0.0
    %2034 = vmatpush1.msra.mxu0 0.0
    %2035 = vmatprep.subr.mxu0 0.0
    %2036 = vmatpush1.msra.mxu0 0.0
    %2037 = vmatprep.subr.mxu0 0.0
    %2038 = vmatpush1.msra.mxu0 0.0
    %2039 = vmatprep.subr.mxu0 0.0
    %2040 = vmatpush1.msra.mxu0 0.0
    %2041 = vmatprep.subr.mxu0 0.0
    %2042 = vmatpush1.msra.mxu0 0.0
    %2043 = vmatprep.subr.mxu0 0.0
    %2044 = vmatpush1.msra.mxu0 0.0
    %2045 = vmatprep.subr.mxu0 0.0
    %2046 = vmatpush1.msra.mxu0 0.0
    %2047 = vmatprep.subr.mxu0 0.0
    %2048 = vmatpush1.msra.mxu0 0.0
    %2049 = vmatprep.subr.mxu0 0.0
    %2050 = vmatpush1.msra.mxu0 0.0
    %2051 = vmatprep.mubr.f32.mxu0 0.0
    %2052 = vmatmul.mubr.f32.gmra.mrb[0].mxu0 %v1985
    %v2053 = vpop.f32.mrb[0].mxu0
    %v2054 = vadd.f32 0.0, %v2053
    %v2055 = vpop.f32.mrb[0].mxu0
    %2056 = vdwg.mxu0
    %v2057 = vadd.f32 %v1979, %v2054
    %v2058 = vxor.u32 %v2057, 2147483648
    %v2059 = vmul.f32 %v2058, 1.442695
    %v2060 = vpow.pop %v2059
    %v2061 = vadd.f32 %v2060, 1.0
    %v2062 = vrcp.pop %v2061
    %v2063 = vmul.f32 1.0, %v2062
    %v2064 = vadd.f32 %v2054, %v255
    %2066 = vrot.lane.b32.xlu0 %v2064, 64
    %v2067 = vpop.permute.xlu0 %2066
    %v2069 = vmul.f32 %v2063, %v2067
    %2071 = vrot.lane.b32.xlu0 %v2069, 64
    %v2072 = vpop.permute.xlu0 %2071
    %v2074 = vadd.f32 %v1979, %v2072
    %v2075 = vtanh.pop %v2074
    %v2076 = vsub.f32 1.0, %v2063
    %2078 = vrot.lane.b32.xlu0 %v2075, 96
    %v2079 = vpop.permute.xlu0 %2078
    %v2081 = vmul.f32 %v2076, %v2079
    %v2082 = vmul.f32 %v2063, %v1367
    %v2083 = vadd.f32 %v2081, %v2082
    %2084 = vmatprep.subr.mxu0 0.0
    %2085 = vmatpush1.msra.mxu0 %v453
    %2086 = vmatprep.subr.mxu0 0.0
    %2087 = vmatpush1.msra.mxu0 %v454
    %2088 = vmatprep.subr.mxu0 0.0
    %2089 = vmatpush1.msra.mxu0 %v455
    %2090 = vmatprep.subr.mxu0 0.0
    %2091 = vmatpush1.msra.mxu0 %v456
    %2092 = vmatprep.subr.mxu0 0.0
    %2093 = vmatpush1.msra.mxu0 0.0
    %2094 = vmatprep.subr.mxu0 0.0
    %2095 = vmatpush1.msra.mxu0 0.0
    %2096 = vmatprep.subr.mxu0 0.0
    %2097 = vmatpush1.msra.mxu0 0.0
    %2098 = vmatprep.subr.mxu0 0.0
    %2099 = vmatpush1.msra.mxu0 0.0
    %2100 = vmatprep.subr.mxu0 0.0
    %2101 = vmatpush1.msra.mxu0 0.0
    %2102 = vmatprep.subr.mxu0 0.0
    %2103 = vmatpush1.msra.mxu0 0.0
    %2104 = vmatprep.subr.mxu0 0.0
    %2105 = vmatpush1.msra.mxu0 0.0
    %2106 = vmatprep.subr.mxu0 0.0
    %2107 = vmatpush1.msra.mxu0 0.0
    %2108 = vmatprep.subr.mxu0 0.0
    %2109 = vmatpush1.msra.mxu0 0.0
    %2110 = vmatprep.subr.mxu0 0.0
    %2111 = vmatpush1.msra.mxu0 0.0
    %2112 = vmatprep.subr.mxu0 0.0
    %2113 = vmatpush1.msra.mxu0 0.0
    %2114 = vmatprep.subr.mxu0 0.0
    %2115 = vmatpush1.msra.mxu0 0.0
    %2116 = vmatprep.subr.mxu0 0.0
    %2117 = vmatpush1.msra.mxu0 0.0
    %2118 = vmatprep.subr.mxu0 0.0
    %2119 = vmatpush1.msra.mxu0 0.0
    %2120 = vmatprep.subr.mxu0 0.0
    %2121 = vmatpush1.msra.mxu0 0.0
    %2122 = vmatprep.subr.mxu0 0.0
    %2123 = vmatpush1.msra.mxu0 0.0
    %2124 = vmatprep.subr.mxu0 0.0
    %2125 = vmatpush1.msra.mxu0 0.0
    %2126 = vmatprep.subr.mxu0 0.0
    %2127 = vmatpush1.msra.mxu0 0.0
    %2128 = vmatprep.subr.mxu0 0.0
    %2129 = vmatpush1.msra.mxu0 0.0
    %2130 = vmatprep.subr.mxu0 0.0
    %2131 = vmatpush1.msra.mxu0 0.0
    %2132 = vmatprep.subr.mxu0 0.0
    %2133 = vmatpush1.msra.mxu0 0.0
    %2134 = vmatprep.subr.mxu0 0.0
    %2135 = vmatpush1.msra.mxu0 0.0
    %2136 = vmatprep.subr.mxu0 0.0
    %2137 = vmatpush1.msra.mxu0 0.0
    %2138 = vmatprep.subr.mxu0 0.0
    %2139 = vmatpush1.msra.mxu0 0.0
    %2140 = vmatprep.subr.mxu0 0.0
    %2141 = vmatpush1.msra.mxu0 0.0
    %2142 = vmatprep.subr.mxu0 0.0
    %2143 = vmatpush1.msra.mxu0 0.0
    %2144 = vmatprep.subr.mxu0 0.0
    %2145 = vmatpush1.msra.mxu0 0.0
    %2146 = vmatprep.subr.mxu0 0.0
    %2147 = vmatpush1.msra.mxu0 0.0
    %2148 = vmatprep.mubr.f32.mxu0 0.0
    %2149 = vmatmul.mubr.f32.gmra.mrb[0].mxu0 %v1985
    %v2150 = vpop.f32.mrb[0].mxu0
    %v2151 = vadd.f32 %v463, %v2150
    %v2152 = vpop.f32.mrb[0].mxu0
    %2153 = vdwg.mxu0
    %2155 = vrot.lane.b32.xlu0 %v1539, 96
    %v2156 = vpop.permute.xlu0 %2155
    %v2157 = vsel %vm167, %v2156, 0
    %2159 = vmatprep.subr.mxu0 0.0
    %2160 = vmatpush1.msra.mxu0 %v536
    %2161 = vmatprep.subr.mxu0 0.0
    %2162 = vmatpush1.msra.mxu0 %v537
    %2163 = vmatprep.subr.mxu0 0.0
    %2164 = vmatpush1.msra.mxu0 %v538
    %2165 = vmatprep.subr.mxu0 0.0
    %2166 = vmatpush1.msra.mxu0 %v539
    %2167 = vmatprep.subr.mxu0 0.0
    %2168 = vmatpush1.msra.mxu0 0.0
    %2169 = vmatprep.subr.mxu0 0.0
    %2170 = vmatpush1.msra.mxu0 0.0
    %2171 = vmatprep.subr.mxu0 0.0
    %2172 = vmatpush1.msra.mxu0 0.0
    %2173 = vmatprep.subr.mxu0 0.0
    %2174 = vmatpush1.msra.mxu0 0.0
    %2175 = vmatprep.subr.mxu0 0.0
    %2176 = vmatpush1.msra.mxu0 0.0
    %2177 = vmatprep.subr.mxu0 0.0
    %2178 = vmatpush1.msra.mxu0 0.0
    %2179 = vmatprep.subr.mxu0 0.0
    %2180 = vmatpush1.msra.mxu0 0.0
    %2181 = vmatprep.subr.mxu0 0.0
    %2182 = vmatpush1.msra.mxu0 0.0
    %2183 = vmatprep.subr.mxu0 0.0
    %2184 = vmatpush1.msra.mxu0 0.0
    %2185 = vmatprep.subr.mxu0 0.0
    %2186 = vmatpush1.msra.mxu0 0.0
    %2187 = vmatprep.subr.mxu0 0.0
    %2188 = vmatpush1.msra.mxu0 0.0
    %2189 = vmatprep.subr.mxu0 0.0
    %2190 = vmatpush1.msra.mxu0 0.0
    %2191 = vmatprep.subr.mxu0 0.0
    %2192 = vmatpush1.msra.mxu0 0.0
    %2193 = vmatprep.subr.mxu0 0.0
    %2194 = vmatpush1.msra.mxu0 0.0
    %2195 = vmatprep.subr.mxu0 0.0
    %2196 = vmatpush1.msra.mxu0 0.0
    %2197 = vmatprep.subr.mxu0 0.0
    %2198 = vmatpush1.msra.mxu0 0.0
    %2199 = vmatprep.subr.mxu0 0.0
    %2200 = vmatpush1.msra.mxu0 0.0
    %2201 = vmatprep.subr.mxu0 0.0
    %2202 = vmatpush1.msra.mxu0 0.0
    %2203 = vmatprep.subr.mxu0 0.0
    %2204 = vmatpush1.msra.mxu0 0.0
    %2205 = vmatprep.subr.mxu0 0.0
    %2206 = vmatpush1.msra.mxu0 0.0
    %2207 = vmatprep.subr.mxu0 0.0
    %2208 = vmatpush1.msra.mxu0 0.0
    %2209 = vmatprep.subr.mxu0 0.0
    %2210 = vmatpush1.msra.mxu0 0.0
    %2211 = vmatprep.subr.mxu0 0.0
    %2212 = vmatpush1.msra.mxu0 0.0
    %2213 = vmatprep.subr.mxu0 0.0
    %2214 = vmatpush1.msra.mxu0 0.0
    %2215 = vmatprep.subr.mxu0 0.0
    %2216 = vmatpush1.msra.mxu0 0.0
    %2217 = vmatprep.subr.mxu0 0.0
    %2218 = vmatpush1.msra.mxu0 0.0
    %2219 = vmatprep.subr.mxu0 0.0
    %2220 = vmatpush1.msra.mxu0 0.0
    %2221 = vmatprep.subr.mxu0 0.0
    %2222 = vmatpush1.msra.mxu0 0.0
    %2223 = vmatprep.mubr.f32.mxu0 0.0
    %2224 = vmatmul.mubr.f32.gmra.mrb[0].mxu0 %v2157
    %v2225 = vpop.f32.mrb[0].mxu0
    %v2226 = vadd.f32 0.0, %v2225
    %v2227 = vpop.f32.mrb[0].mxu0
    %2228 = vdwg.mxu0
    %v2229 = vadd.f32 %v2151, %v2226
    %v2230 = vxor.u32 %v2229, 2147483648
    %v2231 = vmul.f32 %v2230, 1.442695
    %v2232 = vpow.pop %v2231
    %v2233 = vadd.f32 %v2232, 1.0
    %v2234 = vrcp.pop %v2233
    %v2235 = vmul.f32 1.0, %v2234
    %v2236 = vadd.f32 %v2226, %v625
    %2238 = vrot.lane.b32.xlu0 %v2236, 64
    %v2239 = vpop.permute.xlu0 %2238
    %v2241 = vmul.f32 %v2235, %v2239
    %2243 = vrot.lane.b32.xlu0 %v2241, 64
    %v2244 = vpop.permute.xlu0 %2243
    %v2246 = vadd.f32 %v2151, %v2244
    %v2247 = vtanh.pop %v2246
    %v2248 = vsub.f32 1.0, %v2235
    %2250 = vrot.lane.b32.xlu0 %v2247, 96
    %v2251 = vpop.permute.xlu0 %2250
    %v2253 = vmul.f32 %v2248, %v2251
    %v2254 = vmul.f32 %v2235, %v1539
    %v2255 = vadd.f32 %v2253, %v2254
    %2256 = vmatprep.subr.mxu0 0.0
    %2257 = vmatpush1.msra.mxu0 %v997
    %2258 = vmatprep.subr.mxu0 0.0
    %2259 = vmatpush1.msra.mxu0 %v998
    %2260 = vmatprep.subr.mxu0 0.0
    %2261 = vmatpush1.msra.mxu0 %v999
    %2262 = vmatprep.subr.mxu0 0.0
    %2263 = vmatpush1.msra.mxu0 %v1000
    %2264 = vmatprep.subr.mxu0 0.0
    %2265 = vmatpush1.msra.mxu0 0.0
    %2266 = vmatprep.subr.mxu0 0.0
    %2267 = vmatpush1.msra.mxu0 0.0
    %2268 = vmatprep.subr.mxu0 0.0
    %2269 = vmatpush1.msra.mxu0 0.0
    %2270 = vmatprep.subr.mxu0 0.0
    %2271 = vmatpush1.msra.mxu0 0.0
    %2272 = vmatprep.subr.mxu0 0.0
    %2273 = vmatpush1.msra.mxu0 0.0
    %2274 = vmatprep.subr.mxu0 0.0
    %2275 = vmatpush1.msra.mxu0 0.0
    %2276 = vmatprep.subr.mxu0 0.0
    %2277 = vmatpush1.msra.mxu0 0.0
    %2278 = vmatprep.subr.mxu0 0.0
    %2279 = vmatpush1.msra.mxu0 0.0
    %2280 = vmatprep.subr.mxu0 0.0
    %2281 = vmatpush1.msra.mxu0 0.0
    %2282 = vmatprep.subr.mxu0 0.0
    %2283 = vmatpush1.msra.mxu0 0.0
    %2284 = vmatprep.subr.mxu0 0.0
    %2285 = vmatpush1.msra.mxu0 0.0
    %2286 = vmatprep.subr.mxu0 0.0
    %2287 = vmatpush1.msra.mxu0 0.0
    %2288 = vmatprep.subr.mxu0 0.0
    %2289 = vmatpush1.msra.mxu0 0.0
    %2290 = vmatprep.subr.mxu0 0.0
    %2291 = vmatpush1.msra.mxu0 0.0
    %2292 = vmatprep.subr.mxu0 0.0
    %2293 = vmatpush1.msra.mxu0 0.0
    %2294 = vmatprep.subr.mxu0 0.0
    %2295 = vmatpush1.msra.mxu0 0.0
    %2296 = vmatprep.subr.mxu0 0.0
    %2297 = vmatpush1.msra.mxu0 0.0
    %2298 = vmatprep.subr.mxu0 0.0
    %2299 = vmatpush1.msra.mxu0 0.0
    %2300 = vmatprep.subr.mxu0 0.0
    %2301 = vmatpush1.msra.mxu0 0.0
    %2302 = vmatprep.subr.mxu0 0.0
    %2303 = vmatpush1.msra.mxu0 0.0
    %2304 = vmatprep.subr.mxu0 0.0
    %2305 = vmatpush1.msra.mxu0 0.0
    %2306 = vmatprep.subr.mxu0 0.0
    %2307 = vmatpush1.msra.mxu0 0.0
    %2308 = vmatprep.subr.mxu0 0.0
    %2309 = vmatpush1.msra.mxu0 0.0
    %2310 = vmatprep.subr.mxu0 0.0
    %2311 = vmatpush1.msra.mxu0 0.0
    %2312 = vmatprep.subr.mxu0 0.0
    %2313 = vmatpush1.msra.mxu0 0.0
    %2314 = vmatprep.subr.mxu0 0.0
    %2315 = vmatpush1.msra.mxu0 0.0
    %2316 = vmatprep.subr.mxu0 0.0
    %2317 = vmatpush1.msra.mxu0 0.0
    %2318 = vmatprep.subr.mxu0 0.0
    %2319 = vmatpush1.msra.mxu0 0.0
    %2320 = vmatprep.mubr.f32.mxu0 0.0
    %2321 = vmatmul.mubr.f32.gmra.mrb[0].mxu0 %v2157
    %v2322 = vpop.f32.mrb[0].mxu0
    %v2323 = vadd.f32 %v1007, %v2322
    %v2324 = vpop.f32.mrb[0].mxu0
    %2325 = vdwg.mxu0
    %2327 = vrot.lane.b32.xlu0 %v1711, 96
    %v2328 = vpop.permute.xlu0 %2327
    %v2329 = vsel %vm167, %v2328, 0
    %2331 = vmatprep.subr.mxu0 0.0
    %2332 = vmatpush1.msra.mxu0 %v1080
    %2333 = vmatprep.subr.mxu0 0.0
    %2334 = vmatpush1.msra.mxu0 %v1081
    %2335 = vmatprep.subr.mxu0 0.0
    %2336 = vmatpush1.msra.mxu0 %v1082
    %2337 = vmatprep.subr.mxu0 0.0
    %2338 = vmatpush1.msra.mxu0 %v1083
    %2339 = vmatprep.subr.mxu0 0.0
    %2340 = vmatpush1.msra.mxu0 0.0
    %2341 = vmatprep.subr.mxu0 0.0
    %2342 = vmatpush1.msra.mxu0 0.0
    %2343 = vmatprep.subr.mxu0 0.0
    %2344 = vmatpush1.msra.mxu0 0.0
    %2345 = vmatprep.subr.mxu0 0.0
    %2346 = vmatpush1.msra.mxu0 0.0
    %2347 = vmatprep.subr.mxu0 0.0
    %2348 = vmatpush1.msra.mxu0 0.0
    %2349 = vmatprep.subr.mxu0 0.0
    %2350 = vmatpush1.msra.mxu0 0.0
    %2351 = vmatprep.subr.mxu0 0.0
    %2352 = vmatpush1.msra.mxu0 0.0
    %2353 = vmatprep.subr.mxu0 0.0
    %2354 = vmatpush1.msra.mxu0 0.0
    %2355 = vmatprep.subr.mxu0 0.0
    %2356 = vmatpush1.msra.mxu0 0.0
    %2357 = vmatprep.subr.mxu0 0.0
    %2358 = vmatpush1.msra.mxu0 0.0
    %2359 = vmatprep.subr.mxu0 0.0
    %2360 = vmatpush1.msra.mxu0 0.0
    %2361 = vmatprep.subr.mxu0 0.0
    %2362 = vmatpush1.msra.mxu0 0.0
    %2363 = vmatprep.subr.mxu0 0.0
    %2364 = vmatpush1.msra.mxu0 0.0
    %2365 = vmatprep.subr.mxu0 0.0
    %2366 = vmatpush1.msra.mxu0 0.0
    %2367 = vmatprep.subr.mxu0 0.0
    %2368 = vmatpush1.msra.mxu0 0.0
    %2369 = vmatprep.subr.mxu0 0.0
    %2370 = vmatpush1.msra.mxu0 0.0
    %2371 = vmatprep.subr.mxu0 0.0
    %2372 = vmatpush1.msra.mxu0 0.0
    %2373 = vmatprep.subr.mxu0 0.0
    %2374 = vmatpush1.msra.mxu0 0.0
    %2375 = vmatprep.subr.mxu0 0.0
    %2376 = vmatpush1.msra.mxu0 0.0
    %2377 = vmatprep.subr.mxu0 0.0
    %2378 = vmatpush1.msra.mxu0 0.0
    %2379 = vmatprep.subr.mxu0 0.0
    %2380 = vmatpush1.msra.mxu0 0.0
    %2381 = vmatprep.subr.mxu0 0.0
    %2382 = vmatpush1.msra.mxu0 0.0
    %2383 = vmatprep.subr.mxu0 0.0
    %2384 = vmatpush1.msra.mxu0 0.0
    %2385 = vmatprep.subr.mxu0 0.0
    %2386 = vmatpush1.msra.mxu0 0.0
    %2387 = vmatprep.subr.mxu0 0.0
    %2388 = vmatpush1.msra.mxu0 0.0
    %2389 = vmatprep.subr.mxu0 0.0
    %2390 = vmatpush1.msra.mxu0 0.0
    %2391 = vmatprep.subr.mxu0 0.0
    %2392 = vmatpush1.msra.mxu0 0.0
    %2393 = vmatprep.subr.mxu0 0.0
    %2394 = vmatpush1.msra.mxu0 0.0
    %2395 = vmatprep.mubr.f32.mxu0 0.0
    %2396 = vmatmul.mubr.f32.gmra.mrb[0].mxu0 %v2329
    %v2397 = vpop.f32.mrb[0].mxu0
    %v2398 = vadd.f32 0.0, %v2397
    %v2399 = vpop.f32.mrb[0].mxu0
    %2400 = vdwg.mxu0
    %v2401 = vadd.f32 %v2323, %v2398
    %v2402 = vxor.u32 %v2401, 2147483648
    %v2403 = vmul.f32 %v2402, 1.442695
    %v2404 = vpow.pop %v2403
    %v2405 = vadd.f32 %v2404, 1.0
    %v2406 = vrcp.pop %v2405
    %v2407 = vmul.f32 1.0, %v2406
    %v2408 = vadd.f32 %v2398, %v1169
    %2410 = vrot.lane.b32.xlu0 %v2408, 64
    %v2411 = vpop.permute.xlu0 %2410
    %v2413 = vmul.f32 %v2407, %v2411
    %2415 = vrot.lane.b32.xlu0 %v2413, 64
    %v2416 = vpop.permute.xlu0 %2415
    %v2418 = vadd.f32 %v2323, %v2416
    %v2419 = vtanh.pop %v2418
    %v2420 = vsub.f32 1.0, %v2407
    %2422 = vrot.lane.b32.xlu0 %v2419, 96
    %v2423 = vpop.permute.xlu0 %2422
    %v2425 = vmul.f32 %v2420, %v2423
    %v2426 = vmul.f32 %v2407, %v1711
    %v2427 = vadd.f32 %v2425, %v2426
    %2428 = vmatprep.subr.mxu0 0.0
    %2429 = vmatpush1.msra.mxu0 %v1713
    %2430 = vmatprep.subr.mxu0 0.0
    %2431 = vmatpush1.msra.mxu0 %v1714
    %2432 = vmatprep.subr.mxu0 0.0
    %2433 = vmatpush1.msra.mxu0 %v1715
    %2434 = vmatprep.subr.mxu0 0.0
    %2435 = vmatpush1.msra.mxu0 %v1716
    %2436 = vmatprep.subr.mxu0 0.0
    %2437 = vmatpush1.msra.mxu0 0.0
    %2438 = vmatprep.subr.mxu0 0.0
    %2439 = vmatpush1.msra.mxu0 0.0
    %2440 = vmatprep.subr.mxu0 0.0
    %2441 = vmatpush1.msra.mxu0 0.0
    %2442 = vmatprep.subr.mxu0 0.0
    %2443 = vmatpush1.msra.mxu0 0.0
    %2444 = vmatprep.subr.mxu0 0.0
    %2445 = vmatpush1.msra.mxu0 0.0
    %2446 = vmatprep.subr.mxu0 0.0
    %2447 = vmatpush1.msra.mxu0 0.0
    %2448 = vmatprep.subr.mxu0 0.0
    %2449 = vmatpush1.msra.mxu0 0.0
    %2450 = vmatprep.subr.mxu0 0.0
    %2451 = vmatpush1.msra.mxu0 0.0
    %2452 = vmatprep.subr.mxu0 0.0
    %2453 = vmatpush1.msra.mxu0 0.0
    %2454 = vmatprep.subr.mxu0 0.0
    %2455 = vmatpush1.msra.mxu0 0.0
    %2456 = vmatprep.subr.mxu0 0.0
    %2457 = vmatpush1.msra.mxu0 0.0
    %2458 = vmatprep.subr.mxu0 0.0
    %2459 = vmatpush1.msra.mxu0 0.0
    %2460 = vmatprep.subr.mxu0 0.0
    %2461 = vmatpush1.msra.mxu0 0.0
    %2462 = vmatprep.subr.mxu0 0.0
    %2463 = vmatpush1.msra.mxu0 0.0
    %2464 = vmatprep.subr.mxu0 0.0
    %2465 = vmatpush1.msra.mxu0 0.0
    %2466 = vmatprep.subr.mxu0 0.0
    %2467 = vmatpush1.msra.mxu0 0.0
    %2468 = vmatprep.subr.mxu0 0.0
    %2469 = vmatpush1.msra.mxu0 0.0
    %2470 = vmatprep.subr.mxu0 0.0
    %2471 = vmatpush1.msra.mxu0 0.0
    %2472 = vmatprep.subr.mxu0 0.0
    %2473 = vmatpush1.msra.mxu0 0.0
    %2474 = vmatprep.subr.mxu0 0.0
    %2475 = vmatpush1.msra.mxu0 0.0
    %2476 = vmatprep.subr.mxu0 0.0
    %2477 = vmatpush1.msra.mxu0 0.0
    %2478 = vmatprep.subr.mxu0 0.0
    %2479 = vmatpush1.msra.mxu0 0.0
    %2480 = vmatprep.subr.mxu0 0.0
    %2481 = vmatpush1.msra.mxu0 0.0
    %2482 = vmatprep.subr.mxu0 0.0
    %2483 = vmatpush1.msra.mxu0 0.0
    %2484 = vmatprep.subr.mxu0 0.0
    %2485 = vmatpush1.msra.mxu0 0.0
    %2486 = vmatprep.subr.mxu0 0.0
    %2487 = vmatpush1.msra.mxu0 0.0
    %2488 = vmatprep.subr.mxu0 0.0
    %2489 = vmatpush1.msra.mxu0 0.0
    %2490 = vmatprep.subr.mxu0 0.0
    %2491 = vmatpush1.msra.mxu0 0.0
    %2492 = vmatprep.mubr.f32.mxu0 0.0
    %2493 = vmatmul.mubr.f32.gmra.mrb[0].mxu0 %v2329
    %v2494 = vpop.f32.mrb[0].mxu0
    %v2495 = vadd.f32 %v1723, %v2494
    %v2496 = vpop.f32.mrb[0].mxu0
    %2497 = vdwg.mxu0
    %2499 = vrot.lane.b32.xlu0 %v1906, 96
    %v2500 = vpop.permute.xlu0 %2499
    %v2501 = vsel %vm167, %v2500, 0
    %2503 = vmatprep.subr.mxu0 0.0
    %2504 = vmatpush1.msra.mxu0 %v1796
    %2505 = vmatprep.subr.mxu0 0.0
    %2506 = vmatpush1.msra.mxu0 %v1797
    %2507 = vmatprep.subr.mxu0 0.0
    %2508 = vmatpush1.msra.mxu0 %v1798
    %2509 = vmatprep.subr.mxu0 0.0
    %2510 = vmatpush1.msra.mxu0 %v1799
    %2511 = vmatprep.subr.mxu0 0.0
    %2512 = vmatpush1.msra.mxu0 0.0
    %2513 = vmatprep.subr.mxu0 0.0
    %2514 = vmatpush1.msra.mxu0 0.0
    %2515 = vmatprep.subr.mxu0 0.0
    %2516 = vmatpush1.msra.mxu0 0.0
    %2517 = vmatprep.subr.mxu0 0.0
    %2518 = vmatpush1.msra.mxu0 0.0
    %2519 = vmatprep.subr.mxu0 0.0
    %2520 = vmatpush1.msra.mxu0 0.0
    %2521 = vmatprep.subr.mxu0 0.0
    %2522 = vmatpush1.msra.mxu0 0.0
    %2523 = vmatprep.subr.mxu0 0.0
    %2524 = vmatpush1.msra.mxu0 0.0
    %2525 = vmatprep.subr.mxu0 0.0
    %2526 = vmatpush1.msra.mxu0 0.0
    %2527 = vmatprep.subr.mxu0 0.0
    %2528 = vmatpush1.msra.mxu0 0.0
    %2529 = vmatprep.subr.mxu0 0.0
    %2530 = vmatpush1.msra.mxu0 0.0
    %2531 = vmatprep.subr.mxu0 0.0
    %2532 = vmatpush1.msra.mxu0 0.0
    %2533 = vmatprep.subr.mxu0 0.0
    %2534 = vmatpush1.msra.mxu0 0.0
    %2535 = vmatprep.subr.mxu0 0.0
    %2536 = vmatpush1.msra.mxu0 0.0
    %2537 = vmatprep.subr.mxu0 0.0
    %2538 = vmatpush1.msra.mxu0 0.0
    %2539 = vmatprep.subr.mxu0 0.0
    %2540 = vmatpush1.msra.mxu0 0.0
    %2541 = vmatprep.subr.mxu0 0.0
    %2542 = vmatpush1.msra.mxu0 0.0
    %2543 = vmatprep.subr.mxu0 0.0
    %2544 = vmatpush1.msra.mxu0 0.0
    %2545 = vmatprep.subr.mxu0 0.0
    %2546 = vmatpush1.msra.mxu0 0.0
    %2547 = vmatprep.subr.mxu0 0.0
    %2548 = vmatpush1.msra.mxu0 0.0
    %2549 = vmatprep.subr.mxu0 0.0
    %2550 = vmatpush1.msra.mxu0 0.0
    %2551 = vmatprep.subr.mxu0 0.0
    %2552 = vmatpush1.msra.mxu0 0.0
    %2553 = vmatprep.subr.mxu0 0.0
    %2554 = vmatpush1.msra.mxu0 0.0
    %2555 = vmatprep.subr.mxu0 0.0
    %2556 = vmatpush1.msra.mxu0 0.0
    %2557 = vmatprep.subr.mxu0 0.0
    %2558 = vmatpush1.msra.mxu0 0.0
    %2559 = vmatprep.subr.mxu0 0.0
    %2560 = vmatpush1.msra.mxu0 0.0
    %2561 = vmatprep.subr.mxu0 0.0
    %2562 = vmatpush1.msra.mxu0 0.0
    %2563 = vmatprep.subr.mxu0 0.0
    %2564 = vmatpush1.msra.mxu0 0.0
    %2565 = vmatprep.subr.mxu0 0.0
    %2566 = vmatpush1.msra.mxu0 0.0
    %2567 = vmatprep.mubr.f32.mxu0 0.0
    %2568 = vmatmul.mubr.f32.gmra.mrb[0].mxu0 %v2501
    %v2569 = vpop.f32.mrb[0].mxu0
    %v2570 = vadd.f32 0.0, %v2569
    %v2571 = vpop.f32.mrb[0].mxu0
    %2572 = vdwg.mxu0
    %v2573 = vadd.f32 %v2495, %v2570
    %v2574 = vxor.u32 %v2573, 2147483648
    %v2575 = vmul.f32 %v2574, 1.442695
    %v2576 = vpow.pop %v2575
    %v2577 = vadd.f32 %v2576, 1.0
    %v2578 = vrcp.pop %v2577
    %v2579 = vmul.f32 1.0, %v2578
    %v2580 = vadd.f32 %v2570, %v1885
    %2582 = vrot.lane.b32.xlu0 %v2580, 64
    %v2583 = vpop.permute.xlu0 %2582
    %v2585 = vmul.f32 %v2579, %v2583
    %2587 = vrot.lane.b32.xlu0 %v2585, 64
    %v2588 = vpop.permute.xlu0 %2587
    %v2590 = vadd.f32 %v2495, %v2588
    %v2591 = vtanh.pop %v2590
    %v2592 = vsub.f32 1.0, %v2579
    %2594 = vrot.lane.b32.xlu0 %v2591, 96
    %v2595 = vpop.permute.xlu0 %2594
    %v2597 = vmul.f32 %v2592, %v2595
    %v2598 = vmul.f32 %v2579, %v1906
    %v2599 = vadd.f32 %v2597, %v2598
    %v2600 = vrot.slane %v74, 5
    %v2601 = vrot.slane %v75, 4
    %v2602 = vsel %vm88, %v2601, %v2600
    %v2603 = vsel %vm90, %v2602, 0
    %2605 = vmatprep.subr.mxu0 0.0
    %2606 = vmatpush1.msra.mxu0 %v76
    %2607 = vmatprep.subr.mxu0 0.0
    %2608 = vmatpush1.msra.mxu0 %v77
    %2609 = vmatprep.subr.mxu0 0.0
    %2610 = vmatpush1.msra.mxu0 0.0
    %2611 = vmatprep.subr.mxu0 0.0
    %2612 = vmatpush1.msra.mxu0 0.0
    %2613 = vmatprep.subr.mxu0 0.0
    %2614 = vmatpush1.msra.mxu0 0.0
    %2615 = vmatprep.subr.mxu0 0.0
    %2616 = vmatpush1.msra.mxu0 0.0
    %2617 = vmatprep.subr.mxu0 0.0
    %2618 = vmatpush1.msra.mxu0 0.0
    %2619 = vmatprep.subr.mxu0 0.0
    %2620 = vmatpush1.msra.mxu0 0.0
    %2621 = vmatprep.subr.mxu0 0.0
    %2622 = vmatpush1.msra.mxu0 0.0
    %2623 = vmatprep.subr.mxu0 0.0
    %2624 = vmatpush1.msra.mxu0 0.0
    %2625 = vmatprep.subr.mxu0 0.0
    %2626 = vmatpush1.msra.mxu0 0.0
    %2627 = vmatprep.subr.mxu0 0.0
    %2628 = vmatpush1.msra.mxu0 0.0
    %2629 = vmatprep.subr.mxu0 0.0
    %2630 = vmatpush1.msra.mxu0 0.0
    %2631 = vmatprep.subr.mxu0 0.0
    %2632 = vmatpush1.msra.mxu0 0.0
    %2633 = vmatprep.subr.mxu0 0.0
    %2634 = vmatpush1.msra.mxu0 0.0
    %2635 = vmatprep.subr.mxu0 0.0
    %2636 = vmatpush1.msra.mxu0 0.0
    %2637 = vmatprep.subr.mxu0 0.0
    %2638 = vmatpush1.msra.mxu0 0.0
    %2639 = vmatprep.subr.mxu0 0.0
    %2640 = vmatpush1.msra.mxu0 0.0
    %2641 = vmatprep.subr.mxu0 0.0
    %2642 = vmatpush1.msra.mxu0 0.0
    %2643 = vmatprep.subr.mxu0 0.0
    %2644 = vmatpush1.msra.mxu0 0.0
    %2645 = vmatprep.subr.mxu0 0.0
    %2646 = vmatpush1.msra.mxu0 0.0
    %2647 = vmatprep.subr.mxu0 0.0
    %2648 = vmatpush1.msra.mxu0 0.0
    %2649 = vmatprep.subr.mxu0 0.0
    %2650 = vmatpush1.msra.mxu0 0.0
    %2651 = vmatprep.subr.mxu0 0.0
    %2652 = vmatpush1.msra.mxu0 0.0
    %2653 = vmatprep.subr.mxu0 0.0
    %2654 = vmatpush1.msra.mxu0 0.0
    %2655 = vmatprep.subr.mxu0 0.0
    %2656 = vmatpush1.msra.mxu0 0.0
    %2657 = vmatprep.subr.mxu0 0.0
    %2658 = vmatpush1.msra.mxu0 0.0
    %2659 = vmatprep.subr.mxu0 0.0
    %2660 = vmatpush1.msra.mxu0 0.0
    %2661 = vmatprep.subr.mxu0 0.0
    %2662 = vmatpush1.msra.mxu0 0.0
    %2663 = vmatprep.subr.mxu0 0.0
    %2664 = vmatpush1.msra.mxu0 0.0
    %2665 = vmatprep.subr.mxu0 0.0
    %2666 = vmatpush1.msra.mxu0 0.0
    %2667 = vmatprep.subr.mxu0 0.0
    %2668 = vmatpush1.msra.mxu0 0.0
    %2669 = vmatprep.mubr.f32.mxu0 0.0
    %2670 = vmatmul.mubr.f32.gmra.mrb[0].mxu0 %v2603
    %v2671 = vpop.f32.mrb[0].mxu0
    %v2672 = vadd.f32 %v83, %v2671
    %v2673 = vpop.f32.mrb[0].mxu0
    %2674 = vdwg.mxu0
    %2676 = vrot.lane.b32.xlu0 %v2083, 96
    %v2677 = vpop.permute.xlu0 %2676
    %v2678 = vsel %vm167, %v2677, 0
    %2680 = vmatprep.subr.mxu0 0.0
    %2681 = vmatpush1.msra.mxu0 %v163
    %2682 = vmatprep.subr.mxu0 0.0
    %2683 = vmatpush1.msra.mxu0 %v164
    %2684 = vmatprep.subr.mxu0 0.0
    %2685 = vmatpush1.msra.mxu0 %v165
    %2686 = vmatprep.subr.mxu0 0.0
    %2687 = vmatpush1.msra.mxu0 %v166
    %2688 = vmatprep.subr.mxu0 0.0
    %2689 = vmatpush1.msra.mxu0 0.0
    %2690 = vmatprep.subr.mxu0 0.0
    %2691 = vmatpush1.msra.mxu0 0.0
    %2692 = vmatprep.subr.mxu0 0.0
    %2693 = vmatpush1.msra.mxu0 0.0
    %2694 = vmatprep.subr.mxu0 0.0
    %2695 = vmatpush1.msra.mxu0 0.0
    %2696 = vmatprep.subr.mxu0 0.0
    %2697 = vmatpush1.msra.mxu0 0.0
    %2698 = vmatprep.subr.mxu0 0.0
    %2699 = vmatpush1.msra.mxu0 0.0
    %2700 = vmatprep.subr.mxu0 0.0
    %2701 = vmatpush1.msra.mxu0 0.0
    %2702 = vmatprep.subr.mxu0 0.0
    %2703 = vmatpush1.msra.mxu0 0.0
    %2704 = vmatprep.subr.mxu0 0.0
    %2705 = vmatpush1.msra.mxu0 0.0
    %2706 = vmatprep.subr.mxu0 0.0
    %2707 = vmatpush1.msra.mxu0 0.0
    %2708 = vmatprep.subr.mxu0 0.0
    %2709 = vmatpush1.msra.mxu0 0.0
    %2710 = vmatprep.subr.mxu0 0.0
    %2711 = vmatpush1.msra.mxu0 0.0
    %2712 = vmatprep.subr.mxu0 0.0
    %2713 = vmatpush1.msra.mxu0 0.0
    %2714 = vmatprep.subr.mxu0 0.0
    %2715 = vmatpush1.msra.mxu0 0.0
    %2716 = vmatprep.subr.mxu0 0.0
    %2717 = vmatpush1.msra.mxu0 0.0
    %2718 = vmatprep.subr.mxu0 0.0
    %2719 = vmatpush1.msra.mxu0 0.0
    %2720 = vmatprep.subr.mxu0 0.0
    %2721 = vmatpush1.msra.mxu0 0.0
    %2722 = vmatprep.subr.mxu0 0.0
    %2723 = vmatpush1.msra.mxu0 0.0
    %2724 = vmatprep.subr.mxu0 0.0
    %2725 = vmatpush1.msra.mxu0 0.0
    %2726 = vmatprep.subr.mxu0 0.0
    %2727 = vmatpush1.msra.mxu0 0.0
    %2728 = vmatprep.subr.mxu0 0.0
    %2729 = vmatpush1.msra.mxu0 0.0
    %2730 = vmatprep.subr.mxu0 0.0
    %2731 = vmatpush1.msra.mxu0 0.0
    %2732 = vmatprep.subr.mxu0 0.0
    %2733 = vmatpush1.msra.mxu0 0.0
    %2734 = vmatprep.subr.mxu0 0.0
    %2735 = vmatpush1.msra.mxu0 0.0
    %2736 = vmatprep.subr.mxu0 0.0
    %2737 = vmatpush1.msra.mxu0 0.0
    %2738 = vmatprep.subr.mxu0 0.0
    %2739 = vmatpush1.msra.mxu0 0.0
    %2740 = vmatprep.subr.mxu0 0.0
    %2741 = vmatpush1.msra.mxu0 0.0
    %2742 = vmatprep.subr.mxu0 0.0
    %2743 = vmatpush1.msra.mxu0 0.0
    %2744 = vmatprep.mubr.f32.mxu0 0.0
    %2745 = vmatmul.mubr.f32.gmra.mrb[0].mxu0 %v2678
    %v2746 = vpop.f32.mrb[0].mxu0
    %v2747 = vadd.f32 0.0, %v2746
    %v2748 = vpop.f32.mrb[0].mxu0
    %2749 = vdwg.mxu0
    %v2750 = vadd.f32 %v2672, %v2747
    %v2751 = vxor.u32 %v2750, 2147483648
    %v2752 = vmul.f32 %v2751, 1.442695
    %v2753 = vpow.pop %v2752
    %v2754 = vadd.f32 %v2753, 1.0
    %v2755 = vrcp.pop %v2754
    %v2756 = vmul.f32 1.0, %v2755
    %v2757 = vadd.f32 %v2747, %v255
    %2759 = vrot.lane.b32.xlu0 %v2757, 64
    %v2760 = vpop.permute.xlu0 %2759
    %v2762 = vmul.f32 %v2756, %v2760
    %2764 = vrot.lane.b32.xlu0 %v2762, 64
    %v2765 = vpop.permute.xlu0 %2764
    %v2767 = vadd.f32 %v2672, %v2765
    %v2768 = vtanh.pop %v2767
    %v2769 = vsub.f32 1.0, %v2756
    %2771 = vrot.lane.b32.xlu0 %v2768, 96
    %v2772 = vpop.permute.xlu0 %2771
    %v2774 = vmul.f32 %v2769, %v2772
    %v2775 = vmul.f32 %v2756, %v2083
    %v2776 = vadd.f32 %v2774, %v2775
    %2777 = vmatprep.subr.mxu0 0.0
    %2778 = vmatpush1.msra.mxu0 %v453
    %2779 = vmatprep.subr.mxu0 0.0
    %2780 = vmatpush1.msra.mxu0 %v454
    %2781 = vmatprep.subr.mxu0 0.0
    %2782 = vmatpush1.msra.mxu0 %v455
    %2783 = vmatprep.subr.mxu0 0.0
    %2784 = vmatpush1.msra.mxu0 %v456
    %2785 = vmatprep.subr.mxu0 0.0
    %2786 = vmatpush1.msra.mxu0 0.0
    %2787 = vmatprep.subr.mxu0 0.0
    %2788 = vmatpush1.msra.mxu0 0.0
    %2789 = vmatprep.subr.mxu0 0.0
    %2790 = vmatpush1.msra.mxu0 0.0
    %2791 = vmatprep.subr.mxu0 0.0
    %2792 = vmatpush1.msra.mxu0 0.0
    %2793 = vmatprep.subr.mxu0 0.0
    %2794 = vmatpush1.msra.mxu0 0.0
    %2795 = vmatprep.subr.mxu0 0.0
    %2796 = vmatpush1.msra.mxu0 0.0
    %2797 = vmatprep.subr.mxu0 0.0
    %2798 = vmatpush1.msra.mxu0 0.0
    %2799 = vmatprep.subr.mxu0 0.0
    %2800 = vmatpush1.msra.mxu0 0.0
    %2801 = vmatprep.subr.mxu0 0.0
    %2802 = vmatpush1.msra.mxu0 0.0
    %2803 = vmatprep.subr.mxu0 0.0
    %2804 = vmatpush1.msra.mxu0 0.0
    %2805 = vmatprep.subr.mxu0 0.0
    %2806 = vmatpush1.msra.mxu0 0.0
    %2807 = vmatprep.subr.mxu0 0.0
    %2808 = vmatpush1.msra.mxu0 0.0
    %2809 = vmatprep.subr.mxu0 0.0
    %2810 = vmatpush1.msra.mxu0 0.0
    %2811 = vmatprep.subr.mxu0 0.0
    %2812 = vmatpush1.msra.mxu0 0.0
    %2813 = vmatprep.subr.mxu0 0.0
    %2814 = vmatpush1.msra.mxu0 0.0
    %2815 = vmatprep.subr.mxu0 0.0
    %2816 = vmatpush1.msra.mxu0 0.0
    %2817 = vmatprep.subr.mxu0 0.0
    %2818 = vmatpush1.msra.mxu0 0.0
    %2819 = vmatprep.subr.mxu0 0.0
    %2820 = vmatpush1.msra.mxu0 0.0
    %2821 = vmatprep.subr.mxu0 0.0
    %2822 = vmatpush1.msra.mxu0 0.0
    %2823 = vmatprep.subr.mxu0 0.0
    %2824 = vmatpush1.msra.mxu0 0.0
    %2825 = vmatprep.subr.mxu0 0.0
    %2826 = vmatpush1.msra.mxu0 0.0
    %2827 = vmatprep.subr.mxu0 0.0
    %2828 = vmatpush1.msra.mxu0 0.0
    %2829 = vmatprep.subr.mxu0 0.0
    %2830 = vmatpush1.msra.mxu0 0.0
    %2831 = vmatprep.subr.mxu0 0.0
    %2832 = vmatpush1.msra.mxu0 0.0
    %2833 = vmatprep.subr.mxu0 0.0
    %2834 = vmatpush1.msra.mxu0 0.0
    %2835 = vmatprep.subr.mxu0 0.0
    %2836 = vmatpush1.msra.mxu0 0.0
    %2837 = vmatprep.subr.mxu0 0.0
    %2838 = vmatpush1.msra.mxu0 0.0
    %2839 = vmatprep.subr.mxu0 0.0
    %2840 = vmatpush1.msra.mxu0 0.0
    %2841 = vmatprep.mubr.f32.mxu0 0.0
    %2842 = vmatmul.mubr.f32.gmra.mrb[0].mxu0 %v2678
    %v2843 = vpop.f32.mrb[0].mxu0
    %v2844 = vadd.f32 %v463, %v2843
    %v2845 = vpop.f32.mrb[0].mxu0
    %2846 = vdwg.mxu0
    %2848 = vrot.lane.b32.xlu0 %v2255, 96
    %v2849 = vpop.permute.xlu0 %2848
    %v2850 = vsel %vm167, %v2849, 0
    %2852 = vmatprep.subr.mxu0 0.0
    %2853 = vmatpush1.msra.mxu0 %v536
    %2854 = vmatprep.subr.mxu0 0.0
    %2855 = vmatpush1.msra.mxu0 %v537
    %2856 = vmatprep.subr.mxu0 0.0
    %2857 = vmatpush1.msra.mxu0 %v538
    %2858 = vmatprep.subr.mxu0 0.0
    %2859 = vmatpush1.msra.mxu0 %v539
    %2860 = vmatprep.subr.mxu0 0.0
    %2861 = vmatpush1.msra.mxu0 0.0
    %2862 = vmatprep.subr.mxu0 0.0
    %2863 = vmatpush1.msra.mxu0 0.0
    %2864 = vmatprep.subr.mxu0 0.0
    %2865 = vmatpush1.msra.mxu0 0.0
    %2866 = vmatprep.subr.mxu0 0.0
    %2867 = vmatpush1.msra.mxu0 0.0
    %2868 = vmatprep.subr.mxu0 0.0
    %2869 = vmatpush1.msra.mxu0 0.0
    %2870 = vmatprep.subr.mxu0 0.0
    %2871 = vmatpush1.msra.mxu0 0.0
    %2872 = vmatprep.subr.mxu0 0.0
    %2873 = vmatpush1.msra.mxu0 0.0
    %2874 = vmatprep.subr.mxu0 0.0
    %2875 = vmatpush1.msra.mxu0 0.0
    %2876 = vmatprep.subr.mxu0 0.0
    %2877 = vmatpush1.msra.mxu0 0.0
    %2878 = vmatprep.subr.mxu0 0.0
    %2879 = vmatpush1.msra.mxu0 0.0
    %2880 = vmatprep.subr.mxu0 0.0
    %2881 = vmatpush1.msra.mxu0 0.0
    %2882 = vmatprep.subr.mxu0 0.0
    %2883 = vmatpush1.msra.mxu0 0.0
    %2884 = vmatprep.subr.mxu0 0.0
    %2885 = vmatpush1.msra.mxu0 0.0
    %2886 = vmatprep.subr.mxu0 0.0
    %2887 = vmatpush1.msra.mxu0 0.0
    %2888 = vmatprep.subr.mxu0 0.0
    %2889 = vmatpush1.msra.mxu0 0.0
    %2890 = vmatprep.subr.mxu0 0.0
    %2891 = vmatpush1.msra.mxu0 0.0
    %2892 = vmatprep.subr.mxu0 0.0
    %2893 = vmatpush1.msra.mxu0 0.0
    %2894 = vmatprep.subr.mxu0 0.0
    %2895 = vmatpush1.msra.mxu0 0.0
    %2896 = vmatprep.subr.mxu0 0.0
    %2897 = vmatpush1.msra.mxu0 0.0
    %2898 = vmatprep.subr.mxu0 0.0
    %2899 = vmatpush1.msra.mxu0 0.0
    %2900 = vmatprep.subr.mxu0 0.0
    %2901 = vmatpush1.msra.mxu0 0.0
    %2902 = vmatprep.subr.mxu0 0.0
    %2903 = vmatpush1.msra.mxu0 0.0
    %2904 = vmatprep.subr.mxu0 0.0
    %2905 = vmatpush1.msra.mxu0 0.0
    %2906 = vmatprep.subr.mxu0 0.0
    %2907 = vmatpush1.msra.mxu0 0.0
    %2908 = vmatprep.subr.mxu0 0.0
    %2909 = vmatpush1.msra.mxu0 0.0
    %2910 = vmatprep.subr.mxu0 0.0
    %2911 = vmatpush1.msra.mxu0 0.0
    %2912 = vmatprep.subr.mxu0 0.0
    %2913 = vmatpush1.msra.mxu0 0.0
    %2914 = vmatprep.subr.mxu0 0.0
    %2915 = vmatpush1.msra.mxu0 0.0
    %2916 = vmatprep.mubr.f32.mxu0 0.0
    %2917 = vmatmul.mubr.f32.gmra.mrb[0].mxu0 %v2850
    %v2918 = vpop.f32.mrb[0].mxu0
    %v2919 = vadd.f32 0.0, %v2918
    %v2920 = vpop.f32.mrb[0].mxu0
    %2921 = vdwg.mxu0
    %v2922 = vadd.f32 %v2844, %v2919
    %v2923 = vxor.u32 %v2922, 2147483648
    %v2924 = vmul.f32 %v2923, 1.442695
    %v2925 = vpow.pop %v2924
    %v2926 = vadd.f32 %v2925, 1.0
    %v2927 = vrcp.pop %v2926
    %v2928 = vmul.f32 1.0, %v2927
    %v2929 = vadd.f32 %v2919, %v625
    %2931 = vrot.lane.b32.xlu0 %v2929, 64
    %v2932 = vpop.permute.xlu0 %2931
    %v2934 = vmul.f32 %v2928, %v2932
    %2936 = vrot.lane.b32.xlu0 %v2934, 64
    %v2937 = vpop.permute.xlu0 %2936
    %v2939 = vadd.f32 %v2844, %v2937
    %v2940 = vtanh.pop %v2939
    %v2941 = vsub.f32 1.0, %v2928
    %2943 = vrot.lane.b32.xlu0 %v2940, 96
    %v2944 = vpop.permute.xlu0 %2943
    %v2946 = vmul.f32 %v2941, %v2944
    %v2947 = vmul.f32 %v2928, %v2255
    %v2948 = vadd.f32 %v2946, %v2947
    %2949 = vmatprep.subr.mxu0 0.0
    %2950 = vmatpush1.msra.mxu0 %v997
    %2951 = vmatprep.subr.mxu0 0.0
    %2952 = vmatpush1.msra.mxu0 %v998
    %2953 = vmatprep.subr.mxu0 0.0
    %2954 = vmatpush1.msra.mxu0 %v999
    %2955 = vmatprep.subr.mxu0 0.0
    %2956 = vmatpush1.msra.mxu0 %v1000
    %2957 = vmatprep.subr.mxu0 0.0
    %2958 = vmatpush1.msra.mxu0 0.0
    %2959 = vmatprep.subr.mxu0 0.0
    %2960 = vmatpush1.msra.mxu0 0.0
    %2961 = vmatprep.subr.mxu0 0.0
    %2962 = vmatpush1.msra.mxu0 0.0
    %2963 = vmatprep.subr.mxu0 0.0
    %2964 = vmatpush1.msra.mxu0 0.0
    %2965 = vmatprep.subr.mxu0 0.0
    %2966 = vmatpush1.msra.mxu0 0.0
    %2967 = vmatprep.subr.mxu0 0.0
    %2968 = vmatpush1.msra.mxu0 0.0
    %2969 = vmatprep.subr.mxu0 0.0
    %2970 = vmatpush1.msra.mxu0 0.0
    %2971 = vmatprep.subr.mxu0 0.0
    %2972 = vmatpush1.msra.mxu0 0.0
    %2973 = vmatprep.subr.mxu0 0.0
    %2974 = vmatpush1.msra.mxu0 0.0
    %2975 = vmatprep.subr.mxu0 0.0
    %2976 = vmatpush1.msra.mxu0 0.0
    %2977 = vmatprep.subr.mxu0 0.0
    %2978 = vmatpush1.msra.mxu0 0.0
    %2979 = vmatprep.subr.mxu0 0.0
    %2980 = vmatpush1.msra.mxu0 0.0
    %2981 = vmatprep.subr.mxu0 0.0
    %2982 = vmatpush1.msra.mxu0 0.0
    %2983 = vmatprep.subr.mxu0 0.0
    %2984 = vmatpush1.msra.mxu0 0.0
    %2985 = vmatprep.subr.mxu0 0.0
    %2986 = vmatpush1.msra.mxu0 0.0
    %2987 = vmatprep.subr.mxu0 0.0
    %2988 = vmatpush1.msra.mxu0 0.0
    %2989 = vmatprep.subr.mxu0 0.0
    %2990 = vmatpush1.msra.mxu0 0.0
    %2991 = vmatprep.subr.mxu0 0.0
    %2992 = vmatpush1.msra.mxu0 0.0
    %2993 = vmatprep.subr.mxu0 0.0
    %2994 = vmatpush1.msra.mxu0 0.0
    %2995 = vmatprep.subr.mxu0 0.0
    %2996 = vmatpush1.msra.mxu0 0.0
    %2997 = vmatprep.subr.mxu0 0.0
    %2998 = vmatpush1.msra.mxu0 0.0
    %2999 = vmatprep.subr.mxu0 0.0
    %3000 = vmatpush1.msra.mxu0 0.0
    %3001 = vmatprep.subr.mxu0 0.0
    %3002 = vmatpush1.msra.mxu0 0.0
    %3003 = vmatprep.subr.mxu0 0.0
    %3004 = vmatpush1.msra.mxu0 0.0
    %3005 = vmatprep.subr.mxu0 0.0
    %3006 = vmatpush1.msra.mxu0 0.0
    %3007 = vmatprep.subr.mxu0 0.0
    %3008 = vmatpush1.msra.mxu0 0.0
    %3009 = vmatprep.subr.mxu0 0.0
    %3010 = vmatpush1.msra.mxu0 0.0
    %3011 = vmatprep.subr.mxu0 0.0
    %3012 = vmatpush1.msra.mxu0 0.0
    %3013 = vmatprep.mubr.f32.mxu0 0.0
    %3014 = vmatmul.mubr.f32.gmra.mrb[0].mxu0 %v2850
    %v3015 = vpop.f32.mrb[0].mxu0
    %v3016 = vadd.f32 %v1007, %v3015
    %v3017 = vpop.f32.mrb[0].mxu0
    %3018 = vdwg.mxu0
    %3020 = vrot.lane.b32.xlu0 %v2427, 96
    %v3021 = vpop.permute.xlu0 %3020
    %v3022 = vsel %vm167, %v3021, 0
    %3024 = vmatprep.subr.mxu0 0.0
    %3025 = vmatpush1.msra.mxu0 %v1080
    %3026 = vmatprep.subr.mxu0 0.0
    %3027 = vmatpush1.msra.mxu0 %v1081
    %3028 = vmatprep.subr.mxu0 0.0
    %3029 = vmatpush1.msra.mxu0 %v1082
    %3030 = vmatprep.subr.mxu0 0.0
    %3031 = vmatpush1.msra.mxu0 %v1083
    %3032 = vmatprep.subr.mxu0 0.0
    %3033 = vmatpush1.msra.mxu0 0.0
    %3034 = vmatprep.subr.mxu0 0.0
    %3035 = vmatpush1.msra.mxu0 0.0
    %3036 = vmatprep.subr.mxu0 0.0
    %3037 = vmatpush1.msra.mxu0 0.0
    %3038 = vmatprep.subr.mxu0 0.0
    %3039 = vmatpush1.msra.mxu0 0.0
    %3040 = vmatprep.subr.mxu0 0.0
    %3041 = vmatpush1.msra.mxu0 0.0
    %3042 = vmatprep.subr.mxu0 0.0
    %3043 = vmatpush1.msra.mxu0 0.0
    %3044 = vmatprep.subr.mxu0 0.0
    %3045 = vmatpush1.msra.mxu0 0.0
    %3046 = vmatprep.subr.mxu0 0.0
    %3047 = vmatpush1.msra.mxu0 0.0
    %3048 = vmatprep.subr.mxu0 0.0
    %3049 = vmatpush1.msra.mxu0 0.0
    %3050 = vmatprep.subr.mxu0 0.0
    %3051 = vmatpush1.msra.mxu0 0.0
    %3052 = vmatprep.subr.mxu0 0.0
    %3053 = vmatpush1.msra.mxu0 0.0
    %3054 = vmatprep.subr.mxu0 0.0
    %3055 = vmatpush1.msra.mxu0 0.0
    %3056 = vmatprep.subr.mxu0 0.0
    %3057 = vmatpush1.msra.mxu0 0.0
    %3058 = vmatprep.subr.mxu0 0.0
    %3059 = vmatpush1.msra.mxu0 0.0
    %3060 = vmatprep.subr.mxu0 0.0
    %3061 = vmatpush1.msra.mxu0 0.0
    %3062 = vmatprep.subr.mxu0 0.0
    %3063 = vmatpush1.msra.mxu0 0.0
    %3064 = vmatprep.subr.mxu0 0.0
    %3065 = vmatpush1.msra.mxu0 0.0
    %3066 = vmatprep.subr.mxu0 0.0
    %3067 = vmatpush1.msra.mxu0 0.0
    %3068 = vmatprep.subr.mxu0 0.0
    %3069 = vmatpush1.msra.mxu0 0.0
    %3070 = vmatprep.subr.mxu0 0.0
    %3071 = vmatpush1.msra.mxu0 0.0
    %3072 = vmatprep.subr.mxu0 0.0
    %3073 = vmatpush1.msra.mxu0 0.0
    %3074 = vmatprep.subr.mxu0 0.0
    %3075 = vmatpush1.msra.mxu0 0.0
    %3076 = vmatprep.subr.mxu0 0.0
    %3077 = vmatpush1.msra.mxu0 0.0
    %3078 = vmatprep.subr.mxu0 0.0
    %3079 = vmatpush1.msra.mxu0 0.0
    %3080 = vmatprep.subr.mxu0 0.0
    %3081 = vmatpush1.msra.mxu0 0.0
    %3082 = vmatprep.subr.mxu0 0.0
    %3083 = vmatpush1.msra.mxu0 0.0
    %3084 = vmatprep.subr.mxu0 0.0
    %3085 = vmatpush1.msra.mxu0 0.0
    %3086 = vmatprep.subr.mxu0 0.0
    %3087 = vmatpush1.msra.mxu0 0.0
    %3088 = vmatprep.mubr.f32.mxu0 0.0
    %3089 = vmatmul.mubr.f32.gmra.mrb[0].mxu0 %v3022
    %v3090 = vpop.f32.mrb[0].mxu0
    %v3091 = vadd.f32 0.0, %v3090
    %v3092 = vpop.f32.mrb[0].mxu0
    %3093 = vdwg.mxu0
    %v3094 = vadd.f32 %v3016, %v3091
    %v3095 = vxor.u32 %v3094, 2147483648
    %v3096 = vmul.f32 %v3095, 1.442695
    %v3097 = vpow.pop %v3096
    %v3098 = vadd.f32 %v3097, 1.0
    %v3099 = vrcp.pop %v3098
    %v3100 = vmul.f32 1.0, %v3099
    %v3101 = vadd.f32 %v3091, %v1169
    %3103 = vrot.lane.b32.xlu0 %v3101, 64
    %v3104 = vpop.permute.xlu0 %3103
    %v3106 = vmul.f32 %v3100, %v3104
    %3108 = vrot.lane.b32.xlu0 %v3106, 64
    %v3109 = vpop.permute.xlu0 %3108
    %v3111 = vadd.f32 %v3016, %v3109
    %v3112 = vtanh.pop %v3111
    %v3113 = vsub.f32 1.0, %v3100
    %3115 = vrot.lane.b32.xlu0 %v3112, 96
    %v3116 = vpop.permute.xlu0 %3115
    %v3118 = vmul.f32 %v3113, %v3116
    %v3119 = vmul.f32 %v3100, %v2427
    %v3120 = vadd.f32 %v3118, %v3119
    %3121 = vmatprep.subr.mxu0 0.0
    %3122 = vmatpush1.msra.mxu0 %v1713
    %3123 = vmatprep.subr.mxu0 0.0
    %3124 = vmatpush1.msra.mxu0 %v1714
    %3125 = vmatprep.subr.mxu0 0.0
    %3126 = vmatpush1.msra.mxu0 %v1715
    %3127 = vmatprep.subr.mxu0 0.0
    %3128 = vmatpush1.msra.mxu0 %v1716
    %3129 = vmatprep.subr.mxu0 0.0
    %3130 = vmatpush1.msra.mxu0 0.0
    %3131 = vmatprep.subr.mxu0 0.0
    %3132 = vmatpush1.msra.mxu0 0.0
    %3133 = vmatprep.subr.mxu0 0.0
    %3134 = vmatpush1.msra.mxu0 0.0
    %3135 = vmatprep.subr.mxu0 0.0
    %3136 = vmatpush1.msra.mxu0 0.0
    %3137 = vmatprep.subr.mxu0 0.0
    %3138 = vmatpush1.msra.mxu0 0.0
    %3139 = vmatprep.subr.mxu0 0.0
    %3140 = vmatpush1.msra.mxu0 0.0
    %3141 = vmatprep.subr.mxu0 0.0
    %3142 = vmatpush1.msra.mxu0 0.0
    %3143 = vmatprep.subr.mxu0 0.0
    %3144 = vmatpush1.msra.mxu0 0.0
    %3145 = vmatprep.subr.mxu0 0.0
    %3146 = vmatpush1.msra.mxu0 0.0
    %3147 = vmatprep.subr.mxu0 0.0
    %3148 = vmatpush1.msra.mxu0 0.0
    %3149 = vmatprep.subr.mxu0 0.0
    %3150 = vmatpush1.msra.mxu0 0.0
    %3151 = vmatprep.subr.mxu0 0.0
    %3152 = vmatpush1.msra.mxu0 0.0
    %3153 = vmatprep.subr.mxu0 0.0
    %3154 = vmatpush1.msra.mxu0 0.0
    %3155 = vmatprep.subr.mxu0 0.0
    %3156 = vmatpush1.msra.mxu0 0.0
    %3157 = vmatprep.subr.mxu0 0.0
    %3158 = vmatpush1.msra.mxu0 0.0
    %3159 = vmatprep.subr.mxu0 0.0
    %3160 = vmatpush1.msra.mxu0 0.0
    %3161 = vmatprep.subr.mxu0 0.0
    %3162 = vmatpush1.msra.mxu0 0.0
    %3163 = vmatprep.subr.mxu0 0.0
    %3164 = vmatpush1.msra.mxu0 0.0
    %3165 = vmatprep.subr.mxu0 0.0
    %3166 = vmatpush1.msra.mxu0 0.0
    %3167 = vmatprep.subr.mxu0 0.0
    %3168 = vmatpush1.msra.mxu0 0.0
    %3169 = vmatprep.subr.mxu0 0.0
    %3170 = vmatpush1.msra.mxu0 0.0
    %3171 = vmatprep.subr.mxu0 0.0
    %3172 = vmatpush1.msra.mxu0 0.0
    %3173 = vmatprep.subr.mxu0 0.0
    %3174 = vmatpush1.msra.mxu0 0.0
    %3175 = vmatprep.subr.mxu0 0.0
    %3176 = vmatpush1.msra.mxu0 0.0
    %3177 = vmatprep.subr.mxu0 0.0
    %3178 = vmatpush1.msra.mxu0 0.0
    %3179 = vmatprep.subr.mxu0 0.0
    %3180 = vmatpush1.msra.mxu0 0.0
    %3181 = vmatprep.subr.mxu0 0.0
    %3182 = vmatpush1.msra.mxu0 0.0
    %3183 = vmatprep.subr.mxu0 0.0
    %3184 = vmatpush1.msra.mxu0 0.0
    %3185 = vmatprep.mubr.f32.mxu0 0.0
    %3186 = vmatmul.mubr.f32.gmra.mrb[0].mxu0 %v3022
    %v3187 = vpop.f32.mrb[0].mxu0
    %v3188 = vadd.f32 %v1723, %v3187
    %v3189 = vpop.f32.mrb[0].mxu0
    %3190 = vdwg.mxu0
    %3192 = vrot.lane.b32.xlu0 %v2599, 96
    %v3193 = vpop.permute.xlu0 %3192
    %v3194 = vsel %vm167, %v3193, 0
    %3196 = vmatprep.subr.mxu0 0.0
    %3197 = vmatpush1.msra.mxu0 %v1796
    %3198 = vmatprep.subr.mxu0 0.0
    %3199 = vmatpush1.msra.mxu0 %v1797
    %3200 = vmatprep.subr.mxu0 0.0
    %3201 = vmatpush1.msra.mxu0 %v1798
    %3202 = vmatprep.subr.mxu0 0.0
    %3203 = vmatpush1.msra.mxu0 %v1799
    %3204 = vmatprep.subr.mxu0 0.0
    %3205 = vmatpush1.msra.mxu0 0.0
    %3206 = vmatprep.subr.mxu0 0.0
    %3207 = vmatpush1.msra.mxu0 0.0
    %3208 = vmatprep.subr.mxu0 0.0
    %3209 = vmatpush1.msra.mxu0 0.0
    %3210 = vmatprep.subr.mxu0 0.0
    %3211 = vmatpush1.msra.mxu0 0.0
    %3212 = vmatprep.subr.mxu0 0.0
    %3213 = vmatpush1.msra.mxu0 0.0
    %3214 = vmatprep.subr.mxu0 0.0
    %3215 = vmatpush1.msra.mxu0 0.0
    %3216 = vmatprep.subr.mxu0 0.0
    %3217 = vmatpush1.msra.mxu0 0.0
    %3218 = vmatprep.subr.mxu0 0.0
    %3219 = vmatpush1.msra.mxu0 0.0
    %3220 = vmatprep.subr.mxu0 0.0
    %3221 = vmatpush1.msra.mxu0 0.0
    %3222 = vmatprep.subr.mxu0 0.0
    %3223 = vmatpush1.msra.mxu0 0.0
    %3224 = vmatprep.subr.mxu0 0.0
    %3225 = vmatpush1.msra.mxu0 0.0
    %3226 = vmatprep.subr.mxu0 0.0
    %3227 = vmatpush1.msra.mxu0 0.0
    %3228 = vmatprep.subr.mxu0 0.0
    %3229 = vmatpush1.msra.mxu0 0.0
    %3230 = vmatprep.subr.mxu0 0.0
    %3231 = vmatpush1.msra.mxu0 0.0
    %3232 = vmatprep.subr.mxu0 0.0
    %3233 = vmatpush1.msra.mxu0 0.0
    %3234 = vmatprep.subr.mxu0 0.0
    %3235 = vmatpush1.msra.mxu0 0.0
    %3236 = vmatprep.subr.mxu0 0.0
    %3237 = vmatpush1.msra.mxu0 0.0
    %3238 = vmatprep.subr.mxu0 0.0
    %3239 = vmatpush1.msra.mxu0 0.0
    %3240 = vmatprep.subr.mxu0 0.0
    %3241 = vmatpush1.msra.mxu0 0.0
    %3242 = vmatprep.subr.mxu0 0.0
    %3243 = vmatpush1.msra.mxu0 0.0
    %3244 = vmatprep.subr.mxu0 0.0
    %3245 = vmatpush1.msra.mxu0 0.0
    %3246 = vmatprep.subr.mxu0 0.0
    %3247 = vmatpush1.msra.mxu0 0.0
    %3248 = vmatprep.subr.mxu0 0.0
    %3249 = vmatpush1.msra.mxu0 0.0
    %3250 = vmatprep.subr.mxu0 0.0
    %3251 = vmatpush1.msra.mxu0 0.0
    %3252 = vmatprep.subr.mxu0 0.0
    %3253 = vmatpush1.msra.mxu0 0.0
    %3254 = vmatprep.subr.mxu0 0.0
    %3255 = vmatpush1.msra.mxu0 0.0
    %3256 = vmatprep.subr.mxu0 0.0
    %3257 = vmatpush1.msra.mxu0 0.0
    %3258 = vmatprep.subr.mxu0 0.0
    %3259 = vmatpush1.msra.mxu0 0.0
    %3260 = vmatprep.mubr.f32.mxu0 0.0
    %3261 = vmatmul.mubr.f32.gmra.mrb[0].mxu0 %v3194
    %v3262 = vpop.f32.mrb[0].mxu0
    %v3263 = vadd.f32 0.0, %v3262
    %v3264 = vpop.f32.mrb[0].mxu0
    %3265 = vdwg.mxu0
    %v3266 = vadd.f32 %v3188, %v3263
    %v3267 = vxor.u32 %v3266, 2147483648
    %v3268 = vmul.f32 %v3267, 1.442695
    %v3269 = vpow.pop %v3268
    %v3270 = vadd.f32 %v3269, 1.0
    %v3271 = vrcp.pop %v3270
    %v3272 = vmul.f32 1.0, %v3271
    %v3273 = vadd.f32 %v3263, %v1885
    %3275 = vrot.lane.b32.xlu0 %v3273, 64
    %v3276 = vpop.permute.xlu0 %3275
    %v3278 = vmul.f32 %v3272, %v3276
    %3280 = vrot.lane.b32.xlu0 %v3278, 64
    %v3281 = vpop.permute.xlu0 %3280
    %v3283 = vadd.f32 %v3188, %v3281
    %v3284 = vtanh.pop %v3283
    %v3285 = vsub.f32 1.0, %v3272
    %3287 = vrot.lane.b32.xlu0 %v3284, 96
    %v3288 = vpop.permute.xlu0 %3287
    %v3290 = vmul.f32 %v3285, %v3288
    %v3291 = vmul.f32 %v3272, %v2599
    %v3292 = vadd.f32 %v3290, %v3291
    %v3293 = vrot.slane %v74, 6
    %v3294 = vrot.slane %v75, 5
    %v3295 = vsel %vm88, %v3294, %v3293
    %v3296 = vsel %vm90, %v3295, 0
    %3298 = vmatprep.subr.mxu0 0.0
    %3299 = vmatpush1.msra.mxu0 %v76
    %3300 = vmatprep.subr.mxu0 0.0
    %3301 = vmatpush1.msra.mxu0 %v77
    %3302 = vmatprep.subr.mxu0 0.0
    %3303 = vmatpush1.msra.mxu0 0.0
    %3304 = vmatprep.subr.mxu0 0.0
    %3305 = vmatpush1.msra.mxu0 0.0
    %3306 = vmatprep.subr.mxu0 0.0
    %3307 = vmatpush1.msra.mxu0 0.0
    %3308 = vmatprep.subr.mxu0 0.0
    %3309 = vmatpush1.msra.mxu0 0.0
    %3310 = vmatprep.subr.mxu0 0.0
    %3311 = vmatpush1.msra.mxu0 0.0
    %3312 = vmatprep.subr.mxu0 0.0
    %3313 = vmatpush1.msra.mxu0 0.0
    %3314 = vmatprep.subr.mxu0 0.0
    %3315 = vmatpush1.msra.mxu0 0.0
    %3316 = vmatprep.subr.mxu0 0.0
    %3317 = vmatpush1.msra.mxu0 0.0
    %3318 = vmatprep.subr.mxu0 0.0
    %3319 = vmatpush1.msra.mxu0 0.0
    %3320 = vmatprep.subr.mxu0 0.0
    %3321 = vmatpush1.msra.mxu0 0.0
    %3322 = vmatprep.subr.mxu0 0.0
    %3323 = vmatpush1.msra.mxu0 0.0
    %3324 = vmatprep.subr.mxu0 0.0
    %3325 = vmatpush1.msra.mxu0 0.0
    %3326 = vmatprep.subr.mxu0 0.0
    %3327 = vmatpush1.msra.mxu0 0.0
    %3328 = vmatprep.subr.mxu0 0.0
    %3329 = vmatpush1.msra.mxu0 0.0
    %3330 = vmatprep.subr.mxu0 0.0
    %3331 = vmatpush1.msra.mxu0 0.0
    %3332 = vmatprep.subr.mxu0 0.0
    %3333 = vmatpush1.msra.mxu0 0.0
    %3334 = vmatprep.subr.mxu0 0.0
    %3335 = vmatpush1.msra.mxu0 0.0
    %3336 = vmatprep.subr.mxu0 0.0
    %3337 = vmatpush1.msra.mxu0 0.0
    %3338 = vmatprep.subr.mxu0 0.0
    %3339 = vmatpush1.msra.mxu0 0.0
    %3340 = vmatprep.subr.mxu0 0.0
    %3341 = vmatpush1.msra.mxu0 0.0
    %3342 = vmatprep.subr.mxu0 0.0
    %3343 = vmatpush1.msra.mxu0 0.0
    %3344 = vmatprep.subr.mxu0 0.0
    %3345 = vmatpush1.msra.mxu0 0.0
    %3346 = vmatprep.subr.mxu0 0.0
    %3347 = vmatpush1.msra.mxu0 0.0
    %3348 = vmatprep.subr.mxu0 0.0
    %3349 = vmatpush1.msra.mxu0 0.0
    %3350 = vmatprep.subr.mxu0 0.0
    %3351 = vmatpush1.msra.mxu0 0.0
    %3352 = vmatprep.subr.mxu0 0.0
    %3353 = vmatpush1.msra.mxu0 0.0
    %3354 = vmatprep.subr.mxu0 0.0
    %3355 = vmatpush1.msra.mxu0 0.0
    %3356 = vmatprep.subr.mxu0 0.0
    %3357 = vmatpush1.msra.mxu0 0.0
    %3358 = vmatprep.subr.mxu0 0.0
    %3359 = vmatpush1.msra.mxu0 0.0
    %3360 = vmatprep.subr.mxu0 0.0
    %3361 = vmatpush1.msra.mxu0 0.0
    %3362 = vmatprep.mubr.f32.mxu0 0.0
    %3363 = vmatmul.mubr.f32.gmra.mrb[0].mxu0 %v3296
    %v3364 = vpop.f32.mrb[0].mxu0
    %v3365 = vadd.f32 %v83, %v3364
    %v3366 = vpop.f32.mrb[0].mxu0
    %3367 = vdwg.mxu0
    %3369 = vrot.lane.b32.xlu0 %v2776, 96
    %v3370 = vpop.permute.xlu0 %3369
    %v3371 = vsel %vm167, %v3370, 0
    %3373 = vmatprep.subr.mxu0 0.0
    %3374 = vmatpush1.msra.mxu0 %v163
    %3375 = vmatprep.subr.mxu0 0.0
    %3376 = vmatpush1.msra.mxu0 %v164
    %3377 = vmatprep.subr.mxu0 0.0
    %3378 = vmatpush1.msra.mxu0 %v165
    %3379 = vmatprep.subr.mxu0 0.0
    %3380 = vmatpush1.msra.mxu0 %v166
    %3381 = vmatprep.subr.mxu0 0.0
    %3382 = vmatpush1.msra.mxu0 0.0
    %3383 = vmatprep.subr.mxu0 0.0
    %3384 = vmatpush1.msra.mxu0 0.0
    %3385 = vmatprep.subr.mxu0 0.0
    %3386 = vmatpush1.msra.mxu0 0.0
    %3387 = vmatprep.subr.mxu0 0.0
    %3388 = vmatpush1.msra.mxu0 0.0
    %3389 = vmatprep.subr.mxu0 0.0
    %3390 = vmatpush1.msra.mxu0 0.0
    %3391 = vmatprep.subr.mxu0 0.0
    %3392 = vmatpush1.msra.mxu0 0.0
    %3393 = vmatprep.subr.mxu0 0.0
    %3394 = vmatpush1.msra.mxu0 0.0
    %3395 = vmatprep.subr.mxu0 0.0
    %3396 = vmatpush1.msra.mxu0 0.0
    %3397 = vmatprep.subr.mxu0 0.0
    %3398 = vmatpush1.msra.mxu0 0.0
    %3399 = vmatprep.subr.mxu0 0.0
    %3400 = vmatpush1.msra.mxu0 0.0
    %3401 = vmatprep.subr.mxu0 0.0
    %3402 = vmatpush1.msra.mxu0 0.0
    %3403 = vmatprep.subr.mxu0 0.0
    %3404 = vmatpush1.msra.mxu0 0.0
    %3405 = vmatprep.subr.mxu0 0.0
    %3406 = vmatpush1.msra.mxu0 0.0
    %3407 = vmatprep.subr.mxu0 0.0
    %3408 = vmatpush1.msra.mxu0 0.0
    %3409 = vmatprep.subr.mxu0 0.0
    %3410 = vmatpush1.msra.mxu0 0.0
    %3411 = vmatprep.subr.mxu0 0.0
    %3412 = vmatpush1.msra.mxu0 0.0
    %3413 = vmatprep.subr.mxu0 0.0
    %3414 = vmatpush1.msra.mxu0 0.0
    %3415 = vmatprep.subr.mxu0 0.0
    %3416 = vmatpush1.msra.mxu0 0.0
    %3417 = vmatprep.subr.mxu0 0.0
    %3418 = vmatpush1.msra.mxu0 0.0
    %3419 = vmatprep.subr.mxu0 0.0
    %3420 = vmatpush1.msra.mxu0 0.0
    %3421 = vmatprep.subr.mxu0 0.0
    %3422 = vmatpush1.msra.mxu0 0.0
    %3423 = vmatprep.subr.mxu0 0.0
    %3424 = vmatpush1.msra.mxu0 0.0
    %3425 = vmatprep.subr.mxu0 0.0
    %3426 = vmatpush1.msra.mxu0 0.0
    %3427 = vmatprep.subr.mxu0 0.0
    %3428 = vmatpush1.msra.mxu0 0.0
    %3429 = vmatprep.subr.mxu0 0.0
    %3430 = vmatpush1.msra.mxu0 0.0
    %3431 = vmatprep.subr.mxu0 0.0
    %3432 = vmatpush1.msra.mxu0 0.0
    %3433 = vmatprep.subr.mxu0 0.0
    %3434 = vmatpush1.msra.mxu0 0.0
    %3435 = vmatprep.subr.mxu0 0.0
    %3436 = vmatpush1.msra.mxu0 0.0
    %3437 = vmatprep.mubr.f32.mxu0 0.0
    %3438 = vmatmul.mubr.f32.gmra.mrb[0].mxu0 %v3371
    %v3439 = vpop.f32.mrb[0].mxu0
    %v3440 = vadd.f32 0.0, %v3439
    %v3441 = vpop.f32.mrb[0].mxu0
    %3442 = vdwg.mxu0
    %v3443 = vadd.f32 %v3365, %v3440
    %v3444 = vxor.u32 %v3443, 2147483648
    %v3445 = vmul.f32 %v3444, 1.442695
    %v3446 = vpow.pop %v3445
    %v3447 = vadd.f32 %v3446, 1.0
    %v3448 = vrcp.pop %v3447
    %v3449 = vmul.f32 1.0, %v3448
    %v3450 = vadd.f32 %v3440, %v255
    %3452 = vrot.lane.b32.xlu0 %v3450, 64
    %v3453 = vpop.permute.xlu0 %3452
    %v3455 = vmul.f32 %v3449, %v3453
    %3457 = vrot.lane.b32.xlu0 %v3455, 64
    %v3458 = vpop.permute.xlu0 %3457
    %v3460 = vadd.f32 %v3365, %v3458
    %v3461 = vtanh.pop %v3460
    %v3462 = vsub.f32 1.0, %v3449
    %3464 = vrot.lane.b32.xlu0 %v3461, 96
    %v3465 = vpop.permute.xlu0 %3464
    %v3467 = vmul.f32 %v3462, %v3465
    %v3468 = vmul.f32 %v3449, %v2776
    %v3469 = vadd.f32 %v3467, %v3468
    %3470 = vmatprep.subr.mxu0 0.0
    %3471 = vmatpush1.msra.mxu0 %v453
    %3472 = vmatprep.subr.mxu0 0.0
    %3473 = vmatpush1.msra.mxu0 %v454
    %3474 = vmatprep.subr.mxu0 0.0
    %3475 = vmatpush1.msra.mxu0 %v455
    %3476 = vmatprep.subr.mxu0 0.0
    %3477 = vmatpush1.msra.mxu0 %v456
    %3478 = vmatprep.subr.mxu0 0.0
    %3479 = vmatpush1.msra.mxu0 0.0
    %3480 = vmatprep.subr.mxu0 0.0
    %3481 = vmatpush1.msra.mxu0 0.0
    %3482 = vmatprep.subr.mxu0 0.0
    %3483 = vmatpush1.msra.mxu0 0.0
    %3484 = vmatprep.subr.mxu0 0.0
    %3485 = vmatpush1.msra.mxu0 0.0
    %3486 = vmatprep.subr.mxu0 0.0
    %3487 = vmatpush1.msra.mxu0 0.0
    %3488 = vmatprep.subr.mxu0 0.0
    %3489 = vmatpush1.msra.mxu0 0.0
    %3490 = vmatprep.subr.mxu0 0.0
    %3491 = vmatpush1.msra.mxu0 0.0
    %3492 = vmatprep.subr.mxu0 0.0
    %3493 = vmatpush1.msra.mxu0 0.0
    %3494 = vmatprep.subr.mxu0 0.0
    %3495 = vmatpush1.msra.mxu0 0.0
    %3496 = vmatprep.subr.mxu0 0.0
    %3497 = vmatpush1.msra.mxu0 0.0
    %3498 = vmatprep.subr.mxu0 0.0
    %3499 = vmatpush1.msra.mxu0 0.0
    %3500 = vmatprep.subr.mxu0 0.0
    %3501 = vmatpush1.msra.mxu0 0.0
    %3502 = vmatprep.subr.mxu0 0.0
    %3503 = vmatpush1.msra.mxu0 0.0
    %3504 = vmatprep.subr.mxu0 0.0
    %3505 = vmatpush1.msra.mxu0 0.0
    %3506 = vmatprep.subr.mxu0 0.0
    %3507 = vmatpush1.msra.mxu0 0.0
    %3508 = vmatprep.subr.mxu0 0.0
    %3509 = vmatpush1.msra.mxu0 0.0
    %3510 = vmatprep.subr.mxu0 0.0
    %3511 = vmatpush1.msra.mxu0 0.0
    %3512 = vmatprep.subr.mxu0 0.0
    %3513 = vmatpush1.msra.mxu0 0.0
    %3514 = vmatprep.subr.mxu0 0.0
    %3515 = vmatpush1.msra.mxu0 0.0
    %3516 = vmatprep.subr.mxu0 0.0
    %3517 = vmatpush1.msra.mxu0 0.0
    %3518 = vmatprep.subr.mxu0 0.0
    %3519 = vmatpush1.msra.mxu0 0.0
    %3520 = vmatprep.subr.mxu0 0.0
    %3521 = vmatpush1.msra.mxu0 0.0
    %3522 = vmatprep.subr.mxu0 0.0
    %3523 = vmatpush1.msra.mxu0 0.0
    %3524 = vmatprep.subr.mxu0 0.0
    %3525 = vmatpush1.msra.mxu0 0.0
    %3526 = vmatprep.subr.mxu0 0.0
    %3527 = vmatpush1.msra.mxu0 0.0
    %3528 = vmatprep.subr.mxu0 0.0
    %3529 = vmatpush1.msra.mxu0 0.0
    %3530 = vmatprep.subr.mxu0 0.0
    %3531 = vmatpush1.msra.mxu0 0.0
    %3532 = vmatprep.subr.mxu0 0.0
    %3533 = vmatpush1.msra.mxu0 0.0
    %3534 = vmatprep.mubr.f32.mxu0 0.0
    %3535 = vmatmul.mubr.f32.gmra.mrb[0].mxu0 %v3371
    %v3536 = vpop.f32.mrb[0].mxu0
    %v3537 = vadd.f32 %v463, %v3536
    %v3538 = vpop.f32.mrb[0].mxu0
    %3539 = vdwg.mxu0
    %3541 = vrot.lane.b32.xlu0 %v2948, 96
    %v3542 = vpop.permute.xlu0 %3541
    %v3543 = vsel %vm167, %v3542, 0
    %3545 = vmatprep.subr.mxu0 0.0
    %3546 = vmatpush1.msra.mxu0 %v536
    %3547 = vmatprep.subr.mxu0 0.0
    %3548 = vmatpush1.msra.mxu0 %v537
    %3549 = vmatprep.subr.mxu0 0.0
    %3550 = vmatpush1.msra.mxu0 %v538
    %3551 = vmatprep.subr.mxu0 0.0
    %3552 = vmatpush1.msra.mxu0 %v539
    %3553 = vmatprep.subr.mxu0 0.0
    %3554 = vmatpush1.msra.mxu0 0.0
    %3555 = vmatprep.subr.mxu0 0.0
    %3556 = vmatpush1.msra.mxu0 0.0
    %3557 = vmatprep.subr.mxu0 0.0
    %3558 = vmatpush1.msra.mxu0 0.0
    %3559 = vmatprep.subr.mxu0 0.0
    %3560 = vmatpush1.msra.mxu0 0.0
    %3561 = vmatprep.subr.mxu0 0.0
    %3562 = vmatpush1.msra.mxu0 0.0
    %3563 = vmatprep.subr.mxu0 0.0
    %3564 = vmatpush1.msra.mxu0 0.0
    %3565 = vmatprep.subr.mxu0 0.0
    %3566 = vmatpush1.msra.mxu0 0.0
    %3567 = vmatprep.subr.mxu0 0.0
    %3568 = vmatpush1.msra.mxu0 0.0
    %3569 = vmatprep.subr.mxu0 0.0
    %3570 = vmatpush1.msra.mxu0 0.0
    %3571 = vmatprep.subr.mxu0 0.0
    %3572 = vmatpush1.msra.mxu0 0.0
    %3573 = vmatprep.subr.mxu0 0.0
    %3574 = vmatpush1.msra.mxu0 0.0
    %3575 = vmatprep.subr.mxu0 0.0
    %3576 = vmatpush1.msra.mxu0 0.0
    %3577 = vmatprep.subr.mxu0 0.0
    %3578 = vmatpush1.msra.mxu0 0.0
    %3579 = vmatprep.subr.mxu0 0.0
    %3580 = vmatpush1.msra.mxu0 0.0
    %3581 = vmatprep.subr.mxu0 0.0
    %3582 = vmatpush1.msra.mxu0 0.0
    %3583 = vmatprep.subr.mxu0 0.0
    %3584 = vmatpush1.msra.mxu0 0.0
    %3585 = vmatprep.subr.mxu0 0.0
    %3586 = vmatpush1.msra.mxu0 0.0
    %3587 = vmatprep.subr.mxu0 0.0
    %3588 = vmatpush1.msra.mxu0 0.0
    %3589 = vmatprep.subr.mxu0 0.0
    %3590 = vmatpush1.msra.mxu0 0.0
    %3591 = vmatprep.subr.mxu0 0.0
    %3592 = vmatpush1.msra.mxu0 0.0
    %3593 = vmatprep.subr.mxu0 0.0
    %3594 = vmatpush1.msra.mxu0 0.0
    %3595 = vmatprep.subr.mxu0 0.0
    %3596 = vmatpush1.msra.mxu0 0.0
    %3597 = vmatprep.subr.mxu0 0.0
    %3598 = vmatpush1.msra.mxu0 0.0
    %3599 = vmatprep.subr.mxu0 0.0
    %3600 = vmatpush1.msra.mxu0 0.0
    %3601 = vmatprep.subr.mxu0 0.0
    %3602 = vmatpush1.msra.mxu0 0.0
    %3603 = vmatprep.subr.mxu0 0.0
    %3604 = vmatpush1.msra.mxu0 0.0
    %3605 = vmatprep.subr.mxu0 0.0
    %3606 = vmatpush1.msra.mxu0 0.0
    %3607 = vmatprep.subr.mxu0 0.0
    %3608 = vmatpush1.msra.mxu0 0.0
    %3609 = vmatprep.mubr.f32.mxu0 0.0
    %3610 = vmatmul.mubr.f32.gmra.mrb[0].mxu0 %v3543
    %v3611 = vpop.f32.mrb[0].mxu0
    %v3612 = vadd.f32 0.0, %v3611
    %v3613 = vpop.f32.mrb[0].mxu0
    %3614 = vdwg.mxu0
    %v3615 = vadd.f32 %v3537, %v3612
    %v3616 = vxor.u32 %v3615, 2147483648
    %v3617 = vmul.f32 %v3616, 1.442695
    %v3618 = vpow.pop %v3617
    %v3619 = vadd.f32 %v3618, 1.0
    %v3620 = vrcp.pop %v3619
    %v3621 = vmul.f32 1.0, %v3620
    %v3622 = vadd.f32 %v3612, %v625
    %3624 = vrot.lane.b32.xlu0 %v3622, 64
    %v3625 = vpop.permute.xlu0 %3624
    %v3627 = vmul.f32 %v3621, %v3625
    %3629 = vrot.lane.b32.xlu0 %v3627, 64
    %v3630 = vpop.permute.xlu0 %3629
    %v3632 = vadd.f32 %v3537, %v3630
    %v3633 = vtanh.pop %v3632
    %v3634 = vsub.f32 1.0, %v3621
    %3636 = vrot.lane.b32.xlu0 %v3633, 96
    %v3637 = vpop.permute.xlu0 %3636
    %v3639 = vmul.f32 %v3634, %v3637
    %v3640 = vmul.f32 %v3621, %v2948
    %v3641 = vadd.f32 %v3639, %v3640
    %3642 = vmatprep.subr.mxu0 0.0
    %3643 = vmatpush1.msra.mxu0 %v997
    %3644 = vmatprep.subr.mxu0 0.0
    %3645 = vmatpush1.msra.mxu0 %v998
    %3646 = vmatprep.subr.mxu0 0.0
    %3647 = vmatpush1.msra.mxu0 %v999
    %3648 = vmatprep.subr.mxu0 0.0
    %3649 = vmatpush1.msra.mxu0 %v1000
    %3650 = vmatprep.subr.mxu0 0.0
    %3651 = vmatpush1.msra.mxu0 0.0
    %3652 = vmatprep.subr.mxu0 0.0
    %3653 = vmatpush1.msra.mxu0 0.0
    %3654 = vmatprep.subr.mxu0 0.0
    %3655 = vmatpush1.msra.mxu0 0.0
    %3656 = vmatprep.subr.mxu0 0.0
    %3657 = vmatpush1.msra.mxu0 0.0
    %3658 = vmatprep.subr.mxu0 0.0
    %3659 = vmatpush1.msra.mxu0 0.0
    %3660 = vmatprep.subr.mxu0 0.0
    %3661 = vmatpush1.msra.mxu0 0.0
    %3662 = vmatprep.subr.mxu0 0.0
    %3663 = vmatpush1.msra.mxu0 0.0
    %3664 = vmatprep.subr.mxu0 0.0
    %3665 = vmatpush1.msra.mxu0 0.0
    %3666 = vmatprep.subr.mxu0 0.0
    %3667 = vmatpush1.msra.mxu0 0.0
    %3668 = vmatprep.subr.mxu0 0.0
    %3669 = vmatpush1.msra.mxu0 0.0
    %3670 = vmatprep.subr.mxu0 0.0
    %3671 = vmatpush1.msra.mxu0 0.0
    %3672 = vmatprep.subr.mxu0 0.0
    %3673 = vmatpush1.msra.mxu0 0.0
    %3674 = vmatprep.subr.mxu0 0.0
    %3675 = vmatpush1.msra.mxu0 0.0
    %3676 = vmatprep.subr.mxu0 0.0
    %3677 = vmatpush1.msra.mxu0 0.0
    %3678 = vmatprep.subr.mxu0 0.0
    %3679 = vmatpush1.msra.mxu0 0.0
    %3680 = vmatprep.subr.mxu0 0.0
    %3681 = vmatpush1.msra.mxu0 0.0
    %3682 = vmatprep.subr.mxu0 0.0
    %3683 = vmatpush1.msra.mxu0 0.0
    %3684 = vmatprep.subr.mxu0 0.0
    %3685 = vmatpush1.msra.mxu0 0.0
    %3686 = vmatprep.subr.mxu0 0.0
    %3687 = vmatpush1.msra.mxu0 0.0
    %3688 = vmatprep.subr.mxu0 0.0
    %3689 = vmatpush1.msra.mxu0 0.0
    %3690 = vmatprep.subr.mxu0 0.0
    %3691 = vmatpush1.msra.mxu0 0.0
    %3692 = vmatprep.subr.mxu0 0.0
    %3693 = vmatpush1.msra.mxu0 0.0
    %3694 = vmatprep.subr.mxu0 0.0
    %3695 = vmatpush1.msra.mxu0 0.0
    %3696 = vmatprep.subr.mxu0 0.0
    %3697 = vmatpush1.msra.mxu0 0.0
    %3698 = vmatprep.subr.mxu0 0.0
    %3699 = vmatpush1.msra.mxu0 0.0
    %3700 = vmatprep.subr.mxu0 0.0
    %3701 = vmatpush1.msra.mxu0 0.0
    %3702 = vmatprep.subr.mxu0 0.0
    %3703 = vmatpush1.msra.mxu0 0.0
    %3704 = vmatprep.subr.mxu0 0.0
    %3705 = vmatpush1.msra.mxu0 0.0
    %3706 = vmatprep.mubr.f32.mxu0 0.0
    %3707 = vmatmul.mubr.f32.gmra.mrb[0].mxu0 %v3543
    %v3708 = vpop.f32.mrb[0].mxu0
    %v3709 = vadd.f32 %v1007, %v3708
    %v3710 = vpop.f32.mrb[0].mxu0
    %3711 = vdwg.mxu0
    %3713 = vrot.lane.b32.xlu0 %v3120, 96
    %v3714 = vpop.permute.xlu0 %3713
    %v3715 = vsel %vm167, %v3714, 0
    %3717 = vmatprep.subr.mxu0 0.0
    %3718 = vmatpush1.msra.mxu0 %v1080
    %3719 = vmatprep.subr.mxu0 0.0
    %3720 = vmatpush1.msra.mxu0 %v1081
    %3721 = vmatprep.subr.mxu0 0.0
    %3722 = vmatpush1.msra.mxu0 %v1082
    %3723 = vmatprep.subr.mxu0 0.0
    %3724 = vmatpush1.msra.mxu0 %v1083
    %3725 = vmatprep.subr.mxu0 0.0
    %3726 = vmatpush1.msra.mxu0 0.0
    %3727 = vmatprep.subr.mxu0 0.0
    %3728 = vmatpush1.msra.mxu0 0.0
    %3729 = vmatprep.subr.mxu0 0.0
    %3730 = vmatpush1.msra.mxu0 0.0
    %3731 = vmatprep.subr.mxu0 0.0
    %3732 = vmatpush1.msra.mxu0 0.0
    %3733 = vmatprep.subr.mxu0 0.0
    %3734 = vmatpush1.msra.mxu0 0.0
    %3735 = vmatprep.subr.mxu0 0.0
    %3736 = vmatpush1.msra.mxu0 0.0
    %3737 = vmatprep.subr.mxu0 0.0
    %3738 = vmatpush1.msra.mxu0 0.0
    %3739 = vmatprep.subr.mxu0 0.0
    %3740 = vmatpush1.msra.mxu0 0.0
    %3741 = vmatprep.subr.mxu0 0.0
    %3742 = vmatpush1.msra.mxu0 0.0
    %3743 = vmatprep.subr.mxu0 0.0
    %3744 = vmatpush1.msra.mxu0 0.0
    %3745 = vmatprep.subr.mxu0 0.0
    %3746 = vmatpush1.msra.mxu0 0.0
    %3747 = vmatprep.subr.mxu0 0.0
    %3748 = vmatpush1.msra.mxu0 0.0
    %3749 = vmatprep.subr.mxu0 0.0
    %3750 = vmatpush1.msra.mxu0 0.0
    %3751 = vmatprep.subr.mxu0 0.0
    %3752 = vmatpush1.msra.mxu0 0.0
    %3753 = vmatprep.subr.mxu0 0.0
    %3754 = vmatpush1.msra.mxu0 0.0
    %3755 = vmatprep.subr.mxu0 0.0
    %3756 = vmatpush1.msra.mxu0 0.0
    %3757 = vmatprep.subr.mxu0 0.0
    %3758 = vmatpush1.msra.mxu0 0.0
    %3759 = vmatprep.subr.mxu0 0.0
    %3760 = vmatpush1.msra.mxu0 0.0
    %3761 = vmatprep.subr.mxu0 0.0
    %3762 = vmatpush1.msra.mxu0 0.0
    %3763 = vmatprep.subr.mxu0 0.0
    %3764 = vmatpush1.msra.mxu0 0.0
    %3765 = vmatprep.subr.mxu0 0.0
    %3766 = vmatpush1.msra.mxu0 0.0
    %3767 = vmatprep.subr.mxu0 0.0
    %3768 = vmatpush1.msra.mxu0 0.0
    %3769 = vmatprep.subr.mxu0 0.0
    %3770 = vmatpush1.msra.mxu0 0.0
    %3771 = vmatprep.subr.mxu0 0.0
    %3772 = vmatpush1.msra.mxu0 0.0
    %3773 = vmatprep.subr.mxu0 0.0
    %3774 = vmatpush1.msra.mxu0 0.0
    %3775 = vmatprep.subr.mxu0 0.0
    %3776 = vmatpush1.msra.mxu0 0.0
    %3777 = vmatprep.subr.mxu0 0.0
    %3778 = vmatpush1.msra.mxu0 0.0
    %3779 = vmatprep.subr.mxu0 0.0
    %3780 = vmatpush1.msra.mxu0 0.0
    %3781 = vmatprep.mubr.f32.mxu0 0.0
    %3782 = vmatmul.mubr.f32.gmra.mrb[0].mxu0 %v3715
    %v3783 = vpop.f32.mrb[0].mxu0
    %v3784 = vadd.f32 0.0, %v3783
    %v3785 = vpop.f32.mrb[0].mxu0
    %3786 = vdwg.mxu0
    %v3787 = vadd.f32 %v3709, %v3784
    %v3788 = vxor.u32 %v3787, 2147483648
    %v3789 = vmul.f32 %v3788, 1.442695
    %v3790 = vpow.pop %v3789
    %v3791 = vadd.f32 %v3790, 1.0
    %v3792 = vrcp.pop %v3791
    %v3793 = vmul.f32 1.0, %v3792
    %v3794 = vadd.f32 %v3784, %v1169
    %3796 = vrot.lane.b32.xlu0 %v3794, 64
    %v3797 = vpop.permute.xlu0 %3796
    %v3799 = vmul.f32 %v3793, %v3797
    %3801 = vrot.lane.b32.xlu0 %v3799, 64
    %v3802 = vpop.permute.xlu0 %3801
    %v3804 = vadd.f32 %v3709, %v3802
    %v3805 = vtanh.pop %v3804
    %v3806 = vsub.f32 1.0, %v3793
    %3808 = vrot.lane.b32.xlu0 %v3805, 96
    %v3809 = vpop.permute.xlu0 %3808
    %v3811 = vmul.f32 %v3806, %v3809
    %v3812 = vmul.f32 %v3793, %v3120
    %v3813 = vadd.f32 %v3811, %v3812
    %3814 = vmatprep.subr.mxu0 0.0
    %3815 = vmatpush1.msra.mxu0 %v1713
    %3816 = vmatprep.subr.mxu0 0.0
    %3817 = vmatpush1.msra.mxu0 %v1714
    %3818 = vmatprep.subr.mxu0 0.0
    %3819 = vmatpush1.msra.mxu0 %v1715
    %3820 = vmatprep.subr.mxu0 0.0
    %3821 = vmatpush1.msra.mxu0 %v1716
    %3822 = vmatprep.subr.mxu0 0.0
    %3823 = vmatpush1.msra.mxu0 0.0
    %3824 = vmatprep.subr.mxu0 0.0
    %3825 = vmatpush1.msra.mxu0 0.0
    %3826 = vmatprep.subr.mxu0 0.0
    %3827 = vmatpush1.msra.mxu0 0.0
    %3828 = vmatprep.subr.mxu0 0.0
    %3829 = vmatpush1.msra.mxu0 0.0
    %3830 = vmatprep.subr.mxu0 0.0
    %3831 = vmatpush1.msra.mxu0 0.0
    %3832 = vmatprep.subr.mxu0 0.0
    %3833 = vmatpush1.msra.mxu0 0.0
    %3834 = vmatprep.subr.mxu0 0.0
    %3835 = vmatpush1.msra.mxu0 0.0
    %3836 = vmatprep.subr.mxu0 0.0
    %3837 = vmatpush1.msra.mxu0 0.0
    %3838 = vmatprep.subr.mxu0 0.0
    %3839 = vmatpush1.msra.mxu0 0.0
    %3840 = vmatprep.subr.mxu0 0.0
    %3841 = vmatpush1.msra.mxu0 0.0
    %3842 = vmatprep.subr.mxu0 0.0
    %3843 = vmatpush1.msra.mxu0 0.0
    %3844 = vmatprep.subr.mxu0 0.0
    %3845 = vmatpush1.msra.mxu0 0.0
    %3846 = vmatprep.subr.mxu0 0.0
    %3847 = vmatpush1.msra.mxu0 0.0
    %3848 = vmatprep.subr.mxu0 0.0
    %3849 = vmatpush1.msra.mxu0 0.0
    %3850 = vmatprep.subr.mxu0 0.0
    %3851 = vmatpush1.msra.mxu0 0.0
    %3852 = vmatprep.subr.mxu0 0.0
    %3853 = vmatpush1.msra.mxu0 0.0
    %3854 = vmatprep.subr.mxu0 0.0
    %3855 = vmatpush1.msra.mxu0 0.0
    %3856 = vmatprep.subr.mxu0 0.0
    %3857 = vmatpush1.msra.mxu0 0.0
    %3858 = vmatprep.subr.mxu0 0.0
    %3859 = vmatpush1.msra.mxu0 0.0
    %3860 = vmatprep.subr.mxu0 0.0
    %3861 = vmatpush1.msra.mxu0 0.0
    %3862 = vmatprep.subr.mxu0 0.0
    %3863 = vmatpush1.msra.mxu0 0.0
    %3864 = vmatprep.subr.mxu0 0.0
    %3865 = vmatpush1.msra.mxu0 0.0
    %3866 = vmatprep.subr.mxu0 0.0
    %3867 = vmatpush1.msra.mxu0 0.0
    %3868 = vmatprep.subr.mxu0 0.0
    %3869 = vmatpush1.msra.mxu0 0.0
    %3870 = vmatprep.subr.mxu0 0.0
    %3871 = vmatpush1.msra.mxu0 0.0
    %3872 = vmatprep.subr.mxu0 0.0
    %3873 = vmatpush1.msra.mxu0 0.0
    %3874 = vmatprep.subr.mxu0 0.0
    %3875 = vmatpush1.msra.mxu0 0.0
    %3876 = vmatprep.subr.mxu0 0.0
    %3877 = vmatpush1.msra.mxu0 0.0
    %3878 = vmatprep.mubr.f32.mxu0 0.0
    %3879 = vmatmul.mubr.f32.gmra.mrb[0].mxu0 %v3715
    %v3880 = vpop.f32.mrb[0].mxu0
    %v3881 = vadd.f32 %v1723, %v3880
    %v3882 = vpop.f32.mrb[0].mxu0
    %3883 = vdwg.mxu0
    %3885 = vrot.lane.b32.xlu0 %v3292, 96
    %v3886 = vpop.permute.xlu0 %3885
    %v3887 = vsel %vm167, %v3886, 0
    %3889 = vmatprep.subr.mxu0 0.0
    %3890 = vmatpush1.msra.mxu0 %v1796
    %3891 = vmatprep.subr.mxu0 0.0
    %3892 = vmatpush1.msra.mxu0 %v1797
    %3893 = vmatprep.subr.mxu0 0.0
    %3894 = vmatpush1.msra.mxu0 %v1798
    %3895 = vmatprep.subr.mxu0 0.0
    %3896 = vmatpush1.msra.mxu0 %v1799
    %3897 = vmatprep.subr.mxu0 0.0
    %3898 = vmatpush1.msra.mxu0 0.0
    %3899 = vmatprep.subr.mxu0 0.0
    %3900 = vmatpush1.msra.mxu0 0.0
    %3901 = vmatprep.subr.mxu0 0.0
    %3902 = vmatpush1.msra.mxu0 0.0
    %3903 = vmatprep.subr.mxu0 0.0
    %3904 = vmatpush1.msra.mxu0 0.0
    %3905 = vmatprep.subr.mxu0 0.0
    %3906 = vmatpush1.msra.mxu0 0.0
    %3907 = vmatprep.subr.mxu0 0.0
    %3908 = vmatpush1.msra.mxu0 0.0
    %3909 = vmatprep.subr.mxu0 0.0
    %3910 = vmatpush1.msra.mxu0 0.0
    %3911 = vmatprep.subr.mxu0 0.0
    %3912 = vmatpush1.msra.mxu0 0.0
    %3913 = vmatprep.subr.mxu0 0.0
    %3914 = vmatpush1.msra.mxu0 0.0
    %3915 = vmatprep.subr.mxu0 0.0
    %3916 = vmatpush1.msra.mxu0 0.0
    %3917 = vmatprep.subr.mxu0 0.0
    %3918 = vmatpush1.msra.mxu0 0.0
    %3919 = vmatprep.subr.mxu0 0.0
    %3920 = vmatpush1.msra.mxu0 0.0
    %3921 = vmatprep.subr.mxu0 0.0
    %3922 = vmatpush1.msra.mxu0 0.0
    %3923 = vmatprep.subr.mxu0 0.0
    %3924 = vmatpush1.msra.mxu0 0.0
    %3925 = vmatprep.subr.mxu0 0.0
    %3926 = vmatpush1.msra.mxu0 0.0
    %3927 = vmatprep.subr.mxu0 0.0
    %3928 = vmatpush1.msra.mxu0 0.0
    %3929 = vmatprep.subr.mxu0 0.0
    %3930 = vmatpush1.msra.mxu0 0.0
    %3931 = vmatprep.subr.mxu0 0.0
    %3932 = vmatpush1.msra.mxu0 0.0
    %3933 = vmatprep.subr.mxu0 0.0
    %3934 = vmatpush1.msra.mxu0 0.0
    %3935 = vmatprep.subr.mxu0 0.0
    %3936 = vmatpush1.msra.mxu0 0.0
    %3937 = vmatprep.subr.mxu0 0.0
    %3938 = vmatpush1.msra.mxu0 0.0
    %3939 = vmatprep.subr.mxu0 0.0
    %3940 = vmatpush1.msra.mxu0 0.0
    %3941 = vmatprep.subr.mxu0 0.0
    %3942 = vmatpush1.msra.mxu0 0.0
    %3943 = vmatprep.subr.mxu0 0.0
    %3944 = vmatpush1.msra.mxu0 0.0
    %3945 = vmatprep.subr.mxu0 0.0
    %3946 = vmatpush1.msra.mxu0 0.0
    %3947 = vmatprep.subr.mxu0 0.0
    %3948 = vmatpush1.msra.mxu0 0.0
    %3949 = vmatprep.subr.mxu0 0.0
    %3950 = vmatpush1.msra.mxu0 0.0
    %3951 = vmatprep.subr.mxu0 0.0
    %3952 = vmatpush1.msra.mxu0 0.0
    %3953 = vmatprep.mubr.f32.mxu0 0.0
    %3954 = vmatmul.mubr.f32.gmra.mrb[0].mxu0 %v3887
    %v3955 = vpop.f32.mrb[0].mxu0
    %v3956 = vadd.f32 0.0, %v3955
    %v3957 = vpop.f32.mrb[0].mxu0
    %3958 = vdwg.mxu0
    %v3959 = vadd.f32 %v3881, %v3956
    %v3960 = vxor.u32 %v3959, 2147483648
    %v3961 = vmul.f32 %v3960, 1.442695
    %v3962 = vpow.pop %v3961
    %v3963 = vadd.f32 %v3962, 1.0
    %v3964 = vrcp.pop %v3963
    %v3965 = vmul.f32 1.0, %v3964
    %v3966 = vadd.f32 %v3956, %v1885
    %3968 = vrot.lane.b32.xlu0 %v3966, 64
    %v3969 = vpop.permute.xlu0 %3968
    %v3971 = vmul.f32 %v3965, %v3969
    %3973 = vrot.lane.b32.xlu0 %v3971, 64
    %v3974 = vpop.permute.xlu0 %3973
    %v3976 = vadd.f32 %v3881, %v3974
    %v3977 = vtanh.pop %v3976
    %v3978 = vsub.f32 1.0, %v3965
    %3980 = vrot.lane.b32.xlu0 %v3977, 96
    %v3981 = vpop.permute.xlu0 %3980
    %v3983 = vmul.f32 %v3978, %v3981
    %v3984 = vmul.f32 %v3965, %v3292
    %v3985 = vadd.f32 %v3983, %v3984
    %v3986 = vrot.slane %v74, 7
    %v3987 = vrot.slane %v75, 6
    %v3988 = vsel %vm88, %v3987, %v3986
    %v3989 = vsel %vm90, %v3988, 0
    %3991 = vmatprep.subr.mxu0 0.0
    %3992 = vmatpush1.msra.mxu0 %v76
    %3993 = vmatprep.subr.mxu0 0.0
    %3994 = vmatpush1.msra.mxu0 %v77
    %3995 = vmatprep.subr.mxu0 0.0
    %3996 = vmatpush1.msra.mxu0 0.0
    %3997 = vmatprep.subr.mxu0 0.0
    %3998 = vmatpush1.msra.mxu0 0.0
    %3999 = vmatprep.subr.mxu0 0.0
    %4000 = vmatpush1.msra.mxu0 0.0
    %4001 = vmatprep.subr.mxu0 0.0
    %4002 = vmatpush1.msra.mxu0 0.0
    %4003 = vmatprep.subr.mxu0 0.0
    %4004 = vmatpush1.msra.mxu0 0.0
    %4005 = vmatprep.subr.mxu0 0.0
    %4006 = vmatpush1.msra.mxu0 0.0
    %4007 = vmatprep.subr.mxu0 0.0
    %4008 = vmatpush1.msra.mxu0 0.0
    %4009 = vmatprep.subr.mxu0 0.0
    %4010 = vmatpush1.msra.mxu0 0.0
    %4011 = vmatprep.subr.mxu0 0.0
    %4012 = vmatpush1.msra.mxu0 0.0
    %4013 = vmatprep.subr.mxu0 0.0
    %4014 = vmatpush1.msra.mxu0 0.0
    %4015 = vmatprep.subr.mxu0 0.0
    %4016 = vmatpush1.msra.mxu0 0.0
    %4017 = vmatprep.subr.mxu0 0.0
    %4018 = vmatpush1.msra.mxu0 0.0
    %4019 = vmatprep.subr.mxu0 0.0
    %4020 = vmatpush1.msra.mxu0 0.0
    %4021 = vmatprep.subr.mxu0 0.0
    %4022 = vmatpush1.msra.mxu0 0.0
    %4023 = vmatprep.subr.mxu0 0.0
    %4024 = vmatpush1.msra.mxu0 0.0
    %4025 = vmatprep.subr.mxu0 0.0
    %4026 = vmatpush1.msra.mxu0 0.0
    %4027 = vmatprep.subr.mxu0 0.0
    %4028 = vmatpush1.msra.mxu0 0.0
    %4029 = vmatprep.subr.mxu0 0.0
    %4030 = vmatpush1.msra.mxu0 0.0
    %4031 = vmatprep.subr.mxu0 0.0
    %4032 = vmatpush1.msra.mxu0 0.0
    %4033 = vmatprep.subr.mxu0 0.0
    %4034 = vmatpush1.msra.mxu0 0.0
    %4035 = vmatprep.subr.mxu0 0.0
    %4036 = vmatpush1.msra.mxu0 0.0
    %4037 = vmatprep.subr.mxu0 0.0
    %4038 = vmatpush1.msra.mxu0 0.0
    %4039 = vmatprep.subr.mxu0 0.0
    %4040 = vmatpush1.msra.mxu0 0.0
    %4041 = vmatprep.subr.mxu0 0.0
    %4042 = vmatpush1.msra.mxu0 0.0
    %4043 = vmatprep.subr.mxu0 0.0
    %4044 = vmatpush1.msra.mxu0 0.0
    %4045 = vmatprep.subr.mxu0 0.0
    %4046 = vmatpush1.msra.mxu0 0.0
    %4047 = vmatprep.subr.mxu0 0.0
    %4048 = vmatpush1.msra.mxu0 0.0
    %4049 = vmatprep.subr.mxu0 0.0
    %4050 = vmatpush1.msra.mxu0 0.0
    %4051 = vmatprep.subr.mxu0 0.0
    %4052 = vmatpush1.msra.mxu0 0.0
    %4053 = vmatprep.subr.mxu0 0.0
    %4054 = vmatpush1.msra.mxu0 0.0
    %4055 = vmatprep.mubr.f32.mxu0 0.0
    %4056 = vmatmul.mubr.f32.gmra.mrb[0].mxu0 %v3989
    %v4057 = vpop.f32.mrb[0].mxu0
    %v4058 = vadd.f32 %v83, %v4057
    %v4059 = vpop.f32.mrb[0].mxu0
    %4060 = vdwg.mxu0
    %4062 = vrot.lane.b32.xlu0 %v3469, 96
    %v4063 = vpop.permute.xlu0 %4062
    %v4064 = vsel %vm167, %v4063, 0
    %4066 = vmatprep.subr.mxu0 0.0
    %4067 = vmatpush1.msra.mxu0 %v163
    %4068 = vmatprep.subr.mxu0 0.0
    %4069 = vmatpush1.msra.mxu0 %v164
    %4070 = vmatprep.subr.mxu0 0.0
    %4071 = vmatpush1.msra.mxu0 %v165
    %4072 = vmatprep.subr.mxu0 0.0
    %4073 = vmatpush1.msra.mxu0 %v166
    %4074 = vmatprep.subr.mxu0 0.0
    %4075 = vmatpush1.msra.mxu0 0.0
    %4076 = vmatprep.subr.mxu0 0.0
    %4077 = vmatpush1.msra.mxu0 0.0
    %4078 = vmatprep.subr.mxu0 0.0
    %4079 = vmatpush1.msra.mxu0 0.0
    %4080 = vmatprep.subr.mxu0 0.0
    %4081 = vmatpush1.msra.mxu0 0.0
    %4082 = vmatprep.subr.mxu0 0.0
    %4083 = vmatpush1.msra.mxu0 0.0
    %4084 = vmatprep.subr.mxu0 0.0
    %4085 = vmatpush1.msra.mxu0 0.0
    %4086 = vmatprep.subr.mxu0 0.0
    %4087 = vmatpush1.msra.mxu0 0.0
    %4088 = vmatprep.subr.mxu0 0.0
    %4089 = vmatpush1.msra.mxu0 0.0
    %4090 = vmatprep.subr.mxu0 0.0
    %4091 = vmatpush1.msra.mxu0 0.0
    %4092 = vmatprep.subr.mxu0 0.0
    %4093 = vmatpush1.msra.mxu0 0.0
    %4094 = vmatprep.subr.mxu0 0.0
    %4095 = vmatpush1.msra.mxu0 0.0
    %4096 = vmatprep.subr.mxu0 0.0
    %4097 = vmatpush1.msra.mxu0 0.0
    %4098 = vmatprep.subr.mxu0 0.0
    %4099 = vmatpush1.msra.mxu0 0.0
    %4100 = vmatprep.subr.mxu0 0.0
    %4101 = vmatpush1.msra.mxu0 0.0
    %4102 = vmatprep.subr.mxu0 0.0
    %4103 = vmatpush1.msra.mxu0 0.0
    %4104 = vmatprep.subr.mxu0 0.0
    %4105 = vmatpush1.msra.mxu0 0.0
    %4106 = vmatprep.subr.mxu0 0.0
    %4107 = vmatpush1.msra.mxu0 0.0
    %4108 = vmatprep.subr.mxu0 0.0
    %4109 = vmatpush1.msra.mxu0 0.0
    %4110 = vmatprep.subr.mxu0 0.0
    %4111 = vmatpush1.msra.mxu0 0.0
    %4112 = vmatprep.subr.mxu0 0.0
    %4113 = vmatpush1.msra.mxu0 0.0
    %4114 = vmatprep.subr.mxu0 0.0
    %4115 = vmatpush1.msra.mxu0 0.0
    %4116 = vmatprep.subr.mxu0 0.0
    %4117 = vmatpush1.msra.mxu0 0.0
    %4118 = vmatprep.subr.mxu0 0.0
    %4119 = vmatpush1.msra.mxu0 0.0
    %4120 = vmatprep.subr.mxu0 0.0
    %4121 = vmatpush1.msra.mxu0 0.0
    %4122 = vmatprep.subr.mxu0 0.0
    %4123 = vmatpush1.msra.mxu0 0.0
    %4124 = vmatprep.subr.mxu0 0.0
    %4125 = vmatpush1.msra.mxu0 0.0
    %4126 = vmatprep.subr.mxu0 0.0
    %4127 = vmatpush1.msra.mxu0 0.0
    %4128 = vmatprep.subr.mxu0 0.0
    %4129 = vmatpush1.msra.mxu0 0.0
    %4130 = vmatprep.mubr.f32.mxu0 0.0
    %4131 = vmatmul.mubr.f32.gmra.mrb[0].mxu0 %v4064
    %v4132 = vpop.f32.mrb[0].mxu0
    %v4133 = vadd.f32 0.0, %v4132
    %v4134 = vpop.f32.mrb[0].mxu0
    %4135 = vdwg.mxu0
    %v4136 = vadd.f32 %v4058, %v4133
    %v4137 = vxor.u32 %v4136, 2147483648
    %v4138 = vmul.f32 %v4137, 1.442695
    %v4139 = vpow.pop %v4138
    %v4140 = vadd.f32 %v4139, 1.0
    %v4141 = vrcp.pop %v4140
    %v4142 = vmul.f32 1.0, %v4141
    %v4143 = vadd.f32 %v4133, %v255
    %4145 = vrot.lane.b32.xlu0 %v4143, 64
    %v4146 = vpop.permute.xlu0 %4145
    %v4148 = vmul.f32 %v4142, %v4146
    %4150 = vrot.lane.b32.xlu0 %v4148, 64
    %v4151 = vpop.permute.xlu0 %4150
    %v4153 = vadd.f32 %v4058, %v4151
    %v4154 = vtanh.pop %v4153
    %v4155 = vsub.f32 1.0, %v4142
    %4157 = vrot.lane.b32.xlu0 %v4154, 96
    %v4158 = vpop.permute.xlu0 %4157
    %v4160 = vmul.f32 %v4155, %v4158
    %v4161 = vmul.f32 %v4142, %v3469
    %v4162 = vadd.f32 %v4160, %v4161
    %4163 = vmatprep.subr.mxu0 0.0
    %4164 = vmatpush1.msra.mxu0 %v453
    %4165 = vmatprep.subr.mxu0 0.0
    %4166 = vmatpush1.msra.mxu0 %v454
    %4167 = vmatprep.subr.mxu0 0.0
    %4168 = vmatpush1.msra.mxu0 %v455
    %4169 = vmatprep.subr.mxu0 0.0
    %4170 = vmatpush1.msra.mxu0 %v456
    %4171 = vmatprep.subr.mxu0 0.0
    %4172 = vmatpush1.msra.mxu0 0.0
    %4173 = vmatprep.subr.mxu0 0.0
    %4174 = vmatpush1.msra.mxu0 0.0
    %4175 = vmatprep.subr.mxu0 0.0
    %4176 = vmatpush1.msra.mxu0 0.0
    %4177 = vmatprep.subr.mxu0 0.0
    %4178 = vmatpush1.msra.mxu0 0.0
    %4179 = vmatprep.subr.mxu0 0.0
    %4180 = vmatpush1.msra.mxu0 0.0
    %4181 = vmatprep.subr.mxu0 0.0
    %4182 = vmatpush1.msra.mxu0 0.0
    %4183 = vmatprep.subr.mxu0 0.0
    %4184 = vmatpush1.msra.mxu0 0.0
    %4185 = vmatprep.subr.mxu0 0.0
    %4186 = vmatpush1.msra.mxu0 0.0
    %4187 = vmatprep.subr.mxu0 0.0
    %4188 = vmatpush1.msra.mxu0 0.0
    %4189 = vmatprep.subr.mxu0 0.0
    %4190 = vmatpush1.msra.mxu0 0.0
    %4191 = vmatprep.subr.mxu0 0.0
    %4192 = vmatpush1.msra.mxu0 0.0
    %4193 = vmatprep.subr.mxu0 0.0
    %4194 = vmatpush1.msra.mxu0 0.0
    %4195 = vmatprep.subr.mxu0 0.0
    %4196 = vmatpush1.msra.mxu0 0.0
    %4197 = vmatprep.subr.mxu0 0.0
    %4198 = vmatpush1.msra.mxu0 0.0
    %4199 = vmatprep.subr.mxu0 0.0
    %4200 = vmatpush1.msra.mxu0 0.0
    %4201 = vmatprep.subr.mxu0 0.0
    %4202 = vmatpush1.msra.mxu0 0.0
    %4203 = vmatprep.subr.mxu0 0.0
    %4204 = vmatpush1.msra.mxu0 0.0
    %4205 = vmatprep.subr.mxu0 0.0
    %4206 = vmatpush1.msra.mxu0 0.0
    %4207 = vmatprep.subr.mxu0 0.0
    %4208 = vmatpush1.msra.mxu0 0.0
    %4209 = vmatprep.subr.mxu0 0.0
    %4210 = vmatpush1.msra.mxu0 0.0
    %4211 = vmatprep.subr.mxu0 0.0
    %4212 = vmatpush1.msra.mxu0 0.0
    %4213 = vmatprep.subr.mxu0 0.0
    %4214 = vmatpush1.msra.mxu0 0.0
    %4215 = vmatprep.subr.mxu0 0.0
    %4216 = vmatpush1.msra.mxu0 0.0
    %4217 = vmatprep.subr.mxu0 0.0
    %4218 = vmatpush1.msra.mxu0 0.0
    %4219 = vmatprep.subr.mxu0 0.0
    %4220 = vmatpush1.msra.mxu0 0.0
    %4221 = vmatprep.subr.mxu0 0.0
    %4222 = vmatpush1.msra.mxu0 0.0
    %4223 = vmatprep.subr.mxu0 0.0
    %4224 = vmatpush1.msra.mxu0 0.0
    %4225 = vmatprep.subr.mxu0 0.0
    %4226 = vmatpush1.msra.mxu0 0.0
    %4227 = vmatprep.mubr.f32.mxu0 0.0
    %4228 = vmatmul.mubr.f32.gmra.mrb[0].mxu0 %v4064
    %v4229 = vpop.f32.mrb[0].mxu0
    %v4230 = vadd.f32 %v463, %v4229
    %v4231 = vpop.f32.mrb[0].mxu0
    %4232 = vdwg.mxu0
    %4234 = vrot.lane.b32.xlu0 %v3641, 96
    %v4235 = vpop.permute.xlu0 %4234
    %v4236 = vsel %vm167, %v4235, 0
    %4238 = vmatprep.subr.mxu0 0.0
    %4239 = vmatpush1.msra.mxu0 %v536
    %4240 = vmatprep.subr.mxu0 0.0
    %4241 = vmatpush1.msra.mxu0 %v537
    %4242 = vmatprep.subr.mxu0 0.0
    %4243 = vmatpush1.msra.mxu0 %v538
    %4244 = vmatprep.subr.mxu0 0.0
    %4245 = vmatpush1.msra.mxu0 %v539
    %4246 = vmatprep.subr.mxu0 0.0
    %4247 = vmatpush1.msra.mxu0 0.0
    %4248 = vmatprep.subr.mxu0 0.0
    %4249 = vmatpush1.msra.mxu0 0.0
    %4250 = vmatprep.subr.mxu0 0.0
    %4251 = vmatpush1.msra.mxu0 0.0
    %4252 = vmatprep.subr.mxu0 0.0
    %4253 = vmatpush1.msra.mxu0 0.0
    %4254 = vmatprep.subr.mxu0 0.0
    %4255 = vmatpush1.msra.mxu0 0.0
    %4256 = vmatprep.subr.mxu0 0.0
    %4257 = vmatpush1.msra.mxu0 0.0
    %4258 = vmatprep.subr.mxu0 0.0
    %4259 = vmatpush1.msra.mxu0 0.0
    %4260 = vmatprep.subr.mxu0 0.0
    %4261 = vmatpush1.msra.mxu0 0.0
    %4262 = vmatprep.subr.mxu0 0.0
    %4263 = vmatpush1.msra.mxu0 0.0
    %4264 = vmatprep.subr.mxu0 0.0
    %4265 = vmatpush1.msra.mxu0 0.0
    %4266 = vmatprep.subr.mxu0 0.0
    %4267 = vmatpush1.msra.mxu0 0.0
    %4268 = vmatprep.subr.mxu0 0.0
    %4269 = vmatpush1.msra.mxu0 0.0
    %4270 = vmatprep.subr.mxu0 0.0
    %4271 = vmatpush1.msra.mxu0 0.0
    %4272 = vmatprep.subr.mxu0 0.0
    %4273 = vmatpush1.msra.mxu0 0.0
    %4274 = vmatprep.subr.mxu0 0.0
    %4275 = vmatpush1.msra.mxu0 0.0
    %4276 = vmatprep.subr.mxu0 0.0
    %4277 = vmatpush1.msra.mxu0 0.0
    %4278 = vmatprep.subr.mxu0 0.0
    %4279 = vmatpush1.msra.mxu0 0.0
    %4280 = vmatprep.subr.mxu0 0.0
    %4281 = vmatpush1.msra.mxu0 0.0
    %4282 = vmatprep.subr.mxu0 0.0
    %4283 = vmatpush1.msra.mxu0 0.0
    %4284 = vmatprep.subr.mxu0 0.0
    %4285 = vmatpush1.msra.mxu0 0.0
    %4286 = vmatprep.subr.mxu0 0.0
    %4287 = vmatpush1.msra.mxu0 0.0
    %4288 = vmatprep.subr.mxu0 0.0
    %4289 = vmatpush1.msra.mxu0 0.0
    %4290 = vmatprep.subr.mxu0 0.0
    %4291 = vmatpush1.msra.mxu0 0.0
    %4292 = vmatprep.subr.mxu0 0.0
    %4293 = vmatpush1.msra.mxu0 0.0
    %4294 = vmatprep.subr.mxu0 0.0
    %4295 = vmatpush1.msra.mxu0 0.0
    %4296 = vmatprep.subr.mxu0 0.0
    %4297 = vmatpush1.msra.mxu0 0.0
    %4298 = vmatprep.subr.mxu0 0.0
    %4299 = vmatpush1.msra.mxu0 0.0
    %4300 = vmatprep.subr.mxu0 0.0
    %4301 = vmatpush1.msra.mxu0 0.0
    %4302 = vmatprep.mubr.f32.mxu0 0.0
    %4303 = vmatmul.mubr.f32.gmra.mrb[0].mxu0 %v4236
    %v4304 = vpop.f32.mrb[0].mxu0
    %v4305 = vadd.f32 0.0, %v4304
    %v4306 = vpop.f32.mrb[0].mxu0
    %4307 = vdwg.mxu0
    %v4308 = vadd.f32 %v4230, %v4305
    %v4309 = vxor.u32 %v4308, 2147483648
    %v4310 = vmul.f32 %v4309, 1.442695
    %v4311 = vpow.pop %v4310
    %v4312 = vadd.f32 %v4311, 1.0
    %v4313 = vrcp.pop %v4312
    %v4314 = vmul.f32 1.0, %v4313
    %v4315 = vadd.f32 %v4305, %v625
    %4317 = vrot.lane.b32.xlu0 %v4315, 64
    %v4318 = vpop.permute.xlu0 %4317
    %v4320 = vmul.f32 %v4314, %v4318
    %4322 = vrot.lane.b32.xlu0 %v4320, 64
    %v4323 = vpop.permute.xlu0 %4322
    %v4325 = vadd.f32 %v4230, %v4323
    %v4326 = vtanh.pop %v4325
    %v4327 = vsub.f32 1.0, %v4314
    %4329 = vrot.lane.b32.xlu0 %v4326, 96
    %v4330 = vpop.permute.xlu0 %4329
    %v4332 = vmul.f32 %v4327, %v4330
    %v4333 = vmul.f32 %v4314, %v3641
    %v4334 = vadd.f32 %v4332, %v4333
    %4335 = vmatprep.subr.mxu0 0.0
    %4336 = vmatpush1.msra.mxu0 %v997
    %4337 = vmatprep.subr.mxu0 0.0
    %4338 = vmatpush1.msra.mxu0 %v998
    %4339 = vmatprep.subr.mxu0 0.0
    %4340 = vmatpush1.msra.mxu0 %v999
    %4341 = vmatprep.subr.mxu0 0.0
    %4342 = vmatpush1.msra.mxu0 %v1000
    %4343 = vmatprep.subr.mxu0 0.0
    %4344 = vmatpush1.msra.mxu0 0.0
    %4345 = vmatprep.subr.mxu0 0.0
    %4346 = vmatpush1.msra.mxu0 0.0
    %4347 = vmatprep.subr.mxu0 0.0
    %4348 = vmatpush1.msra.mxu0 0.0
    %4349 = vmatprep.subr.mxu0 0.0
    %4350 = vmatpush1.msra.mxu0 0.0
    %4351 = vmatprep.subr.mxu0 0.0
    %4352 = vmatpush1.msra.mxu0 0.0
    %4353 = vmatprep.subr.mxu0 0.0
    %4354 = vmatpush1.msra.mxu0 0.0
    %4355 = vmatprep.subr.mxu0 0.0
    %4356 = vmatpush1.msra.mxu0 0.0
    %4357 = vmatprep.subr.mxu0 0.0
    %4358 = vmatpush1.msra.mxu0 0.0
    %4359 = vmatprep.subr.mxu0 0.0
    %4360 = vmatpush1.msra.mxu0 0.0
    %4361 = vmatprep.subr.mxu0 0.0
    %4362 = vmatpush1.msra.mxu0 0.0
    %4363 = vmatprep.subr.mxu0 0.0
    %4364 = vmatpush1.msra.mxu0 0.0
    %4365 = vmatprep.subr.mxu0 0.0
    %4366 = vmatpush1.msra.mxu0 0.0
    %4367 = vmatprep.subr.mxu0 0.0
    %4368 = vmatpush1.msra.mxu0 0.0
    %4369 = vmatprep.subr.mxu0 0.0
    %4370 = vmatpush1.msra.mxu0 0.0
    %4371 = vmatprep.subr.mxu0 0.0
    %4372 = vmatpush1.msra.mxu0 0.0
    %4373 = vmatprep.subr.mxu0 0.0
    %4374 = vmatpush1.msra.mxu0 0.0
    %4375 = vmatprep.subr.mxu0 0.0
    %4376 = vmatpush1.msra.mxu0 0.0
    %4377 = vmatprep.subr.mxu0 0.0
    %4378 = vmatpush1.msra.mxu0 0.0
    %4379 = vmatprep.subr.mxu0 0.0
    %4380 = vmatpush1.msra.mxu0 0.0
    %4381 = vmatprep.subr.mxu0 0.0
    %4382 = vmatpush1.msra.mxu0 0.0
    %4383 = vmatprep.subr.mxu0 0.0
    %4384 = vmatpush1.msra.mxu0 0.0
    %4385 = vmatprep.subr.mxu0 0.0
    %4386 = vmatpush1.msra.mxu0 0.0
    %4387 = vmatprep.subr.mxu0 0.0
    %4388 = vmatpush1.msra.mxu0 0.0
    %4389 = vmatprep.subr.mxu0 0.0
    %4390 = vmatpush1.msra.mxu0 0.0
    %4391 = vmatprep.subr.mxu0 0.0
    %4392 = vmatpush1.msra.mxu0 0.0
    %4393 = vmatprep.subr.mxu0 0.0
    %4394 = vmatpush1.msra.mxu0 0.0
    %4395 = vmatprep.subr.mxu0 0.0
    %4396 = vmatpush1.msra.mxu0 0.0
    %4397 = vmatprep.subr.mxu0 0.0
    %4398 = vmatpush1.msra.mxu0 0.0
    %4399 = vmatprep.mubr.f32.mxu0 0.0
    %4400 = vmatmul.mubr.f32.gmra.mrb[0].mxu0 %v4236
    %v4401 = vpop.f32.mrb[0].mxu0
    %v4402 = vadd.f32 %v1007, %v4401
    %v4403 = vpop.f32.mrb[0].mxu0
    %4404 = vdwg.mxu0
    %4406 = vrot.lane.b32.xlu0 %v3813, 96
    %v4407 = vpop.permute.xlu0 %4406
    %v4408 = vsel %vm167, %v4407, 0
    %4410 = vmatprep.subr.mxu0 0.0
    %4411 = vmatpush1.msra.mxu0 %v1080
    %4412 = vmatprep.subr.mxu0 0.0
    %4413 = vmatpush1.msra.mxu0 %v1081
    %4414 = vmatprep.subr.mxu0 0.0
    %4415 = vmatpush1.msra.mxu0 %v1082
    %4416 = vmatprep.subr.mxu0 0.0
    %4417 = vmatpush1.msra.mxu0 %v1083
    %4418 = vmatprep.subr.mxu0 0.0
    %4419 = vmatpush1.msra.mxu0 0.0
    %4420 = vmatprep.subr.mxu0 0.0
    %4421 = vmatpush1.msra.mxu0 0.0
    %4422 = vmatprep.subr.mxu0 0.0
    %4423 = vmatpush1.msra.mxu0 0.0
    %4424 = vmatprep.subr.mxu0 0.0
    %4425 = vmatpush1.msra.mxu0 0.0
    %4426 = vmatprep.subr.mxu0 0.0
    %4427 = vmatpush1.msra.mxu0 0.0
    %4428 = vmatprep.subr.mxu0 0.0
    %4429 = vmatpush1.msra.mxu0 0.0
    %4430 = vmatprep.subr.mxu0 0.0
    %4431 = vmatpush1.msra.mxu0 0.0
    %4432 = vmatprep.subr.mxu0 0.0
    %4433 = vmatpush1.msra.mxu0 0.0
    %4434 = vmatprep.subr.mxu0 0.0
    %4435 = vmatpush1.msra.mxu0 0.0
    %4436 = vmatprep.subr.mxu0 0.0
    %4437 = vmatpush1.msra.mxu0 0.0
    %4438 = vmatprep.subr.mxu0 0.0
    %4439 = vmatpush1.msra.mxu0 0.0
    %4440 = vmatprep.subr.mxu0 0.0
    %4441 = vmatpush1.msra.mxu0 0.0
    %4442 = vmatprep.subr.mxu0 0.0
    %4443 = vmatpush1.msra.mxu0 0.0
    %4444 = vmatprep.subr.mxu0 0.0
    %4445 = vmatpush1.msra.mxu0 0.0
    %4446 = vmatprep.subr.mxu0 0.0
    %4447 = vmatpush1.msra.mxu0 0.0
    %4448 = vmatprep.subr.mxu0 0.0
    %4449 = vmatpush1.msra.mxu0 0.0
    %4450 = vmatprep.subr.mxu0 0.0
    %4451 = vmatpush1.msra.mxu0 0.0
    %4452 = vmatprep.subr.mxu0 0.0
    %4453 = vmatpush1.msra.mxu0 0.0
    %4454 = vmatprep.subr.mxu0 0.0
    %4455 = vmatpush1.msra.mxu0 0.0
    %4456 = vmatprep.subr.mxu0 0.0
    %4457 = vmatpush1.msra.mxu0 0.0
    %4458 = vmatprep.subr.mxu0 0.0
    %4459 = vmatpush1.msra.mxu0 0.0
    %4460 = vmatprep.subr.mxu0 0.0
    %4461 = vmatpush1.msra.mxu0 0.0
    %4462 = vmatprep.subr.mxu0 0.0
    %4463 = vmatpush1.msra.mxu0 0.0
    %4464 = vmatprep.subr.mxu0 0.0
    %4465 = vmatpush1.msra.mxu0 0.0
    %4466 = vmatprep.subr.mxu0 0.0
    %4467 = vmatpush1.msra.mxu0 0.0
    %4468 = vmatprep.subr.mxu0 0.0
    %4469 = vmatpush1.msra.mxu0 0.0
    %4470 = vmatprep.subr.mxu0 0.0
    %4471 = vmatpush1.msra.mxu0 0.0
    %4472 = vmatprep.subr.mxu0 0.0
    %4473 = vmatpush1.msra.mxu0 0.0
    %4474 = vmatprep.mubr.f32.mxu0 0.0
    %4475 = vmatmul.mubr.f32.gmra.mrb[0].mxu0 %v4408
    %v4476 = vpop.f32.mrb[0].mxu0
    %v4477 = vadd.f32 0.0, %v4476
    %v4478 = vpop.f32.mrb[0].mxu0
    %4479 = vdwg.mxu0
    %v4480 = vadd.f32 %v4402, %v4477
    %v4481 = vxor.u32 %v4480, 2147483648
    %v4482 = vmul.f32 %v4481, 1.442695
    %v4483 = vpow.pop %v4482
    %v4484 = vadd.f32 %v4483, 1.0
    %v4485 = vrcp.pop %v4484
    %v4486 = vmul.f32 1.0, %v4485
    %v4487 = vadd.f32 %v4477, %v1169
    %4489 = vrot.lane.b32.xlu0 %v4487, 64
    %v4490 = vpop.permute.xlu0 %4489
    %v4492 = vmul.f32 %v4486, %v4490
    %4494 = vrot.lane.b32.xlu0 %v4492, 64
    %v4495 = vpop.permute.xlu0 %4494
    %v4497 = vadd.f32 %v4402, %v4495
    %v4498 = vtanh.pop %v4497
    %v4499 = vsub.f32 1.0, %v4486
    %4501 = vrot.lane.b32.xlu0 %v4498, 96
    %v4502 = vpop.permute.xlu0 %4501
    %v4504 = vmul.f32 %v4499, %v4502
    %v4505 = vmul.f32 %v4486, %v3813
    %v4506 = vadd.f32 %v4504, %v4505
    %4507 = vmatprep.subr.mxu0 0.0
    %4508 = vmatpush1.msra.mxu0 %v1713
    %4509 = vmatprep.subr.mxu0 0.0
    %4510 = vmatpush1.msra.mxu0 %v1714
    %4511 = vmatprep.subr.mxu0 0.0
    %4512 = vmatpush1.msra.mxu0 %v1715
    %4513 = vmatprep.subr.mxu0 0.0
    %4514 = vmatpush1.msra.mxu0 %v1716
    %4515 = vmatprep.subr.mxu0 0.0
    %4516 = vmatpush1.msra.mxu0 0.0
    %4517 = vmatprep.subr.mxu0 0.0
    %4518 = vmatpush1.msra.mxu0 0.0
    %4519 = vmatprep.subr.mxu0 0.0
    %4520 = vmatpush1.msra.mxu0 0.0
    %4521 = vmatprep.subr.mxu0 0.0
    %4522 = vmatpush1.msra.mxu0 0.0
    %4523 = vmatprep.subr.mxu0 0.0
    %4524 = vmatpush1.msra.mxu0 0.0
    %4525 = vmatprep.subr.mxu0 0.0
    %4526 = vmatpush1.msra.mxu0 0.0
    %4527 = vmatprep.subr.mxu0 0.0
    %4528 = vmatpush1.msra.mxu0 0.0
    %4529 = vmatprep.subr.mxu0 0.0
    %4530 = vmatpush1.msra.mxu0 0.0
    %4531 = vmatprep.subr.mxu0 0.0
    %4532 = vmatpush1.msra.mxu0 0.0
    %4533 = vmatprep.subr.mxu0 0.0
    %4534 = vmatpush1.msra.mxu0 0.0
    %4535 = vmatprep.subr.mxu0 0.0
    %4536 = vmatpush1.msra.mxu0 0.0
    %4537 = vmatprep.subr.mxu0 0.0
    %4538 = vmatpush1.msra.mxu0 0.0
    %4539 = vmatprep.subr.mxu0 0.0
    %4540 = vmatpush1.msra.mxu0 0.0
    %4541 = vmatprep.subr.mxu0 0.0
    %4542 = vmatpush1.msra.mxu0 0.0
    %4543 = vmatprep.subr.mxu0 0.0
    %4544 = vmatpush1.msra.mxu0 0.0
    %4545 = vmatprep.subr.mxu0 0.0
    %4546 = vmatpush1.msra.mxu0 0.0
    %4547 = vmatprep.subr.mxu0 0.0
    %4548 = vmatpush1.msra.mxu0 0.0
    %4549 = vmatprep.subr.mxu0 0.0
    %4550 = vmatpush1.msra.mxu0 0.0
    %4551 = vmatprep.subr.mxu0 0.0
    %4552 = vmatpush1.msra.mxu0 0.0
    %4553 = vmatprep.subr.mxu0 0.0
    %4554 = vmatpush1.msra.mxu0 0.0
    %4555 = vmatprep.subr.mxu0 0.0
    %4556 = vmatpush1.msra.mxu0 0.0
    %4557 = vmatprep.subr.mxu0 0.0
    %4558 = vmatpush1.msra.mxu0 0.0
    %4559 = vmatprep.subr.mxu0 0.0
    %4560 = vmatpush1.msra.mxu0 0.0
    %4561 = vmatprep.subr.mxu0 0.0
    %4562 = vmatpush1.msra.mxu0 0.0
    %4563 = vmatprep.subr.mxu0 0.0
    %4564 = vmatpush1.msra.mxu0 0.0
    %4565 = vmatprep.subr.mxu0 0.0
    %4566 = vmatpush1.msra.mxu0 0.0
    %4567 = vmatprep.subr.mxu0 0.0
    %4568 = vmatpush1.msra.mxu0 0.0
    %4569 = vmatprep.subr.mxu0 0.0
    %4570 = vmatpush1.msra.mxu0 0.0
    %4571 = vmatprep.mubr.f32.mxu0 0.0
    %4572 = vmatmul.mubr.f32.gmra.mrb[0].mxu0 %v4408
    %v4573 = vpop.f32.mrb[0].mxu0
    %v4574 = vadd.f32 %v1723, %v4573
    %v4575 = vpop.f32.mrb[0].mxu0
    %4576 = vdwg.mxu0
    %4578 = vrot.lane.b32.xlu0 %v3985, 96
    %v4579 = vpop.permute.xlu0 %4578
    %v4580 = vsel %vm167, %v4579, 0
    %4582 = vmatprep.subr.mxu0 0.0
    %4583 = vmatpush1.msra.mxu0 %v1796
    %4584 = vmatprep.subr.mxu0 0.0
    %4585 = vmatpush1.msra.mxu0 %v1797
    %4586 = vmatprep.subr.mxu0 0.0
    %4587 = vmatpush1.msra.mxu0 %v1798
    %4588 = vmatprep.subr.mxu0 0.0
    %4589 = vmatpush1.msra.mxu0 %v1799
    %4590 = vmatprep.subr.mxu0 0.0
    %4591 = vmatpush1.msra.mxu0 0.0
    %4592 = vmatprep.subr.mxu0 0.0
    %4593 = vmatpush1.msra.mxu0 0.0
    %4594 = vmatprep.subr.mxu0 0.0
    %4595 = vmatpush1.msra.mxu0 0.0
    %4596 = vmatprep.subr.mxu0 0.0
    %4597 = vmatpush1.msra.mxu0 0.0
    %4598 = vmatprep.subr.mxu0 0.0
    %4599 = vmatpush1.msra.mxu0 0.0
    %4600 = vmatprep.subr.mxu0 0.0
    %4601 = vmatpush1.msra.mxu0 0.0
    %4602 = vmatprep.subr.mxu0 0.0
    %4603 = vmatpush1.msra.mxu0 0.0
    %4604 = vmatprep.subr.mxu0 0.0
    %4605 = vmatpush1.msra.mxu0 0.0
    %4606 = vmatprep.subr.mxu0 0.0
    %4607 = vmatpush1.msra.mxu0 0.0
    %4608 = vmatprep.subr.mxu0 0.0
    %4609 = vmatpush1.msra.mxu0 0.0
    %4610 = vmatprep.subr.mxu0 0.0
    %4611 = vmatpush1.msra.mxu0 0.0
    %4612 = vmatprep.subr.mxu0 0.0
    %4613 = vmatpush1.msra.mxu0 0.0
    %4614 = vmatprep.subr.mxu0 0.0
    %4615 = vmatpush1.msra.mxu0 0.0
    %4616 = vmatprep.subr.mxu0 0.0
    %4617 = vmatpush1.msra.mxu0 0.0
    %4618 = vmatprep.subr.mxu0 0.0
    %4619 = vmatpush1.msra.mxu0 0.0
    %4620 = vmatprep.subr.mxu0 0.0
    %4621 = vmatpush1.msra.mxu0 0.0
    %4622 = vmatprep.subr.mxu0 0.0
    %4623 = vmatpush1.msra.mxu0 0.0
    %4624 = vmatprep.subr.mxu0 0.0
    %4625 = vmatpush1.msra.mxu0 0.0
    %4626 = vmatprep.subr.mxu0 0.0
    %4627 = vmatpush1.msra.mxu0 0.0
    %4628 = vmatprep.subr.mxu0 0.0
    %4629 = vmatpush1.msra.mxu0 0.0
    %4630 = vmatprep.subr.mxu0 0.0
    %4631 = vmatpush1.msra.mxu0 0.0
    %4632 = vmatprep.subr.mxu0 0.0
    %4633 = vmatpush1.msra.mxu0 0.0
    %4634 = vmatprep.subr.mxu0 0.0
    %4635 = vmatpush1.msra.mxu0 0.0
    %4636 = vmatprep.subr.mxu0 0.0
    %4637 = vmatpush1.msra.mxu0 0.0
    %4638 = vmatprep.subr.mxu0 0.0
    %4639 = vmatpush1.msra.mxu0 0.0
    %4640 = vmatprep.subr.mxu0 0.0
    %4641 = vmatpush1.msra.mxu0 0.0
    %4642 = vmatprep.subr.mxu0 0.0
    %4643 = vmatpush1.msra.mxu0 0.0
    %4644 = vmatprep.subr.mxu0 0.0
    %4645 = vmatpush1.msra.mxu0 0.0
    %4646 = vmatprep.mubr.f32.mxu0 0.0
    %4647 = vmatmul.mubr.f32.gmra.mrb[0].mxu0 %v4580
    %v4648 = vpop.f32.mrb[0].mxu0
    %v4649 = vadd.f32 0.0, %v4648
    %v4650 = vpop.f32.mrb[0].mxu0
    %4651 = vdwg.mxu0
    %v4652 = vadd.f32 %v4574, %v4649
    %v4653 = vxor.u32 %v4652, 2147483648
    %v4654 = vmul.f32 %v4653, 1.442695
    %v4655 = vpow.pop %v4654
    %v4656 = vadd.f32 %v4655, 1.0
    %v4657 = vrcp.pop %v4656
    %v4658 = vmul.f32 1.0, %v4657
    %v4659 = vadd.f32 %v4649, %v1885
    %4661 = vrot.lane.b32.xlu0 %v4659, 64
    %v4662 = vpop.permute.xlu0 %4661
    %v4664 = vmul.f32 %v4658, %v4662
    %4666 = vrot.lane.b32.xlu0 %v4664, 64
    %v4667 = vpop.permute.xlu0 %4666
    %v4669 = vadd.f32 %v4574, %v4667
    %v4670 = vtanh.pop %v4669
    %v4671 = vsub.f32 1.0, %v4658
    %4673 = vrot.lane.b32.xlu0 %v4670, 96
    %v4674 = vpop.permute.xlu0 %4673
    %v4676 = vmul.f32 %v4671, %v4674
    %v4677 = vmul.f32 %v4658, %v3985
    %v4678 = vadd.f32 %v4676, %v4677
    %4680 = vrot.lane.b32.xlu0 %v4162, 96
    %v4681 = vpop.permute.xlu0 %4680
    %v4682 = vsel %vm167, %v4681, 0
    %4684 = vmatprep.subr.mxu0 0.0
    %4685 = vmatpush1.msra.mxu0 %v453
    %4686 = vmatprep.subr.mxu0 0.0
    %4687 = vmatpush1.msra.mxu0 %v454
    %4688 = vmatprep.subr.mxu0 0.0
    %4689 = vmatpush1.msra.mxu0 %v455
    %4690 = vmatprep.subr.mxu0 0.0
    %4691 = vmatpush1.msra.mxu0 %v456
    %4692 = vmatprep.subr.mxu0 0.0
    %4693 = vmatpush1.msra.mxu0 0.0
    %4694 = vmatprep.subr.mxu0 0.0
    %4695 = vmatpush1.msra.mxu0 0.0
    %4696 = vmatprep.subr.mxu0 0.0
    %4697 = vmatpush1.msra.mxu0 0.0
    %4698 = vmatprep.subr.mxu0 0.0
    %4699 = vmatpush1.msra.mxu0 0.0
    %4700 = vmatprep.subr.mxu0 0.0
    %4701 = vmatpush1.msra.mxu0 0.0
    %4702 = vmatprep.subr.mxu0 0.0
    %4703 = vmatpush1.msra.mxu0 0.0
    %4704 = vmatprep.subr.mxu0 0.0
    %4705 = vmatpush1.msra.mxu0 0.0
    %4706 = vmatprep.subr.mxu0 0.0
    %4707 = vmatpush1.msra.mxu0 0.0
    %4708 = vmatprep.subr.mxu0 0.0
    %4709 = vmatpush1.msra.mxu0 0.0
    %4710 = vmatprep.subr.mxu0 0.0
    %4711 = vmatpush1.msra.mxu0 0.0
    %4712 = vmatprep.subr.mxu0 0.0
    %4713 = vmatpush1.msra.mxu0 0.0
    %4714 = vmatprep.subr.mxu0 0.0
    %4715 = vmatpush1.msra.mxu0 0.0
    %4716 = vmatprep.subr.mxu0 0.0
    %4717 = vmatpush1.msra.mxu0 0.0
    %4718 = vmatprep.subr.mxu0 0.0
    %4719 = vmatpush1.msra.mxu0 0.0
    %4720 = vmatprep.subr.mxu0 0.0
    %4721 = vmatpush1.msra.mxu0 0.0
    %4722 = vmatprep.subr.mxu0 0.0
    %4723 = vmatpush1.msra.mxu0 0.0
    %4724 = vmatprep.subr.mxu0 0.0
    %4725 = vmatpush1.msra.mxu0 0.0
    %4726 = vmatprep.subr.mxu0 0.0
    %4727 = vmatpush1.msra.mxu0 0.0
    %4728 = vmatprep.subr.mxu0 0.0
    %4729 = vmatpush1.msra.mxu0 0.0
    %4730 = vmatprep.subr.mxu0 0.0
    %4731 = vmatpush1.msra.mxu0 0.0
    %4732 = vmatprep.subr.mxu0 0.0
    %4733 = vmatpush1.msra.mxu0 0.0
    %4734 = vmatprep.subr.mxu0 0.0
    %4735 = vmatpush1.msra.mxu0 0.0
    %4736 = vmatprep.subr.mxu0 0.0
    %4737 = vmatpush1.msra.mxu0 0.0
    %4738 = vmatprep.subr.mxu0 0.0
    %4739 = vmatpush1.msra.mxu0 0.0
    %4740 = vmatprep.subr.mxu0 0.0
    %4741 = vmatpush1.msra.mxu0 0.0
    %4742 = vmatprep.subr.mxu0 0.0
    %4743 = vmatpush1.msra.mxu0 0.0
    %4744 = vmatprep.subr.mxu0 0.0
    %4745 = vmatpush1.msra.mxu0 0.0
    %4746 = vmatprep.subr.mxu0 0.0
    %4747 = vmatpush1.msra.mxu0 0.0
    %4748 = vmatprep.mubr.f32.mxu0 0.0
    %4749 = vmatmul.mubr.f32.gmra.mrb[0].mxu0 %v4682
    %v4750 = vpop.f32.mrb[0].mxu0
    %v4751 = vadd.f32 %v463, %v4750
    %v4752 = vpop.f32.mrb[0].mxu0
    %4753 = vdwg.mxu0
    %4755 = vrot.lane.b32.xlu0 %v4334, 96
    %v4756 = vpop.permute.xlu0 %4755
    %v4757 = vsel %vm167, %v4756, 0
    %4759 = vmatprep.subr.mxu0 0.0
    %4760 = vmatpush1.msra.mxu0 %v536
    %4761 = vmatprep.subr.mxu0 0.0
    %4762 = vmatpush1.msra.mxu0 %v537
    %4763 = vmatprep.subr.mxu0 0.0
    %4764 = vmatpush1.msra.mxu0 %v538
    %4765 = vmatprep.subr.mxu0 0.0
    %4766 = vmatpush1.msra.mxu0 %v539
    %4767 = vmatprep.subr.mxu0 0.0
    %4768 = vmatpush1.msra.mxu0 0.0
    %4769 = vmatprep.subr.mxu0 0.0
    %4770 = vmatpush1.msra.mxu0 0.0
    %4771 = vmatprep.subr.mxu0 0.0
    %4772 = vmatpush1.msra.mxu0 0.0
    %4773 = vmatprep.subr.mxu0 0.0
    %4774 = vmatpush1.msra.mxu0 0.0
    %4775 = vmatprep.subr.mxu0 0.0
    %4776 = vmatpush1.msra.mxu0 0.0
    %4777 = vmatprep.subr.mxu0 0.0
    %4778 = vmatpush1.msra.mxu0 0.0
    %4779 = vmatprep.subr.mxu0 0.0
    %4780 = vmatpush1.msra.mxu0 0.0
    %4781 = vmatprep.subr.mxu0 0.0
    %4782 = vmatpush1.msra.mxu0 0.0
    %4783 = vmatprep.subr.mxu0 0.0
    %4784 = vmatpush1.msra.mxu0 0.0
    %4785 = vmatprep.subr.mxu0 0.0
    %4786 = vmatpush1.msra.mxu0 0.0
    %4787 = vmatprep.subr.mxu0 0.0
    %4788 = vmatpush1.msra.mxu0 0.0
    %4789 = vmatprep.subr.mxu0 0.0
    %4790 = vmatpush1.msra.mxu0 0.0
    %4791 = vmatprep.subr.mxu0 0.0
    %4792 = vmatpush1.msra.mxu0 0.0
    %4793 = vmatprep.subr.mxu0 0.0
    %4794 = vmatpush1.msra.mxu0 0.0
    %4795 = vmatprep.subr.mxu0 0.0
    %4796 = vmatpush1.msra.mxu0 0.0
    %4797 = vmatprep.subr.mxu0 0.0
    %4798 = vmatpush1.msra.mxu0 0.0
    %4799 = vmatprep.subr.mxu0 0.0
    %4800 = vmatpush1.msra.mxu0 0.0
    %4801 = vmatprep.subr.mxu0 0.0
    %4802 = vmatpush1.msra.mxu0 0.0
    %4803 = vmatprep.subr.mxu0 0.0
    %4804 = vmatpush1.msra.mxu0 0.0
    %4805 = vmatprep.subr.mxu0 0.0
    %4806 = vmatpush1.msra.mxu0 0.0
    %4807 = vmatprep.subr.mxu0 0.0
    %4808 = vmatpush1.msra.mxu0 0.0
    %4809 = vmatprep.subr.mxu0 0.0
    %4810 = vmatpush1.msra.mxu0 0.0
    %4811 = vmatprep.subr.mxu0 0.0
    %4812 = vmatpush1.msra.mxu0 0.0
    %4813 = vmatprep.subr.mxu0 0.0
    %4814 = vmatpush1.msra.mxu0 0.0
    %4815 = vmatprep.subr.mxu0 0.0
    %4816 = vmatpush1.msra.mxu0 0.0
    %4817 = vmatprep.subr.mxu0 0.0
    %4818 = vmatpush1.msra.mxu0 0.0
    %4819 = vmatprep.subr.mxu0 0.0
    %4820 = vmatpush1.msra.mxu0 0.0
    %4821 = vmatprep.subr.mxu0 0.0
    %4822 = vmatpush1.msra.mxu0 0.0
    %4823 = vmatprep.mubr.f32.mxu0 0.0
    %4824 = vmatmul.mubr.f32.gmra.mrb[0].mxu0 %v4757
    %v4825 = vpop.f32.mrb[0].mxu0
    %v4826 = vadd.f32 0.0, %v4825
    %v4827 = vpop.f32.mrb[0].mxu0
    %4828 = vdwg.mxu0
    %v4829 = vadd.f32 %v4751, %v4826
    %v4830 = vxor.u32 %v4829, 2147483648
    %v4831 = vmul.f32 %v4830, 1.442695
    %v4832 = vpow.pop %v4831
    %v4833 = vadd.f32 %v4832, 1.0
    %v4834 = vrcp.pop %v4833
    %v4835 = vmul.f32 1.0, %v4834
    %v4836 = vadd.f32 %v4826, %v625
    %4838 = vrot.lane.b32.xlu0 %v4836, 64
    %v4839 = vpop.permute.xlu0 %4838
    %v4841 = vmul.f32 %v4835, %v4839
    %4843 = vrot.lane.b32.xlu0 %v4841, 64
    %v4844 = vpop.permute.xlu0 %4843
    %v4846 = vadd.f32 %v4751, %v4844
    %v4847 = vtanh.pop %v4846
    %v4848 = vsub.f32 1.0, %v4835
    %4850 = vrot.lane.b32.xlu0 %v4847, 96
    %v4851 = vpop.permute.xlu0 %4850
    %v4853 = vmul.f32 %v4848, %v4851
    %v4854 = vmul.f32 %v4835, %v4334
    %v4855 = vadd.f32 %v4853, %v4854
    %4856 = vmatprep.subr.mxu0 0.0
    %4857 = vmatpush1.msra.mxu0 %v997
    %4858 = vmatprep.subr.mxu0 0.0
    %4859 = vmatpush1.msra.mxu0 %v998
    %4860 = vmatprep.subr.mxu0 0.0
    %4861 = vmatpush1.msra.mxu0 %v999
    %4862 = vmatprep.subr.mxu0 0.0
    %4863 = vmatpush1.msra.mxu0 %v1000
    %4864 = vmatprep.subr.mxu0 0.0
    %4865 = vmatpush1.msra.mxu0 0.0
    %4866 = vmatprep.subr.mxu0 0.0
    %4867 = vmatpush1.msra.mxu0 0.0
    %4868 = vmatprep.subr.mxu0 0.0
    %4869 = vmatpush1.msra.mxu0 0.0
    %4870 = vmatprep.subr.mxu0 0.0
    %4871 = vmatpush1.msra.mxu0 0.0
    %4872 = vmatprep.subr.mxu0 0.0
    %4873 = vmatpush1.msra.mxu0 0.0
    %4874 = vmatprep.subr.mxu0 0.0
    %4875 = vmatpush1.msra.mxu0 0.0
    %4876 = vmatprep.subr.mxu0 0.0
    %4877 = vmatpush1.msra.mxu0 0.0
    %4878 = vmatprep.subr.mxu0 0.0
    %4879 = vmatpush1.msra.mxu0 0.0
    %4880 = vmatprep.subr.mxu0 0.0
    %4881 = vmatpush1.msra.mxu0 0.0
    %4882 = vmatprep.subr.mxu0 0.0
    %4883 = vmatpush1.msra.mxu0 0.0
    %4884 = vmatprep.subr.mxu0 0.0
    %4885 = vmatpush1.msra.mxu0 0.0
    %4886 = vmatprep.subr.mxu0 0.0
    %4887 = vmatpush1.msra.mxu0 0.0
    %4888 = vmatprep.subr.mxu0 0.0
    %4889 = vmatpush1.msra.mxu0 0.0
    %4890 = vmatprep.subr.mxu0 0.0
    %4891 = vmatpush1.msra.mxu0 0.0
    %4892 = vmatprep.subr.mxu0 0.0
    %4893 = vmatpush1.msra.mxu0 0.0
    %4894 = vmatprep.subr.mxu0 0.0
    %4895 = vmatpush1.msra.mxu0 0.0
    %4896 = vmatprep.subr.mxu0 0.0
    %4897 = vmatpush1.msra.mxu0 0.0
    %4898 = vmatprep.subr.mxu0 0.0
    %4899 = vmatpush1.msra.mxu0 0.0
    %4900 = vmatprep.subr.mxu0 0.0
    %4901 = vmatpush1.msra.mxu0 0.0
    %4902 = vmatprep.subr.mxu0 0.0
    %4903 = vmatpush1.msra.mxu0 0.0
    %4904 = vmatprep.subr.mxu0 0.0
    %4905 = vmatpush1.msra.mxu0 0.0
    %4906 = vmatprep.subr.mxu0 0.0
    %4907 = vmatpush1.msra.mxu0 0.0
    %4908 = vmatprep.subr.mxu0 0.0
    %4909 = vmatpush1.msra.mxu0 0.0
    %4910 = vmatprep.subr.mxu0 0.0
    %4911 = vmatpush1.msra.mxu0 0.0
    %4912 = vmatprep.subr.mxu0 0.0
    %4913 = vmatpush1.msra.mxu0 0.0
    %4914 = vmatprep.subr.mxu0 0.0
    %4915 = vmatpush1.msra.mxu0 0.0
    %4916 = vmatprep.subr.mxu0 0.0
    %4917 = vmatpush1.msra.mxu0 0.0
    %4918 = vmatprep.subr.mxu0 0.0
    %4919 = vmatpush1.msra.mxu0 0.0
    %4920 = vmatprep.mubr.f32.mxu0 0.0
    %4921 = vmatmul.mubr.f32.gmra.mrb[0].mxu0 %v4757
    %v4922 = vpop.f32.mrb[0].mxu0
    %v4923 = vadd.f32 %v1007, %v4922
    %v4924 = vpop.f32.mrb[0].mxu0
    %4925 = vdwg.mxu0
    %4927 = vrot.lane.b32.xlu0 %v4506, 96
    %v4928 = vpop.permute.xlu0 %4927
    %v4929 = vsel %vm167, %v4928, 0
    %4931 = vmatprep.subr.mxu0 0.0
    %4932 = vmatpush1.msra.mxu0 %v1080
    %4933 = vmatprep.subr.mxu0 0.0
    %4934 = vmatpush1.msra.mxu0 %v1081
    %4935 = vmatprep.subr.mxu0 0.0
    %4936 = vmatpush1.msra.mxu0 %v1082
    %4937 = vmatprep.subr.mxu0 0.0
    %4938 = vmatpush1.msra.mxu0 %v1083
    %4939 = vmatprep.subr.mxu0 0.0
    %4940 = vmatpush1.msra.mxu0 0.0
    %4941 = vmatprep.subr.mxu0 0.0
    %4942 = vmatpush1.msra.mxu0 0.0
    %4943 = vmatprep.subr.mxu0 0.0
    %4944 = vmatpush1.msra.mxu0 0.0
    %4945 = vmatprep.subr.mxu0 0.0
    %4946 = vmatpush1.msra.mxu0 0.0
    %4947 = vmatprep.subr.mxu0 0.0
    %4948 = vmatpush1.msra.mxu0 0.0
    %4949 = vmatprep.subr.mxu0 0.0
    %4950 = vmatpush1.msra.mxu0 0.0
    %4951 = vmatprep.subr.mxu0 0.0
    %4952 = vmatpush1.msra.mxu0 0.0
    %4953 = vmatprep.subr.mxu0 0.0
    %4954 = vmatpush1.msra.mxu0 0.0
    %4955 = vmatprep.subr.mxu0 0.0
    %4956 = vmatpush1.msra.mxu0 0.0
    %4957 = vmatprep.subr.mxu0 0.0
    %4958 = vmatpush1.msra.mxu0 0.0
    %4959 = vmatprep.subr.mxu0 0.0
    %4960 = vmatpush1.msra.mxu0 0.0
    %4961 = vmatprep.subr.mxu0 0.0
    %4962 = vmatpush1.msra.mxu0 0.0
    %4963 = vmatprep.subr.mxu0 0.0
    %4964 = vmatpush1.msra.mxu0 0.0
    %4965 = vmatprep.subr.mxu0 0.0
    %4966 = vmatpush1.msra.mxu0 0.0
    %4967 = vmatprep.subr.mxu0 0.0
    %4968 = vmatpush1.msra.mxu0 0.0
    %4969 = vmatprep.subr.mxu0 0.0
    %4970 = vmatpush1.msra.mxu0 0.0
    %4971 = vmatprep.subr.mxu0 0.0
    %4972 = vmatpush1.msra.mxu0 0.0
    %4973 = vmatprep.subr.mxu0 0.0
    %4974 = vmatpush1.msra.mxu0 0.0
    %4975 = vmatprep.subr.mxu0 0.0
    %4976 = vmatpush1.msra.mxu0 0.0
    %4977 = vmatprep.subr.mxu0 0.0
    %4978 = vmatpush1.msra.mxu0 0.0
    %4979 = vmatprep.subr.mxu0 0.0
    %4980 = vmatpush1.msra.mxu0 0.0
    %4981 = vmatprep.subr.mxu0 0.0
    %4982 = vmatpush1.msra.mxu0 0.0
    %4983 = vmatprep.subr.mxu0 0.0
    %4984 = vmatpush1.msra.mxu0 0.0
    %4985 = vmatprep.subr.mxu0 0.0
    %4986 = vmatpush1.msra.mxu0 0.0
    %4987 = vmatprep.subr.mxu0 0.0
    %4988 = vmatpush1.msra.mxu0 0.0
    %4989 = vmatprep.subr.mxu0 0.0
    %4990 = vmatpush1.msra.mxu0 0.0
    %4991 = vmatprep.subr.mxu0 0.0
    %4992 = vmatpush1.msra.mxu0 0.0
    %4993 = vmatprep.subr.mxu0 0.0
    %4994 = vmatpush1.msra.mxu0 0.0
    %4995 = vmatprep.mubr.f32.mxu0 0.0
    %4996 = vmatmul.mubr.f32.gmra.mrb[0].mxu0 %v4929
    %v4997 = vpop.f32.mrb[0].mxu0
    %v4998 = vadd.f32 0.0, %v4997
    %v4999 = vpop.f32.mrb[0].mxu0
    %5000 = vdwg.mxu0
    %v5001 = vadd.f32 %v4923, %v4998
    %v5002 = vxor.u32 %v5001, 2147483648
    %v5003 = vmul.f32 %v5002, 1.442695
    %v5004 = vpow.pop %v5003
    %v5005 = vadd.f32 %v5004, 1.0
    %v5006 = vrcp.pop %v5005
    %v5007 = vmul.f32 1.0, %v5006
    %v5008 = vadd.f32 %v4998, %v1169
    %5010 = vrot.lane.b32.xlu0 %v5008, 64
    %v5011 = vpop.permute.xlu0 %5010
    %v5013 = vmul.f32 %v5007, %v5011
    %5015 = vrot.lane.b32.xlu0 %v5013, 64
    %v5016 = vpop.permute.xlu0 %5015
    %v5018 = vadd.f32 %v4923, %v5016
    %v5019 = vtanh.pop %v5018
    %v5020 = vsub.f32 1.0, %v5007
    %5022 = vrot.lane.b32.xlu0 %v5019, 96
    %v5023 = vpop.permute.xlu0 %5022
    %v5025 = vmul.f32 %v5020, %v5023
    %v5026 = vmul.f32 %v5007, %v4506
    %v5027 = vadd.f32 %v5025, %v5026
    %5028 = vmatprep.subr.mxu0 0.0
    %5029 = vmatpush1.msra.mxu0 %v1713
    %5030 = vmatprep.subr.mxu0 0.0
    %5031 = vmatpush1.msra.mxu0 %v1714
    %5032 = vmatprep.subr.mxu0 0.0
    %5033 = vmatpush1.msra.mxu0 %v1715
    %5034 = vmatprep.subr.mxu0 0.0
    %5035 = vmatpush1.msra.mxu0 %v1716
    %5036 = vmatprep.subr.mxu0 0.0
    %5037 = vmatpush1.msra.mxu0 0.0
    %5038 = vmatprep.subr.mxu0 0.0
    %5039 = vmatpush1.msra.mxu0 0.0
    %5040 = vmatprep.subr.mxu0 0.0
    %5041 = vmatpush1.msra.mxu0 0.0
    %5042 = vmatprep.subr.mxu0 0.0
    %5043 = vmatpush1.msra.mxu0 0.0
    %5044 = vmatprep.subr.mxu0 0.0
    %5045 = vmatpush1.msra.mxu0 0.0
    %5046 = vmatprep.subr.mxu0 0.0
    %5047 = vmatpush1.msra.mxu0 0.0
    %5048 = vmatprep.subr.mxu0 0.0
    %5049 = vmatpush1.msra.mxu0 0.0
    %5050 = vmatprep.subr.mxu0 0.0
    %5051 = vmatpush1.msra.mxu0 0.0
    %5052 = vmatprep.subr.mxu0 0.0
    %5053 = vmatpush1.msra.mxu0 0.0
    %5054 = vmatprep.subr.mxu0 0.0
    %5055 = vmatpush1.msra.mxu0 0.0
    %5056 = vmatprep.subr.mxu0 0.0
    %5057 = vmatpush1.msra.mxu0 0.0
    %5058 = vmatprep.subr.mxu0 0.0
    %5059 = vmatpush1.msra.mxu0 0.0
    %5060 = vmatprep.subr.mxu0 0.0
    %5061 = vmatpush1.msra.mxu0 0.0
    %5062 = vmatprep.subr.mxu0 0.0
    %5063 = vmatpush1.msra.mxu0 0.0
    %5064 = vmatprep.subr.mxu0 0.0
    %5065 = vmatpush1.msra.mxu0 0.0
    %5066 = vmatprep.subr.mxu0 0.0
    %5067 = vmatpush1.msra.mxu0 0.0
    %5068 = vmatprep.subr.mxu0 0.0
    %5069 = vmatpush1.msra.mxu0 0.0
    %5070 = vmatprep.subr.mxu0 0.0
    %5071 = vmatpush1.msra.mxu0 0.0
    %5072 = vmatprep.subr.mxu0 0.0
    %5073 = vmatpush1.msra.mxu0 0.0
    %5074 = vmatprep.subr.mxu0 0.0
    %5075 = vmatpush1.msra.mxu0 0.0
    %5076 = vmatprep.subr.mxu0 0.0
    %5077 = vmatpush1.msra.mxu0 0.0
    %5078 = vmatprep.subr.mxu0 0.0
    %5079 = vmatpush1.msra.mxu0 0.0
    %5080 = vmatprep.subr.mxu0 0.0
    %5081 = vmatpush1.msra.mxu0 0.0
    %5082 = vmatprep.subr.mxu0 0.0
    %5083 = vmatpush1.msra.mxu0 0.0
    %5084 = vmatprep.subr.mxu0 0.0
    %5085 = vmatpush1.msra.mxu0 0.0
    %5086 = vmatprep.subr.mxu0 0.0
    %5087 = vmatpush1.msra.mxu0 0.0
    %5088 = vmatprep.subr.mxu0 0.0
    %5089 = vmatpush1.msra.mxu0 0.0
    %5090 = vmatprep.subr.mxu0 0.0
    %5091 = vmatpush1.msra.mxu0 0.0
    %5092 = vmatprep.mubr.f32.mxu0 0.0
    %5093 = vmatmul.mubr.f32.gmra.mrb[0].mxu0 %v4929
    %v5094 = vpop.f32.mrb[0].mxu0
    %v5095 = vadd.f32 %v1723, %v5094
    %v5096 = vpop.f32.mrb[0].mxu0
    %5097 = vdwg.mxu0
    %5099 = vrot.lane.b32.xlu0 %v4678, 96
    %v5100 = vpop.permute.xlu0 %5099
    %v5101 = vsel %vm167, %v5100, 0
    %5103 = vmatprep.subr.mxu0 0.0
    %5104 = vmatpush1.msra.mxu0 %v1796
    %5105 = vmatprep.subr.mxu0 0.0
    %5106 = vmatpush1.msra.mxu0 %v1797
    %5107 = vmatprep.subr.mxu0 0.0
    %5108 = vmatpush1.msra.mxu0 %v1798
    %5109 = vmatprep.subr.mxu0 0.0
    %5110 = vmatpush1.msra.mxu0 %v1799
    %5111 = vmatprep.subr.mxu0 0.0
    %5112 = vmatpush1.msra.mxu0 0.0
    %5113 = vmatprep.subr.mxu0 0.0
    %5114 = vmatpush1.msra.mxu0 0.0
    %5115 = vmatprep.subr.mxu0 0.0
    %5116 = vmatpush1.msra.mxu0 0.0
    %5117 = vmatprep.subr.mxu0 0.0
    %5118 = vmatpush1.msra.mxu0 0.0
    %5119 = vmatprep.subr.mxu0 0.0
    %5120 = vmatpush1.msra.mxu0 0.0
    %5121 = vmatprep.subr.mxu0 0.0
    %5122 = vmatpush1.msra.mxu0 0.0
    %5123 = vmatprep.subr.mxu0 0.0
    %5124 = vmatpush1.msra.mxu0 0.0
    %5125 = vmatprep.subr.mxu0 0.0
    %5126 = vmatpush1.msra.mxu0 0.0
    %5127 = vmatprep.subr.mxu0 0.0
    %5128 = vmatpush1.msra.mxu0 0.0
    %5129 = vmatprep.subr.mxu0 0.0
    %5130 = vmatpush1.msra.mxu0 0.0
    %5131 = vmatprep.subr.mxu0 0.0
    %5132 = vmatpush1.msra.mxu0 0.0
    %5133 = vmatprep.subr.mxu0 0.0
    %5134 = vmatpush1.msra.mxu0 0.0
    %5135 = vmatprep.subr.mxu0 0.0
    %5136 = vmatpush1.msra.mxu0 0.0
    %5137 = vmatprep.subr.mxu0 0.0
    %5138 = vmatpush1.msra.mxu0 0.0
    %5139 = vmatprep.subr.mxu0 0.0
    %5140 = vmatpush1.msra.mxu0 0.0
    %5141 = vmatprep.subr.mxu0 0.0
    %5142 = vmatpush1.msra.mxu0 0.0
    %5143 = vmatprep.subr.mxu0 0.0
    %5144 = vmatpush1.msra.mxu0 0.0
    %5145 = vmatprep.subr.mxu0 0.0
    %5146 = vmatpush1.msra.mxu0 0.0
    %5147 = vmatprep.subr.mxu0 0.0
    %5148 = vmatpush1.msra.mxu0 0.0
    %5149 = vmatprep.subr.mxu0 0.0
    %5150 = vmatpush1.msra.mxu0 0.0
    %5151 = vmatprep.subr.mxu0 0.0
    %5152 = vmatpush1.msra.mxu0 0.0
    %5153 = vmatprep.subr.mxu0 0.0
    %5154 = vmatpush1.msra.mxu0 0.0
    %5155 = vmatprep.subr.mxu0 0.0
    %5156 = vmatpush1.msra.mxu0 0.0
    %5157 = vmatprep.subr.mxu0 0.0
    %5158 = vmatpush1.msra.mxu0 0.0
    %5159 = vmatprep.subr.mxu0 0.0
    %5160 = vmatpush1.msra.mxu0 0.0
    %5161 = vmatprep.subr.mxu0 0.0
    %5162 = vmatpush1.msra.mxu0 0.0
    %5163 = vmatprep.subr.mxu0 0.0
    %5164 = vmatpush1.msra.mxu0 0.0
    %5165 = vmatprep.subr.mxu0 0.0
    %5166 = vmatpush1.msra.mxu0 0.0
    %5167 = vmatprep.mubr.f32.mxu0 0.0
    %5168 = vmatmul.mubr.f32.gmra.mrb[0].mxu0 %v5101
    %v5169 = vpop.f32.mrb[0].mxu0
    %v5170 = vadd.f32 0.0, %v5169
    %v5171 = vpop.f32.mrb[0].mxu0
    %5172 = vdwg.mxu0
    %v5173 = vadd.f32 %v5095, %v5170
    %v5174 = vxor.u32 %v5173, 2147483648
    %v5175 = vmul.f32 %v5174, 1.442695
    %v5176 = vpow.pop %v5175
    %v5177 = vadd.f32 %v5176, 1.0
    %v5178 = vrcp.pop %v5177
    %v5179 = vmul.f32 1.0, %v5178
    %v5180 = vadd.f32 %v5170, %v1885
    %5182 = vrot.lane.b32.xlu0 %v5180, 64
    %v5183 = vpop.permute.xlu0 %5182
    %v5185 = vmul.f32 %v5179, %v5183
    %5187 = vrot.lane.b32.xlu0 %v5185, 64
    %v5188 = vpop.permute.xlu0 %5187
    %v5190 = vadd.f32 %v5095, %v5188
    %v5191 = vtanh.pop %v5190
    %v5192 = vsub.f32 1.0, %v5179
    %5194 = vrot.lane.b32.xlu0 %v5191, 96
    %v5195 = vpop.permute.xlu0 %5194
    %v5197 = vmul.f32 %v5192, %v5195
    %v5198 = vmul.f32 %v5179, %v4678
    %v5199 = vadd.f32 %v5197, %v5198
    %5201 = vrot.lane.b32.xlu0 %v4855, 96
    %v5202 = vpop.permute.xlu0 %5201
    %v5203 = vsel %vm167, %v5202, 0
    %5205 = vmatprep.subr.mxu0 0.0
    %5206 = vmatpush1.msra.mxu0 %v997
    %5207 = vmatprep.subr.mxu0 0.0
    %5208 = vmatpush1.msra.mxu0 %v998
    %5209 = vmatprep.subr.mxu0 0.0
    %5210 = vmatpush1.msra.mxu0 %v999
    %5211 = vmatprep.subr.mxu0 0.0
    %5212 = vmatpush1.msra.mxu0 %v1000
    %5213 = vmatprep.subr.mxu0 0.0
    %5214 = vmatpush1.msra.mxu0 0.0
    %5215 = vmatprep.subr.mxu0 0.0
    %5216 = vmatpush1.msra.mxu0 0.0
    %5217 = vmatprep.subr.mxu0 0.0
    %5218 = vmatpush1.msra.mxu0 0.0
    %5219 = vmatprep.subr.mxu0 0.0
    %5220 = vmatpush1.msra.mxu0 0.0
    %5221 = vmatprep.subr.mxu0 0.0
    %5222 = vmatpush1.msra.mxu0 0.0
    %5223 = vmatprep.subr.mxu0 0.0
    %5224 = vmatpush1.msra.mxu0 0.0
    %5225 = vmatprep.subr.mxu0 0.0
    %5226 = vmatpush1.msra.mxu0 0.0
    %5227 = vmatprep.subr.mxu0 0.0
    %5228 = vmatpush1.msra.mxu0 0.0
    %5229 = vmatprep.subr.mxu0 0.0
    %5230 = vmatpush1.msra.mxu0 0.0
    %5231 = vmatprep.subr.mxu0 0.0
    %5232 = vmatpush1.msra.mxu0 0.0
    %5233 = vmatprep.subr.mxu0 0.0
    %5234 = vmatpush1.msra.mxu0 0.0
    %5235 = vmatprep.subr.mxu0 0.0
    %5236 = vmatpush1.msra.mxu0 0.0
    %5237 = vmatprep.subr.mxu0 0.0
    %5238 = vmatpush1.msra.mxu0 0.0
    %5239 = vmatprep.subr.mxu0 0.0
    %5240 = vmatpush1.msra.mxu0 0.0
    %5241 = vmatprep.subr.mxu0 0.0
    %5242 = vmatpush1.msra.mxu0 0.0
    %5243 = vmatprep.subr.mxu0 0.0
    %5244 = vmatpush1.msra.mxu0 0.0
    %5245 = vmatprep.subr.mxu0 0.0
    %5246 = vmatpush1.msra.mxu0 0.0
    %5247 = vmatprep.subr.mxu0 0.0
    %5248 = vmatpush1.msra.mxu0 0.0
    %5249 = vmatprep.subr.mxu0 0.0
    %5250 = vmatpush1.msra.mxu0 0.0
    %5251 = vmatprep.subr.mxu0 0.0
    %5252 = vmatpush1.msra.mxu0 0.0
    %5253 = vmatprep.subr.mxu0 0.0
    %5254 = vmatpush1.msra.mxu0 0.0
    %5255 = vmatprep.subr.mxu0 0.0
    %5256 = vmatpush1.msra.mxu0 0.0
    %5257 = vmatprep.subr.mxu0 0.0
    %5258 = vmatpush1.msra.mxu0 0.0
    %5259 = vmatprep.subr.mxu0 0.0
    %5260 = vmatpush1.msra.mxu0 0.0
    %5261 = vmatprep.subr.mxu0 0.0
    %5262 = vmatpush1.msra.mxu0 0.0
    %5263 = vmatprep.subr.mxu0 0.0
    %5264 = vmatpush1.msra.mxu0 0.0
    %5265 = vmatprep.subr.mxu0 0.0
    %5266 = vmatpush1.msra.mxu0 0.0
    %5267 = vmatprep.subr.mxu0 0.0
    %5268 = vmatpush1.msra.mxu0 0.0
    %5269 = vmatprep.mubr.f32.mxu0 0.0
    %5270 = vmatmul.mubr.f32.gmra.mrb[0].mxu0 %v5203
    %v5271 = vpop.f32.mrb[0].mxu0
    %v5272 = vadd.f32 %v1007, %v5271
    %v5273 = vpop.f32.mrb[0].mxu0
    %5274 = vdwg.mxu0
    %5276 = vrot.lane.b32.xlu0 %v5027, 96
    %v5277 = vpop.permute.xlu0 %5276
    %v5278 = vsel %vm167, %v5277, 0
    %5280 = vmatprep.subr.mxu0 0.0
    %5281 = vmatpush1.msra.mxu0 %v1080
    %5282 = vmatprep.subr.mxu0 0.0
    %5283 = vmatpush1.msra.mxu0 %v1081
    %5284 = vmatprep.subr.mxu0 0.0
    %5285 = vmatpush1.msra.mxu0 %v1082
    %5286 = vmatprep.subr.mxu0 0.0
    %5287 = vmatpush1.msra.mxu0 %v1083
    %5288 = vmatprep.subr.mxu0 0.0
    %5289 = vmatpush1.msra.mxu0 0.0
    %5290 = vmatprep.subr.mxu0 0.0
    %5291 = vmatpush1.msra.mxu0 0.0
    %5292 = vmatprep.subr.mxu0 0.0
    %5293 = vmatpush1.msra.mxu0 0.0
    %5294 = vmatprep.subr.mxu0 0.0
    %5295 = vmatpush1.msra.mxu0 0.0
    %5296 = vmatprep.subr.mxu0 0.0
    %5297 = vmatpush1.msra.mxu0 0.0
    %5298 = vmatprep.subr.mxu0 0.0
    %5299 = vmatpush1.msra.mxu0 0.0
    %5300 = vmatprep.subr.mxu0 0.0
    %5301 = vmatpush1.msra.mxu0 0.0
    %5302 = vmatprep.subr.mxu0 0.0
    %5303 = vmatpush1.msra.mxu0 0.0
    %5304 = vmatprep.subr.mxu0 0.0
    %5305 = vmatpush1.msra.mxu0 0.0
    %5306 = vmatprep.subr.mxu0 0.0
    %5307 = vmatpush1.msra.mxu0 0.0
    %5308 = vmatprep.subr.mxu0 0.0
    %5309 = vmatpush1.msra.mxu0 0.0
    %5310 = vmatprep.subr.mxu0 0.0
    %5311 = vmatpush1.msra.mxu0 0.0
    %5312 = vmatprep.subr.mxu0 0.0
    %5313 = vmatpush1.msra.mxu0 0.0
    %5314 = vmatprep.subr.mxu0 0.0
    %5315 = vmatpush1.msra.mxu0 0.0
    %5316 = vmatprep.subr.mxu0 0.0
    %5317 = vmatpush1.msra.mxu0 0.0
    %5318 = vmatprep.subr.mxu0 0.0
    %5319 = vmatpush1.msra.mxu0 0.0
    %5320 = vmatprep.subr.mxu0 0.0
    %5321 = vmatpush1.msra.mxu0 0.0
    %5322 = vmatprep.subr.mxu0 0.0
    %5323 = vmatpush1.msra.mxu0 0.0
    %5324 = vmatprep.subr.mxu0 0.0
    %5325 = vmatpush1.msra.mxu0 0.0
    %5326 = vmatprep.subr.mxu0 0.0
    %5327 = vmatpush1.msra.mxu0 0.0
    %5328 = vmatprep.subr.mxu0 0.0
    %5329 = vmatpush1.msra.mxu0 0.0
    %5330 = vmatprep.subr.mxu0 0.0
    %5331 = vmatpush1.msra.mxu0 0.0
    %5332 = vmatprep.subr.mxu0 0.0
    %5333 = vmatpush1.msra.mxu0 0.0
    %5334 = vmatprep.subr.mxu0 0.0
    %5335 = vmatpush1.msra.mxu0 0.0
    %5336 = vmatprep.subr.mxu0 0.0
    %5337 = vmatpush1.msra.mxu0 0.0
    %5338 = vmatprep.subr.mxu0 0.0
    %5339 = vmatpush1.msra.mxu0 0.0
    %5340 = vmatprep.subr.mxu0 0.0
    %5341 = vmatpush1.msra.mxu0 0.0
    %5342 = vmatprep.subr.mxu0 0.0
    %5343 = vmatpush1.msra.mxu0 0.0
    %5344 = vmatprep.mubr.f32.mxu0 0.0
    %5345 = vmatmul.mubr.f32.gmra.mrb[0].mxu0 %v5278
    %v5346 = vpop.f32.mrb[0].mxu0
    %v5347 = vadd.f32 0.0, %v5346
    %v5348 = vpop.f32.mrb[0].mxu0
    %5349 = vdwg.mxu0
    %v5350 = vadd.f32 %v5272, %v5347
    %v5351 = vxor.u32 %v5350, 2147483648
    %v5352 = vmul.f32 %v5351, 1.442695
    %v5353 = vpow.pop %v5352
    %v5354 = vadd.f32 %v5353, 1.0
    %v5355 = vrcp.pop %v5354
    %v5356 = vmul.f32 1.0, %v5355
    %v5357 = vadd.f32 %v5347, %v1169
    %5359 = vrot.lane.b32.xlu0 %v5357, 64
    %v5360 = vpop.permute.xlu0 %5359
    %v5362 = vmul.f32 %v5356, %v5360
    %5364 = vrot.lane.b32.xlu0 %v5362, 64
    %v5365 = vpop.permute.xlu0 %5364
    %v5367 = vadd.f32 %v5272, %v5365
    %v5368 = vtanh.pop %v5367
    %v5369 = vsub.f32 1.0, %v5356
    %5371 = vrot.lane.b32.xlu0 %v5368, 96
    %v5372 = vpop.permute.xlu0 %5371
    %v5374 = vmul.f32 %v5369, %v5372
    %v5375 = vmul.f32 %v5356, %v5027
    %v5376 = vadd.f32 %v5374, %v5375
    %5377 = vmatprep.subr.mxu0 0.0
    %5378 = vmatpush1.msra.mxu0 %v1713
    %5379 = vmatprep.subr.mxu0 0.0
    %5380 = vmatpush1.msra.mxu0 %v1714
    %5381 = vmatprep.subr.mxu0 0.0
    %5382 = vmatpush1.msra.mxu0 %v1715
    %5383 = vmatprep.subr.mxu0 0.0
    %5384 = vmatpush1.msra.mxu0 %v1716
    %5385 = vmatprep.subr.mxu0 0.0
    %5386 = vmatpush1.msra.mxu0 0.0
    %5387 = vmatprep.subr.mxu0 0.0
    %5388 = vmatpush1.msra.mxu0 0.0
    %5389 = vmatprep.subr.mxu0 0.0
    %5390 = vmatpush1.msra.mxu0 0.0
    %5391 = vmatprep.subr.mxu0 0.0
    %5392 = vmatpush1.msra.mxu0 0.0
    %5393 = vmatprep.subr.mxu0 0.0
    %5394 = vmatpush1.msra.mxu0 0.0
    %5395 = vmatprep.subr.mxu0 0.0
    %5396 = vmatpush1.msra.mxu0 0.0
    %5397 = vmatprep.subr.mxu0 0.0
    %5398 = vmatpush1.msra.mxu0 0.0
    %5399 = vmatprep.subr.mxu0 0.0
    %5400 = vmatpush1.msra.mxu0 0.0
    %5401 = vmatprep.subr.mxu0 0.0
    %5402 = vmatpush1.msra.mxu0 0.0
    %5403 = vmatprep.subr.mxu0 0.0
    %5404 = vmatpush1.msra.mxu0 0.0
    %5405 = vmatprep.subr.mxu0 0.0
    %5406 = vmatpush1.msra.mxu0 0.0
    %5407 = vmatprep.subr.mxu0 0.0
    %5408 = vmatpush1.msra.mxu0 0.0
    %5409 = vmatprep.subr.mxu0 0.0
    %5410 = vmatpush1.msra.mxu0 0.0
    %5411 = vmatprep.subr.mxu0 0.0
    %5412 = vmatpush1.msra.mxu0 0.0
    %5413 = vmatprep.subr.mxu0 0.0
    %5414 = vmatpush1.msra.mxu0 0.0
    %5415 = vmatprep.subr.mxu0 0.0
    %5416 = vmatpush1.msra.mxu0 0.0
    %5417 = vmatprep.subr.mxu0 0.0
    %5418 = vmatpush1.msra.mxu0 0.0
    %5419 = vmatprep.subr.mxu0 0.0
    %5420 = vmatpush1.msra.mxu0 0.0
    %5421 = vmatprep.subr.mxu0 0.0
    %5422 = vmatpush1.msra.mxu0 0.0
    %5423 = vmatprep.subr.mxu0 0.0
    %5424 = vmatpush1.msra.mxu0 0.0
    %5425 = vmatprep.subr.mxu0 0.0
    %5426 = vmatpush1.msra.mxu0 0.0
    %5427 = vmatprep.subr.mxu0 0.0
    %5428 = vmatpush1.msra.mxu0 0.0
    %5429 = vmatprep.subr.mxu0 0.0
    %5430 = vmatpush1.msra.mxu0 0.0
    %5431 = vmatprep.subr.mxu0 0.0
    %5432 = vmatpush1.msra.mxu0 0.0
    %5433 = vmatprep.subr.mxu0 0.0
    %5434 = vmatpush1.msra.mxu0 0.0
    %5435 = vmatprep.subr.mxu0 0.0
    %5436 = vmatpush1.msra.mxu0 0.0
    %5437 = vmatprep.subr.mxu0 0.0
    %5438 = vmatpush1.msra.mxu0 0.0
    %5439 = vmatprep.subr.mxu0 0.0
    %5440 = vmatpush1.msra.mxu0 0.0
    %5441 = vmatprep.mubr.f32.mxu0 0.0
    %5442 = vmatmul.mubr.f32.gmra.mrb[0].mxu0 %v5278
    %v5443 = vpop.f32.mrb[0].mxu0
    %v5444 = vadd.f32 %v1723, %v5443
    %v5445 = vpop.f32.mrb[0].mxu0
    %5446 = vdwg.mxu0
    %5448 = vrot.lane.b32.xlu0 %v5199, 96
    %v5449 = vpop.permute.xlu0 %5448
    %v5450 = vsel %vm167, %v5449, 0
    %5452 = vmatprep.subr.mxu0 0.0
    %5453 = vmatpush1.msra.mxu0 %v1796
    %5454 = vmatprep.subr.mxu0 0.0
    %5455 = vmatpush1.msra.mxu0 %v1797
    %5456 = vmatprep.subr.mxu0 0.0
    %5457 = vmatpush1.msra.mxu0 %v1798
    %5458 = vmatprep.subr.mxu0 0.0
    %5459 = vmatpush1.msra.mxu0 %v1799
    %5460 = vmatprep.subr.mxu0 0.0
    %5461 = vmatpush1.msra.mxu0 0.0
    %5462 = vmatprep.subr.mxu0 0.0
    %5463 = vmatpush1.msra.mxu0 0.0
    %5464 = vmatprep.subr.mxu0 0.0
    %5465 = vmatpush1.msra.mxu0 0.0
    %5466 = vmatprep.subr.mxu0 0.0
    %5467 = vmatpush1.msra.mxu0 0.0
    %5468 = vmatprep.subr.mxu0 0.0
    %5469 = vmatpush1.msra.mxu0 0.0
    %5470 = vmatprep.subr.mxu0 0.0
    %5471 = vmatpush1.msra.mxu0 0.0
    %5472 = vmatprep.subr.mxu0 0.0
    %5473 = vmatpush1.msra.mxu0 0.0
    %5474 = vmatprep.subr.mxu0 0.0
    %5475 = vmatpush1.msra.mxu0 0.0
    %5476 = vmatprep.subr.mxu0 0.0
    %5477 = vmatpush1.msra.mxu0 0.0
    %5478 = vmatprep.subr.mxu0 0.0
    %5479 = vmatpush1.msra.mxu0 0.0
    %5480 = vmatprep.subr.mxu0 0.0
    %5481 = vmatpush1.msra.mxu0 0.0
    %5482 = vmatprep.subr.mxu0 0.0
    %5483 = vmatpush1.msra.mxu0 0.0
    %5484 = vmatprep.subr.mxu0 0.0
    %5485 = vmatpush1.msra.mxu0 0.0
    %5486 = vmatprep.subr.mxu0 0.0
    %5487 = vmatpush1.msra.mxu0 0.0
    %5488 = vmatprep.subr.mxu0 0.0
    %5489 = vmatpush1.msra.mxu0 0.0
    %5490 = vmatprep.subr.mxu0 0.0
    %5491 = vmatpush1.msra.mxu0 0.0
    %5492 = vmatprep.subr.mxu0 0.0
    %5493 = vmatpush1.msra.mxu0 0.0
    %5494 = vmatprep.subr.mxu0 0.0
    %5495 = vmatpush1.msra.mxu0 0.0
    %5496 = vmatprep.subr.mxu0 0.0
    %5497 = vmatpush1.msra.mxu0 0.0
    %5498 = vmatprep.subr.mxu0 0.0
    %5499 = vmatpush1.msra.mxu0 0.0
    %5500 = vmatprep.subr.mxu0 0.0
    %5501 = vmatpush1.msra.mxu0 0.0
    %5502 = vmatprep.subr.mxu0 0.0
    %5503 = vmatpush1.msra.mxu0 0.0
    %5504 = vmatprep.subr.mxu0 0.0
    %5505 = vmatpush1.msra.mxu0 0.0
    %5506 = vmatprep.subr.mxu0 0.0
    %5507 = vmatpush1.msra.mxu0 0.0
    %5508 = vmatprep.subr.mxu0 0.0
    %5509 = vmatpush1.msra.mxu0 0.0
    %5510 = vmatprep.subr.mxu0 0.0
    %5511 = vmatpush1.msra.mxu0 0.0
    %5512 = vmatprep.subr.mxu0 0.0
    %5513 = vmatpush1.msra.mxu0 0.0
    %5514 = vmatprep.subr.mxu0 0.0
    %5515 = vmatpush1.msra.mxu0 0.0
    %5516 = vmatprep.mubr.f32.mxu0 0.0
    %5517 = vmatmul.mubr.f32.gmra.mrb[0].mxu0 %v5450
    %v5518 = vpop.f32.mrb[0].mxu0
    %v5519 = vadd.f32 0.0, %v5518
    %v5520 = vpop.f32.mrb[0].mxu0
    %5521 = vdwg.mxu0
    %v5522 = vadd.f32 %v5444, %v5519
    %v5523 = vxor.u32 %v5522, 2147483648
    %v5524 = vmul.f32 %v5523, 1.442695
    %v5525 = vpow.pop %v5524
    %v5526 = vadd.f32 %v5525, 1.0
    %v5527 = vrcp.pop %v5526
    %v5528 = vmul.f32 1.0, %v5527
    %v5529 = vadd.f32 %v5519, %v1885
    %5531 = vrot.lane.b32.xlu0 %v5529, 64
    %v5532 = vpop.permute.xlu0 %5531
    %v5534 = vmul.f32 %v5528, %v5532
    %5536 = vrot.lane.b32.xlu0 %v5534, 64
    %v5537 = vpop.permute.xlu0 %5536
    %v5539 = vadd.f32 %v5444, %v5537
    %v5540 = vtanh.pop %v5539
    %v5541 = vsub.f32 1.0, %v5528
    %5543 = vrot.lane.b32.xlu0 %v5540, 96
    %v5544 = vpop.permute.xlu0 %5543
    %v5546 = vmul.f32 %v5541, %v5544
    %v5547 = vmul.f32 %v5528, %v5199
    %v5548 = vadd.f32 %v5546, %v5547
    %5550 = vrot.lane.b32.xlu0 %v5376, 96
    %v5551 = vpop.permute.xlu0 %5550
    %v5552 = vsel %vm167, %v5551, 0
    %5554 = vmatprep.subr.mxu0 0.0
    %5555 = vmatpush1.msra.mxu0 %v1713
    %5556 = vmatprep.subr.mxu0 0.0
    %5557 = vmatpush1.msra.mxu0 %v1714
    %5558 = vmatprep.subr.mxu0 0.0
    %5559 = vmatpush1.msra.mxu0 %v1715
    %5560 = vmatprep.subr.mxu0 0.0
    %5561 = vmatpush1.msra.mxu0 %v1716
    %5562 = vmatprep.subr.mxu0 0.0
    %5563 = vmatpush1.msra.mxu0 0.0
    %5564 = vmatprep.subr.mxu0 0.0
    %5565 = vmatpush1.msra.mxu0 0.0
    %5566 = vmatprep.subr.mxu0 0.0
    %5567 = vmatpush1.msra.mxu0 0.0
    %5568 = vmatprep.subr.mxu0 0.0
    %5569 = vmatpush1.msra.mxu0 0.0
    %5570 = vmatprep.subr.mxu0 0.0
    %5571 = vmatpush1.msra.mxu0 0.0
    %5572 = vmatprep.subr.mxu0 0.0
    %5573 = vmatpush1.msra.mxu0 0.0
    %5574 = vmatprep.subr.mxu0 0.0
    %5575 = vmatpush1.msra.mxu0 0.0
    %5576 = vmatprep.subr.mxu0 0.0
    %5577 = vmatpush1.msra.mxu0 0.0
    %5578 = vmatprep.subr.mxu0 0.0
    %5579 = vmatpush1.msra.mxu0 0.0
    %5580 = vmatprep.subr.mxu0 0.0
    %5581 = vmatpush1.msra.mxu0 0.0
    %5582 = vmatprep.subr.mxu0 0.0
    %5583 = vmatpush1.msra.mxu0 0.0
    %5584 = vmatprep.subr.mxu0 0.0
    %5585 = vmatpush1.msra.mxu0 0.0
    %5586 = vmatprep.subr.mxu0 0.0
    %5587 = vmatpush1.msra.mxu0 0.0
    %5588 = vmatprep.subr.mxu0 0.0
    %5589 = vmatpush1.msra.mxu0 0.0
    %5590 = vmatprep.subr.mxu0 0.0
    %5591 = vmatpush1.msra.mxu0 0.0
    %5592 = vmatprep.subr.mxu0 0.0
    %5593 = vmatpush1.msra.mxu0 0.0
    %5594 = vmatprep.subr.mxu0 0.0
    %5595 = vmatpush1.msra.mxu0 0.0
    %5596 = vmatprep.subr.mxu0 0.0
    %5597 = vmatpush1.msra.mxu0 0.0
    %5598 = vmatprep.subr.mxu0 0.0
    %5599 = vmatpush1.msra.mxu0 0.0
    %5600 = vmatprep.subr.mxu0 0.0
    %5601 = vmatpush1.msra.mxu0 0.0
    %5602 = vmatprep.subr.mxu0 0.0
    %5603 = vmatpush1.msra.mxu0 0.0
    %5604 = vmatprep.subr.mxu0 0.0
    %5605 = vmatpush1.msra.mxu0 0.0
    %5606 = vmatprep.subr.mxu0 0.0
    %5607 = vmatpush1.msra.mxu0 0.0
    %5608 = vmatprep.subr.mxu0 0.0
    %5609 = vmatpush1.msra.mxu0 0.0
    %5610 = vmatprep.subr.mxu0 0.0
    %5611 = vmatpush1.msra.mxu0 0.0
    %5612 = vmatprep.subr.mxu0 0.0
    %5613 = vmatpush1.msra.mxu0 0.0
    %5614 = vmatprep.subr.mxu0 0.0
    %5615 = vmatpush1.msra.mxu0 0.0
    %5616 = vmatprep.subr.mxu0 0.0
    %5617 = vmatpush1.msra.mxu0 0.0
    %5618 = vmatprep.mubr.f32.mxu0 0.0
    %5619 = vmatmul.mubr.f32.gmra.mrb[0].mxu0 %v5552
    %v5620 = vpop.f32.mrb[0].mxu0
    %v5621 = vadd.f32 %v1723, %v5620
    %v5622 = vpop.f32.mrb[0].mxu0
    %5623 = vdwg.mxu0
    %5625 = vrot.lane.b32.xlu0 %v5548, 96
    %v5626 = vpop.permute.xlu0 %5625
    %v5627 = vsel %vm167, %v5626, 0
    %5629 = vmatprep.subr.mxu0 0.0
    %5630 = vmatpush1.msra.mxu0 %v1796
    %5631 = vmatprep.subr.mxu0 0.0
    %5632 = vmatpush1.msra.mxu0 %v1797
    %5633 = vmatprep.subr.mxu0 0.0
    %5634 = vmatpush1.msra.mxu0 %v1798
    %5635 = vmatprep.subr.mxu0 0.0
    %5636 = vmatpush1.msra.mxu0 %v1799
    %5637 = vmatprep.subr.mxu0 0.0
    %5638 = vmatpush1.msra.mxu0 0.0
    %5639 = vmatprep.subr.mxu0 0.0
    %5640 = vmatpush1.msra.mxu0 0.0
    %5641 = vmatprep.subr.mxu0 0.0
    %5642 = vmatpush1.msra.mxu0 0.0
    %5643 = vmatprep.subr.mxu0 0.0
    %5644 = vmatpush1.msra.mxu0 0.0
    %5645 = vmatprep.subr.mxu0 0.0
    %5646 = vmatpush1.msra.mxu0 0.0
    %5647 = vmatprep.subr.mxu0 0.0
    %5648 = vmatpush1.msra.mxu0 0.0
    %5649 = vmatprep.subr.mxu0 0.0
    %5650 = vmatpush1.msra.mxu0 0.0
    %5651 = vmatprep.subr.mxu0 0.0
    %5652 = vmatpush1.msra.mxu0 0.0
    %5653 = vmatprep.subr.mxu0 0.0
    %5654 = vmatpush1.msra.mxu0 0.0
    %5655 = vmatprep.subr.mxu0 0.0
    %5656 = vmatpush1.msra.mxu0 0.0
    %5657 = vmatprep.subr.mxu0 0.0
    %5658 = vmatpush1.msra.mxu0 0.0
    %5659 = vmatprep.subr.mxu0 0.0
    %5660 = vmatpush1.msra.mxu0 0.0
    %5661 = vmatprep.subr.mxu0 0.0
    %5662 = vmatpush1.msra.mxu0 0.0
    %5663 = vmatprep.subr.mxu0 0.0
    %5664 = vmatpush1.msra.mxu0 0.0
    %5665 = vmatprep.subr.mxu0 0.0
    %5666 = vmatpush1.msra.mxu0 0.0
    %5667 = vmatprep.subr.mxu0 0.0
    %5668 = vmatpush1.msra.mxu0 0.0
    %5669 = vmatprep.subr.mxu0 0.0
    %5670 = vmatpush1.msra.mxu0 0.0
    %5671 = vmatprep.subr.mxu0 0.0
    %5672 = vmatpush1.msra.mxu0 0.0
    %5673 = vmatprep.subr.mxu0 0.0
    %5674 = vmatpush1.msra.mxu0 0.0
    %5675 = vmatprep.subr.mxu0 0.0
    %5676 = vmatpush1.msra.mxu0 0.0
    %5677 = vmatprep.subr.mxu0 0.0
    %5678 = vmatpush1.msra.mxu0 0.0
    %5679 = vmatprep.subr.mxu0 0.0
    %5680 = vmatpush1.msra.mxu0 0.0
    %5681 = vmatprep.subr.mxu0 0.0
    %5682 = vmatpush1.msra.mxu0 0.0
    %5683 = vmatprep.subr.mxu0 0.0
    %5684 = vmatpush1.msra.mxu0 0.0
    %5685 = vmatprep.subr.mxu0 0.0
    %5686 = vmatpush1.msra.mxu0 0.0
    %5687 = vmatprep.subr.mxu0 0.0
    %5688 = vmatpush1.msra.mxu0 0.0
    %5689 = vmatprep.subr.mxu0 0.0
    %5690 = vmatpush1.msra.mxu0 0.0
    %5691 = vmatprep.subr.mxu0 0.0
    %5692 = vmatpush1.msra.mxu0 0.0
    %5693 = vmatprep.mubr.f32.mxu0 0.0
    %5694 = vmatmul.mubr.f32.gmra.mrb[0].mxu0 %v5627
    %v5695 = vpop.f32.mrb[0].mxu0
    %v5696 = vadd.f32 0.0, %v5695
    %v5697 = vpop.f32.mrb[0].mxu0
    %5698 = vdwg.mxu0
    %v5699 = vadd.f32 %v5621, %v5696
    %v5700 = vxor.u32 %v5699, 2147483648
    %v5701 = vmul.f32 %v5700, 1.442695
    %v5702 = vpow.pop %v5701
    %v5703 = vadd.f32 %v5702, 1.0
    %v5704 = vrcp.pop %v5703
    %v5705 = vmul.f32 1.0, %v5704
    %v5706 = vadd.f32 %v5696, %v1885
    %5708 = vrot.lane.b32.xlu0 %v5706, 64
    %v5709 = vpop.permute.xlu0 %5708
    %v5711 = vmul.f32 %v5705, %v5709
    %5713 = vrot.lane.b32.xlu0 %v5711, 64
    %v5714 = vpop.permute.xlu0 %5713
    %v5716 = vadd.f32 %v5621, %v5714
    %v5717 = vtanh.pop %v5716
    %v5718 = vsub.f32 1.0, %v5705
    %5720 = vrot.lane.b32.xlu0 %v5717, 96
    %v5721 = vpop.permute.xlu0 %5720
    %v5723 = vmul.f32 %v5718, %v5721
    %v5724 = vmul.f32 %v5705, %v5548
    %v5725 = vadd.f32 %v5723, %v5724
    %v5726 = vrot.slane %v4855, 6
    %v5728 = vrot.slane %v5376, 4
    %v5731 = vrot.slane %v5725, 2
    %vm5733 = vcmask 1041408
    %v5734 = vsel %vm5733, %v4162, %v5726
    %vm5735 = vcmask 1043456
    %v5736 = vsel %vm5735, %v5734, %v5728
    %vm5737 = vcmask 1045504
    %v5738 = vsel %vm5737, %v5736, %v5731
    %5740 = vrot.lane.b32.xlu0 %v5738, 96
    %v5741 = vpop.permute.xlu0 %5740
    %5743 = vst.msk [vmem:[#allocation9] sm:$0xff] %vm167, %v5741
    %v5744 = vld [vmem:[%s6] sm:$0xff]
    %v5745 = vld [vmem:[%s6 + $0x8] sm:$0xff]
    %v5746 = vld [vmem:[%s6 + $0x10] sm:$0xff]
    %v5747 = vld [vmem:[%s6 + $0x18] sm:$0xff]
    %v5748 = vld [vmem:[%s7] sm:$0x1]
    %v5750 = vlaneseq
    %v5751 = vshrl.u32 %v5750, 7
    %v5752 = vsub.s32 0, %v5751
    %v5753 = vrot.slane %v5748, %v5752
    %5755 = vrot.lane.b32.xlu0 %v5725, 96
    %v5756 = vpop.permute.xlu0 %5755
    %v5757 = vsel %vm167, %v5756, 0
    %5759 = vmatprep.subr.mxu0 0.0
    %5760 = vmatpush1.msra.mxu0 %v5744
    %5761 = vmatprep.subr.mxu0 0.0
    %5762 = vmatpush1.msra.mxu0 %v5745
    %5763 = vmatprep.subr.mxu0 0.0
    %5764 = vmatpush1.msra.mxu0 %v5746
    %5765 = vmatprep.subr.mxu0 0.0
    %5766 = vmatpush1.msra.mxu0 %v5747
    %5767 = vmatprep.subr.mxu0 0.0
    %5768 = vmatpush1.msra.mxu0 0.0
    %5769 = vmatprep.subr.mxu0 0.0
    %5770 = vmatpush1.msra.mxu0 0.0
    %5771 = vmatprep.subr.mxu0 0.0
    %5772 = vmatpush1.msra.mxu0 0.0
    %5773 = vmatprep.subr.mxu0 0.0
    %5774 = vmatpush1.msra.mxu0 0.0
    %5775 = vmatprep.subr.mxu0 0.0
    %5776 = vmatpush1.msra.mxu0 0.0
    %5777 = vmatprep.subr.mxu0 0.0
    %5778 = vmatpush1.msra.mxu0 0.0
    %5779 = vmatprep.subr.mxu0 0.0
    %5780 = vmatpush1.msra.mxu0 0.0
    %5781 = vmatprep.subr.mxu0 0.0
    %5782 = vmatpush1.msra.mxu0 0.0
    %5783 = vmatprep.subr.mxu0 0.0
    %5784 = vmatpush1.msra.mxu0 0.0
    %5785 = vmatprep.subr.mxu0 0.0
    %5786 = vmatpush1.msra.mxu0 0.0
    %5787 = vmatprep.subr.mxu0 0.0
    %5788 = vmatpush1.msra.mxu0 0.0
    %5789 = vmatprep.subr.mxu0 0.0
    %5790 = vmatpush1.msra.mxu0 0.0
    %5791 = vmatprep.subr.mxu0 0.0
    %5792 = vmatpush1.msra.mxu0 0.0
    %5793 = vmatprep.subr.mxu0 0.0
    %5794 = vmatpush1.msra.mxu0 0.0
    %5795 = vmatprep.subr.mxu0 0.0
    %5796 = vmatpush1.msra.mxu0 0.0
    %5797 = vmatprep.subr.mxu0 0.0
    %5798 = vmatpush1.msra.mxu0 0.0
    %5799 = vmatprep.subr.mxu0 0.0
    %5800 = vmatpush1.msra.mxu0 0.0
    %5801 = vmatprep.subr.mxu0 0.0
    %5802 = vmatpush1.msra.mxu0 0.0
    %5803 = vmatprep.subr.mxu0 0.0
    %5804 = vmatpush1.msra.mxu0 0.0
    %5805 = vmatprep.subr.mxu0 0.0
    %5806 = vmatpush1.msra.mxu0 0.0
    %5807 = vmatprep.subr.mxu0 0.0
    %5808 = vmatpush1.msra.mxu0 0.0
    %5809 = vmatprep.subr.mxu0 0.0
    %5810 = vmatpush1.msra.mxu0 0.0
    %5811 = vmatprep.subr.mxu0 0.0
    %5812 = vmatpush1.msra.mxu0 0.0
    %5813 = vmatprep.subr.mxu0 0.0
    %5814 = vmatpush1.msra.mxu0 0.0
    %5815 = vmatprep.subr.mxu0 0.0
    %5816 = vmatpush1.msra.mxu0 0.0
    %5817 = vmatprep.subr.mxu0 0.0
    %5818 = vmatpush1.msra.mxu0 0.0
    %5819 = vmatprep.subr.mxu0 0.0
    %5820 = vmatpush1.msra.mxu0 0.0
    %5821 = vmatprep.subr.mxu0 0.0
    %5822 = vmatpush1.msra.mxu0 0.0
    %5823 = vmatprep.mubr.f32.mxu0 0.0
    %5824 = vmatmul.mubr.f32.gmra.mrb[0].mxu0 %v5757
    %v5825 = vpop.f32.mrb[0].mxu0
    %v5826 = vadd.f32 %v5753, %v5825
    %v5827 = vpop.f32.mrb[0].mxu0
    %5828 = vdwg.mxu0
    %vm5829 = vcmask 9216
    %5830 = vst.msk [vmem:[#allocation8] sm:$0x3] %vm5829, %v5826
    // Predicated region
    $region46: #{student_forward.1} parent=1 // pred_check
      _
    $region47: #{student_forward.1} parent=1 // pred_check_branch
      %5832 = sbr.rel (0) target = $region49
    $region48: #{student_forward.1} parent=1 // pred_region
      %s5834 = ssub.s32 32, 32
      %5835 = vsyncadd [#allocation4], %s5834
      %s5837 = sshll.u32 [#allocation8], 4
      %s5838 = int_to_ptr.vmem [resolvable:$true] %s5837
      %5840 = dma.vmem_to_hbm [thread:$0]  %s5838, 32, %s8, [#allocation4]
    $region49: #{student_forward.1} parent=1 // pred_fallthru
      _
    // Predicated region
    $region50: #{student_forward.1} parent=1 // pred_check
      _
    $region51: #{student_forward.1} parent=1 // pred_check_branch
      %5842 = sbr.rel (0) target = $region53
    $region52: #{student_forward.1} parent=1 // pred_region
      %s5844 = ssub.s32 128, 128
      %5845 = vsyncadd [#allocation10], %s5844
      %s5847 = sshll.u32 [#allocation9], 4
      %s5848 = int_to_ptr.vmem [resolvable:$true] %s5847
      %5850 = dma.vmem_to_hbm [thread:$0]  %s5848, 128, %s9, [#allocation10]
    $region53: #{student_forward.1} parent=1 // pred_fallthru
      _
    // Predicated region
    $region54: #{student_forward.1} parent=1 // pred_check
      _
    $region55: #{student_forward.1} parent=1 // pred_check_branch
      %5852 = sbr.rel (0) target = $region57
    $region56: #{student_forward.1} parent=1 // pred_region
      %5853 = dma.done [#allocation4], 32
    $region57: #{student_forward.1} parent=1 // pred_fallthru
      _
    // Predicated region
    $region58: #{student_forward.1} parent=1 // pred_check
      _
    $region59: #{student_forward.1} parent=1 // pred_check_branch
      %5855 = sbr.rel (0) target = $region61
    $region60: #{student_forward.1} parent=1 // pred_region
      %5856 = dma.done [#allocation10], 128
    $region61: #{student_forward.1} parent=1 // pred_fallthru
      _
    %5857 = vsyncpa [#allocation3], 1
    %5858 = vsyncpa [#allocation6], 1
    %5859 = vsyncpa [#allocation4], 1
    %5860 = vsyncpa [#allocation10], 1

</llo_original>
